<compile_context>
chip_gen: v6e
topology: v6e:2x2x1
jax: 0.10.0
libtpu: 0.0.40
codegen_flags: <defaults>
</compile_context>

<pallas_src>
import jax
import jax.numpy as jnp
from jax.experimental import pallas as pl
from jax.experimental.pallas import tpu as pltpu


# ------------------------------ fused kernel ------------------------------- #

def _fused_weight_score_kernel(x_ref, fw_ref, fb_ref,
                               w1_ref, b1_ref, w2_ref, b2_ref,
                               w3_ref, b3_ref, w4_ref, b4_ref, o_ref):
    """Grid point (head h, row-tile r):
         fea = ReLU(x @ feat_w + feat_b)              (synthetic feature model)
         h   = ReLU(fea @ W1 + b1); h = ReLU(h @ W2 + b2); h = ReLU(h @ W3 + b3)
               (BatchNorm eval-mode folded into Wi, bi)
         out[h, r-tile] = sigmoid(sum(h * w4, -1) + b4)
       The feature matmul is recomputed per head (~2 MFLOP) -- far cheaper
       than materializing fea through HBM twice."""
    xb = x_ref[...].astype(jnp.bfloat16)
    fea = jnp.maximum(
        jnp.dot(xb, fw_ref[...], preferred_element_type=jnp.float32)
        + fb_ref[...], 0.0)

    h = fea.astype(jnp.bfloat16)
    h = jnp.maximum(
        jnp.dot(h, w1_ref[0], preferred_element_type=jnp.float32) + b1_ref[0],
        0.0).astype(jnp.bfloat16)
    h = jnp.maximum(
        jnp.dot(h, w2_ref[0], preferred_element_type=jnp.float32) + b2_ref[0],
        0.0).astype(jnp.bfloat16)
    h = jnp.maximum(
        jnp.dot(h, w3_ref[0], preferred_element_type=jnp.float32) + b3_ref[0],
        0.0)
    # Final 64 -> 1 layer: VPU multiply + lane reduction (XLU slot), not a
    # degenerate 1-column MXU matmul.
    z = jnp.sum(h * w4_ref[0], axis=-1, keepdims=True) + b4_ref[0]
    o_ref[0] = jax.nn.sigmoid(z)


# ------------------------------ forward wrapper ----------------------------- #

def weight_score_forward(x, params):
    B, pn, ps, D = x.shape
    N, C = B * pn, ps * D
    # Same memory content as torch `x.view(-1, D, patch_size)` then flatten.
    x_flat = x.reshape(N, C)

    feat_w, feat_b = params["feat_w"], params["feat_b"]
    w1, b1 = params["w1"], params["b1"]
    w2, b2 = params["w2"], params["b2"]
    w3, b3 = params["w3"], params["b3"]
    w4, b4 = params["w4"], params["b4"]
    F = feat_w.shape[1]
    H1, H2, H3 = w1.shape[2], w2.shape[2], w3.shape[2]

    # Row tile: full array at toy shapes, 256-row tiles for large N so the
    # activation block stays bounded and row tiles pipeline/megacore-split.
    TN = 256 if N % 256 == 0 else N

    sv = pl.pallas_call(
        _fused_weight_score_kernel,
        out_shape=jax.ShapeDtypeStruct((2, N, 1), jnp.float32),
        grid_spec=pltpu.PrefetchScalarGridSpec(
            num_scalar_prefetch=0,
            grid=(2, N // TN),                                    # (head, row-tile)
            in_specs=[
                pl.BlockSpec((TN, C), lambda h, r: (r, 0)),        # x rows
                pl.BlockSpec((C, F), lambda h, r: (0, 0)),         # feat W (bf16)
                pl.BlockSpec((1, F), lambda h, r: (0, 0)),         # feat b
                pl.BlockSpec((1, F, H1), lambda h, r: (h, 0, 0)),  # W1 (bf16)
                pl.BlockSpec((1, 1, H1), lambda h, r: (h, 0, 0)),  # b1
                pl.BlockSpec((1, H1, H2), lambda h, r: (h, 0, 0)), # W2 (bf16)
                pl.BlockSpec((1, 1, H2), lambda h, r: (h, 0, 0)),  # b2
                pl.BlockSpec((1, H2, H3), lambda h, r: (h, 0, 0)), # W3 (bf16)
                pl.BlockSpec((1, 1, H3), lambda h, r: (h, 0, 0)),  # b3
                pl.BlockSpec((1, 1, H3), lambda h, r: (h, 0, 0)),  # w4 row
                pl.BlockSpec((1, 1, 1), lambda h, r: (h, 0, 0)),   # b4
            ],
            out_specs=pl.BlockSpec((1, TN, 1), lambda h, r: (h, r, 0)),
        ),
        compiler_params=pltpu.CompilerParams(
            dimension_semantics=("parallel", "parallel"),
            vmem_limit_bytes=40 * 1024 * 1024,
        ),
    )(x_flat, feat_w, feat_b, w1, b1, w2, b2, w3, b3, w4, b4)

    # Tiny weighted-average epilogue (B scalars) in plain JAX -- no extra
    # pallas_call launch for ~32 bytes of work.
    score = sv[0, :, 0].reshape(B, pn)
    weight = sv[1, :, 0].reshape(B, pn)
    num = jnp.sum(score * weight, axis=-1, keepdims=True)
    den = jnp.sum(weight, axis=-1, keepdims=True)
    return num / den                                              # (B, 1)


# --------------------------- deterministic params -------------------------- #

def init_linear(key, fan_in, fan_out):
    kw, kb = jax.random.split(key)
    bound = 1.0 / (fan_in ** 0.5)
    w = jax.random.uniform(kw, (fan_in, fan_out), jnp.float32, -bound, bound)
    b = jax.random.uniform(kb, (1, fan_out), jnp.float32, -bound, bound)
    return w, b


def init_bn(key, num_features):
    k1, k2, k3, k4 = jax.random.split(key, 4)
    gamma = 1.0 + 0.1 * jax.random.normal(k1, (1, num_features), jnp.float32)
    beta = 0.1 * jax.random.normal(k2, (1, num_features), jnp.float32)
    mean = 0.1 * jax.random.normal(k3, (1, num_features), jnp.float32)
    var = 1.0 + 0.1 * jax.random.uniform(k4, (1, num_features), jnp.float32)
    return gamma, beta, mean, var


def fold_bn_into_linear(w, b, gamma, beta, mean, var, eps=1e-5):
    # BN(eval): (z - mean)/sqrt(var+eps)*gamma + beta, with z = x@W + b
    s = gamma / jnp.sqrt(var + eps)          # (1, out) per-feature scale
    return w * s, (b - mean) * s + beta


def init_basic_fc(key, inp_len=2048):
    """Returns f32 params [w1,b1,w2,b2,w3,b3,w4_row,b4] with BN folded."""
    sizes = [(inp_len, 1024), (1024, 512), (512, 64)]
    keys = jax.random.split(key, 4)
    params = []
    for k, (fi, fo) in zip(keys[:3], sizes):
        kl, kbn = jax.random.split(k)
        w, b = init_linear(kl, fi, fo)
        g, be, m, v = init_bn(kbn, fo)
        wf, bf = fold_bn_into_linear(w, b, g, be, m, v)
        params += [wf, bf]
    w4, b4 = init_linear(keys[3], 64, 1)
    params += [w4.T, b4]                      # (1, 64), (1, 1)
    return params


def prepare_params(feat_w, feat_b, score_params, weight_params):
    """Parameter setup (runs ONCE, outside jit): stack the two heads along a
    leading axis of 2 (grid-selectable) and cast matmul weights to bf16.
    Biases and the tiny (1,64) final row stay f32."""
    def stack(i):
        return jnp.stack([score_params[i], weight_params[i]], axis=0)
    return dict(
        feat_w=feat_w.astype(jnp.bfloat16),
        feat_b=feat_b,
        w1=stack(0).astype(jnp.bfloat16), b1=stack(1),
        w2=stack(2).astype(jnp.bfloat16), b2=stack(3),
        w3=stack(4).astype(jnp.bfloat16), b3=stack(5),
        w4=stack(6), b4=stack(7),
    )


# ------------------------------ f32 reference ------------------------------- #

def _reference_forward(x, feat_w, feat_b, score_params, weight_params):
    B, pn, ps, D = x.shape
    xf = x.reshape(B * pn, ps * D)
    fea = jnp.maximum(xf @ feat_w + feat_b, 0.0)

    def mlp(h, p):
        w1, b1, w2, b2, w3, b3, w4, b4 = p
        h = jnp.maximum(h @ w1 + b1, 0.0)
        h = jnp.maximum(h @ w2 + b2, 0.0)
        h = jnp.maximum(h @ w3 + b3, 0.0)
        return jax.nn.sigmoid(jnp.sum(h * w4, -1, keepdims=True) + b4)

    score = mlp(fea, score_params).reshape(B, pn)
    weight = mlp(fea, weight_params).reshape(B, pn)
    return (jnp.sum(score * weight, -1, keepdims=True)
            / jnp.sum(weight, -1, keepdims=True))


# ---------------------------------- main ----------------------------------- #

if __name__ == "__main__":
    key = jax.random.PRNGKey(0)
    kx, kf, ks, kw = jax.random.split(key, 4)

    # Small shapes consistent with the module's forward signature.
    B, patch_number, patch_size, D = 2, 4, 8, 16
    FEA_LEN = 2048                            # BasicFCModule inp_len

    x = jax.random.normal(kx, (B, patch_number, patch_size, D), jnp.float32)
    feat_w, feat_b = init_linear(kf, patch_size * D, FEA_LEN)
    score_params = init_basic_fc(ks, FEA_LEN)
    weight_params = init_basic_fc(kw, FEA_LEN)

    params = prepare_params(feat_w, feat_b, score_params, weight_params)

    fwd = jax.jit(weight_score_forward)
    out = jax.block_until_ready(fwd(x, params))

    assert out.shape == (B, 1), out.shape
    assert bool(jnp.all(jnp.isfinite(out)))

    # fp32 pure-JAX oracle; loose tolerance accounts for bf16 weight/activation
    # quantization in the kernel.
    ref = _reference_forward(x, feat_w, feat_b, score_params, weight_params)
    assert jnp.allclose(out, ref, atol=5e-2, rtol=5e-2), (out, ref)

    print("KERNEL_OK")
</pallas_src>

<mosaic_0001>
module attributes {stable_mosaic.version = 11 : i64} {
  func.func @_fused_weight_score_kernel(%arg0: i32, %arg1: i32, %arg2: memref<8x128xf32, #tpu.memory_space<vmem>>, %arg3: memref<128x2048xbf16, #tpu.memory_space<vmem>>, %arg4: memref<1x2048xf32, #tpu.memory_space<vmem>>, %arg5: memref<1x2048x1024xbf16, #tpu.memory_space<vmem>>, %arg6: memref<1x1x1024xf32, #tpu.memory_space<vmem>>, %arg7: memref<1x1024x512xbf16, #tpu.memory_space<vmem>>, %arg8: memref<1x1x512xf32, #tpu.memory_space<vmem>>, %arg9: memref<1x512x64xbf16, #tpu.memory_space<vmem>>, %arg10: memref<1x1x64xf32, #tpu.memory_space<vmem>>, %arg11: memref<1x1x64xf32, #tpu.memory_space<vmem>>, %arg12: memref<1x1x1xf32, #tpu.memory_space<vmem>>, %arg13: memref<1x8x1xf32, #tpu.memory_space<vmem>>) attributes {dimension_semantics = [#tpu.dimension_semantics<parallel>, #tpu.dimension_semantics<parallel>], iteration_bounds = array<i64: 2, 1>, scalar_prefetch = 0 : i64, scratch_operands = 0 : i64, tpu.core_type = #tpu.core_type<tc>, window_params = [{transform_indices = @transform_0, window_bounds = array<i64: 8, 128>}, {pipeline_mode = #tpu.pipeline_mode<synchronous>, transform_indices = @transform_1, window_bounds = array<i64: 128, 2048>}, {pipeline_mode = #tpu.pipeline_mode<synchronous>, transform_indices = @transform_2, window_bounds = array<i64: 1, 2048>}, {transform_indices = @transform_3, window_bounds = array<i64: 1, 2048, 1024>}, {transform_indices = @transform_4, window_bounds = array<i64: 1, 1, 1024>}, {transform_indices = @transform_5, window_bounds = array<i64: 1, 1024, 512>}, {transform_indices = @transform_6, window_bounds = array<i64: 1, 1, 512>}, {transform_indices = @transform_7, window_bounds = array<i64: 1, 512, 64>}, {transform_indices = @transform_8, window_bounds = array<i64: 1, 1, 64>}, {transform_indices = @transform_9, window_bounds = array<i64: 1, 1, 64>}, {transform_indices = @transform_10, window_bounds = array<i64: 1, 1, 1>}, {transform_indices = @transform_11, window_bounds = array<i64: 1, 8, 1>}]} {
    %c0 = arith.constant 0 : index
    %c0_0 = arith.constant 0 : index
    %0 = vector.load %arg2[%c0, %c0_0] : memref<8x128xf32, #tpu.memory_space<vmem>>, vector<8x128xf32>
    %1 = arith.truncf %0 : vector<8x128xf32> to vector<8x128xbf16>
    %c0_1 = arith.constant 0 : index
    %c0_2 = arith.constant 0 : index
    %2 = vector.load %arg3[%c0_1, %c0_2] : memref<128x2048xbf16, #tpu.memory_space<vmem>>, vector<128x2048xbf16>
    %cst = arith.constant dense<0.000000e+00> : vector<8x2048xf32>
    %3 = tpu.matmul %1, %2, %cst {dimension_numbers = #tpu.dot_dimension_numbers<[1], [0], [0], [1], [0, 0, 1, 1], [], []>} : vector<8x128xbf16>, vector<128x2048xbf16>, vector<8x2048xf32> -> vector<8x2048xf32>
    %c0_3 = arith.constant 0 : index
    %c0_4 = arith.constant 0 : index
    %4 = vector.load %arg4[%c0_3, %c0_4] : memref<1x2048xf32, #tpu.memory_space<vmem>>, vector<1x2048xf32>
    %5 = vector.broadcast %4 : vector<1x2048xf32> to vector<8x2048xf32>
    %6 = arith.addf %3, %5 : vector<8x2048xf32>
    %cst_5 = arith.constant 0.000000e+00 : f32
    %7 = vector.broadcast %cst_5 : f32 to vector<8x2048xf32>
    %8 = arith.maximumf %6, %7 : vector<8x2048xf32>
    %9 = arith.truncf %8 : vector<8x2048xf32> to vector<8x2048xbf16>
    %c0_6 = arith.constant 0 : index
    %c0_7 = arith.constant 0 : index
    %c0_8 = arith.constant 0 : index
    %10 = vector.load %arg5[%c0_6, %c0_7, %c0_8] : memref<1x2048x1024xbf16, #tpu.memory_space<vmem>>, vector<1x2048x1024xbf16>
    %11 = vector.shape_cast %10 : vector<1x2048x1024xbf16> to vector<2048x1024xbf16>
    %cst_9 = arith.constant dense<0.000000e+00> : vector<8x1024xf32>
    %12 = tpu.matmul %9, %11, %cst_9 {dimension_numbers = #tpu.dot_dimension_numbers<[1], [0], [0], [1], [0, 0, 1, 1], [], []>} : vector<8x2048xbf16>, vector<2048x1024xbf16>, vector<8x1024xf32> -> vector<8x1024xf32>
    %c0_10 = arith.constant 0 : index
    %c0_11 = arith.constant 0 : index
    %c0_12 = arith.constant 0 : index
    %13 = vector.load %arg6[%c0_10, %c0_11, %c0_12] : memref<1x1x1024xf32, #tpu.memory_space<vmem>>, vector<1x1x1024xf32>
    %14 = vector.shape_cast %13 : vector<1x1x1024xf32> to vector<1x1024xf32>
    %15 = vector.broadcast %14 : vector<1x1024xf32> to vector<8x1024xf32>
    %16 = arith.addf %12, %15 : vector<8x1024xf32>
    %cst_13 = arith.constant 0.000000e+00 : f32
    %17 = vector.broadcast %cst_13 : f32 to vector<8x1024xf32>
    %18 = arith.maximumf %16, %17 : vector<8x1024xf32>
    %19 = arith.truncf %18 : vector<8x1024xf32> to vector<8x1024xbf16>
    %c0_14 = arith.constant 0 : index
    %c0_15 = arith.constant 0 : index
    %c0_16 = arith.constant 0 : index
    %20 = vector.load %arg7[%c0_14, %c0_15, %c0_16] : memref<1x1024x512xbf16, #tpu.memory_space<vmem>>, vector<1x1024x512xbf16>
    %21 = vector.shape_cast %20 : vector<1x1024x512xbf16> to vector<1024x512xbf16>
    %cst_17 = arith.constant dense<0.000000e+00> : vector<8x512xf32>
    %22 = tpu.matmul %19, %21, %cst_17 {dimension_numbers = #tpu.dot_dimension_numbers<[1], [0], [0], [1], [0, 0, 1, 1], [], []>} : vector<8x1024xbf16>, vector<1024x512xbf16>, vector<8x512xf32> -> vector<8x512xf32>
    %c0_18 = arith.constant 0 : index
    %c0_19 = arith.constant 0 : index
    %c0_20 = arith.constant 0 : index
    %23 = vector.load %arg8[%c0_18, %c0_19, %c0_20] : memref<1x1x512xf32, #tpu.memory_space<vmem>>, vector<1x1x512xf32>
    %24 = vector.shape_cast %23 : vector<1x1x512xf32> to vector<1x512xf32>
    %25 = vector.broadcast %24 : vector<1x512xf32> to vector<8x512xf32>
    %26 = arith.addf %22, %25 : vector<8x512xf32>
    %cst_21 = arith.constant 0.000000e+00 : f32
    %27 = vector.broadcast %cst_21 : f32 to vector<8x512xf32>
    %28 = arith.maximumf %26, %27 : vector<8x512xf32>
    %29 = arith.truncf %28 : vector<8x512xf32> to vector<8x512xbf16>
    %c0_22 = arith.constant 0 : index
    %c0_23 = arith.constant 0 : index
    %c0_24 = arith.constant 0 : index
    %30 = vector.load %arg9[%c0_22, %c0_23, %c0_24] : memref<1x512x64xbf16, #tpu.memory_space<vmem>>, vector<1x512x64xbf16>
    %31 = vector.shape_cast %30 : vector<1x512x64xbf16> to vector<512x64xbf16>
    %cst_25 = arith.constant dense<0.000000e+00> : vector<8x64xf32>
    %32 = tpu.matmul %29, %31, %cst_25 {dimension_numbers = #tpu.dot_dimension_numbers<[1], [0], [0], [1], [0, 0, 1, 1], [], []>} : vector<8x512xbf16>, vector<512x64xbf16>, vector<8x64xf32> -> vector<8x64xf32>
    %c0_26 = arith.constant 0 : index
    %c0_27 = arith.constant 0 : index
    %c0_28 = arith.constant 0 : index
    %33 = vector.load %arg10[%c0_26, %c0_27, %c0_28] : memref<1x1x64xf32, #tpu.memory_space<vmem>>, vector<1x1x64xf32>
    %34 = vector.shape_cast %33 : vector<1x1x64xf32> to vector<1x64xf32>
    %35 = vector.broadcast %34 : vector<1x64xf32> to vector<8x64xf32>
    %36 = arith.addf %32, %35 : vector<8x64xf32>
    %cst_29 = arith.constant 0.000000e+00 : f32
    %37 = vector.broadcast %cst_29 : f32 to vector<8x64xf32>
    %38 = arith.maximumf %36, %37 : vector<8x64xf32>
    %c0_30 = arith.constant 0 : index
    %c0_31 = arith.constant 0 : index
    %c0_32 = arith.constant 0 : index
    %39 = vector.load %arg11[%c0_30, %c0_31, %c0_32] : memref<1x1x64xf32, #tpu.memory_space<vmem>>, vector<1x1x64xf32>
    %40 = vector.shape_cast %39 : vector<1x1x64xf32> to vector<1x64xf32>
    %41 = vector.broadcast %40 : vector<1x64xf32> to vector<8x64xf32>
    %42 = arith.mulf %38, %41 : vector<8x64xf32>
    %cst_33 = arith.constant dense<0.000000e+00> : vector<8xf32>
    %43 = vector.multi_reduction <add>, %42, %cst_33 [1] : vector<8x64xf32> to vector<8xf32>
    %44 = vector.shape_cast %43 : vector<8xf32> to vector<8x1xf32>
    %c0_34 = arith.constant 0 : index
    %c0_35 = arith.constant 0 : index
    %c0_36 = arith.constant 0 : index
    %45 = vector.load %arg12[%c0_34, %c0_35, %c0_36] : memref<1x1x1xf32, #tpu.memory_space<vmem>>, vector<1x1x1xf32>
    %46 = vector.shape_cast %45 : vector<1x1x1xf32> to vector<1x1xf32>
    %47 = vector.broadcast %46 : vector<1x1xf32> to vector<8x1xf32>
    %48 = arith.addf %44, %47 : vector<8x1xf32>
    %49 = arith.negf %48 : vector<8x1xf32>
    %50 = math.exp %49 : vector<8x1xf32>
    %cst_37 = arith.constant 1.000000e+00 : f32
    %51 = vector.broadcast %cst_37 : f32 to vector<8x1xf32>
    %52 = arith.addf %51, %50 : vector<8x1xf32>
    %53 = arith.divf %51, %52 : vector<8x1xf32>
    %c0_38 = arith.constant 0 : index
    %c0_39 = arith.constant 0 : index
    %c0_40 = arith.constant 0 : index
    %54 = vector.load %arg13[%c0_38, %c0_39, %c0_40] : memref<1x8x1xf32, #tpu.memory_space<vmem>>, vector<1x8x1xf32>
    %55 = vector.shape_cast %54 : vector<1x8x1xf32> to vector<8x1xf32>
    %56 = vector.shape_cast %53 : vector<8x1xf32> to vector<1x8x1xf32>
    tpu.vector_store %arg13[%c0_38, %c0_39, %c0_40], %56 {strides = array<i32>} : memref<1x8x1xf32, #tpu.memory_space<vmem>>, vector<1x8x1xf32>,
    return
  }
  func.func @transform_0(%arg0: i32, %arg1: i32) -> (i32, i32) {
    %c0_i32 = arith.constant 0 : i32
    %c0_i32_0 = arith.constant 0 : i32
    return %arg1, %c0_i32 : i32, i32
  }
  func.func @transform_1(%arg0: i32, %arg1: i32) -> (i32, i32) {
    %c0_i32 = arith.constant 0 : i32
    %c0_i32_0 = arith.constant 0 : i32
    %c0_i32_1 = arith.constant 0 : i32
    return %c0_i32, %c0_i32_0 : i32, i32
  }
  func.func @transform_2(%arg0: i32, %arg1: i32) -> (i32, i32) {
    %c0_i32 = arith.constant 0 : i32
    %c0_i32_0 = arith.constant 0 : i32
    %c0_i32_1 = arith.constant 0 : i32
    return %c0_i32, %c0_i32_0 : i32, i32
  }
  func.func @transform_3(%arg0: i32, %arg1: i32) -> (i32, i32, i32) {
    %c0_i32 = arith.constant 0 : i32
    %c0_i32_0 = arith.constant 0 : i32
    %c0_i32_1 = arith.constant 0 : i32
    return %arg0, %c0_i32, %c0_i32_0 : i32, i32, i32
  }
  func.func @transform_4(%arg0: i32, %arg1: i32) -> (i32, i32, i32) {
    %c0_i32 = arith.constant 0 : i32
    %c0_i32_0 = arith.constant 0 : i32
    %c0_i32_1 = arith.constant 0 : i32
    return %arg0, %c0_i32, %c0_i32_0 : i32, i32, i32
  }
  func.func @transform_5(%arg0: i32, %arg1: i32) -> (i32, i32, i32) {
    %c0_i32 = arith.constant 0 : i32
    %c0_i32_0 = arith.constant 0 : i32
    %c0_i32_1 = arith.constant 0 : i32
    return %arg0, %c0_i32, %c0_i32_0 : i32, i32, i32
  }
  func.func @transform_6(%arg0: i32, %arg1: i32) -> (i32, i32, i32) {
    %c0_i32 = arith.constant 0 : i32
    %c0_i32_0 = arith.constant 0 : i32
    %c0_i32_1 = arith.constant 0 : i32
    return %arg0, %c0_i32, %c0_i32_0 : i32, i32, i32
  }
  func.func @transform_7(%arg0: i32, %arg1: i32) -> (i32, i32, i32) {
    %c0_i32 = arith.constant 0 : i32
    %c0_i32_0 = arith.constant 0 : i32
    %c0_i32_1 = arith.constant 0 : i32
    return %arg0, %c0_i32, %c0_i32_0 : i32, i32, i32
  }
  func.func @transform_8(%arg0: i32, %arg1: i32) -> (i32, i32, i32) {
    %c0_i32 = arith.constant 0 : i32
    %c0_i32_0 = arith.constant 0 : i32
    %c0_i32_1 = arith.constant 0 : i32
    return %arg0, %c0_i32, %c0_i32_0 : i32, i32, i32
  }
  func.func @transform_9(%arg0: i32, %arg1: i32) -> (i32, i32, i32) {
    %c0_i32 = arith.constant 0 : i32
    %c0_i32_0 = arith.constant 0 : i32
    %c0_i32_1 = arith.constant 0 : i32
    return %arg0, %c0_i32, %c0_i32_0 : i32, i32, i32
  }
  func.func @transform_10(%arg0: i32, %arg1: i32) -> (i32, i32, i32) {
    %c0_i32 = arith.constant 0 : i32
    %c0_i32_0 = arith.constant 0 : i32
    %c0_i32_1 = arith.constant 0 : i32
    return %arg0, %c0_i32, %c0_i32_0 : i32, i32, i32
  }
  func.func @transform_11(%arg0: i32, %arg1: i32) -> (i32, i32, i32) {
    %c0_i32 = arith.constant 0 : i32
    %c0_i32_0 = arith.constant 0 : i32
    return %arg0, %arg1, %c0_i32 : i32, i32, i32
  }
}

</mosaic_0001>

<llo_original>
// kernel: squeeze.3
$region0: #{squeeze.3}
  %s0 = inlined_call_operand.vmem [shape: f32[8], index: 0, kind: input, shape index: {}]
  %s1 = inlined_call_operand.vmem [shape: f32[2,4], index: 1, kind: output, shape index: {}]
  $region1: #{squeeze.3} parent=0
    #allocation0 [shape = 'u8[4096]{0}', space=vmem, size = 0x1000, scoped, tag = 'scoped mem for output reshape']
    #allocation1 [shape = 'u8[4096]{0}', space=vmem, size = 0x1000, scoped, tag = 'scoped mem for input reshape']
    %s3 = sshll.u32 1, 1
    %s4 = ssub.s32 %s3, 1
    %v5 = vld [vmem:[%s0] sm:%s4]
    %6 = vst [vmem:[#allocation1] sm:%s4] %v5
    %v7 = vld [vmem:[#allocation1] sm:$0x1]
    %vm8 = vcmask 31744
    %9 = vst.msk [vmem:[#allocation0] sm:$0x1] %vm8, %v7
    %v10 = vld [vmem:[#allocation1] sm:$0x1]
    %11 = vrot.lane.b32.xlu0 %v10, 124
    %v12 = vpop.permute.xlu0 %11
    %vm13 = vcmask 31744
    %s14 = scalar_lea.vmem [#allocation0], 1
    %15 = vst.msk [vmem:[%s14] sm:$0x1] %vm13, %v12
    %s17 = sshll.u32 1, 2
    %s18 = ssub.s32 %s17, 1
    %v20 = vld [vmem:[#allocation0] sm:%s18]
    %s21 = sshll.u32 1, 2
    %s22 = ssub.s32 %s21, 1
    %23 = vst [vmem:[%s1] sm:%s22] %v20

// kernel: weight_score_forward.1
$region0: #{weight_score_forward.1}
  #allocation0 [shape = 'u32[]', space=smem, size = 0x4, offset = 0x4, fixed_abs, tag = 'smem constant byte address 0x4 - core index']
  #allocation1 [shape = 'u32[144,128]{1,0:T(1,128)}', space=vmem, size = 0x12000, scoped, tag = 'internal scratch']
  %s0 = inlined_call_operand.vmem [shape: f32[8,128], index: 0, kind: input, shape index: {}]
  %s1 = inlined_call_operand.hbm [shape: bf16[128,2048], index: 1, kind: input, shape index: {}]
  %s2 = inlined_call_operand.hbm [shape: f32[1,2048], index: 2, kind: input, shape index: {}]
  %s3 = inlined_call_operand.hbm [shape: bf16[2,2048,1024], index: 3, kind: input, shape index: {}]
  %s4 = inlined_call_operand.hbm [shape: f32[2,1,1024], index: 4, kind: input, shape index: {}]
  %s5 = inlined_call_operand.hbm [shape: bf16[2,1024,512], index: 5, kind: input, shape index: {}]
  %s6 = inlined_call_operand.hbm [shape: f32[2,1,512], index: 6, kind: input, shape index: {}]
  %s7 = inlined_call_operand.vmem [shape: bf16[2,512,64], index: 7, kind: input, shape index: {}]
  %s8 = inlined_call_operand.hbm [shape: f32[2,1,64], index: 8, kind: input, shape index: {}]
  %s9 = inlined_call_operand.hbm [shape: f32[2,1,64], index: 9, kind: input, shape index: {}]
  %s10 = inlined_call_operand.vmem [shape: f32[2,1,1], index: 10, kind: input, shape index: {}]
  %s11 = inlined_call_operand.vmem [shape: f32[2,8,1], index: 11, kind: output, shape index: {}]
  %s12 = sld [smem:[#allocation0]]
  $region109: #{weight_score_forward.1} parent=0
    _
  %s14 = ssub.s32 1, %s12
  %s15 = scalar_select 0, %s14, %s12
  $region1: #{weight_score_forward.1} parent=0
    #allocation2 [shape = 'u8[524288]{0}', space=vmem, size = 0x80000, scoped, tag = 'input window, operand 1, single buffered']
    #allocation3 [shape = 's32[2]{0}', space=sflag, size = 0x8, scoped, tag = 'scoped memory for weight_score_forward.1']
    #allocation4 [shape = 'u8[8192]{0}', space=vmem, size = 0x2000, scoped, tag = 'input window, operand 2, single buffered']
    #allocation5 [shape = 's32[1]{0}', space=sflag, size = 0x4, scoped, tag = 'scoped memory for weight_score_forward.1']
    #allocation6 [shape = 'u8[8388608]{0}', space=vmem, size = 0x800000, scoped, tag = 'input window, operand 3']
    #allocation7 [shape = 'u8[8192]{0}', space=vmem, size = 0x2000, scoped, tag = 'input window, operand 4']
    #allocation8 [shape = 'u8[2097152]{0}', space=vmem, size = 0x200000, scoped, tag = 'input window, operand 5']
    #allocation9 [shape = 'u8[4096]{0}', space=vmem, size = 0x1000, scoped, tag = 'input window, operand 6']
    #allocation10 [shape = 'u8[1024]{0}', space=vmem, size = 0x400, scoped, tag = 'input window, operand 8']
    #allocation11 [shape = 'u8[1024]{0}', space=vmem, size = 0x400, scoped, tag = 'input window, operand 9']
    %16 = vsyncpa [#allocation3], 0
    %17 = vsyncpa [#allocation5], 0
    loop: start=0, step=1, limit=4
    $region2: #{weight_score_forward.1} parent=1 // loop_pre_header
      _
    $region3: #{weight_score_forward.1} parent=1 // loop_header
      %s19 = sphi 0, %s23
      %p20 = scmp.ge.s32.totalorder %s19, 4
      %s26 = sphi 0, %s38
      %s27 = sphi 0, %s34
      %s28 = sphi 0, %s26
      %s29 = sphi 0, %s27
      %s30 = sphi 0, %s28
      %s31 = sphi 0, %s29
      %s41 = sphi 0, %s43
      %s44 = sphi 0, %s41
      %s45 = sphi 0, %s44
      %s61 = sphi 0, %s45
      %s65 = sphi 0, %s65
      %s67 = sphi 0, %s65
      %s68 = sphi 0, %s67
      %s82 = sphi 0, %s68
      %s86 = sphi 0, %s86
      %s88 = sphi 0, %s86
      %s89 = sphi 0, %s88
      %s103 = sphi 0, %s89
      %s109 = sphi 0, %s111
      %s112 = sphi 0, %s109
      %s113 = sphi 0, %s112
      %s129 = sphi 0, %s113
      %s135 = sphi 0, %s137
      %s138 = sphi 0, %s135
      %s139 = sphi 0, %s138
      %s155 = sphi 0, %s139
      %s161 = sphi 0, %s163
      %s164 = sphi 0, %s161
      %s165 = sphi 0, %s164
      %s181 = sphi 0, %s165
      %s187 = sphi 0, %s189
      %s190 = sphi 0, %s187
      %s191 = sphi 0, %s190
      %s207 = sphi 0, %s191
      %s213 = sphi 0, %s215
      %s216 = sphi 0, %s213
      %s217 = sphi 0, %s216
      %s233 = sphi 0, %s217
      %s239 = sphi 0, %s241
      %s242 = sphi 0, %s239
      %s243 = sphi 0, %s242
      %s259 = sphi 0, %s243
      %s265 = sphi 0, %s267
      %s268 = sphi 0, %s265
      %s269 = sphi 0, %s268
      %s285 = sphi 0, %s269
      %s291 = sphi 0, %s293
      %s294 = sphi 0, %s291
      %s295 = sphi 0, %s294
      %s311 = sphi 0, %s295
      %s319 = sphi 0, %s321
      %s322 = sphi 0, %s319
      %s323 = sphi 0, %s322
      %s339 = sphi 0, %s323
    $region4: #{weight_score_forward.1} parent=1 // loop_header_branch
      %22 = sbr.rel (%p20) target = $region8
    $region5: #{weight_score_forward.1} parent=1 // loop_body
      %s24 = ssub.s32 %s19, 1
      %s25 = ssub.s32 %s19, 2
      %s32 = sadd.s32 1, %s27
      %p33 = scmp.ge.s32.totalorder %s32, 1
      %s34 = scalar_select %p33, 0, %s32
      %s35 = sadd.s32 1, %s26
      %s36 = scalar_select %p33, %s35, %s26
      %p37 = scmp.ge.s32.totalorder %s36, 2
      %s38 = scalar_select %p37, 0, %s36
      %s39 = ssub.s32 %s27, %s34
      %p40 = scmp.eq.s32.totalorder %s39, 0
      %s42 = sadd.s32 %s41, 1
      %s43 = scalar_select %p40, %s41, %s42
      %p46 = pneg %p40
      %p47 = scmp.eq.s32.totalorder %s19, 1
      %p48 = por %p46, %p47
      %p49 = scmp.ne.s32.totalorder %s41, %s44
      %p50 = scmp.eq.s32.totalorder %s19, 0
      %p51 = por %p49, %p50
      %p52 = scmp.ne.s32.totalorder %s41, %s44
      %p53 = scmp.eq.s32.totalorder %s24, 1
      %p54 = por %p52, %p53
      %p55 = scmp.ne.s32.totalorder %s44, %s45
      %p56 = scmp.eq.s32.totalorder %s24, 0
      %p57 = por %p55, %p56
      %p58 = scmp.ne.s32.totalorder %s44, %s45
      %p59 = scmp.eq.s32.totalorder %s25, 1
      %p60 = por %p58, %p59
      %p62 = scmp.ne.s32.totalorder %s45, %s61
      %p63 = scmp.eq.s32.totalorder %s25, 0
      %p64 = por %p62, %p63
      %s66 = sadd.s32 %s65, 1
      %p69 = scmp.eq.s32.totalorder %s19, 1
      %p70 = scmp.ne.s32.totalorder %s65, %s67
      %p71 = scmp.eq.s32.totalorder %s19, 0
      %p72 = por %p70, %p71
      %p73 = scmp.ne.s32.totalorder %s65, %s67
      %p74 = scmp.eq.s32.totalorder %s24, 1
      %p75 = por %p73, %p74
      %p76 = scmp.ne.s32.totalorder %s67, %s68
      %p77 = scmp.eq.s32.totalorder %s24, 0
      %p78 = por %p76, %p77
      %p79 = scmp.ne.s32.totalorder %s67, %s68
      %p80 = scmp.eq.s32.totalorder %s25, 1
      %p81 = por %p79, %p80
      %p83 = scmp.ne.s32.totalorder %s68, %s82
      %p84 = scmp.eq.s32.totalorder %s25, 0
      %p85 = por %p83, %p84
      %s87 = sadd.s32 %s86, 1
      %p90 = scmp.eq.s32.totalorder %s19, 1
      %p91 = scmp.ne.s32.totalorder %s86, %s88
      %p92 = scmp.eq.s32.totalorder %s19, 0
      %p93 = por %p91, %p92
      %p94 = scmp.ne.s32.totalorder %s86, %s88
      %p95 = scmp.eq.s32.totalorder %s24, 1
      %p96 = por %p94, %p95
      %p97 = scmp.ne.s32.totalorder %s88, %s89
      %p98 = scmp.eq.s32.totalorder %s24, 0
      %p99 = por %p97, %p98
      %p100 = scmp.ne.s32.totalorder %s88, %s89
      %p101 = scmp.eq.s32.totalorder %s25, 1
      %p102 = por %p100, %p101
      %p104 = scmp.ne.s32.totalorder %s89, %s103
      %p105 = scmp.eq.s32.totalorder %s25, 0
      %p106 = por %p104, %p105
      %s107 = ssub.s32 %s26, %s38
      %p108 = scmp.eq.s32.totalorder %s107, 0
      %s110 = sadd.s32 %s109, 1
      %s111 = scalar_select %p108, %s109, %s110
      %p114 = pneg %p108
      %p115 = scmp.eq.s32.totalorder %s19, 1
      %p116 = por %p114, %p115
      %p117 = scmp.ne.s32.totalorder %s109, %s112
      %p118 = scmp.eq.s32.totalorder %s19, 0
      %p119 = por %p117, %p118
      %p120 = scmp.ne.s32.totalorder %s109, %s112
      %p121 = scmp.eq.s32.totalorder %s24, 1
      %p122 = por %p120, %p121
      %p123 = scmp.ne.s32.totalorder %s112, %s113
      %p124 = scmp.eq.s32.totalorder %s24, 0
      %p125 = por %p123, %p124
      %p126 = scmp.ne.s32.totalorder %s112, %s113
      %p127 = scmp.eq.s32.totalorder %s25, 1
      %p128 = por %p126, %p127
      %p130 = scmp.ne.s32.totalorder %s113, %s129
      %p131 = scmp.eq.s32.totalorder %s25, 0
      %p132 = por %p130, %p131
      %s133 = ssub.s32 %s26, %s38
      %p134 = scmp.eq.s32.totalorder %s133, 0
      %s136 = sadd.s32 %s135, 1
      %s137 = scalar_select %p134, %s135, %s136
      %p140 = pneg %p134
      %p141 = scmp.eq.s32.totalorder %s19, 1
      %p142 = por %p140, %p141
      %p143 = scmp.ne.s32.totalorder %s135, %s138
      %p144 = scmp.eq.s32.totalorder %s19, 0
      %p145 = por %p143, %p144
      %p146 = scmp.ne.s32.totalorder %s135, %s138
      %p147 = scmp.eq.s32.totalorder %s24, 1
      %p148 = por %p146, %p147
      %p149 = scmp.ne.s32.totalorder %s138, %s139
      %p150 = scmp.eq.s32.totalorder %s24, 0
      %p151 = por %p149, %p150
      %p152 = scmp.ne.s32.totalorder %s138, %s139
      %p153 = scmp.eq.s32.totalorder %s25, 1
      %p154 = por %p152, %p153
      %p156 = scmp.ne.s32.totalorder %s139, %s155
      %p157 = scmp.eq.s32.totalorder %s25, 0
      %p158 = por %p156, %p157
      %s159 = ssub.s32 %s26, %s38
      %p160 = scmp.eq.s32.totalorder %s159, 0
      %s162 = sadd.s32 %s161, 1
      %s163 = scalar_select %p160, %s161, %s162
      %p166 = pneg %p160
      %p167 = scmp.eq.s32.totalorder %s19, 1
      %p168 = por %p166, %p167
      %p169 = scmp.ne.s32.totalorder %s161, %s164
      %p170 = scmp.eq.s32.totalorder %s19, 0
      %p171 = por %p169, %p170
      %p172 = scmp.ne.s32.totalorder %s161, %s164
      %p173 = scmp.eq.s32.totalorder %s24, 1
      %p174 = por %p172, %p173
      %p175 = scmp.ne.s32.totalorder %s164, %s165
      %p176 = scmp.eq.s32.totalorder %s24, 0
      %p177 = por %p175, %p176
      %p178 = scmp.ne.s32.totalorder %s164, %s165
      %p179 = scmp.eq.s32.totalorder %s25, 1
      %p180 = por %p178, %p179
      %p182 = scmp.ne.s32.totalorder %s165, %s181
      %p183 = scmp.eq.s32.totalorder %s25, 0
      %p184 = por %p182, %p183
      %s185 = ssub.s32 %s26, %s38
      %p186 = scmp.eq.s32.totalorder %s185, 0
      %s188 = sadd.s32 %s187, 1
      %s189 = scalar_select %p186, %s187, %s188
      %p192 = pneg %p186
      %p193 = scmp.eq.s32.totalorder %s19, 1
      %p194 = por %p192, %p193
      %p195 = scmp.ne.s32.totalorder %s187, %s190
      %p196 = scmp.eq.s32.totalorder %s19, 0
      %p197 = por %p195, %p196
      %p198 = scmp.ne.s32.totalorder %s187, %s190
      %p199 = scmp.eq.s32.totalorder %s24, 1
      %p200 = por %p198, %p199
      %p201 = scmp.ne.s32.totalorder %s190, %s191
      %p202 = scmp.eq.s32.totalorder %s24, 0
      %p203 = por %p201, %p202
      %p204 = scmp.ne.s32.totalorder %s190, %s191
      %p205 = scmp.eq.s32.totalorder %s25, 1
      %p206 = por %p204, %p205
      %p208 = scmp.ne.s32.totalorder %s191, %s207
      %p209 = scmp.eq.s32.totalorder %s25, 0
      %p210 = por %p208, %p209
      %s211 = ssub.s32 %s26, %s38
      %p212 = scmp.eq.s32.totalorder %s211, 0
      %s214 = sadd.s32 %s213, 1
      %s215 = scalar_select %p212, %s213, %s214
      %p218 = pneg %p212
      %p219 = scmp.eq.s32.totalorder %s19, 1
      %p220 = por %p218, %p219
      %p221 = scmp.ne.s32.totalorder %s213, %s216
      %p222 = scmp.eq.s32.totalorder %s19, 0
      %p223 = por %p221, %p222
      %p224 = scmp.ne.s32.totalorder %s213, %s216
      %p225 = scmp.eq.s32.totalorder %s24, 1
      %p226 = por %p224, %p225
      %p227 = scmp.ne.s32.totalorder %s216, %s217
      %p228 = scmp.eq.s32.totalorder %s24, 0
      %p229 = por %p227, %p228
      %p230 = scmp.ne.s32.totalorder %s216, %s217
      %p231 = scmp.eq.s32.totalorder %s25, 1
      %p232 = por %p230, %p231
      %p234 = scmp.ne.s32.totalorder %s217, %s233
      %p235 = scmp.eq.s32.totalorder %s25, 0
      %p236 = por %p234, %p235
      %s237 = ssub.s32 %s26, %s38
      %p238 = scmp.eq.s32.totalorder %s237, 0
      %s240 = sadd.s32 %s239, 1
      %s241 = scalar_select %p238, %s239, %s240
      %p244 = pneg %p238
      %p245 = scmp.eq.s32.totalorder %s19, 1
      %p246 = por %p244, %p245
      %p247 = scmp.ne.s32.totalorder %s239, %s242
      %p248 = scmp.eq.s32.totalorder %s19, 0
      %p249 = por %p247, %p248
      %p250 = scmp.ne.s32.totalorder %s239, %s242
      %p251 = scmp.eq.s32.totalorder %s24, 1
      %p252 = por %p250, %p251
      %p253 = scmp.ne.s32.totalorder %s242, %s243
      %p254 = scmp.eq.s32.totalorder %s24, 0
      %p255 = por %p253, %p254
      %p256 = scmp.ne.s32.totalorder %s242, %s243
      %p257 = scmp.eq.s32.totalorder %s25, 1
      %p258 = por %p256, %p257
      %p260 = scmp.ne.s32.totalorder %s243, %s259
      %p261 = scmp.eq.s32.totalorder %s25, 0
      %p262 = por %p260, %p261
      %s263 = ssub.s32 %s26, %s38
      %p264 = scmp.eq.s32.totalorder %s263, 0
      %s266 = sadd.s32 %s265, 1
      %s267 = scalar_select %p264, %s265, %s266
      %p270 = pneg %p264
      %p271 = scmp.eq.s32.totalorder %s19, 1
      %p272 = por %p270, %p271
      %p273 = scmp.ne.s32.totalorder %s265, %s268
      %p274 = scmp.eq.s32.totalorder %s19, 0
      %p275 = por %p273, %p274
      %p276 = scmp.ne.s32.totalorder %s265, %s268
      %p277 = scmp.eq.s32.totalorder %s24, 1
      %p278 = por %p276, %p277
      %p279 = scmp.ne.s32.totalorder %s268, %s269
      %p280 = scmp.eq.s32.totalorder %s24, 0
      %p281 = por %p279, %p280
      %p282 = scmp.ne.s32.totalorder %s268, %s269
      %p283 = scmp.eq.s32.totalorder %s25, 1
      %p284 = por %p282, %p283
      %p286 = scmp.ne.s32.totalorder %s269, %s285
      %p287 = scmp.eq.s32.totalorder %s25, 0
      %p288 = por %p286, %p287
      %s289 = ssub.s32 %s26, %s38
      %p290 = scmp.eq.s32.totalorder %s289, 0
      %s292 = sadd.s32 %s291, 1
      %s293 = scalar_select %p290, %s291, %s292
      %p296 = pneg %p290
      %p297 = scmp.eq.s32.totalorder %s19, 1
      %p298 = por %p296, %p297
      %p299 = scmp.ne.s32.totalorder %s291, %s294
      %p300 = scmp.eq.s32.totalorder %s19, 0
      %p301 = por %p299, %p300
      %p302 = scmp.ne.s32.totalorder %s291, %s294
      %p303 = scmp.eq.s32.totalorder %s24, 1
      %p304 = por %p302, %p303
      %p305 = scmp.ne.s32.totalorder %s294, %s295
      %p306 = scmp.eq.s32.totalorder %s24, 0
      %p307 = por %p305, %p306
      %p308 = scmp.ne.s32.totalorder %s294, %s295
      %p309 = scmp.eq.s32.totalorder %s25, 1
      %p310 = por %p308, %p309
      %p312 = scmp.ne.s32.totalorder %s295, %s311
      %p313 = scmp.eq.s32.totalorder %s25, 0
      %p314 = por %p312, %p313
      %s315 = ssub.s32 %s26, %s38
      %s316 = ssub.s32 %s27, %s34
      %s317 = sor.u32 %s315, %s316
      %p318 = scmp.eq.s32.totalorder %s317, 0
      %s320 = sadd.s32 %s319, 1
      %s321 = scalar_select %p318, %s319, %s320
      %p324 = pneg %p318
      %p325 = scmp.eq.s32.totalorder %s19, 1
      %p326 = por %p324, %p325
      %p327 = scmp.ne.s32.totalorder %s319, %s322
      %p328 = scmp.eq.s32.totalorder %s19, 0
      %p329 = por %p327, %p328
      %p330 = scmp.ne.s32.totalorder %s319, %s322
      %p331 = scmp.eq.s32.totalorder %s24, 1
      %p332 = por %p330, %p331
      %p333 = scmp.ne.s32.totalorder %s322, %s323
      %p334 = scmp.eq.s32.totalorder %s24, 0
      %p335 = por %p333, %p334
      %p336 = scmp.ne.s32.totalorder %s322, %s323
      %p337 = scmp.eq.s32.totalorder %s25, 1
      %p338 = por %p336, %p337
      %p340 = scmp.ne.s32.totalorder %s323, %s339
      %p341 = scmp.eq.s32.totalorder %s25, 0
      %p342 = por %p340, %p341
      %p343 = scmp.le.s32.totalorder 1, %s19
      %p344 = scmp.lt.s32.totalorder %s19, 3
      %p345 = pnand %p343, %p344
      %p346 = pneg %p345
      // Predicated region
      $region9: #{weight_score_forward.1} parent=5 // pred_check
        _
      $region10: #{weight_score_forward.1} parent=5 // pred_check_branch
        %348 = sbr.rel (%p345) target = $region12
      $region11: #{weight_score_forward.1} parent=5 // pred_region
        %s349 = ssub.s32 %s19, 1
        // Predicated region
        $region13: #{weight_score_forward.1} parent=11 // pred_check
          %p350 = pneg %p57
        $region14: #{weight_score_forward.1} parent=11 // pred_check_branch
          %352 = sbr.rel (%p350) target = $region16
        $region15: #{weight_score_forward.1} parent=11 // pred_region
          %p353 = scmp.lt.s32.totalorder %s29, 0
          %s354 = scalar_select %p353, %s29, 0
          %s355 = smul.addr %s354, 8
          %s356 = scalar_lea.vmem %s0, %s355
        $region16: #{weight_score_forward.1} parent=11 // pred_fallthru
          _
        // Predicated region
        $region17: #{weight_score_forward.1} parent=11 // pred_check
          %p357 = pneg %p78
        $region18: #{weight_score_forward.1} parent=11 // pred_check_branch
          %359 = sbr.rel (%p357) target = $region20
        $region19: #{weight_score_forward.1} parent=11 // pred_region
          %s361 = ssub.s32 16384, 16384
          %362 = vsyncadd [#allocation3], %s361
          %s363 = sshll.u32 [#allocation2], 4
          %s364 = int_to_ptr.vmem [resolvable:$true] %s363
          %369 = dma.hbm_to_vmem [thread:$0]  %s1, 16384, %s364, [#allocation3], 1024, 1024, 64
        $region20: #{weight_score_forward.1} parent=11 // pred_fallthru
          _
        // Predicated region
        $region21: #{weight_score_forward.1} parent=11 // pred_check
          %p370 = pneg %p99
        $region22: #{weight_score_forward.1} parent=11 // pred_check_branch
          %372 = sbr.rel (%p370) target = $region24
        $region23: #{weight_score_forward.1} parent=11 // pred_region
          %s374 = ssub.s32 256, 256
          %375 = vsyncadd [#allocation5], %s374
          %s377 = sshll.u32 [#allocation4], 4
          %s378 = int_to_ptr.vmem [resolvable:$true] %s377
          %380 = dma.hbm_to_vmem [thread:$0]  %s2, 256, %s378, [#allocation5]
        $region24: #{weight_score_forward.1} parent=11 // pred_fallthru
          _
      $region12: #{weight_score_forward.1} parent=5 // pred_fallthru
        _
      %p381 = scmp.lt.s32.totalorder %s19, 2
      // Predicated region
      $region25: #{weight_score_forward.1} parent=5 // pred_check
        %p382 = pneg %p381
      $region26: #{weight_score_forward.1} parent=5 // pred_check_branch
        %384 = sbr.rel (%p382) target = $region28
      $region27: #{weight_score_forward.1} parent=5 // pred_region
        // Predicated region
        $region29: #{weight_score_forward.1} parent=27 // pred_check
          %p385 = pneg %p119
        $region30: #{weight_score_forward.1} parent=27 // pred_check_branch
          %387 = sbr.rel (%p385) target = $region32
        $region31: #{weight_score_forward.1} parent=27 // pred_region
          %s388 = sand.u32 %s19, 1
          %s389 = scalar_lea.sflag [#allocation3], %s388
          %s390 = sand.u32 %s109, 1
          %s391 = smul.addr %s390, 8192
          %s392 = scalar_lea.vmem [#allocation6], %s391
          %s394 = ssub.s32 131072, 131072
          %395 = vsyncadd %s389, %s394
          %s396 = smul.addr %s26, 2048
          %s397 = smul.addr %s396, 64
          %s398 = scalar_lea.hbm %s3, %s397
          %s399 = sshll.u32 %s392, 4
          %s400 = int_to_ptr.vmem [resolvable:$true] %s399
          %405 = dma.hbm_to_vmem [thread:$0]  %s398, 131072, %s400, %s389, 512, 512, 32
        $region32: #{weight_score_forward.1} parent=27 // pred_fallthru
          _
        // Predicated region
        $region33: #{weight_score_forward.1} parent=27 // pred_check
          %p406 = pneg %p145
        $region34: #{weight_score_forward.1} parent=27 // pred_check_branch
          %408 = sbr.rel (%p406) target = $region36
        $region35: #{weight_score_forward.1} parent=27 // pred_region
          %s409 = sand.u32 %s19, 1
          %s410 = scalar_lea.sflag [#allocation3], %s409
          %s411 = sand.u32 %s135, 1
          %s412 = smul.addr %s411, 8
          %s413 = scalar_lea.vmem [#allocation7], %s412
          %s415 = ssub.s32 128, 128
          %416 = vsyncadd %s410, %s415
          %s417 = smul.addr %s26, 8
          %s418 = smul.addr %s417, 16
          %s419 = scalar_lea.hbm %s4, %s418
          %s421 = sshll.u32 %s413, 4
          %s422 = int_to_ptr.vmem [resolvable:$true] %s421
          %424 = dma.hbm_to_vmem [thread:$0]  %s419, 128, %s422, %s410
        $region36: #{weight_score_forward.1} parent=27 // pred_fallthru
          _
        // Predicated region
        $region37: #{weight_score_forward.1} parent=27 // pred_check
          %p425 = pneg %p171
        $region38: #{weight_score_forward.1} parent=27 // pred_check_branch
          %427 = sbr.rel (%p425) target = $region40
        $region39: #{weight_score_forward.1} parent=27 // pred_region
          %s428 = sand.u32 %s19, 1
          %s429 = scalar_lea.sflag [#allocation3], %s428
          %s430 = sand.u32 %s161, 1
          %s431 = smul.addr %s430, 2048
          %s432 = scalar_lea.vmem [#allocation8], %s431
          %s434 = ssub.s32 32768, 32768
          %435 = vsyncadd %s429, %s434
          %s436 = smul.addr %s26, 512
          %s437 = smul.addr %s436, 64
          %s438 = scalar_lea.hbm %s5, %s437
          %s439 = sshll.u32 %s432, 4
          %s440 = int_to_ptr.vmem [resolvable:$true] %s439
          %445 = dma.hbm_to_vmem [thread:$0]  %s438, 32768, %s440, %s429, 256, 256, 16
        $region40: #{weight_score_forward.1} parent=27 // pred_fallthru
          _
        // Predicated region
        $region41: #{weight_score_forward.1} parent=27 // pred_check
          %p446 = pneg %p197
        $region42: #{weight_score_forward.1} parent=27 // pred_check_branch
          %448 = sbr.rel (%p446) target = $region44
        $region43: #{weight_score_forward.1} parent=27 // pred_region
          %s449 = sand.u32 %s19, 1
          %s450 = scalar_lea.sflag [#allocation3], %s449
          %s451 = sand.u32 %s187, 1
          %s452 = smul.addr %s451, 4
          %s453 = scalar_lea.vmem [#allocation9], %s452
          %s455 = ssub.s32 64, 64
          %456 = vsyncadd %s450, %s455
          %s457 = smul.addr %s26, 4
          %s458 = smul.addr %s457, 16
          %s459 = scalar_lea.hbm %s6, %s458
          %s461 = sshll.u32 %s453, 4
          %s462 = int_to_ptr.vmem [resolvable:$true] %s461
          %464 = dma.hbm_to_vmem [thread:$0]  %s459, 64, %s462, %s450
        $region44: #{weight_score_forward.1} parent=27 // pred_fallthru
          _
        // Predicated region
        $region45: #{weight_score_forward.1} parent=27 // pred_check
          %p465 = pneg %p223
        $region46: #{weight_score_forward.1} parent=27 // pred_check_branch
          %467 = sbr.rel (%p465) target = $region48
        $region47: #{weight_score_forward.1} parent=27 // pred_region
          %p468 = scmp.lt.s32.totalorder %s26, 1
          %s469 = scalar_select %p468, %s26, 1
          %s470 = smul.addr %s469, 64
          %s471 = smul.addr %s470, 4
          %s472 = scalar_lea.vmem %s7, %s471
        $region48: #{weight_score_forward.1} parent=27 // pred_fallthru
          _
        // Predicated region
        $region49: #{weight_score_forward.1} parent=27 // pred_check
          %p473 = pneg %p249
        $region50: #{weight_score_forward.1} parent=27 // pred_check_branch
          %475 = sbr.rel (%p473) target = $region52
        $region51: #{weight_score_forward.1} parent=27 // pred_region
          %s476 = sand.u32 %s19, 1
          %s477 = scalar_lea.sflag [#allocation3], %s476
          %s478 = sand.u32 %s239, 1
          %s479 = scalar_lea.vmem [#allocation10], %s478
          %s481 = ssub.s32 16, 16
          %482 = vsyncadd %s477, %s481
          %s483 = smul.addr %s26, 16
          %s484 = scalar_lea.hbm %s8, %s483
          %s486 = sshll.u32 %s479, 4
          %s487 = int_to_ptr.vmem [resolvable:$true] %s486
          %489 = dma.hbm_to_vmem [thread:$0]  %s484, 16, %s487, %s477
        $region52: #{weight_score_forward.1} parent=27 // pred_fallthru
          _
        // Predicated region
        $region53: #{weight_score_forward.1} parent=27 // pred_check
          %p490 = pneg %p275
        $region54: #{weight_score_forward.1} parent=27 // pred_check_branch
          %492 = sbr.rel (%p490) target = $region56
        $region55: #{weight_score_forward.1} parent=27 // pred_region
          %s493 = sand.u32 %s19, 1
          %s494 = scalar_lea.sflag [#allocation3], %s493
          %s495 = sand.u32 %s265, 1
          %s496 = scalar_lea.vmem [#allocation11], %s495
          %s498 = ssub.s32 16, 16
          %499 = vsyncadd %s494, %s498
          %s500 = smul.addr %s26, 16
          %s501 = scalar_lea.hbm %s9, %s500
          %s503 = sshll.u32 %s496, 4
          %s504 = int_to_ptr.vmem [resolvable:$true] %s503
          %506 = dma.hbm_to_vmem [thread:$0]  %s501, 16, %s504, %s494
        $region56: #{weight_score_forward.1} parent=27 // pred_fallthru
          _
        // Predicated region
        $region57: #{weight_score_forward.1} parent=27 // pred_check
          %p507 = pneg %p301
        $region58: #{weight_score_forward.1} parent=27 // pred_check_branch
          %509 = sbr.rel (%p507) target = $region60
        $region59: #{weight_score_forward.1} parent=27 // pred_region
          %p510 = scmp.lt.s32.totalorder %s26, 1
          %s511 = scalar_select %p510, %s26, 1
          %s512 = scalar_lea.vmem %s10, %s511
        $region60: #{weight_score_forward.1} parent=27 // pred_fallthru
          _
      $region28: #{weight_score_forward.1} parent=5 // pred_fallthru
        _
      %p513 = scmp.le.s32.totalorder 1, %s19
      %p514 = scmp.lt.s32.totalorder %s19, 3
      %p515 = pnand %p513, %p514
      %p516 = pneg %p515
      // Predicated region
      $region61: #{weight_score_forward.1} parent=5 // pred_check
        _
      $region62: #{weight_score_forward.1} parent=5 // pred_check_branch
        %518 = sbr.rel (%p515) target = $region64
      $region63: #{weight_score_forward.1} parent=5 // pred_region
        %s519 = ssub.s32 %s19, 1
        // Predicated region
        $region65: #{weight_score_forward.1} parent=63 // pred_check
          %p520 = pneg %p78
        $region66: #{weight_score_forward.1} parent=63 // pred_check_branch
          %522 = sbr.rel (%p520) target = $region68
        $region67: #{weight_score_forward.1} parent=63 // pred_region
          %523 = dma.done [#allocation3], 16384
        $region68: #{weight_score_forward.1} parent=63 // pred_fallthru
          _
        // Predicated region
        $region69: #{weight_score_forward.1} parent=63 // pred_check
          %p524 = pneg %p99
        $region70: #{weight_score_forward.1} parent=63 // pred_check_branch
          %526 = sbr.rel (%p524) target = $region72
        $region71: #{weight_score_forward.1} parent=63 // pred_region
          %527 = dma.done [#allocation5], 256
        $region72: #{weight_score_forward.1} parent=63 // pred_fallthru
          _
        %s528 = sand.u32 %s24, 1
        %s529 = scalar_lea.sflag [#allocation3], %s528
        %s530 = sand.u32 %s112, 1
        %s531 = smul.addr %s530, 8192
        %s532 = scalar_lea.vmem [#allocation6], %s531
        // Predicated region
        $region73: #{weight_score_forward.1} parent=63 // pred_check
          %p533 = pneg %p125
        $region74: #{weight_score_forward.1} parent=63 // pred_check_branch
          %535 = sbr.rel (%p533) target = $region76
        $region75: #{weight_score_forward.1} parent=63 // pred_region
          %536 = dma.done %s529, 131072
        $region76: #{weight_score_forward.1} parent=63 // pred_fallthru
          _
        %s537 = sand.u32 %s24, 1
        %s538 = scalar_lea.sflag [#allocation3], %s537
        %s539 = sand.u32 %s138, 1
        %s540 = smul.addr %s539, 8
        %s541 = scalar_lea.vmem [#allocation7], %s540
        // Predicated region
        $region77: #{weight_score_forward.1} parent=63 // pred_check
          %p542 = pneg %p151
        $region78: #{weight_score_forward.1} parent=63 // pred_check_branch
          %544 = sbr.rel (%p542) target = $region80
        $region79: #{weight_score_forward.1} parent=63 // pred_region
          %545 = dma.done %s538, 128
        $region80: #{weight_score_forward.1} parent=63 // pred_fallthru
          _
        %s546 = sand.u32 %s24, 1
        %s547 = scalar_lea.sflag [#allocation3], %s546
        %s548 = sand.u32 %s164, 1
        %s549 = smul.addr %s548, 2048
        %s550 = scalar_lea.vmem [#allocation8], %s549
        // Predicated region
        $region81: #{weight_score_forward.1} parent=63 // pred_check
          %p551 = pneg %p177
        $region82: #{weight_score_forward.1} parent=63 // pred_check_branch
          %553 = sbr.rel (%p551) target = $region84
        $region83: #{weight_score_forward.1} parent=63 // pred_region
          %554 = dma.done %s547, 32768
        $region84: #{weight_score_forward.1} parent=63 // pred_fallthru
          _
        %s555 = sand.u32 %s24, 1
        %s556 = scalar_lea.sflag [#allocation3], %s555
        %s557 = sand.u32 %s190, 1
        %s558 = smul.addr %s557, 4
        %s559 = scalar_lea.vmem [#allocation9], %s558
        // Predicated region
        $region85: #{weight_score_forward.1} parent=63 // pred_check
          %p560 = pneg %p203
        $region86: #{weight_score_forward.1} parent=63 // pred_check_branch
          %562 = sbr.rel (%p560) target = $region88
        $region87: #{weight_score_forward.1} parent=63 // pred_region
          %563 = dma.done %s556, 64
        $region88: #{weight_score_forward.1} parent=63 // pred_fallthru
          _
        %s564 = sand.u32 %s24, 1
        %s565 = scalar_lea.sflag [#allocation3], %s564
        %s566 = sand.u32 %s242, 1
        %s567 = scalar_lea.vmem [#allocation10], %s566
        // Predicated region
        $region89: #{weight_score_forward.1} parent=63 // pred_check
          %p568 = pneg %p255
        $region90: #{weight_score_forward.1} parent=63 // pred_check_branch
          %570 = sbr.rel (%p568) target = $region92
        $region91: #{weight_score_forward.1} parent=63 // pred_region
          %571 = dma.done %s565, 16
        $region92: #{weight_score_forward.1} parent=63 // pred_fallthru
          _
        %s572 = sand.u32 %s24, 1
        %s573 = scalar_lea.sflag [#allocation3], %s572
        %s574 = sand.u32 %s268, 1
        %s575 = scalar_lea.vmem [#allocation11], %s574
        // Predicated region
        $region93: #{weight_score_forward.1} parent=63 // pred_check
          %p576 = pneg %p281
        $region94: #{weight_score_forward.1} parent=63 // pred_check_branch
          %578 = sbr.rel (%p576) target = $region96
        $region95: #{weight_score_forward.1} parent=63 // pred_region
          %579 = dma.done %s573, 16
        $region96: #{weight_score_forward.1} parent=63 // pred_fallthru
          _
        %p580 = scmp.lt.s32.totalorder %s29, 0
        %s581 = scalar_select %p580, %s29, 0
        %s582 = smul.addr %s581, 8
        %s583 = scalar_lea.vmem %s0, %s582
        %p584 = pneg %p57
        %p585 = pneg %p54
        %p586 = pneg %p78
        %p587 = pneg %p75
        %p588 = pneg %p99
        %p589 = pneg %p96
        %s590 = sand.u32 %s24, 1
        %s591 = scalar_lea.sflag [#allocation3], %s590
        %s592 = sand.u32 %s112, 1
        %s593 = smul.addr %s592, 8192
        %s594 = scalar_lea.vmem [#allocation6], %s593
        %p595 = pneg %p125
        %p596 = pneg %p122
        %s597 = sand.u32 %s24, 1
        %s598 = scalar_lea.sflag [#allocation3], %s597
        %s599 = sand.u32 %s138, 1
        %s600 = smul.addr %s599, 8
        %s601 = scalar_lea.vmem [#allocation7], %s600
        %p602 = pneg %p151
        %p603 = pneg %p148
        %s604 = sand.u32 %s24, 1
        %s605 = scalar_lea.sflag [#allocation3], %s604
        %s606 = sand.u32 %s164, 1
        %s607 = smul.addr %s606, 2048
        %s608 = scalar_lea.vmem [#allocation8], %s607
        %p609 = pneg %p177
        %p610 = pneg %p174
        %s611 = sand.u32 %s24, 1
        %s612 = scalar_lea.sflag [#allocation3], %s611
        %s613 = sand.u32 %s190, 1
        %s614 = smul.addr %s613, 4
        %s615 = scalar_lea.vmem [#allocation9], %s614
        %p616 = pneg %p203
        %p617 = pneg %p200
        %p618 = scmp.lt.s32.totalorder %s28, 1
        %s619 = scalar_select %p618, %s28, 1
        %s620 = smul.addr %s619, 64
        %s621 = smul.addr %s620, 4
        %s622 = scalar_lea.vmem %s7, %s621
        %p623 = pneg %p229
        %p624 = pneg %p226
        %s625 = sand.u32 %s24, 1
        %s626 = scalar_lea.sflag [#allocation3], %s625
        %s627 = sand.u32 %s242, 1
        %s628 = scalar_lea.vmem [#allocation10], %s627
        %p629 = pneg %p255
        %p630 = pneg %p252
        %s631 = sand.u32 %s24, 1
        %s632 = scalar_lea.sflag [#allocation3], %s631
        %s633 = sand.u32 %s268, 1
        %s634 = scalar_lea.vmem [#allocation11], %s633
        %p635 = pneg %p281
        %p636 = pneg %p278
        %p637 = scmp.lt.s32.totalorder %s28, 1
        %s638 = scalar_select %p637, %s28, 1
        %s639 = scalar_lea.vmem %s10, %s638
        %p640 = pneg %p307
        %p641 = pneg %p304
        %p642 = pneg %p335
        %p643 = pneg %p332
        %p644 = scmp.lt.s32.totalorder %s28, 1
        %s645 = scalar_select %p644, %s28, 1
        %p646 = scmp.lt.s32.totalorder %s29, 0
        %s647 = scalar_select %p646, %s29, 0
        %s648 = sadd.s32 %s647, %s645
        %s649 = smul.addr %s648, 8
        %s650 = scalar_lea.vmem %s11, %s649
        %p651 = scmp.lt.s32.totalorder %s29, 0
        %s652 = scalar_select %p651, %s29, 0
        %s653 = smul.addr %s652, 8
        %s654 = scalar_lea.vmem %s0, %s653
        %p655 = scmp.lt.s32.totalorder %s28, 1
        %s656 = scalar_select %p655, %s28, 1
        %s657 = smul.addr %s656, 64
        %s658 = smul.addr %s657, 4
        %s659 = scalar_lea.vmem %s7, %s658
        %p660 = scmp.lt.s32.totalorder %s28, 1
        %s661 = scalar_select %p660, %s28, 1
        %s662 = scalar_lea.vmem %s10, %s661
        %p663 = scmp.lt.s32.totalorder %s28, 1
        %s664 = scalar_select %p663, %s28, 1
        %p665 = scmp.lt.s32.totalorder %s29, 0
        %s666 = scalar_select %p665, %s29, 0
        %s667 = sadd.s32 %s666, %s664
        %s668 = smul.addr %s667, 8
        %s669 = scalar_lea.vmem %s11, %s668
        %v671 = vld [vmem:[%s654] sm:$0xff]
        %v672 = vpack.c.bf16 %v671, %v671
        %v673 = vld [vmem:[#allocation2] sm:$0xff]
        %v674 = vld [vmem:[#allocation2 + $0x8] sm:$0xff]
        %v675 = vld [vmem:[#allocation2 + $0x10] sm:$0xff]
        %v676 = vld [vmem:[#allocation2 + $0x18] sm:$0xff]
        %v677 = vld [vmem:[#allocation2 + $0x20] sm:$0xff]
        %v678 = vld [vmem:[#allocation2 + $0x28] sm:$0xff]
        %v679 = vld [vmem:[#allocation2 + $0x30] sm:$0xff]
        %v680 = vld [vmem:[#allocation2 + $0x38] sm:$0xff]
        %v681 = vld [vmem:[#allocation2 + $0x40] sm:$0xff]
        %v682 = vld [vmem:[#allocation2 + $0x48] sm:$0xff]
        %v683 = vld [vmem:[#allocation2 + $0x50] sm:$0xff]
        %v684 = vld [vmem:[#allocation2 + $0x58] sm:$0xff]
        %v685 = vld [vmem:[#allocation2 + $0x60] sm:$0xff]
        %v686 = vld [vmem:[#allocation2 + $0x68] sm:$0xff]
        %v687 = vld [vmem:[#allocation2 + $0x70] sm:$0xff]
        %v688 = vld [vmem:[#allocation2 + $0x78] sm:$0xff]
        %v689 = vld [vmem:[#allocation2 + $0x80] sm:$0xff]
        %v690 = vld [vmem:[#allocation2 + $0x88] sm:$0xff]
        %v691 = vld [vmem:[#allocation2 + $0x90] sm:$0xff]
        %v692 = vld [vmem:[#allocation2 + $0x98] sm:$0xff]
        %v693 = vld [vmem:[#allocation2 + $0xa0] sm:$0xff]
        %v694 = vld [vmem:[#allocation2 + $0xa8] sm:$0xff]
        %v695 = vld [vmem:[#allocation2 + $0xb0] sm:$0xff]
        %v696 = vld [vmem:[#allocation2 + $0xb8] sm:$0xff]
        %v697 = vld [vmem:[#allocation2 + $0xc0] sm:$0xff]
        %v698 = vld [vmem:[#allocation2 + $0xc8] sm:$0xff]
        %v699 = vld [vmem:[#allocation2 + $0xd0] sm:$0xff]
        %v700 = vld [vmem:[#allocation2 + $0xd8] sm:$0xff]
        %v701 = vld [vmem:[#allocation2 + $0xe0] sm:$0xff]
        %v702 = vld [vmem:[#allocation2 + $0xe8] sm:$0xff]
        %v703 = vld [vmem:[#allocation2 + $0xf0] sm:$0xff]
        %v704 = vld [vmem:[#allocation2 + $0xf8] sm:$0xff]
        %v705 = vld [vmem:[#allocation2 + $0x100] sm:$0xff]
        %v706 = vld [vmem:[#allocation2 + $0x108] sm:$0xff]
        %v707 = vld [vmem:[#allocation2 + $0x110] sm:$0xff]
        %v708 = vld [vmem:[#allocation2 + $0x118] sm:$0xff]
        %v709 = vld [vmem:[#allocation2 + $0x120] sm:$0xff]
        %v710 = vld [vmem:[#allocation2 + $0x128] sm:$0xff]
        %v711 = vld [vmem:[#allocation2 + $0x130] sm:$0xff]
        %v712 = vld [vmem:[#allocation2 + $0x138] sm:$0xff]
        %v713 = vld [vmem:[#allocation2 + $0x140] sm:$0xff]
        %v714 = vld [vmem:[#allocation2 + $0x148] sm:$0xff]
        %v715 = vld [vmem:[#allocation2 + $0x150] sm:$0xff]
        %v716 = vld [vmem:[#allocation2 + $0x158] sm:$0xff]
        %v717 = vld [vmem:[#allocation2 + $0x160] sm:$0xff]
        %v718 = vld [vmem:[#allocation2 + $0x168] sm:$0xff]
        %v719 = vld [vmem:[#allocation2 + $0x170] sm:$0xff]
        %v720 = vld [vmem:[#allocation2 + $0x178] sm:$0xff]
        %v721 = vld [vmem:[#allocation2 + $0x180] sm:$0xff]
        %v722 = vld [vmem:[#allocation2 + $0x188] sm:$0xff]
        %v723 = vld [vmem:[#allocation2 + $0x190] sm:$0xff]
        %v724 = vld [vmem:[#allocation2 + $0x198] sm:$0xff]
        %v725 = vld [vmem:[#allocation2 + $0x1a0] sm:$0xff]
        %v726 = vld [vmem:[#allocation2 + $0x1a8] sm:$0xff]
        %v727 = vld [vmem:[#allocation2 + $0x1b0] sm:$0xff]
        %v728 = vld [vmem:[#allocation2 + $0x1b8] sm:$0xff]
        %v729 = vld [vmem:[#allocation2 + $0x1c0] sm:$0xff]
        %v730 = vld [vmem:[#allocation2 + $0x1c8] sm:$0xff]
        %v731 = vld [vmem:[#allocation2 + $0x1d0] sm:$0xff]
        %v732 = vld [vmem:[#allocation2 + $0x1d8] sm:$0xff]
        %v733 = vld [vmem:[#allocation2 + $0x1e0] sm:$0xff]
        %v734 = vld [vmem:[#allocation2 + $0x1e8] sm:$0xff]
        %v735 = vld [vmem:[#allocation2 + $0x1f0] sm:$0xff]
        %v736 = vld [vmem:[#allocation2 + $0x1f8] sm:$0xff]
        %v737 = vld [vmem:[#allocation2 + $0x200] sm:$0xff]
        %v738 = vld [vmem:[#allocation2 + $0x208] sm:$0xff]
        %v739 = vld [vmem:[#allocation2 + $0x210] sm:$0xff]
        %v740 = vld [vmem:[#allocation2 + $0x218] sm:$0xff]
        %v741 = vld [vmem:[#allocation2 + $0x220] sm:$0xff]
        %v742 = vld [vmem:[#allocation2 + $0x228] sm:$0xff]
        %v743 = vld [vmem:[#allocation2 + $0x230] sm:$0xff]
        %v744 = vld [vmem:[#allocation2 + $0x238] sm:$0xff]
        %v745 = vld [vmem:[#allocation2 + $0x240] sm:$0xff]
        %v746 = vld [vmem:[#allocation2 + $0x248] sm:$0xff]
        %v747 = vld [vmem:[#allocation2 + $0x250] sm:$0xff]
        %v748 = vld [vmem:[#allocation2 + $0x258] sm:$0xff]
        %v749 = vld [vmem:[#allocation2 + $0x260] sm:$0xff]
        %v750 = vld [vmem:[#allocation2 + $0x268] sm:$0xff]
        %v751 = vld [vmem:[#allocation2 + $0x270] sm:$0xff]
        %v752 = vld [vmem:[#allocation2 + $0x278] sm:$0xff]
        %v753 = vld [vmem:[#allocation2 + $0x280] sm:$0xff]
        %v754 = vld [vmem:[#allocation2 + $0x288] sm:$0xff]
        %v755 = vld [vmem:[#allocation2 + $0x290] sm:$0xff]
        %v756 = vld [vmem:[#allocation2 + $0x298] sm:$0xff]
        %v757 = vld [vmem:[#allocation2 + $0x2a0] sm:$0xff]
        %v758 = vld [vmem:[#allocation2 + $0x2a8] sm:$0xff]
        %v759 = vld [vmem:[#allocation2 + $0x2b0] sm:$0xff]
        %v760 = vld [vmem:[#allocation2 + $0x2b8] sm:$0xff]
        %v761 = vld [vmem:[#allocation2 + $0x2c0] sm:$0xff]
        %v762 = vld [vmem:[#allocation2 + $0x2c8] sm:$0xff]
        %v763 = vld [vmem:[#allocation2 + $0x2d0] sm:$0xff]
        %v764 = vld [vmem:[#allocation2 + $0x2d8] sm:$0xff]
        %v765 = vld [vmem:[#allocation2 + $0x2e0] sm:$0xff]
        %v766 = vld [vmem:[#allocation2 + $0x2e8] sm:$0xff]
        %v767 = vld [vmem:[#allocation2 + $0x2f0] sm:$0xff]
        %v768 = vld [vmem:[#allocation2 + $0x2f8] sm:$0xff]
        %v769 = vld [vmem:[#allocation2 + $0x300] sm:$0xff]
        %v770 = vld [vmem:[#allocation2 + $0x308] sm:$0xff]
        %v771 = vld [vmem:[#allocation2 + $0x310] sm:$0xff]
        %v772 = vld [vmem:[#allocation2 + $0x318] sm:$0xff]
        %v773 = vld [vmem:[#allocation2 + $0x320] sm:$0xff]
        %v774 = vld [vmem:[#allocation2 + $0x328] sm:$0xff]
        %v775 = vld [vmem:[#allocation2 + $0x330] sm:$0xff]
        %v776 = vld [vmem:[#allocation2 + $0x338] sm:$0xff]
        %v777 = vld [vmem:[#allocation2 + $0x340] sm:$0xff]
        %v778 = vld [vmem:[#allocation2 + $0x348] sm:$0xff]
        %v779 = vld [vmem:[#allocation2 + $0x350] sm:$0xff]
        %v780 = vld [vmem:[#allocation2 + $0x358] sm:$0xff]
        %v781 = vld [vmem:[#allocation2 + $0x360] sm:$0xff]
        %v782 = vld [vmem:[#allocation2 + $0x368] sm:$0xff]
        %v783 = vld [vmem:[#allocation2 + $0x370] sm:$0xff]
        %v784 = vld [vmem:[#allocation2 + $0x378] sm:$0xff]
        %v785 = vld [vmem:[#allocation2 + $0x380] sm:$0xff]
        %v786 = vld [vmem:[#allocation2 + $0x388] sm:$0xff]
        %v787 = vld [vmem:[#allocation2 + $0x390] sm:$0xff]
        %v788 = vld [vmem:[#allocation2 + $0x398] sm:$0xff]
        %v789 = vld [vmem:[#allocation2 + $0x3a0] sm:$0xff]
        %v790 = vld [vmem:[#allocation2 + $0x3a8] sm:$0xff]
        %v791 = vld [vmem:[#allocation2 + $0x3b0] sm:$0xff]
        %v792 = vld [vmem:[#allocation2 + $0x3b8] sm:$0xff]
        %v793 = vld [vmem:[#allocation2 + $0x3c0] sm:$0xff]
        %v794 = vld [vmem:[#allocation2 + $0x3c8] sm:$0xff]
        %v795 = vld [vmem:[#allocation2 + $0x3d0] sm:$0xff]
        %v796 = vld [vmem:[#allocation2 + $0x3d8] sm:$0xff]
        %v797 = vld [vmem:[#allocation2 + $0x3e0] sm:$0xff]
        %v798 = vld [vmem:[#allocation2 + $0x3e8] sm:$0xff]
        %v799 = vld [vmem:[#allocation2 + $0x3f0] sm:$0xff]
        %v800 = vld [vmem:[#allocation2 + $0x3f8] sm:$0xff]
        %v801 = vld [vmem:[#allocation4] sm:$0xff]
        %v802 = vld [vmem:[#allocation4 + $0x8] sm:$0xff]
        %v805 = vlaneseq
        %v806 = vshrl.u32 %v805, 7
        %v807 = vsub.s32 0, %v806
        %v808 = vrot.slane %v801, %v807
        %v809 = vlaneseq
        %v810 = vshrl.u32 %v809, 7
        %v811 = vsub.s32 1, %v810
        %v812 = vrot.slane %v801, %v811
        %v813 = vlaneseq
        %v814 = vshrl.u32 %v813, 7
        %v815 = vsub.s32 2, %v814
        %v816 = vrot.slane %v801, %v815
        %v817 = vlaneseq
        %v818 = vshrl.u32 %v817, 7
        %v819 = vsub.s32 3, %v818
        %v820 = vrot.slane %v801, %v819
        %v821 = vlaneseq
        %v822 = vshrl.u32 %v821, 7
        %v823 = vsub.s32 4, %v822
        %v824 = vrot.slane %v801, %v823
        %v825 = vlaneseq
        %v826 = vshrl.u32 %v825, 7
        %v827 = vsub.s32 5, %v826
        %v828 = vrot.slane %v801, %v827
        %v829 = vlaneseq
        %v830 = vshrl.u32 %v829, 7
        %v831 = vsub.s32 6, %v830
        %v832 = vrot.slane %v801, %v831
        %v833 = vlaneseq
        %v834 = vshrl.u32 %v833, 7
        %v835 = vsub.s32 7, %v834
        %v836 = vrot.slane %v801, %v835
        %v837 = vlaneseq
        %v838 = vshrl.u32 %v837, 7
        %v839 = vsub.s32 0, %v838
        %v840 = vrot.slane %v802, %v839
        %v841 = vlaneseq
        %v842 = vshrl.u32 %v841, 7
        %v843 = vsub.s32 1, %v842
        %v844 = vrot.slane %v802, %v843
        %v845 = vlaneseq
        %v846 = vshrl.u32 %v845, 7
        %v847 = vsub.s32 2, %v846
        %v848 = vrot.slane %v802, %v847
        %v849 = vlaneseq
        %v850 = vshrl.u32 %v849, 7
        %v851 = vsub.s32 3, %v850
        %v852 = vrot.slane %v802, %v851
        %v853 = vlaneseq
        %v854 = vshrl.u32 %v853, 7
        %v855 = vsub.s32 4, %v854
        %v856 = vrot.slane %v802, %v855
        %v857 = vlaneseq
        %v858 = vshrl.u32 %v857, 7
        %v859 = vsub.s32 5, %v858
        %v860 = vrot.slane %v802, %v859
        %v861 = vlaneseq
        %v862 = vshrl.u32 %v861, 7
        %v863 = vsub.s32 6, %v862
        %v864 = vrot.slane %v802, %v863
        %v865 = vlaneseq
        %v866 = vshrl.u32 %v865, 7
        %v867 = vsub.s32 7, %v866
        %v868 = vrot.slane %v802, %v867
        %v1013 = vunpack.c.l.b16 %v673
        %v1014 = vunpack.c.h.b16 %v673
        %v1015 = vunpack.c.l.b16 %v674
        %v1016 = vunpack.c.h.b16 %v674
        %v1017 = vunpack.c.l.b16 %v675
        %v1018 = vunpack.c.h.b16 %v675
        %v1019 = vunpack.c.l.b16 %v676
        %v1020 = vunpack.c.h.b16 %v676
        %v1021 = vunpack.c.l.b16 %v677
        %v1022 = vunpack.c.h.b16 %v677
        %v1023 = vunpack.c.l.b16 %v678
        %v1024 = vunpack.c.h.b16 %v678
        %v1025 = vunpack.c.l.b16 %v679
        %v1026 = vunpack.c.h.b16 %v679
        %v1027 = vunpack.c.l.b16 %v680
        %v1028 = vunpack.c.h.b16 %v680
        %v1029 = vunpack.c.l.b16 %v681
        %v1030 = vunpack.c.h.b16 %v681
        %v1031 = vunpack.c.l.b16 %v682
        %v1032 = vunpack.c.h.b16 %v682
        %v1033 = vunpack.c.l.b16 %v683
        %v1034 = vunpack.c.h.b16 %v683
        %v1035 = vunpack.c.l.b16 %v684
        %v1036 = vunpack.c.h.b16 %v684
        %v1037 = vunpack.c.l.b16 %v685
        %v1038 = vunpack.c.h.b16 %v685
        %v1039 = vunpack.c.l.b16 %v686
        %v1040 = vunpack.c.h.b16 %v686
        %v1041 = vunpack.c.l.b16 %v687
        %v1042 = vunpack.c.h.b16 %v687
        %v1043 = vunpack.c.l.b16 %v688
        %v1044 = vunpack.c.h.b16 %v688
        %v1045 = vunpack.c.l.b16 %v689
        %v1046 = vunpack.c.h.b16 %v689
        %v1047 = vunpack.c.l.b16 %v690
        %v1048 = vunpack.c.h.b16 %v690
        %v1049 = vunpack.c.l.b16 %v691
        %v1050 = vunpack.c.h.b16 %v691
        %v1051 = vunpack.c.l.b16 %v692
        %v1052 = vunpack.c.h.b16 %v692
        %v1053 = vunpack.c.l.b16 %v693
        %v1054 = vunpack.c.h.b16 %v693
        %v1055 = vunpack.c.l.b16 %v694
        %v1056 = vunpack.c.h.b16 %v694
        %v1057 = vunpack.c.l.b16 %v695
        %v1058 = vunpack.c.h.b16 %v695
        %v1059 = vunpack.c.l.b16 %v696
        %v1060 = vunpack.c.h.b16 %v696
        %v1061 = vunpack.c.l.b16 %v697
        %v1062 = vunpack.c.h.b16 %v697
        %v1063 = vunpack.c.l.b16 %v698
        %v1064 = vunpack.c.h.b16 %v698
        %v1065 = vunpack.c.l.b16 %v699
        %v1066 = vunpack.c.h.b16 %v699
        %v1067 = vunpack.c.l.b16 %v700
        %v1068 = vunpack.c.h.b16 %v700
        %v1069 = vunpack.c.l.b16 %v701
        %v1070 = vunpack.c.h.b16 %v701
        %v1071 = vunpack.c.l.b16 %v702
        %v1072 = vunpack.c.h.b16 %v702
        %v1073 = vunpack.c.l.b16 %v703
        %v1074 = vunpack.c.h.b16 %v703
        %v1075 = vunpack.c.l.b16 %v704
        %v1076 = vunpack.c.h.b16 %v704
        %v1077 = vunpack.c.l.b16 %v705
        %v1078 = vunpack.c.h.b16 %v705
        %v1079 = vunpack.c.l.b16 %v706
        %v1080 = vunpack.c.h.b16 %v706
        %v1081 = vunpack.c.l.b16 %v707
        %v1082 = vunpack.c.h.b16 %v707
        %v1083 = vunpack.c.l.b16 %v708
        %v1084 = vunpack.c.h.b16 %v708
        %v1085 = vunpack.c.l.b16 %v709
        %v1086 = vunpack.c.h.b16 %v709
        %v1087 = vunpack.c.l.b16 %v710
        %v1088 = vunpack.c.h.b16 %v710
        %v1089 = vunpack.c.l.b16 %v711
        %v1090 = vunpack.c.h.b16 %v711
        %v1091 = vunpack.c.l.b16 %v712
        %v1092 = vunpack.c.h.b16 %v712
        %v1093 = vunpack.c.l.b16 %v713
        %v1094 = vunpack.c.h.b16 %v713
        %v1095 = vunpack.c.l.b16 %v714
        %v1096 = vunpack.c.h.b16 %v714
        %v1097 = vunpack.c.l.b16 %v715
        %v1098 = vunpack.c.h.b16 %v715
        %v1099 = vunpack.c.l.b16 %v716
        %v1100 = vunpack.c.h.b16 %v716
        %v1101 = vunpack.c.l.b16 %v717
        %v1102 = vunpack.c.h.b16 %v717
        %v1103 = vunpack.c.l.b16 %v718
        %v1104 = vunpack.c.h.b16 %v718
        %v1105 = vunpack.c.l.b16 %v719
        %v1106 = vunpack.c.h.b16 %v719
        %v1107 = vunpack.c.l.b16 %v720
        %v1108 = vunpack.c.h.b16 %v720
        %v1109 = vunpack.c.l.b16 %v721
        %v1110 = vunpack.c.h.b16 %v721
        %v1111 = vunpack.c.l.b16 %v722
        %v1112 = vunpack.c.h.b16 %v722
        %v1113 = vunpack.c.l.b16 %v723
        %v1114 = vunpack.c.h.b16 %v723
        %v1115 = vunpack.c.l.b16 %v724
        %v1116 = vunpack.c.h.b16 %v724
        %v1117 = vunpack.c.l.b16 %v725
        %v1118 = vunpack.c.h.b16 %v725
        %v1119 = vunpack.c.l.b16 %v726
        %v1120 = vunpack.c.h.b16 %v726
        %v1121 = vunpack.c.l.b16 %v727
        %v1122 = vunpack.c.h.b16 %v727
        %v1123 = vunpack.c.l.b16 %v728
        %v1124 = vunpack.c.h.b16 %v728
        %v1125 = vunpack.c.l.b16 %v729
        %v1126 = vunpack.c.h.b16 %v729
        %v1127 = vunpack.c.l.b16 %v730
        %v1128 = vunpack.c.h.b16 %v730
        %v1129 = vunpack.c.l.b16 %v731
        %v1130 = vunpack.c.h.b16 %v731
        %v1131 = vunpack.c.l.b16 %v732
        %v1132 = vunpack.c.h.b16 %v732
        %v1133 = vunpack.c.l.b16 %v733
        %v1134 = vunpack.c.h.b16 %v733
        %v1135 = vunpack.c.l.b16 %v734
        %v1136 = vunpack.c.h.b16 %v734
        %v1137 = vunpack.c.l.b16 %v735
        %v1138 = vunpack.c.h.b16 %v735
        %v1139 = vunpack.c.l.b16 %v736
        %v1140 = vunpack.c.h.b16 %v736
        %v1141 = vunpack.c.l.b16 %v737
        %v1142 = vunpack.c.h.b16 %v737
        %v1143 = vunpack.c.l.b16 %v738
        %v1144 = vunpack.c.h.b16 %v738
        %v1145 = vunpack.c.l.b16 %v739
        %v1146 = vunpack.c.h.b16 %v739
        %v1147 = vunpack.c.l.b16 %v740
        %v1148 = vunpack.c.h.b16 %v740
        %v1149 = vunpack.c.l.b16 %v741
        %v1150 = vunpack.c.h.b16 %v741
        %v1151 = vunpack.c.l.b16 %v742
        %v1152 = vunpack.c.h.b16 %v742
        %v1153 = vunpack.c.l.b16 %v743
        %v1154 = vunpack.c.h.b16 %v743
        %v1155 = vunpack.c.l.b16 %v744
        %v1156 = vunpack.c.h.b16 %v744
        %v1157 = vunpack.c.l.b16 %v745
        %v1158 = vunpack.c.h.b16 %v745
        %v1159 = vunpack.c.l.b16 %v746
        %v1160 = vunpack.c.h.b16 %v746
        %v1161 = vunpack.c.l.b16 %v747
        %v1162 = vunpack.c.h.b16 %v747
        %v1163 = vunpack.c.l.b16 %v748
        %v1164 = vunpack.c.h.b16 %v748
        %v1165 = vunpack.c.l.b16 %v749
        %v1166 = vunpack.c.h.b16 %v749
        %v1167 = vunpack.c.l.b16 %v750
        %v1168 = vunpack.c.h.b16 %v750
        %v1169 = vunpack.c.l.b16 %v751
        %v1170 = vunpack.c.h.b16 %v751
        %v1171 = vunpack.c.l.b16 %v752
        %v1172 = vunpack.c.h.b16 %v752
        %v1173 = vunpack.c.l.b16 %v753
        %v1174 = vunpack.c.h.b16 %v753
        %v1175 = vunpack.c.l.b16 %v754
        %v1176 = vunpack.c.h.b16 %v754
        %v1177 = vunpack.c.l.b16 %v755
        %v1178 = vunpack.c.h.b16 %v755
        %v1179 = vunpack.c.l.b16 %v756
        %v1180 = vunpack.c.h.b16 %v756
        %v1181 = vunpack.c.l.b16 %v757
        %v1182 = vunpack.c.h.b16 %v757
        %v1183 = vunpack.c.l.b16 %v758
        %v1184 = vunpack.c.h.b16 %v758
        %v1185 = vunpack.c.l.b16 %v759
        %v1186 = vunpack.c.h.b16 %v759
        %v1187 = vunpack.c.l.b16 %v760
        %v1188 = vunpack.c.h.b16 %v760
        %v1189 = vunpack.c.l.b16 %v761
        %v1190 = vunpack.c.h.b16 %v761
        %v1191 = vunpack.c.l.b16 %v762
        %v1192 = vunpack.c.h.b16 %v762
        %v1193 = vunpack.c.l.b16 %v763
        %v1194 = vunpack.c.h.b16 %v763
        %v1195 = vunpack.c.l.b16 %v764
        %v1196 = vunpack.c.h.b16 %v764
        %v1197 = vunpack.c.l.b16 %v765
        %v1198 = vunpack.c.h.b16 %v765
        %v1199 = vunpack.c.l.b16 %v766
        %v1200 = vunpack.c.h.b16 %v766
        %v1201 = vunpack.c.l.b16 %v767
        %v1202 = vunpack.c.h.b16 %v767
        %v1203 = vunpack.c.l.b16 %v768
        %v1204 = vunpack.c.h.b16 %v768
        %v1205 = vunpack.c.l.b16 %v769
        %v1206 = vunpack.c.h.b16 %v769
        %v1207 = vunpack.c.l.b16 %v770
        %v1208 = vunpack.c.h.b16 %v770
        %v1209 = vunpack.c.l.b16 %v771
        %v1210 = vunpack.c.h.b16 %v771
        %v1211 = vunpack.c.l.b16 %v772
        %v1212 = vunpack.c.h.b16 %v772
        %v1213 = vunpack.c.l.b16 %v773
        %v1214 = vunpack.c.h.b16 %v773
        %v1215 = vunpack.c.l.b16 %v774
        %v1216 = vunpack.c.h.b16 %v774
        %v1217 = vunpack.c.l.b16 %v775
        %v1218 = vunpack.c.h.b16 %v775
        %v1219 = vunpack.c.l.b16 %v776
        %v1220 = vunpack.c.h.b16 %v776
        %v1221 = vunpack.c.l.b16 %v777
        %v1222 = vunpack.c.h.b16 %v777
        %v1223 = vunpack.c.l.b16 %v778
        %v1224 = vunpack.c.h.b16 %v778
        %v1225 = vunpack.c.l.b16 %v779
        %v1226 = vunpack.c.h.b16 %v779
        %v1227 = vunpack.c.l.b16 %v780
        %v1228 = vunpack.c.h.b16 %v780
        %v1229 = vunpack.c.l.b16 %v781
        %v1230 = vunpack.c.h.b16 %v781
        %v1231 = vunpack.c.l.b16 %v782
        %v1232 = vunpack.c.h.b16 %v782
        %v1233 = vunpack.c.l.b16 %v783
        %v1234 = vunpack.c.h.b16 %v783
        %v1235 = vunpack.c.l.b16 %v784
        %v1236 = vunpack.c.h.b16 %v784
        %v1237 = vunpack.c.l.b16 %v785
        %v1238 = vunpack.c.h.b16 %v785
        %v1239 = vunpack.c.l.b16 %v786
        %v1240 = vunpack.c.h.b16 %v786
        %v1241 = vunpack.c.l.b16 %v787
        %v1242 = vunpack.c.h.b16 %v787
        %v1243 = vunpack.c.l.b16 %v788
        %v1244 = vunpack.c.h.b16 %v788
        %v1245 = vunpack.c.l.b16 %v789
        %v1246 = vunpack.c.h.b16 %v789
        %v1247 = vunpack.c.l.b16 %v790
        %v1248 = vunpack.c.h.b16 %v790
        %v1249 = vunpack.c.l.b16 %v791
        %v1250 = vunpack.c.h.b16 %v791
        %v1251 = vunpack.c.l.b16 %v792
        %v1252 = vunpack.c.h.b16 %v792
        %v1253 = vunpack.c.l.b16 %v793
        %v1254 = vunpack.c.h.b16 %v793
        %v1255 = vunpack.c.l.b16 %v794
        %v1256 = vunpack.c.h.b16 %v794
        %v1257 = vunpack.c.l.b16 %v795
        %v1258 = vunpack.c.h.b16 %v795
        %v1259 = vunpack.c.l.b16 %v796
        %v1260 = vunpack.c.h.b16 %v796
        %v1261 = vunpack.c.l.b16 %v797
        %v1262 = vunpack.c.h.b16 %v797
        %v1263 = vunpack.c.l.b16 %v798
        %v1264 = vunpack.c.h.b16 %v798
        %v1265 = vunpack.c.l.b16 %v799
        %v1266 = vunpack.c.h.b16 %v799
        %v1267 = vunpack.c.l.b16 %v800
        %v1268 = vunpack.c.h.b16 %v800
        %v1269 = vpack.c.b16 %v1029, %v1013
        %v1270 = vpack.c.b16 %v1030, %v1014
        %v1271 = vpack.c.b16 %v1031, %v1015
        %v1272 = vpack.c.b16 %v1032, %v1016
        %v1273 = vpack.c.b16 %v1033, %v1017
        %v1274 = vpack.c.b16 %v1034, %v1018
        %v1275 = vpack.c.b16 %v1035, %v1019
        %v1276 = vpack.c.b16 %v1036, %v1020
        %v1277 = vpack.c.b16 %v1037, %v1021
        %v1278 = vpack.c.b16 %v1038, %v1022
        %v1279 = vpack.c.b16 %v1039, %v1023
        %v1280 = vpack.c.b16 %v1040, %v1024
        %v1281 = vpack.c.b16 %v1041, %v1025
        %v1282 = vpack.c.b16 %v1042, %v1026
        %v1283 = vpack.c.b16 %v1043, %v1027
        %v1284 = vpack.c.b16 %v1044, %v1028
        %v1285 = vpack.c.b16 %v1061, %v1045
        %v1286 = vpack.c.b16 %v1062, %v1046
        %v1287 = vpack.c.b16 %v1063, %v1047
        %v1288 = vpack.c.b16 %v1064, %v1048
        %v1289 = vpack.c.b16 %v1065, %v1049
        %v1290 = vpack.c.b16 %v1066, %v1050
        %v1291 = vpack.c.b16 %v1067, %v1051
        %v1292 = vpack.c.b16 %v1068, %v1052
        %v1293 = vpack.c.b16 %v1069, %v1053
        %v1294 = vpack.c.b16 %v1070, %v1054
        %v1295 = vpack.c.b16 %v1071, %v1055
        %v1296 = vpack.c.b16 %v1072, %v1056
        %v1297 = vpack.c.b16 %v1073, %v1057
        %v1298 = vpack.c.b16 %v1074, %v1058
        %v1299 = vpack.c.b16 %v1075, %v1059
        %v1300 = vpack.c.b16 %v1076, %v1060
        %v1301 = vpack.c.b16 %v1093, %v1077
        %v1302 = vpack.c.b16 %v1094, %v1078
        %v1303 = vpack.c.b16 %v1095, %v1079
        %v1304 = vpack.c.b16 %v1096, %v1080
        %v1305 = vpack.c.b16 %v1097, %v1081
        %v1306 = vpack.c.b16 %v1098, %v1082
        %v1307 = vpack.c.b16 %v1099, %v1083
        %v1308 = vpack.c.b16 %v1100, %v1084
        %v1309 = vpack.c.b16 %v1101, %v1085
        %v1310 = vpack.c.b16 %v1102, %v1086
        %v1311 = vpack.c.b16 %v1103, %v1087
        %v1312 = vpack.c.b16 %v1104, %v1088
        %v1313 = vpack.c.b16 %v1105, %v1089
        %v1314 = vpack.c.b16 %v1106, %v1090
        %v1315 = vpack.c.b16 %v1107, %v1091
        %v1316 = vpack.c.b16 %v1108, %v1092
        %v1317 = vpack.c.b16 %v1125, %v1109
        %v1318 = vpack.c.b16 %v1126, %v1110
        %v1319 = vpack.c.b16 %v1127, %v1111
        %v1320 = vpack.c.b16 %v1128, %v1112
        %v1321 = vpack.c.b16 %v1129, %v1113
        %v1322 = vpack.c.b16 %v1130, %v1114
        %v1323 = vpack.c.b16 %v1131, %v1115
        %v1324 = vpack.c.b16 %v1132, %v1116
        %v1325 = vpack.c.b16 %v1133, %v1117
        %v1326 = vpack.c.b16 %v1134, %v1118
        %v1327 = vpack.c.b16 %v1135, %v1119
        %v1328 = vpack.c.b16 %v1136, %v1120
        %v1329 = vpack.c.b16 %v1137, %v1121
        %v1330 = vpack.c.b16 %v1138, %v1122
        %v1331 = vpack.c.b16 %v1139, %v1123
        %v1332 = vpack.c.b16 %v1140, %v1124
        %v1333 = vpack.c.b16 %v1157, %v1141
        %v1334 = vpack.c.b16 %v1158, %v1142
        %v1335 = vpack.c.b16 %v1159, %v1143
        %v1336 = vpack.c.b16 %v1160, %v1144
        %v1337 = vpack.c.b16 %v1161, %v1145
        %v1338 = vpack.c.b16 %v1162, %v1146
        %v1339 = vpack.c.b16 %v1163, %v1147
        %v1340 = vpack.c.b16 %v1164, %v1148
        %v1341 = vpack.c.b16 %v1165, %v1149
        %v1342 = vpack.c.b16 %v1166, %v1150
        %v1343 = vpack.c.b16 %v1167, %v1151
        %v1344 = vpack.c.b16 %v1168, %v1152
        %v1345 = vpack.c.b16 %v1169, %v1153
        %v1346 = vpack.c.b16 %v1170, %v1154
        %v1347 = vpack.c.b16 %v1171, %v1155
        %v1348 = vpack.c.b16 %v1172, %v1156
        %v1349 = vpack.c.b16 %v1189, %v1173
        %v1350 = vpack.c.b16 %v1190, %v1174
        %v1351 = vpack.c.b16 %v1191, %v1175
        %v1352 = vpack.c.b16 %v1192, %v1176
        %v1353 = vpack.c.b16 %v1193, %v1177
        %v1354 = vpack.c.b16 %v1194, %v1178
        %v1355 = vpack.c.b16 %v1195, %v1179
        %v1356 = vpack.c.b16 %v1196, %v1180
        %v1357 = vpack.c.b16 %v1197, %v1181
        %v1358 = vpack.c.b16 %v1198, %v1182
        %v1359 = vpack.c.b16 %v1199, %v1183
        %v1360 = vpack.c.b16 %v1200, %v1184
        %v1361 = vpack.c.b16 %v1201, %v1185
        %v1362 = vpack.c.b16 %v1202, %v1186
        %v1363 = vpack.c.b16 %v1203, %v1187
        %v1364 = vpack.c.b16 %v1204, %v1188
        %v1365 = vpack.c.b16 %v1221, %v1205
        %v1366 = vpack.c.b16 %v1222, %v1206
        %v1367 = vpack.c.b16 %v1223, %v1207
        %v1368 = vpack.c.b16 %v1224, %v1208
        %v1369 = vpack.c.b16 %v1225, %v1209
        %v1370 = vpack.c.b16 %v1226, %v1210
        %v1371 = vpack.c.b16 %v1227, %v1211
        %v1372 = vpack.c.b16 %v1228, %v1212
        %v1373 = vpack.c.b16 %v1229, %v1213
        %v1374 = vpack.c.b16 %v1230, %v1214
        %v1375 = vpack.c.b16 %v1231, %v1215
        %v1376 = vpack.c.b16 %v1232, %v1216
        %v1377 = vpack.c.b16 %v1233, %v1217
        %v1378 = vpack.c.b16 %v1234, %v1218
        %v1379 = vpack.c.b16 %v1235, %v1219
        %v1380 = vpack.c.b16 %v1236, %v1220
        %v1381 = vpack.c.b16 %v1253, %v1237
        %v1382 = vpack.c.b16 %v1254, %v1238
        %v1383 = vpack.c.b16 %v1255, %v1239
        %v1384 = vpack.c.b16 %v1256, %v1240
        %v1385 = vpack.c.b16 %v1257, %v1241
        %v1386 = vpack.c.b16 %v1258, %v1242
        %v1387 = vpack.c.b16 %v1259, %v1243
        %v1388 = vpack.c.b16 %v1260, %v1244
        %v1389 = vpack.c.b16 %v1261, %v1245
        %v1390 = vpack.c.b16 %v1262, %v1246
        %v1391 = vpack.c.b16 %v1263, %v1247
        %v1392 = vpack.c.b16 %v1264, %v1248
        %v1393 = vpack.c.b16 %v1265, %v1249
        %v1394 = vpack.c.b16 %v1266, %v1250
        %v1395 = vpack.c.b16 %v1267, %v1251
        %v1396 = vpack.c.b16 %v1268, %v1252
        %1525 = vmatprep.subr.bf16.mxu0 %v1382
        %1526 = vmatpush1.bf16.msra.mxu0 %v1381
        %1527 = vmatprep.subr.bf16.mxu0 %v1366
        %1528 = vmatpush1.bf16.msra.mxu0 %v1365
        %1529 = vmatprep.subr.bf16.mxu0 %v1350
        %1530 = vmatpush1.bf16.msra.mxu0 %v1349
        %1531 = vmatprep.subr.bf16.mxu0 %v1334
        %1532 = vmatpush1.bf16.msra.mxu0 %v1333
        %1533 = vmatprep.subr.bf16.mxu0 %v1318
        %1534 = vmatpush1.bf16.msra.mxu0 %v1317
        %1535 = vmatprep.subr.bf16.mxu0 %v1302
        %1536 = vmatpush1.bf16.msra.mxu0 %v1301
        %1537 = vmatprep.subr.bf16.mxu0 %v1286
        %1538 = vmatpush1.bf16.msra.mxu0 %v1285
        %1539 = vmatprep.subr.bf16.mxu0 %v1270
        %1540 = vmatpush1.bf16.msra.mxu0 %v1269
        %1541 = vmatprep.subr.bf16.mxu0 0
        %1542 = vmatpush2.bf16.msra.mxu0 0
        %1543 = vmatprep.subr.bf16.mxu0 0
        %1544 = vmatpush2.bf16.msra.mxu0 0
        %1545 = vmatprep.subr.bf16.mxu0 0
        %1546 = vmatpush2.bf16.msra.mxu0 0
        %1547 = vmatprep.subr.bf16.mxu0 0
        %1548 = vmatpush2.bf16.msra.mxu0 0
        %1549 = vmatprep.subr.bf16.mxu0 0
        %1550 = vmatpush2.bf16.msra.mxu0 0
        %1551 = vmatprep.subr.bf16.mxu0 0
        %1552 = vmatpush2.bf16.msra.mxu0 0
        %1553 = vmatprep.subr.bf16.mxu0 0
        %1554 = vmatpush2.bf16.msra.mxu0 0
        %1555 = vmatprep.subr.bf16.mxu0 0
        %1556 = vmatpush2.bf16.msra.mxu0 0
        %1557 = vmatprep.mubr.bf16.mxu0 0
        %1558 = vmatmul.mubr.bf16.gmra.mxu0 %v672
        %v1559 = vpop.f32.mrf.mxu0
        %v1560 = vadd.f32 %v808, %v1559
        %v1561 = vpop.f32.mrf.mxu0
        %v1562 = vadd.f32 %v812, %v1561
        %v1563 = vpop.f32.mrf.mxu0
        %v1564 = vpop.f32.mrf.mxu0
        %1565 = vdwg.mxu0
        %1566 = vmatprep.subr.bf16.mxu0 %v1384
        %1567 = vmatpush1.bf16.msra.mxu0 %v1383
        %1568 = vmatprep.subr.bf16.mxu0 %v1368
        %1569 = vmatpush1.bf16.msra.mxu0 %v1367
        %1570 = vmatprep.subr.bf16.mxu0 %v1352
        %1571 = vmatpush1.bf16.msra.mxu0 %v1351
        %1572 = vmatprep.subr.bf16.mxu0 %v1336
        %1573 = vmatpush1.bf16.msra.mxu0 %v1335
        %1574 = vmatprep.subr.bf16.mxu0 %v1320
        %1575 = vmatpush1.bf16.msra.mxu0 %v1319
        %1576 = vmatprep.subr.bf16.mxu0 %v1304
        %1577 = vmatpush1.bf16.msra.mxu0 %v1303
        %1578 = vmatprep.subr.bf16.mxu0 %v1288
        %1579 = vmatpush1.bf16.msra.mxu0 %v1287
        %1580 = vmatprep.subr.bf16.mxu0 %v1272
        %1581 = vmatpush1.bf16.msra.mxu0 %v1271
        %1582 = vmatprep.subr.bf16.mxu0 0
        %1583 = vmatpush2.bf16.msra.mxu0 0
        %1584 = vmatprep.subr.bf16.mxu0 0
        %1585 = vmatpush2.bf16.msra.mxu0 0
        %1586 = vmatprep.subr.bf16.mxu0 0
        %1587 = vmatpush2.bf16.msra.mxu0 0
        %1588 = vmatprep.subr.bf16.mxu0 0
        %1589 = vmatpush2.bf16.msra.mxu0 0
        %1590 = vmatprep.subr.bf16.mxu0 0
        %1591 = vmatpush2.bf16.msra.mxu0 0
        %1592 = vmatprep.subr.bf16.mxu0 0
        %1593 = vmatpush2.bf16.msra.mxu0 0
        %1594 = vmatprep.subr.bf16.mxu0 0
        %1595 = vmatpush2.bf16.msra.mxu0 0
        %1596 = vmatprep.subr.bf16.mxu0 0
        %1597 = vmatpush2.bf16.msra.mxu0 0
        %1598 = vmatprep.mubr.bf16.mxu0 0
        %1599 = vmatmul.mubr.bf16.gmra.mxu0 %v672
        %v1600 = vpop.f32.mrf.mxu0
        %v1601 = vadd.f32 %v816, %v1600
        %v1602 = vpop.f32.mrf.mxu0
        %v1603 = vadd.f32 %v820, %v1602
        %v1604 = vpop.f32.mrf.mxu0
        %v1605 = vpop.f32.mrf.mxu0
        %1606 = vdwg.mxu0
        %1607 = vmatprep.subr.bf16.mxu0 %v1386
        %1608 = vmatpush1.bf16.msra.mxu0 %v1385
        %1609 = vmatprep.subr.bf16.mxu0 %v1370
        %1610 = vmatpush1.bf16.msra.mxu0 %v1369
        %1611 = vmatprep.subr.bf16.mxu0 %v1354
        %1612 = vmatpush1.bf16.msra.mxu0 %v1353
        %1613 = vmatprep.subr.bf16.mxu0 %v1338
        %1614 = vmatpush1.bf16.msra.mxu0 %v1337
        %1615 = vmatprep.subr.bf16.mxu0 %v1322
        %1616 = vmatpush1.bf16.msra.mxu0 %v1321
        %1617 = vmatprep.subr.bf16.mxu0 %v1306
        %1618 = vmatpush1.bf16.msra.mxu0 %v1305
        %1619 = vmatprep.subr.bf16.mxu0 %v1290
        %1620 = vmatpush1.bf16.msra.mxu0 %v1289
        %1621 = vmatprep.subr.bf16.mxu0 %v1274
        %1622 = vmatpush1.bf16.msra.mxu0 %v1273
        %1623 = vmatprep.subr.bf16.mxu0 0
        %1624 = vmatpush2.bf16.msra.mxu0 0
        %1625 = vmatprep.subr.bf16.mxu0 0
        %1626 = vmatpush2.bf16.msra.mxu0 0
        %1627 = vmatprep.subr.bf16.mxu0 0
        %1628 = vmatpush2.bf16.msra.mxu0 0
        %1629 = vmatprep.subr.bf16.mxu0 0
        %1630 = vmatpush2.bf16.msra.mxu0 0
        %1631 = vmatprep.subr.bf16.mxu0 0
        %1632 = vmatpush2.bf16.msra.mxu0 0
        %1633 = vmatprep.subr.bf16.mxu0 0
        %1634 = vmatpush2.bf16.msra.mxu0 0
        %1635 = vmatprep.subr.bf16.mxu0 0
        %1636 = vmatpush2.bf16.msra.mxu0 0
        %1637 = vmatprep.subr.bf16.mxu0 0
        %1638 = vmatpush2.bf16.msra.mxu0 0
        %1639 = vmatprep.mubr.bf16.mxu0 0
        %1640 = vmatmul.mubr.bf16.gmra.mxu0 %v672
        %v1641 = vpop.f32.mrf.mxu0
        %v1642 = vadd.f32 %v824, %v1641
        %v1643 = vpop.f32.mrf.mxu0
        %v1644 = vadd.f32 %v828, %v1643
        %v1645 = vpop.f32.mrf.mxu0
        %v1646 = vpop.f32.mrf.mxu0
        %1647 = vdwg.mxu0
        %1648 = vmatprep.subr.bf16.mxu0 %v1388
        %1649 = vmatpush1.bf16.msra.mxu0 %v1387
        %1650 = vmatprep.subr.bf16.mxu0 %v1372
        %1651 = vmatpush1.bf16.msra.mxu0 %v1371
        %1652 = vmatprep.subr.bf16.mxu0 %v1356
        %1653 = vmatpush1.bf16.msra.mxu0 %v1355
        %1654 = vmatprep.subr.bf16.mxu0 %v1340
        %1655 = vmatpush1.bf16.msra.mxu0 %v1339
        %1656 = vmatprep.subr.bf16.mxu0 %v1324
        %1657 = vmatpush1.bf16.msra.mxu0 %v1323
        %1658 = vmatprep.subr.bf16.mxu0 %v1308
        %1659 = vmatpush1.bf16.msra.mxu0 %v1307
        %1660 = vmatprep.subr.bf16.mxu0 %v1292
        %1661 = vmatpush1.bf16.msra.mxu0 %v1291
        %1662 = vmatprep.subr.bf16.mxu0 %v1276
        %1663 = vmatpush1.bf16.msra.mxu0 %v1275
        %1664 = vmatprep.subr.bf16.mxu0 0
        %1665 = vmatpush2.bf16.msra.mxu0 0
        %1666 = vmatprep.subr.bf16.mxu0 0
        %1667 = vmatpush2.bf16.msra.mxu0 0
        %1668 = vmatprep.subr.bf16.mxu0 0
        %1669 = vmatpush2.bf16.msra.mxu0 0
        %1670 = vmatprep.subr.bf16.mxu0 0
        %1671 = vmatpush2.bf16.msra.mxu0 0
        %1672 = vmatprep.subr.bf16.mxu0 0
        %1673 = vmatpush2.bf16.msra.mxu0 0
        %1674 = vmatprep.subr.bf16.mxu0 0
        %1675 = vmatpush2.bf16.msra.mxu0 0
        %1676 = vmatprep.subr.bf16.mxu0 0
        %1677 = vmatpush2.bf16.msra.mxu0 0
        %1678 = vmatprep.subr.bf16.mxu0 0
        %1679 = vmatpush2.bf16.msra.mxu0 0
        %1680 = vmatprep.mubr.bf16.mxu0 0
        %1681 = vmatmul.mubr.bf16.gmra.mxu0 %v672
        %v1682 = vpop.f32.mrf.mxu0
        %v1683 = vadd.f32 %v832, %v1682
        %v1684 = vpop.f32.mrf.mxu0
        %v1685 = vadd.f32 %v836, %v1684
        %v1686 = vpop.f32.mrf.mxu0
        %v1687 = vpop.f32.mrf.mxu0
        %1688 = vdwg.mxu0
        %1689 = vmatprep.subr.bf16.mxu0 %v1390
        %1690 = vmatpush1.bf16.msra.mxu0 %v1389
        %1691 = vmatprep.subr.bf16.mxu0 %v1374
        %1692 = vmatpush1.bf16.msra.mxu0 %v1373
        %1693 = vmatprep.subr.bf16.mxu0 %v1358
        %1694 = vmatpush1.bf16.msra.mxu0 %v1357
        %1695 = vmatprep.subr.bf16.mxu0 %v1342
        %1696 = vmatpush1.bf16.msra.mxu0 %v1341
        %1697 = vmatprep.subr.bf16.mxu0 %v1326
        %1698 = vmatpush1.bf16.msra.mxu0 %v1325
        %1699 = vmatprep.subr.bf16.mxu0 %v1310
        %1700 = vmatpush1.bf16.msra.mxu0 %v1309
        %1701 = vmatprep.subr.bf16.mxu0 %v1294
        %1702 = vmatpush1.bf16.msra.mxu0 %v1293
        %1703 = vmatprep.subr.bf16.mxu0 %v1278
        %1704 = vmatpush1.bf16.msra.mxu0 %v1277
        %1705 = vmatprep.subr.bf16.mxu0 0
        %1706 = vmatpush2.bf16.msra.mxu0 0
        %1707 = vmatprep.subr.bf16.mxu0 0
        %1708 = vmatpush2.bf16.msra.mxu0 0
        %1709 = vmatprep.subr.bf16.mxu0 0
        %1710 = vmatpush2.bf16.msra.mxu0 0
        %1711 = vmatprep.subr.bf16.mxu0 0
        %1712 = vmatpush2.bf16.msra.mxu0 0
        %1713 = vmatprep.subr.bf16.mxu0 0
        %1714 = vmatpush2.bf16.msra.mxu0 0
        %1715 = vmatprep.subr.bf16.mxu0 0
        %1716 = vmatpush2.bf16.msra.mxu0 0
        %1717 = vmatprep.subr.bf16.mxu0 0
        %1718 = vmatpush2.bf16.msra.mxu0 0
        %1719 = vmatprep.subr.bf16.mxu0 0
        %1720 = vmatpush2.bf16.msra.mxu0 0
        %1721 = vmatprep.mubr.bf16.mxu0 0
        %1722 = vmatmul.mubr.bf16.gmra.mxu0 %v672
        %v1723 = vpop.f32.mrf.mxu0
        %v1724 = vadd.f32 %v840, %v1723
        %v1725 = vpop.f32.mrf.mxu0
        %v1726 = vadd.f32 %v844, %v1725
        %v1727 = vpop.f32.mrf.mxu0
        %v1728 = vpop.f32.mrf.mxu0
        %1729 = vdwg.mxu0
        %1730 = vmatprep.subr.bf16.mxu0 %v1392
        %1731 = vmatpush1.bf16.msra.mxu0 %v1391
        %1732 = vmatprep.subr.bf16.mxu0 %v1376
        %1733 = vmatpush1.bf16.msra.mxu0 %v1375
        %1734 = vmatprep.subr.bf16.mxu0 %v1360
        %1735 = vmatpush1.bf16.msra.mxu0 %v1359
        %1736 = vmatprep.subr.bf16.mxu0 %v1344
        %1737 = vmatpush1.bf16.msra.mxu0 %v1343
        %1738 = vmatprep.subr.bf16.mxu0 %v1328
        %1739 = vmatpush1.bf16.msra.mxu0 %v1327
        %1740 = vmatprep.subr.bf16.mxu0 %v1312
        %1741 = vmatpush1.bf16.msra.mxu0 %v1311
        %1742 = vmatprep.subr.bf16.mxu0 %v1296
        %1743 = vmatpush1.bf16.msra.mxu0 %v1295
        %1744 = vmatprep.subr.bf16.mxu0 %v1280
        %1745 = vmatpush1.bf16.msra.mxu0 %v1279
        %1746 = vmatprep.subr.bf16.mxu0 0
        %1747 = vmatpush2.bf16.msra.mxu0 0
        %1748 = vmatprep.subr.bf16.mxu0 0
        %1749 = vmatpush2.bf16.msra.mxu0 0
        %1750 = vmatprep.subr.bf16.mxu0 0
        %1751 = vmatpush2.bf16.msra.mxu0 0
        %1752 = vmatprep.subr.bf16.mxu0 0
        %1753 = vmatpush2.bf16.msra.mxu0 0
        %1754 = vmatprep.subr.bf16.mxu0 0
        %1755 = vmatpush2.bf16.msra.mxu0 0
        %1756 = vmatprep.subr.bf16.mxu0 0
        %1757 = vmatpush2.bf16.msra.mxu0 0
        %1758 = vmatprep.subr.bf16.mxu0 0
        %1759 = vmatpush2.bf16.msra.mxu0 0
        %1760 = vmatprep.subr.bf16.mxu0 0
        %1761 = vmatpush2.bf16.msra.mxu0 0
        %1762 = vmatprep.mubr.bf16.mxu0 0
        %1763 = vmatmul.mubr.bf16.gmra.mxu0 %v672
        %v1764 = vpop.f32.mrf.mxu0
        %v1765 = vadd.f32 %v848, %v1764
        %v1766 = vpop.f32.mrf.mxu0
        %v1767 = vadd.f32 %v852, %v1766
        %v1768 = vpop.f32.mrf.mxu0
        %v1769 = vpop.f32.mrf.mxu0
        %1770 = vdwg.mxu0
        %1771 = vmatprep.subr.bf16.mxu0 %v1394
        %1772 = vmatpush1.bf16.msra.mxu0 %v1393
        %1773 = vmatprep.subr.bf16.mxu0 %v1378
        %1774 = vmatpush1.bf16.msra.mxu0 %v1377
        %1775 = vmatprep.subr.bf16.mxu0 %v1362
        %1776 = vmatpush1.bf16.msra.mxu0 %v1361
        %1777 = vmatprep.subr.bf16.mxu0 %v1346
        %1778 = vmatpush1.bf16.msra.mxu0 %v1345
        %1779 = vmatprep.subr.bf16.mxu0 %v1330
        %1780 = vmatpush1.bf16.msra.mxu0 %v1329
        %1781 = vmatprep.subr.bf16.mxu0 %v1314
        %1782 = vmatpush1.bf16.msra.mxu0 %v1313
        %1783 = vmatprep.subr.bf16.mxu0 %v1298
        %1784 = vmatpush1.bf16.msra.mxu0 %v1297
        %1785 = vmatprep.subr.bf16.mxu0 %v1282
        %1786 = vmatpush1.bf16.msra.mxu0 %v1281
        %1787 = vmatprep.subr.bf16.mxu0 0
        %1788 = vmatpush2.bf16.msra.mxu0 0
        %1789 = vmatprep.subr.bf16.mxu0 0
        %1790 = vmatpush2.bf16.msra.mxu0 0
        %1791 = vmatprep.subr.bf16.mxu0 0
        %1792 = vmatpush2.bf16.msra.mxu0 0
        %1793 = vmatprep.subr.bf16.mxu0 0
        %1794 = vmatpush2.bf16.msra.mxu0 0
        %1795 = vmatprep.subr.bf16.mxu0 0
        %1796 = vmatpush2.bf16.msra.mxu0 0
        %1797 = vmatprep.subr.bf16.mxu0 0
        %1798 = vmatpush2.bf16.msra.mxu0 0
        %1799 = vmatprep.subr.bf16.mxu0 0
        %1800 = vmatpush2.bf16.msra.mxu0 0
        %1801 = vmatprep.subr.bf16.mxu0 0
        %1802 = vmatpush2.bf16.msra.mxu0 0
        %1803 = vmatprep.mubr.bf16.mxu0 0
        %1804 = vmatmul.mubr.bf16.gmra.mxu0 %v672
        %v1805 = vpop.f32.mrf.mxu0
        %v1806 = vadd.f32 %v856, %v1805
        %v1807 = vpop.f32.mrf.mxu0
        %v1808 = vadd.f32 %v860, %v1807
        %v1809 = vpop.f32.mrf.mxu0
        %v1810 = vpop.f32.mrf.mxu0
        %1811 = vdwg.mxu0
        %1812 = vmatprep.subr.bf16.mxu0 %v1396
        %1813 = vmatpush1.bf16.msra.mxu0 %v1395
        %1814 = vmatprep.subr.bf16.mxu0 %v1380
        %1815 = vmatpush1.bf16.msra.mxu0 %v1379
        %1816 = vmatprep.subr.bf16.mxu0 %v1364
        %1817 = vmatpush1.bf16.msra.mxu0 %v1363
        %1818 = vmatprep.subr.bf16.mxu0 %v1348
        %1819 = vmatpush1.bf16.msra.mxu0 %v1347
        %1820 = vmatprep.subr.bf16.mxu0 %v1332
        %1821 = vmatpush1.bf16.msra.mxu0 %v1331
        %1822 = vmatprep.subr.bf16.mxu0 %v1316
        %1823 = vmatpush1.bf16.msra.mxu0 %v1315
        %1824 = vmatprep.subr.bf16.mxu0 %v1300
        %1825 = vmatpush1.bf16.msra.mxu0 %v1299
        %1826 = vmatprep.subr.bf16.mxu0 %v1284
        %1827 = vmatpush1.bf16.msra.mxu0 %v1283
        %1828 = vmatprep.subr.bf16.mxu0 0
        %1829 = vmatpush2.bf16.msra.mxu0 0
        %1830 = vmatprep.subr.bf16.mxu0 0
        %1831 = vmatpush2.bf16.msra.mxu0 0
        %1832 = vmatprep.subr.bf16.mxu0 0
        %1833 = vmatpush2.bf16.msra.mxu0 0
        %1834 = vmatprep.subr.bf16.mxu0 0
        %1835 = vmatpush2.bf16.msra.mxu0 0
        %1836 = vmatprep.subr.bf16.mxu0 0
        %1837 = vmatpush2.bf16.msra.mxu0 0
        %1838 = vmatprep.subr.bf16.mxu0 0
        %1839 = vmatpush2.bf16.msra.mxu0 0
        %1840 = vmatprep.subr.bf16.mxu0 0
        %1841 = vmatpush2.bf16.msra.mxu0 0
        %1842 = vmatprep.subr.bf16.mxu0 0
        %1843 = vmatpush2.bf16.msra.mxu0 0
        %1844 = vmatprep.mubr.bf16.mxu0 0
        %1845 = vmatmul.mubr.bf16.gmra.mxu0 %v672
        %v1846 = vpop.f32.mrf.mxu0
        %v1847 = vadd.f32 %v864, %v1846
        %v1848 = vpop.f32.mrf.mxu0
        %v1849 = vadd.f32 %v868, %v1848
        %v1850 = vpop.f32.mrf.mxu0
        %v1851 = vpop.f32.mrf.mxu0
        %1852 = vdwg.mxu0
        %v1853 = vmax.f32 %v1560, 0.0
        %v1854 = vmax.f32 %v1562, 0.0
        %v1855 = vmax.f32 %v1601, 0.0
        %v1856 = vmax.f32 %v1603, 0.0
        %v1857 = vmax.f32 %v1642, 0.0
        %v1858 = vmax.f32 %v1644, 0.0
        %v1859 = vmax.f32 %v1683, 0.0
        %v1860 = vmax.f32 %v1685, 0.0
        %v1861 = vmax.f32 %v1724, 0.0
        %v1862 = vmax.f32 %v1726, 0.0
        %v1863 = vmax.f32 %v1765, 0.0
        %v1864 = vmax.f32 %v1767, 0.0
        %v1865 = vmax.f32 %v1806, 0.0
        %v1866 = vmax.f32 %v1808, 0.0
        %v1867 = vmax.f32 %v1847, 0.0
        %v1868 = vmax.f32 %v1849, 0.0
        %v1869 = vpack.c.bf16 %v1853, %v1853
        %v1870 = vpack.c.bf16 %v1854, %v1854
        %v1871 = vpack.c.bf16 %v1855, %v1855
        %v1872 = vpack.c.bf16 %v1856, %v1856
        %v1873 = vpack.c.bf16 %v1857, %v1857
        %v1874 = vpack.c.bf16 %v1858, %v1858
        %v1875 = vpack.c.bf16 %v1859, %v1859
        %v1876 = vpack.c.bf16 %v1860, %v1860
        %v1877 = vpack.c.bf16 %v1861, %v1861
        %v1878 = vpack.c.bf16 %v1862, %v1862
        %v1879 = vpack.c.bf16 %v1863, %v1863
        %v1880 = vpack.c.bf16 %v1864, %v1864
        %v1881 = vpack.c.bf16 %v1865, %v1865
        %v1882 = vpack.c.bf16 %v1866, %v1866
        %v1883 = vpack.c.bf16 %v1867, %v1867
        %v1884 = vpack.c.bf16 %v1868, %v1868
        %v1885 = vld [vmem:[%s532] sm:$0xff]
        %v1886 = vld [vmem:[%s532 + $0x8] sm:$0xff]
        %v1887 = vld [vmem:[%s532 + $0x10] sm:$0xff]
        %v1888 = vld [vmem:[%s532 + $0x18] sm:$0xff]
        %v1889 = vld [vmem:[%s532 + $0x20] sm:$0xff]
        %v1890 = vld [vmem:[%s532 + $0x28] sm:$0xff]
        %v1891 = vld [vmem:[%s532 + $0x30] sm:$0xff]
        %v1892 = vld [vmem:[%s532 + $0x38] sm:$0xff]
        %v1893 = vld [vmem:[%s532 + $0x40] sm:$0xff]
        %v1894 = vld [vmem:[%s532 + $0x48] sm:$0xff]
        %v1895 = vld [vmem:[%s532 + $0x50] sm:$0xff]
        %v1896 = vld [vmem:[%s532 + $0x58] sm:$0xff]
        %v1897 = vld [vmem:[%s532 + $0x60] sm:$0xff]
        %v1898 = vld [vmem:[%s532 + $0x68] sm:$0xff]
        %v1899 = vld [vmem:[%s532 + $0x70] sm:$0xff]
        %v1900 = vld [vmem:[%s532 + $0x78] sm:$0xff]
        %v1901 = vld [vmem:[%s532 + $0x80] sm:$0xff]
        %v1902 = vld [vmem:[%s532 + $0x88] sm:$0xff]
        %v1903 = vld [vmem:[%s532 + $0x90] sm:$0xff]
        %v1904 = vld [vmem:[%s532 + $0x98] sm:$0xff]
        %v1905 = vld [vmem:[%s532 + $0xa0] sm:$0xff]
        %v1906 = vld [vmem:[%s532 + $0xa8] sm:$0xff]
        %v1907 = vld [vmem:[%s532 + $0xb0] sm:$0xff]
        %v1908 = vld [vmem:[%s532 + $0xb8] sm:$0xff]
        %v1909 = vld [vmem:[%s532 + $0xc0] sm:$0xff]
        %v1910 = vld [vmem:[%s532 + $0xc8] sm:$0xff]
        %v1911 = vld [vmem:[%s532 + $0xd0] sm:$0xff]
        %v1912 = vld [vmem:[%s532 + $0xd8] sm:$0xff]
        %v1913 = vld [vmem:[%s532 + $0xe0] sm:$0xff]
        %v1914 = vld [vmem:[%s532 + $0xe8] sm:$0xff]
        %v1915 = vld [vmem:[%s532 + $0xf0] sm:$0xff]
        %v1916 = vld [vmem:[%s532 + $0xf8] sm:$0xff]
        %v1917 = vld [vmem:[%s532 + $0x100] sm:$0xff]
        %v1918 = vld [vmem:[%s532 + $0x108] sm:$0xff]
        %v1919 = vld [vmem:[%s532 + $0x110] sm:$0xff]
        %v1920 = vld [vmem:[%s532 + $0x118] sm:$0xff]
        %v1921 = vld [vmem:[%s532 + $0x120] sm:$0xff]
        %v1922 = vld [vmem:[%s532 + $0x128] sm:$0xff]
        %v1923 = vld [vmem:[%s532 + $0x130] sm:$0xff]
        %v1924 = vld [vmem:[%s532 + $0x138] sm:$0xff]
        %v1925 = vld [vmem:[%s532 + $0x140] sm:$0xff]
        %v1926 = vld [vmem:[%s532 + $0x148] sm:$0xff]
        %v1927 = vld [vmem:[%s532 + $0x150] sm:$0xff]
        %v1928 = vld [vmem:[%s532 + $0x158] sm:$0xff]
        %v1929 = vld [vmem:[%s532 + $0x160] sm:$0xff]
        %v1930 = vld [vmem:[%s532 + $0x168] sm:$0xff]
        %v1931 = vld [vmem:[%s532 + $0x170] sm:$0xff]
        %v1932 = vld [vmem:[%s532 + $0x178] sm:$0xff]
        %v1933 = vld [vmem:[%s532 + $0x180] sm:$0xff]
        %v1934 = vld [vmem:[%s532 + $0x188] sm:$0xff]
        %v1935 = vld [vmem:[%s532 + $0x190] sm:$0xff]
        %v1936 = vld [vmem:[%s532 + $0x198] sm:$0xff]
        %v1937 = vld [vmem:[%s532 + $0x1a0] sm:$0xff]
        %v1938 = vld [vmem:[%s532 + $0x1a8] sm:$0xff]
        %v1939 = vld [vmem:[%s532 + $0x1b0] sm:$0xff]
        %v1940 = vld [vmem:[%s532 + $0x1b8] sm:$0xff]
        %v1941 = vld [vmem:[%s532 + $0x1c0] sm:$0xff]
        %v1942 = vld [vmem:[%s532 + $0x1c8] sm:$0xff]
        %v1943 = vld [vmem:[%s532 + $0x1d0] sm:$0xff]
        %v1944 = vld [vmem:[%s532 + $0x1d8] sm:$0xff]
        %v1945 = vld [vmem:[%s532 + $0x1e0] sm:$0xff]
        %v1946 = vld [vmem:[%s532 + $0x1e8] sm:$0xff]
        %v1947 = vld [vmem:[%s532 + $0x1f0] sm:$0xff]
        %v1948 = vld [vmem:[%s532 + $0x1f8] sm:$0xff]
        %v1949 = vld [vmem:[%s532 + $0x200] sm:$0xff]
        %v1950 = vld [vmem:[%s532 + $0x208] sm:$0xff]
        %v1951 = vld [vmem:[%s532 + $0x210] sm:$0xff]
        %v1952 = vld [vmem:[%s532 + $0x218] sm:$0xff]
        %v1953 = vld [vmem:[%s532 + $0x220] sm:$0xff]
        %v1954 = vld [vmem:[%s532 + $0x228] sm:$0xff]
        %v1955 = vld [vmem:[%s532 + $0x230] sm:$0xff]
        %v1956 = vld [vmem:[%s532 + $0x238] sm:$0xff]
        %v1957 = vld [vmem:[%s532 + $0x240] sm:$0xff]
        %v1958 = vld [vmem:[%s532 + $0x248] sm:$0xff]
        %v1959 = vld [vmem:[%s532 + $0x250] sm:$0xff]
        %v1960 = vld [vmem:[%s532 + $0x258] sm:$0xff]
        %v1961 = vld [vmem:[%s532 + $0x260] sm:$0xff]
        %v1962 = vld [vmem:[%s532 + $0x268] sm:$0xff]
        %v1963 = vld [vmem:[%s532 + $0x270] sm:$0xff]
        %v1964 = vld [vmem:[%s532 + $0x278] sm:$0xff]
        %v1965 = vld [vmem:[%s532 + $0x280] sm:$0xff]
        %v1966 = vld [vmem:[%s532 + $0x288] sm:$0xff]
        %v1967 = vld [vmem:[%s532 + $0x290] sm:$0xff]
        %v1968 = vld [vmem:[%s532 + $0x298] sm:$0xff]
        %v1969 = vld [vmem:[%s532 + $0x2a0] sm:$0xff]
        %v1970 = vld [vmem:[%s532 + $0x2a8] sm:$0xff]
        %v1971 = vld [vmem:[%s532 + $0x2b0] sm:$0xff]
        %v1972 = vld [vmem:[%s532 + $0x2b8] sm:$0xff]
        %v1973 = vld [vmem:[%s532 + $0x2c0] sm:$0xff]
        %v1974 = vld [vmem:[%s532 + $0x2c8] sm:$0xff]
        %v1975 = vld [vmem:[%s532 + $0x2d0] sm:$0xff]
        %v1976 = vld [vmem:[%s532 + $0x2d8] sm:$0xff]
        %v1977 = vld [vmem:[%s532 + $0x2e0] sm:$0xff]
        %v1978 = vld [vmem:[%s532 + $0x2e8] sm:$0xff]
        %v1979 = vld [vmem:[%s532 + $0x2f0] sm:$0xff]
        %v1980 = vld [vmem:[%s532 + $0x2f8] sm:$0xff]
        %v1981 = vld [vmem:[%s532 + $0x300] sm:$0xff]
        %v1982 = vld [vmem:[%s532 + $0x308] sm:$0xff]
        %v1983 = vld [vmem:[%s532 + $0x310] sm:$0xff]
        %v1984 = vld [vmem:[%s532 + $0x318] sm:$0xff]
        %v1985 = vld [vmem:[%s532 + $0x320] sm:$0xff]
        %v1986 = vld [vmem:[%s532 + $0x328] sm:$0xff]
        %v1987 = vld [vmem:[%s532 + $0x330] sm:$0xff]
        %v1988 = vld [vmem:[%s532 + $0x338] sm:$0xff]
        %v1989 = vld [vmem:[%s532 + $0x340] sm:$0xff]
        %v1990 = vld [vmem:[%s532 + $0x348] sm:$0xff]
        %v1991 = vld [vmem:[%s532 + $0x350] sm:$0xff]
        %v1992 = vld [vmem:[%s532 + $0x358] sm:$0xff]
        %v1993 = vld [vmem:[%s532 + $0x360] sm:$0xff]
        %v1994 = vld [vmem:[%s532 + $0x368] sm:$0xff]
        %v1995 = vld [vmem:[%s532 + $0x370] sm:$0xff]
        %v1996 = vld [vmem:[%s532 + $0x378] sm:$0xff]
        %v1997 = vld [vmem:[%s532 + $0x380] sm:$0xff]
        %v1998 = vld [vmem:[%s532 + $0x388] sm:$0xff]
        %v1999 = vld [vmem:[%s532 + $0x390] sm:$0xff]
        %v2000 = vld [vmem:[%s532 + $0x398] sm:$0xff]
        %v2001 = vld [vmem:[%s532 + $0x3a0] sm:$0xff]
        %v2002 = vld [vmem:[%s532 + $0x3a8] sm:$0xff]
        %v2003 = vld [vmem:[%s532 + $0x3b0] sm:$0xff]
        %v2004 = vld [vmem:[%s532 + $0x3b8] sm:$0xff]
        %v2005 = vld [vmem:[%s532 + $0x3c0] sm:$0xff]
        %v2006 = vld [vmem:[%s532 + $0x3c8] sm:$0xff]
        %v2007 = vld [vmem:[%s532 + $0x3d0] sm:$0xff]
        %v2008 = vld [vmem:[%s532 + $0x3d8] sm:$0xff]
        %v2009 = vld [vmem:[%s532 + $0x3e0] sm:$0xff]
        %v2010 = vld [vmem:[%s532 + $0x3e8] sm:$0xff]
        %v2011 = vld [vmem:[%s532 + $0x3f0] sm:$0xff]
        %v2012 = vld [vmem:[%s532 + $0x3f8] sm:$0xff]
        %v2013 = vld [vmem:[%s532 + $0x400] sm:$0xff]
        %v2014 = vld [vmem:[%s532 + $0x408] sm:$0xff]
        %v2015 = vld [vmem:[%s532 + $0x410] sm:$0xff]
        %v2016 = vld [vmem:[%s532 + $0x418] sm:$0xff]
        %v2017 = vld [vmem:[%s532 + $0x420] sm:$0xff]
        %v2018 = vld [vmem:[%s532 + $0x428] sm:$0xff]
        %v2019 = vld [vmem:[%s532 + $0x430] sm:$0xff]
        %v2020 = vld [vmem:[%s532 + $0x438] sm:$0xff]
        %v2021 = vld [vmem:[%s532 + $0x440] sm:$0xff]
        %v2022 = vld [vmem:[%s532 + $0x448] sm:$0xff]
        %v2023 = vld [vmem:[%s532 + $0x450] sm:$0xff]
        %v2024 = vld [vmem:[%s532 + $0x458] sm:$0xff]
        %v2025 = vld [vmem:[%s532 + $0x460] sm:$0xff]
        %v2026 = vld [vmem:[%s532 + $0x468] sm:$0xff]
        %v2027 = vld [vmem:[%s532 + $0x470] sm:$0xff]
        %v2028 = vld [vmem:[%s532 + $0x478] sm:$0xff]
        %v2029 = vld [vmem:[%s532 + $0x480] sm:$0xff]
        %v2030 = vld [vmem:[%s532 + $0x488] sm:$0xff]
        %v2031 = vld [vmem:[%s532 + $0x490] sm:$0xff]
        %v2032 = vld [vmem:[%s532 + $0x498] sm:$0xff]
        %v2033 = vld [vmem:[%s532 + $0x4a0] sm:$0xff]
        %v2034 = vld [vmem:[%s532 + $0x4a8] sm:$0xff]
        %v2035 = vld [vmem:[%s532 + $0x4b0] sm:$0xff]
        %v2036 = vld [vmem:[%s532 + $0x4b8] sm:$0xff]
        %v2037 = vld [vmem:[%s532 + $0x4c0] sm:$0xff]
        %v2038 = vld [vmem:[%s532 + $0x4c8] sm:$0xff]
        %v2039 = vld [vmem:[%s532 + $0x4d0] sm:$0xff]
        %v2040 = vld [vmem:[%s532 + $0x4d8] sm:$0xff]
        %v2041 = vld [vmem:[%s532 + $0x4e0] sm:$0xff]
        %v2042 = vld [vmem:[%s532 + $0x4e8] sm:$0xff]
        %v2043 = vld [vmem:[%s532 + $0x4f0] sm:$0xff]
        %v2044 = vld [vmem:[%s532 + $0x4f8] sm:$0xff]
        %v2045 = vld [vmem:[%s532 + $0x500] sm:$0xff]
        %v2046 = vld [vmem:[%s532 + $0x508] sm:$0xff]
        %v2047 = vld [vmem:[%s532 + $0x510] sm:$0xff]
        %v2048 = vld [vmem:[%s532 + $0x518] sm:$0xff]
        %v2049 = vld [vmem:[%s532 + $0x520] sm:$0xff]
        %v2050 = vld [vmem:[%s532 + $0x528] sm:$0xff]
        %v2051 = vld [vmem:[%s532 + $0x530] sm:$0xff]
        %v2052 = vld [vmem:[%s532 + $0x538] sm:$0xff]
        %v2053 = vld [vmem:[%s532 + $0x540] sm:$0xff]
        %v2054 = vld [vmem:[%s532 + $0x548] sm:$0xff]
        %v2055 = vld [vmem:[%s532 + $0x550] sm:$0xff]
        %v2056 = vld [vmem:[%s532 + $0x558] sm:$0xff]
        %v2057 = vld [vmem:[%s532 + $0x560] sm:$0xff]
        %v2058 = vld [vmem:[%s532 + $0x568] sm:$0xff]
        %v2059 = vld [vmem:[%s532 + $0x570] sm:$0xff]
        %v2060 = vld [vmem:[%s532 + $0x578] sm:$0xff]
        %v2061 = vld [vmem:[%s532 + $0x580] sm:$0xff]
        %v2062 = vld [vmem:[%s532 + $0x588] sm:$0xff]
        %v2063 = vld [vmem:[%s532 + $0x590] sm:$0xff]
        %v2064 = vld [vmem:[%s532 + $0x598] sm:$0xff]
        %v2065 = vld [vmem:[%s532 + $0x5a0] sm:$0xff]
        %v2066 = vld [vmem:[%s532 + $0x5a8] sm:$0xff]
        %v2067 = vld [vmem:[%s532 + $0x5b0] sm:$0xff]
        %v2068 = vld [vmem:[%s532 + $0x5b8] sm:$0xff]
        %v2069 = vld [vmem:[%s532 + $0x5c0] sm:$0xff]
        %v2070 = vld [vmem:[%s532 + $0x5c8] sm:$0xff]
        %v2071 = vld [vmem:[%s532 + $0x5d0] sm:$0xff]
        %v2072 = vld [vmem:[%s532 + $0x5d8] sm:$0xff]
        %v2073 = vld [vmem:[%s532 + $0x5e0] sm:$0xff]
        %v2074 = vld [vmem:[%s532 + $0x5e8] sm:$0xff]
        %v2075 = vld [vmem:[%s532 + $0x5f0] sm:$0xff]
        %v2076 = vld [vmem:[%s532 + $0x5f8] sm:$0xff]
        %v2077 = vld [vmem:[%s532 + $0x600] sm:$0xff]
        %v2078 = vld [vmem:[%s532 + $0x608] sm:$0xff]
        %v2079 = vld [vmem:[%s532 + $0x610] sm:$0xff]
        %v2080 = vld [vmem:[%s532 + $0x618] sm:$0xff]
        %v2081 = vld [vmem:[%s532 + $0x620] sm:$0xff]
        %v2082 = vld [vmem:[%s532 + $0x628] sm:$0xff]
        %v2083 = vld [vmem:[%s532 + $0x630] sm:$0xff]
        %v2084 = vld [vmem:[%s532 + $0x638] sm:$0xff]
        %v2085 = vld [vmem:[%s532 + $0x640] sm:$0xff]
        %v2086 = vld [vmem:[%s532 + $0x648] sm:$0xff]
        %v2087 = vld [vmem:[%s532 + $0x650] sm:$0xff]
        %v2088 = vld [vmem:[%s532 + $0x658] sm:$0xff]
        %v2089 = vld [vmem:[%s532 + $0x660] sm:$0xff]
        %v2090 = vld [vmem:[%s532 + $0x668] sm:$0xff]
        %v2091 = vld [vmem:[%s532 + $0x670] sm:$0xff]
        %v2092 = vld [vmem:[%s532 + $0x678] sm:$0xff]
        %v2093 = vld [vmem:[%s532 + $0x680] sm:$0xff]
        %v2094 = vld [vmem:[%s532 + $0x688] sm:$0xff]
        %v2095 = vld [vmem:[%s532 + $0x690] sm:$0xff]
        %v2096 = vld [vmem:[%s532 + $0x698] sm:$0xff]
        %v2097 = vld [vmem:[%s532 + $0x6a0] sm:$0xff]
        %v2098 = vld [vmem:[%s532 + $0x6a8] sm:$0xff]
        %v2099 = vld [vmem:[%s532 + $0x6b0] sm:$0xff]
        %v2100 = vld [vmem:[%s532 + $0x6b8] sm:$0xff]
        %v2101 = vld [vmem:[%s532 + $0x6c0] sm:$0xff]
        %v2102 = vld [vmem:[%s532 + $0x6c8] sm:$0xff]
        %v2103 = vld [vmem:[%s532 + $0x6d0] sm:$0xff]
        %v2104 = vld [vmem:[%s532 + $0x6d8] sm:$0xff]
        %v2105 = vld [vmem:[%s532 + $0x6e0] sm:$0xff]
        %v2106 = vld [vmem:[%s532 + $0x6e8] sm:$0xff]
        %v2107 = vld [vmem:[%s532 + $0x6f0] sm:$0xff]
        %v2108 = vld [vmem:[%s532 + $0x6f8] sm:$0xff]
        %v2109 = vld [vmem:[%s532 + $0x700] sm:$0xff]
        %v2110 = vld [vmem:[%s532 + $0x708] sm:$0xff]
        %v2111 = vld [vmem:[%s532 + $0x710] sm:$0xff]
        %v2112 = vld [vmem:[%s532 + $0x718] sm:$0xff]
        %v2113 = vld [vmem:[%s532 + $0x720] sm:$0xff]
        %v2114 = vld [vmem:[%s532 + $0x728] sm:$0xff]
        %v2115 = vld [vmem:[%s532 + $0x730] sm:$0xff]
        %v2116 = vld [vmem:[%s532 + $0x738] sm:$0xff]
        %v2117 = vld [vmem:[%s532 + $0x740] sm:$0xff]
        %v2118 = vld [vmem:[%s532 + $0x748] sm:$0xff]
        %v2119 = vld [vmem:[%s532 + $0x750] sm:$0xff]
        %v2120 = vld [vmem:[%s532 + $0x758] sm:$0xff]
        %v2121 = vld [vmem:[%s532 + $0x760] sm:$0xff]
        %v2122 = vld [vmem:[%s532 + $0x768] sm:$0xff]
        %v2123 = vld [vmem:[%s532 + $0x770] sm:$0xff]
        %v2124 = vld [vmem:[%s532 + $0x778] sm:$0xff]
        %v2125 = vld [vmem:[%s532 + $0x780] sm:$0xff]
        %v2126 = vld [vmem:[%s532 + $0x788] sm:$0xff]
        %v2127 = vld [vmem:[%s532 + $0x790] sm:$0xff]
        %v2128 = vld [vmem:[%s532 + $0x798] sm:$0xff]
        %v2129 = vld [vmem:[%s532 + $0x7a0] sm:$0xff]
        %v2130 = vld [vmem:[%s532 + $0x7a8] sm:$0xff]
        %v2131 = vld [vmem:[%s532 + $0x7b0] sm:$0xff]
        %v2132 = vld [vmem:[%s532 + $0x7b8] sm:$0xff]
        %v2133 = vld [vmem:[%s532 + $0x7c0] sm:$0xff]
        %v2134 = vld [vmem:[%s532 + $0x7c8] sm:$0xff]
        %v2135 = vld [vmem:[%s532 + $0x7d0] sm:$0xff]
        %v2136 = vld [vmem:[%s532 + $0x7d8] sm:$0xff]
        %v2137 = vld [vmem:[%s532 + $0x7e0] sm:$0xff]
        %v2138 = vld [vmem:[%s532 + $0x7e8] sm:$0xff]
        %v2139 = vld [vmem:[%s532 + $0x7f0] sm:$0xff]
        %v2140 = vld [vmem:[%s532 + $0x7f8] sm:$0xff]
        %v2141 = vld [vmem:[%s532 + $0x800] sm:$0xff]
        %v2142 = vld [vmem:[%s532 + $0x808] sm:$0xff]
        %v2143 = vld [vmem:[%s532 + $0x810] sm:$0xff]
        %v2144 = vld [vmem:[%s532 + $0x818] sm:$0xff]
        %v2145 = vld [vmem:[%s532 + $0x820] sm:$0xff]
        %v2146 = vld [vmem:[%s532 + $0x828] sm:$0xff]
        %v2147 = vld [vmem:[%s532 + $0x830] sm:$0xff]
        %v2148 = vld [vmem:[%s532 + $0x838] sm:$0xff]
        %v2149 = vld [vmem:[%s532 + $0x840] sm:$0xff]
        %v2150 = vld [vmem:[%s532 + $0x848] sm:$0xff]
        %v2151 = vld [vmem:[%s532 + $0x850] sm:$0xff]
        %v2152 = vld [vmem:[%s532 + $0x858] sm:$0xff]
        %v2153 = vld [vmem:[%s532 + $0x860] sm:$0xff]
        %v2154 = vld [vmem:[%s532 + $0x868] sm:$0xff]
        %v2155 = vld [vmem:[%s532 + $0x870] sm:$0xff]
        %v2156 = vld [vmem:[%s532 + $0x878] sm:$0xff]
        %v2157 = vld [vmem:[%s532 + $0x880] sm:$0xff]
        %v2158 = vld [vmem:[%s532 + $0x888] sm:$0xff]
        %v2159 = vld [vmem:[%s532 + $0x890] sm:$0xff]
        %v2160 = vld [vmem:[%s532 + $0x898] sm:$0xff]
        %v2161 = vld [vmem:[%s532 + $0x8a0] sm:$0xff]
        %v2162 = vld [vmem:[%s532 + $0x8a8] sm:$0xff]
        %v2163 = vld [vmem:[%s532 + $0x8b0] sm:$0xff]
        %v2164 = vld [vmem:[%s532 + $0x8b8] sm:$0xff]
        %v2165 = vld [vmem:[%s532 + $0x8c0] sm:$0xff]
        %v2166 = vld [vmem:[%s532 + $0x8c8] sm:$0xff]
        %v2167 = vld [vmem:[%s532 + $0x8d0] sm:$0xff]
        %v2168 = vld [vmem:[%s532 + $0x8d8] sm:$0xff]
        %v2169 = vld [vmem:[%s532 + $0x8e0] sm:$0xff]
        %v2170 = vld [vmem:[%s532 + $0x8e8] sm:$0xff]
        %v2171 = vld [vmem:[%s532 + $0x8f0] sm:$0xff]
        %v2172 = vld [vmem:[%s532 + $0x8f8] sm:$0xff]
        %v2173 = vld [vmem:[%s532 + $0x900] sm:$0xff]
        %v2174 = vld [vmem:[%s532 + $0x908] sm:$0xff]
        %v2175 = vld [vmem:[%s532 + $0x910] sm:$0xff]
        %v2176 = vld [vmem:[%s532 + $0x918] sm:$0xff]
        %v2177 = vld [vmem:[%s532 + $0x920] sm:$0xff]
        %v2178 = vld [vmem:[%s532 + $0x928] sm:$0xff]
        %v2179 = vld [vmem:[%s532 + $0x930] sm:$0xff]
        %v2180 = vld [vmem:[%s532 + $0x938] sm:$0xff]
        %v2181 = vld [vmem:[%s532 + $0x940] sm:$0xff]
        %v2182 = vld [vmem:[%s532 + $0x948] sm:$0xff]
        %v2183 = vld [vmem:[%s532 + $0x950] sm:$0xff]
        %v2184 = vld [vmem:[%s532 + $0x958] sm:$0xff]
        %v2185 = vld [vmem:[%s532 + $0x960] sm:$0xff]
        %v2186 = vld [vmem:[%s532 + $0x968] sm:$0xff]
        %v2187 = vld [vmem:[%s532 + $0x970] sm:$0xff]
        %v2188 = vld [vmem:[%s532 + $0x978] sm:$0xff]
        %v2189 = vld [vmem:[%s532 + $0x980] sm:$0xff]
        %v2190 = vld [vmem:[%s532 + $0x988] sm:$0xff]
        %v2191 = vld [vmem:[%s532 + $0x990] sm:$0xff]
        %v2192 = vld [vmem:[%s532 + $0x998] sm:$0xff]
        %v2193 = vld [vmem:[%s532 + $0x9a0] sm:$0xff]
        %v2194 = vld [vmem:[%s532 + $0x9a8] sm:$0xff]
        %v2195 = vld [vmem:[%s532 + $0x9b0] sm:$0xff]
        %v2196 = vld [vmem:[%s532 + $0x9b8] sm:$0xff]
        %v2197 = vld [vmem:[%s532 + $0x9c0] sm:$0xff]
        %v2198 = vld [vmem:[%s532 + $0x9c8] sm:$0xff]
        %v2199 = vld [vmem:[%s532 + $0x9d0] sm:$0xff]
        %v2200 = vld [vmem:[%s532 + $0x9d8] sm:$0xff]
        %v2201 = vld [vmem:[%s532 + $0x9e0] sm:$0xff]
        %v2202 = vld [vmem:[%s532 + $0x9e8] sm:$0xff]
        %v2203 = vld [vmem:[%s532 + $0x9f0] sm:$0xff]
        %v2204 = vld [vmem:[%s532 + $0x9f8] sm:$0xff]
        %v2205 = vld [vmem:[%s532 + $0xa00] sm:$0xff]
        %v2206 = vld [vmem:[%s532 + $0xa08] sm:$0xff]
        %v2207 = vld [vmem:[%s532 + $0xa10] sm:$0xff]
        %v2208 = vld [vmem:[%s532 + $0xa18] sm:$0xff]
        %v2209 = vld [vmem:[%s532 + $0xa20] sm:$0xff]
        %v2210 = vld [vmem:[%s532 + $0xa28] sm:$0xff]
        %v2211 = vld [vmem:[%s532 + $0xa30] sm:$0xff]
        %v2212 = vld [vmem:[%s532 + $0xa38] sm:$0xff]
        %v2213 = vld [vmem:[%s532 + $0xa40] sm:$0xff]
        %v2214 = vld [vmem:[%s532 + $0xa48] sm:$0xff]
        %v2215 = vld [vmem:[%s532 + $0xa50] sm:$0xff]
        %v2216 = vld [vmem:[%s532 + $0xa58] sm:$0xff]
        %v2217 = vld [vmem:[%s532 + $0xa60] sm:$0xff]
        %v2218 = vld [vmem:[%s532 + $0xa68] sm:$0xff]
        %v2219 = vld [vmem:[%s532 + $0xa70] sm:$0xff]
        %v2220 = vld [vmem:[%s532 + $0xa78] sm:$0xff]
        %v2221 = vld [vmem:[%s532 + $0xa80] sm:$0xff]
        %v2222 = vld [vmem:[%s532 + $0xa88] sm:$0xff]
        %v2223 = vld [vmem:[%s532 + $0xa90] sm:$0xff]
        %v2224 = vld [vmem:[%s532 + $0xa98] sm:$0xff]
        %v2225 = vld [vmem:[%s532 + $0xaa0] sm:$0xff]
        %v2226 = vld [vmem:[%s532 + $0xaa8] sm:$0xff]
        %v2227 = vld [vmem:[%s532 + $0xab0] sm:$0xff]
        %v2228 = vld [vmem:[%s532 + $0xab8] sm:$0xff]
        %v2229 = vld [vmem:[%s532 + $0xac0] sm:$0xff]
        %v2230 = vld [vmem:[%s532 + $0xac8] sm:$0xff]
        %v2231 = vld [vmem:[%s532 + $0xad0] sm:$0xff]
        %v2232 = vld [vmem:[%s532 + $0xad8] sm:$0xff]
        %v2233 = vld [vmem:[%s532 + $0xae0] sm:$0xff]
        %v2234 = vld [vmem:[%s532 + $0xae8] sm:$0xff]
        %v2235 = vld [vmem:[%s532 + $0xaf0] sm:$0xff]
        %v2236 = vld [vmem:[%s532 + $0xaf8] sm:$0xff]
        %v2237 = vld [vmem:[%s532 + $0xb00] sm:$0xff]
        %v2238 = vld [vmem:[%s532 + $0xb08] sm:$0xff]
        %v2239 = vld [vmem:[%s532 + $0xb10] sm:$0xff]
        %v2240 = vld [vmem:[%s532 + $0xb18] sm:$0xff]
        %v2241 = vld [vmem:[%s532 + $0xb20] sm:$0xff]
        %v2242 = vld [vmem:[%s532 + $0xb28] sm:$0xff]
        %v2243 = vld [vmem:[%s532 + $0xb30] sm:$0xff]
        %v2244 = vld [vmem:[%s532 + $0xb38] sm:$0xff]
        %v2245 = vld [vmem:[%s532 + $0xb40] sm:$0xff]
        %v2246 = vld [vmem:[%s532 + $0xb48] sm:$0xff]
        %v2247 = vld [vmem:[%s532 + $0xb50] sm:$0xff]
        %v2248 = vld [vmem:[%s532 + $0xb58] sm:$0xff]
        %v2249 = vld [vmem:[%s532 + $0xb60] sm:$0xff]
        %v2250 = vld [vmem:[%s532 + $0xb68] sm:$0xff]
        %v2251 = vld [vmem:[%s532 + $0xb70] sm:$0xff]
        %v2252 = vld [vmem:[%s532 + $0xb78] sm:$0xff]
        %v2253 = vld [vmem:[%s532 + $0xb80] sm:$0xff]
        %v2254 = vld [vmem:[%s532 + $0xb88] sm:$0xff]
        %v2255 = vld [vmem:[%s532 + $0xb90] sm:$0xff]
        %v2256 = vld [vmem:[%s532 + $0xb98] sm:$0xff]
        %v2257 = vld [vmem:[%s532 + $0xba0] sm:$0xff]
        %v2258 = vld [vmem:[%s532 + $0xba8] sm:$0xff]
        %v2259 = vld [vmem:[%s532 + $0xbb0] sm:$0xff]
        %v2260 = vld [vmem:[%s532 + $0xbb8] sm:$0xff]
        %v2261 = vld [vmem:[%s532 + $0xbc0] sm:$0xff]
        %v2262 = vld [vmem:[%s532 + $0xbc8] sm:$0xff]
        %v2263 = vld [vmem:[%s532 + $0xbd0] sm:$0xff]
        %v2264 = vld [vmem:[%s532 + $0xbd8] sm:$0xff]
        %v2265 = vld [vmem:[%s532 + $0xbe0] sm:$0xff]
        %v2266 = vld [vmem:[%s532 + $0xbe8] sm:$0xff]
        %v2267 = vld [vmem:[%s532 + $0xbf0] sm:$0xff]
        %v2268 = vld [vmem:[%s532 + $0xbf8] sm:$0xff]
        %v2269 = vld [vmem:[%s532 + $0xc00] sm:$0xff]
        %v2270 = vld [vmem:[%s532 + $0xc08] sm:$0xff]
        %v2271 = vld [vmem:[%s532 + $0xc10] sm:$0xff]
        %v2272 = vld [vmem:[%s532 + $0xc18] sm:$0xff]
        %v2273 = vld [vmem:[%s532 + $0xc20] sm:$0xff]
        %v2274 = vld [vmem:[%s532 + $0xc28] sm:$0xff]
        %v2275 = vld [vmem:[%s532 + $0xc30] sm:$0xff]
        %v2276 = vld [vmem:[%s532 + $0xc38] sm:$0xff]
        %v2277 = vld [vmem:[%s532 + $0xc40] sm:$0xff]
        %v2278 = vld [vmem:[%s532 + $0xc48] sm:$0xff]
        %v2279 = vld [vmem:[%s532 + $0xc50] sm:$0xff]
        %v2280 = vld [vmem:[%s532 + $0xc58] sm:$0xff]
        %v2281 = vld [vmem:[%s532 + $0xc60] sm:$0xff]
        %v2282 = vld [vmem:[%s532 + $0xc68] sm:$0xff]
        %v2283 = vld [vmem:[%s532 + $0xc70] sm:$0xff]
        %v2284 = vld [vmem:[%s532 + $0xc78] sm:$0xff]
        %v2285 = vld [vmem:[%s532 + $0xc80] sm:$0xff]
        %v2286 = vld [vmem:[%s532 + $0xc88] sm:$0xff]
        %v2287 = vld [vmem:[%s532 + $0xc90] sm:$0xff]
        %v2288 = vld [vmem:[%s532 + $0xc98] sm:$0xff]
        %v2289 = vld [vmem:[%s532 + $0xca0] sm:$0xff]
        %v2290 = vld [vmem:[%s532 + $0xca8] sm:$0xff]
        %v2291 = vld [vmem:[%s532 + $0xcb0] sm:$0xff]
        %v2292 = vld [vmem:[%s532 + $0xcb8] sm:$0xff]
        %v2293 = vld [vmem:[%s532 + $0xcc0] sm:$0xff]
        %v2294 = vld [vmem:[%s532 + $0xcc8] sm:$0xff]
        %v2295 = vld [vmem:[%s532 + $0xcd0] sm:$0xff]
        %v2296 = vld [vmem:[%s532 + $0xcd8] sm:$0xff]
        %v2297 = vld [vmem:[%s532 + $0xce0] sm:$0xff]
        %v2298 = vld [vmem:[%s532 + $0xce8] sm:$0xff]
        %v2299 = vld [vmem:[%s532 + $0xcf0] sm:$0xff]
        %v2300 = vld [vmem:[%s532 + $0xcf8] sm:$0xff]
        %v2301 = vld [vmem:[%s532 + $0xd00] sm:$0xff]
        %v2302 = vld [vmem:[%s532 + $0xd08] sm:$0xff]
        %v2303 = vld [vmem:[%s532 + $0xd10] sm:$0xff]
        %v2304 = vld [vmem:[%s532 + $0xd18] sm:$0xff]
        %v2305 = vld [vmem:[%s532 + $0xd20] sm:$0xff]
        %v2306 = vld [vmem:[%s532 + $0xd28] sm:$0xff]
        %v2307 = vld [vmem:[%s532 + $0xd30] sm:$0xff]
        %v2308 = vld [vmem:[%s532 + $0xd38] sm:$0xff]
        %v2309 = vld [vmem:[%s532 + $0xd40] sm:$0xff]
        %v2310 = vld [vmem:[%s532 + $0xd48] sm:$0xff]
        %v2311 = vld [vmem:[%s532 + $0xd50] sm:$0xff]
        %v2312 = vld [vmem:[%s532 + $0xd58] sm:$0xff]
        %v2313 = vld [vmem:[%s532 + $0xd60] sm:$0xff]
        %v2314 = vld [vmem:[%s532 + $0xd68] sm:$0xff]
        %v2315 = vld [vmem:[%s532 + $0xd70] sm:$0xff]
        %v2316 = vld [vmem:[%s532 + $0xd78] sm:$0xff]
        %v2317 = vld [vmem:[%s532 + $0xd80] sm:$0xff]
        %v2318 = vld [vmem:[%s532 + $0xd88] sm:$0xff]
        %v2319 = vld [vmem:[%s532 + $0xd90] sm:$0xff]
        %v2320 = vld [vmem:[%s532 + $0xd98] sm:$0xff]
        %v2321 = vld [vmem:[%s532 + $0xda0] sm:$0xff]
        %v2322 = vld [vmem:[%s532 + $0xda8] sm:$0xff]
        %v2323 = vld [vmem:[%s532 + $0xdb0] sm:$0xff]
        %v2324 = vld [vmem:[%s532 + $0xdb8] sm:$0xff]
        %v2325 = vld [vmem:[%s532 + $0xdc0] sm:$0xff]
        %v2326 = vld [vmem:[%s532 + $0xdc8] sm:$0xff]
        %v2327 = vld [vmem:[%s532 + $0xdd0] sm:$0xff]
        %v2328 = vld [vmem:[%s532 + $0xdd8] sm:$0xff]
        %v2329 = vld [vmem:[%s532 + $0xde0] sm:$0xff]
        %v2330 = vld [vmem:[%s532 + $0xde8] sm:$0xff]
        %v2331 = vld [vmem:[%s532 + $0xdf0] sm:$0xff]
        %v2332 = vld [vmem:[%s532 + $0xdf8] sm:$0xff]
        %v2333 = vld [vmem:[%s532 + $0xe00] sm:$0xff]
        %v2334 = vld [vmem:[%s532 + $0xe08] sm:$0xff]
        %v2335 = vld [vmem:[%s532 + $0xe10] sm:$0xff]
        %v2336 = vld [vmem:[%s532 + $0xe18] sm:$0xff]
        %v2337 = vld [vmem:[%s532 + $0xe20] sm:$0xff]
        %v2338 = vld [vmem:[%s532 + $0xe28] sm:$0xff]
        %v2339 = vld [vmem:[%s532 + $0xe30] sm:$0xff]
        %v2340 = vld [vmem:[%s532 + $0xe38] sm:$0xff]
        %v2341 = vld [vmem:[%s532 + $0xe40] sm:$0xff]
        %v2342 = vld [vmem:[%s532 + $0xe48] sm:$0xff]
        %v2343 = vld [vmem:[%s532 + $0xe50] sm:$0xff]
        %v2344 = vld [vmem:[%s532 + $0xe58] sm:$0xff]
        %v2345 = vld [vmem:[%s532 + $0xe60] sm:$0xff]
        %v2346 = vld [vmem:[%s532 + $0xe68] sm:$0xff]
        %v2347 = vld [vmem:[%s532 + $0xe70] sm:$0xff]
        %v2348 = vld [vmem:[%s532 + $0xe78] sm:$0xff]
        %v2349 = vld [vmem:[%s532 + $0xe80] sm:$0xff]
        %v2350 = vld [vmem:[%s532 + $0xe88] sm:$0xff]
        %v2351 = vld [vmem:[%s532 + $0xe90] sm:$0xff]
        %v2352 = vld [vmem:[%s532 + $0xe98] sm:$0xff]
        %v2353 = vld [vmem:[%s532 + $0xea0] sm:$0xff]
        %v2354 = vld [vmem:[%s532 + $0xea8] sm:$0xff]
        %v2355 = vld [vmem:[%s532 + $0xeb0] sm:$0xff]
        %v2356 = vld [vmem:[%s532 + $0xeb8] sm:$0xff]
        %v2357 = vld [vmem:[%s532 + $0xec0] sm:$0xff]
        %v2358 = vld [vmem:[%s532 + $0xec8] sm:$0xff]
        %v2359 = vld [vmem:[%s532 + $0xed0] sm:$0xff]
        %v2360 = vld [vmem:[%s532 + $0xed8] sm:$0xff]
        %v2361 = vld [vmem:[%s532 + $0xee0] sm:$0xff]
        %v2362 = vld [vmem:[%s532 + $0xee8] sm:$0xff]
        %v2363 = vld [vmem:[%s532 + $0xef0] sm:$0xff]
        %v2364 = vld [vmem:[%s532 + $0xef8] sm:$0xff]
        %v2365 = vld [vmem:[%s532 + $0xf00] sm:$0xff]
        %v2366 = vld [vmem:[%s532 + $0xf08] sm:$0xff]
        %v2367 = vld [vmem:[%s532 + $0xf10] sm:$0xff]
        %v2368 = vld [vmem:[%s532 + $0xf18] sm:$0xff]
        %v2369 = vld [vmem:[%s532 + $0xf20] sm:$0xff]
        %v2370 = vld [vmem:[%s532 + $0xf28] sm:$0xff]
        %v2371 = vld [vmem:[%s532 + $0xf30] sm:$0xff]
        %v2372 = vld [vmem:[%s532 + $0xf38] sm:$0xff]
        %v2373 = vld [vmem:[%s532 + $0xf40] sm:$0xff]
        %v2374 = vld [vmem:[%s532 + $0xf48] sm:$0xff]
        %v2375 = vld [vmem:[%s532 + $0xf50] sm:$0xff]
        %v2376 = vld [vmem:[%s532 + $0xf58] sm:$0xff]
        %v2377 = vld [vmem:[%s532 + $0xf60] sm:$0xff]
        %v2378 = vld [vmem:[%s532 + $0xf68] sm:$0xff]
        %v2379 = vld [vmem:[%s532 + $0xf70] sm:$0xff]
        %v2380 = vld [vmem:[%s532 + $0xf78] sm:$0xff]
        %v2381 = vld [vmem:[%s532 + $0xf80] sm:$0xff]
        %v2382 = vld [vmem:[%s532 + $0xf88] sm:$0xff]
        %v2383 = vld [vmem:[%s532 + $0xf90] sm:$0xff]
        %v2384 = vld [vmem:[%s532 + $0xf98] sm:$0xff]
        %v2385 = vld [vmem:[%s532 + $0xfa0] sm:$0xff]
        %v2386 = vld [vmem:[%s532 + $0xfa8] sm:$0xff]
        %v2387 = vld [vmem:[%s532 + $0xfb0] sm:$0xff]
        %v2388 = vld [vmem:[%s532 + $0xfb8] sm:$0xff]
        %v2389 = vld [vmem:[%s532 + $0xfc0] sm:$0xff]
        %v2390 = vld [vmem:[%s532 + $0xfc8] sm:$0xff]
        %v2391 = vld [vmem:[%s532 + $0xfd0] sm:$0xff]
        %v2392 = vld [vmem:[%s532 + $0xfd8] sm:$0xff]
        %v2393 = vld [vmem:[%s532 + $0xfe0] sm:$0xff]
        %v2394 = vld [vmem:[%s532 + $0xfe8] sm:$0xff]
        %v2395 = vld [vmem:[%s532 + $0xff0] sm:$0xff]
        %v2396 = vld [vmem:[%s532 + $0xff8] sm:$0xff]
        %v2397 = vld [vmem:[%s532 + $0x1000] sm:$0xff]
        %v2398 = vld [vmem:[%s532 + $0x1008] sm:$0xff]
        %v2399 = vld [vmem:[%s532 + $0x1010] sm:$0xff]
        %v2400 = vld [vmem:[%s532 + $0x1018] sm:$0xff]
        %v2401 = vld [vmem:[%s532 + $0x1020] sm:$0xff]
        %v2402 = vld [vmem:[%s532 + $0x1028] sm:$0xff]
        %v2403 = vld [vmem:[%s532 + $0x1030] sm:$0xff]
        %v2404 = vld [vmem:[%s532 + $0x1038] sm:$0xff]
        %v2405 = vld [vmem:[%s532 + $0x1040] sm:$0xff]
        %v2406 = vld [vmem:[%s532 + $0x1048] sm:$0xff]
        %v2407 = vld [vmem:[%s532 + $0x1050] sm:$0xff]
        %v2408 = vld [vmem:[%s532 + $0x1058] sm:$0xff]
        %v2409 = vld [vmem:[%s532 + $0x1060] sm:$0xff]
        %v2410 = vld [vmem:[%s532 + $0x1068] sm:$0xff]
        %v2411 = vld [vmem:[%s532 + $0x1070] sm:$0xff]
        %v2412 = vld [vmem:[%s532 + $0x1078] sm:$0xff]
        %v2413 = vld [vmem:[%s532 + $0x1080] sm:$0xff]
        %v2414 = vld [vmem:[%s532 + $0x1088] sm:$0xff]
        %v2415 = vld [vmem:[%s532 + $0x1090] sm:$0xff]
        %v2416 = vld [vmem:[%s532 + $0x1098] sm:$0xff]
        %v2417 = vld [vmem:[%s532 + $0x10a0] sm:$0xff]
        %v2418 = vld [vmem:[%s532 + $0x10a8] sm:$0xff]
        %v2419 = vld [vmem:[%s532 + $0x10b0] sm:$0xff]
        %v2420 = vld [vmem:[%s532 + $0x10b8] sm:$0xff]
        %v2421 = vld [vmem:[%s532 + $0x10c0] sm:$0xff]
        %v2422 = vld [vmem:[%s532 + $0x10c8] sm:$0xff]
        %v2423 = vld [vmem:[%s532 + $0x10d0] sm:$0xff]
        %v2424 = vld [vmem:[%s532 + $0x10d8] sm:$0xff]
        %v2425 = vld [vmem:[%s532 + $0x10e0] sm:$0xff]
        %v2426 = vld [vmem:[%s532 + $0x10e8] sm:$0xff]
        %v2427 = vld [vmem:[%s532 + $0x10f0] sm:$0xff]
        %v2428 = vld [vmem:[%s532 + $0x10f8] sm:$0xff]
        %v2429 = vld [vmem:[%s532 + $0x1100] sm:$0xff]
        %v2430 = vld [vmem:[%s532 + $0x1108] sm:$0xff]
        %v2431 = vld [vmem:[%s532 + $0x1110] sm:$0xff]
        %v2432 = vld [vmem:[%s532 + $0x1118] sm:$0xff]
        %v2433 = vld [vmem:[%s532 + $0x1120] sm:$0xff]
        %v2434 = vld [vmem:[%s532 + $0x1128] sm:$0xff]
        %v2435 = vld [vmem:[%s532 + $0x1130] sm:$0xff]
        %v2436 = vld [vmem:[%s532 + $0x1138] sm:$0xff]
        %v2437 = vld [vmem:[%s532 + $0x1140] sm:$0xff]
        %v2438 = vld [vmem:[%s532 + $0x1148] sm:$0xff]
        %v2439 = vld [vmem:[%s532 + $0x1150] sm:$0xff]
        %v2440 = vld [vmem:[%s532 + $0x1158] sm:$0xff]
        %v2441 = vld [vmem:[%s532 + $0x1160] sm:$0xff]
        %v2442 = vld [vmem:[%s532 + $0x1168] sm:$0xff]
        %v2443 = vld [vmem:[%s532 + $0x1170] sm:$0xff]
        %v2444 = vld [vmem:[%s532 + $0x1178] sm:$0xff]
        %v2445 = vld [vmem:[%s532 + $0x1180] sm:$0xff]
        %v2446 = vld [vmem:[%s532 + $0x1188] sm:$0xff]
        %v2447 = vld [vmem:[%s532 + $0x1190] sm:$0xff]
        %v2448 = vld [vmem:[%s532 + $0x1198] sm:$0xff]
        %v2449 = vld [vmem:[%s532 + $0x11a0] sm:$0xff]
        %v2450 = vld [vmem:[%s532 + $0x11a8] sm:$0xff]
        %v2451 = vld [vmem:[%s532 + $0x11b0] sm:$0xff]
        %v2452 = vld [vmem:[%s532 + $0x11b8] sm:$0xff]
        %v2453 = vld [vmem:[%s532 + $0x11c0] sm:$0xff]
        %v2454 = vld [vmem:[%s532 + $0x11c8] sm:$0xff]
        %v2455 = vld [vmem:[%s532 + $0x11d0] sm:$0xff]
        %v2456 = vld [vmem:[%s532 + $0x11d8] sm:$0xff]
        %v2457 = vld [vmem:[%s532 + $0x11e0] sm:$0xff]
        %v2458 = vld [vmem:[%s532 + $0x11e8] sm:$0xff]
        %v2459 = vld [vmem:[%s532 + $0x11f0] sm:$0xff]
        %v2460 = vld [vmem:[%s532 + $0x11f8] sm:$0xff]
        %v2461 = vld [vmem:[%s532 + $0x1200] sm:$0xff]
        %v2462 = vld [vmem:[%s532 + $0x1208] sm:$0xff]
        %v2463 = vld [vmem:[%s532 + $0x1210] sm:$0xff]
        %v2464 = vld [vmem:[%s532 + $0x1218] sm:$0xff]
        %v2465 = vld [vmem:[%s532 + $0x1220] sm:$0xff]
        %v2466 = vld [vmem:[%s532 + $0x1228] sm:$0xff]
        %v2467 = vld [vmem:[%s532 + $0x1230] sm:$0xff]
        %v2468 = vld [vmem:[%s532 + $0x1238] sm:$0xff]
        %v2469 = vld [vmem:[%s532 + $0x1240] sm:$0xff]
        %v2470 = vld [vmem:[%s532 + $0x1248] sm:$0xff]
        %v2471 = vld [vmem:[%s532 + $0x1250] sm:$0xff]
        %v2472 = vld [vmem:[%s532 + $0x1258] sm:$0xff]
        %v2473 = vld [vmem:[%s532 + $0x1260] sm:$0xff]
        %v2474 = vld [vmem:[%s532 + $0x1268] sm:$0xff]
        %v2475 = vld [vmem:[%s532 + $0x1270] sm:$0xff]
        %v2476 = vld [vmem:[%s532 + $0x1278] sm:$0xff]
        %v2477 = vld [vmem:[%s532 + $0x1280] sm:$0xff]
        %v2478 = vld [vmem:[%s532 + $0x1288] sm:$0xff]
        %v2479 = vld [vmem:[%s532 + $0x1290] sm:$0xff]
        %v2480 = vld [vmem:[%s532 + $0x1298] sm:$0xff]
        %v2481 = vld [vmem:[%s532 + $0x12a0] sm:$0xff]
        %v2482 = vld [vmem:[%s532 + $0x12a8] sm:$0xff]
        %v2483 = vld [vmem:[%s532 + $0x12b0] sm:$0xff]
        %v2484 = vld [vmem:[%s532 + $0x12b8] sm:$0xff]
        %v2485 = vld [vmem:[%s532 + $0x12c0] sm:$0xff]
        %v2486 = vld [vmem:[%s532 + $0x12c8] sm:$0xff]
        %v2487 = vld [vmem:[%s532 + $0x12d0] sm:$0xff]
        %v2488 = vld [vmem:[%s532 + $0x12d8] sm:$0xff]
        %v2489 = vld [vmem:[%s532 + $0x12e0] sm:$0xff]
        %v2490 = vld [vmem:[%s532 + $0x12e8] sm:$0xff]
        %v2491 = vld [vmem:[%s532 + $0x12f0] sm:$0xff]
        %v2492 = vld [vmem:[%s532 + $0x12f8] sm:$0xff]
        %v2493 = vld [vmem:[%s532 + $0x1300] sm:$0xff]
        %v2494 = vld [vmem:[%s532 + $0x1308] sm:$0xff]
        %v2495 = vld [vmem:[%s532 + $0x1310] sm:$0xff]
        %v2496 = vld [vmem:[%s532 + $0x1318] sm:$0xff]
        %v2497 = vld [vmem:[%s532 + $0x1320] sm:$0xff]
        %v2498 = vld [vmem:[%s532 + $0x1328] sm:$0xff]
        %v2499 = vld [vmem:[%s532 + $0x1330] sm:$0xff]
        %v2500 = vld [vmem:[%s532 + $0x1338] sm:$0xff]
        %v2501 = vld [vmem:[%s532 + $0x1340] sm:$0xff]
        %v2502 = vld [vmem:[%s532 + $0x1348] sm:$0xff]
        %v2503 = vld [vmem:[%s532 + $0x1350] sm:$0xff]
        %v2504 = vld [vmem:[%s532 + $0x1358] sm:$0xff]
        %v2505 = vld [vmem:[%s532 + $0x1360] sm:$0xff]
        %v2506 = vld [vmem:[%s532 + $0x1368] sm:$0xff]
        %v2507 = vld [vmem:[%s532 + $0x1370] sm:$0xff]
        %v2508 = vld [vmem:[%s532 + $0x1378] sm:$0xff]
        %v2509 = vld [vmem:[%s532 + $0x1380] sm:$0xff]
        %v2510 = vld [vmem:[%s532 + $0x1388] sm:$0xff]
        %v2511 = vld [vmem:[%s532 + $0x1390] sm:$0xff]
        %v2512 = vld [vmem:[%s532 + $0x1398] sm:$0xff]
        %v2513 = vld [vmem:[%s532 + $0x13a0] sm:$0xff]
        %v2514 = vld [vmem:[%s532 + $0x13a8] sm:$0xff]
        %v2515 = vld [vmem:[%s532 + $0x13b0] sm:$0xff]
        %v2516 = vld [vmem:[%s532 + $0x13b8] sm:$0xff]
        %v2517 = vld [vmem:[%s532 + $0x13c0] sm:$0xff]
        %v2518 = vld [vmem:[%s532 + $0x13c8] sm:$0xff]
        %v2519 = vld [vmem:[%s532 + $0x13d0] sm:$0xff]
        %v2520 = vld [vmem:[%s532 + $0x13d8] sm:$0xff]
        %v2521 = vld [vmem:[%s532 + $0x13e0] sm:$0xff]
        %v2522 = vld [vmem:[%s532 + $0x13e8] sm:$0xff]
        %v2523 = vld [vmem:[%s532 + $0x13f0] sm:$0xff]
        %v2524 = vld [vmem:[%s532 + $0x13f8] sm:$0xff]
        %v2525 = vld [vmem:[%s532 + $0x1400] sm:$0xff]
        %v2526 = vld [vmem:[%s532 + $0x1408] sm:$0xff]
        %v2527 = vld [vmem:[%s532 + $0x1410] sm:$0xff]
        %v2528 = vld [vmem:[%s532 + $0x1418] sm:$0xff]
        %v2529 = vld [vmem:[%s532 + $0x1420] sm:$0xff]
        %v2530 = vld [vmem:[%s532 + $0x1428] sm:$0xff]
        %v2531 = vld [vmem:[%s532 + $0x1430] sm:$0xff]
        %v2532 = vld [vmem:[%s532 + $0x1438] sm:$0xff]
        %v2533 = vld [vmem:[%s532 + $0x1440] sm:$0xff]
        %v2534 = vld [vmem:[%s532 + $0x1448] sm:$0xff]
        %v2535 = vld [vmem:[%s532 + $0x1450] sm:$0xff]
        %v2536 = vld [vmem:[%s532 + $0x1458] sm:$0xff]
        %v2537 = vld [vmem:[%s532 + $0x1460] sm:$0xff]
        %v2538 = vld [vmem:[%s532 + $0x1468] sm:$0xff]
        %v2539 = vld [vmem:[%s532 + $0x1470] sm:$0xff]
        %v2540 = vld [vmem:[%s532 + $0x1478] sm:$0xff]
        %v2541 = vld [vmem:[%s532 + $0x1480] sm:$0xff]
        %v2542 = vld [vmem:[%s532 + $0x1488] sm:$0xff]
        %v2543 = vld [vmem:[%s532 + $0x1490] sm:$0xff]
        %v2544 = vld [vmem:[%s532 + $0x1498] sm:$0xff]
        %v2545 = vld [vmem:[%s532 + $0x14a0] sm:$0xff]
        %v2546 = vld [vmem:[%s532 + $0x14a8] sm:$0xff]
        %v2547 = vld [vmem:[%s532 + $0x14b0] sm:$0xff]
        %v2548 = vld [vmem:[%s532 + $0x14b8] sm:$0xff]
        %v2549 = vld [vmem:[%s532 + $0x14c0] sm:$0xff]
        %v2550 = vld [vmem:[%s532 + $0x14c8] sm:$0xff]
        %v2551 = vld [vmem:[%s532 + $0x14d0] sm:$0xff]
        %v2552 = vld [vmem:[%s532 + $0x14d8] sm:$0xff]
        %v2553 = vld [vmem:[%s532 + $0x14e0] sm:$0xff]
        %v2554 = vld [vmem:[%s532 + $0x14e8] sm:$0xff]
        %v2555 = vld [vmem:[%s532 + $0x14f0] sm:$0xff]
        %v2556 = vld [vmem:[%s532 + $0x14f8] sm:$0xff]
        %v2557 = vld [vmem:[%s532 + $0x1500] sm:$0xff]
        %v2558 = vld [vmem:[%s532 + $0x1508] sm:$0xff]
        %v2559 = vld [vmem:[%s532 + $0x1510] sm:$0xff]
        %v2560 = vld [vmem:[%s532 + $0x1518] sm:$0xff]
        %v2561 = vld [vmem:[%s532 + $0x1520] sm:$0xff]
        %v2562 = vld [vmem:[%s532 + $0x1528] sm:$0xff]
        %v2563 = vld [vmem:[%s532 + $0x1530] sm:$0xff]
        %v2564 = vld [vmem:[%s532 + $0x1538] sm:$0xff]
        %v2565 = vld [vmem:[%s532 + $0x1540] sm:$0xff]
        %v2566 = vld [vmem:[%s532 + $0x1548] sm:$0xff]
        %v2567 = vld [vmem:[%s532 + $0x1550] sm:$0xff]
        %v2568 = vld [vmem:[%s532 + $0x1558] sm:$0xff]
        %v2569 = vld [vmem:[%s532 + $0x1560] sm:$0xff]
        %v2570 = vld [vmem:[%s532 + $0x1568] sm:$0xff]
        %v2571 = vld [vmem:[%s532 + $0x1570] sm:$0xff]
        %v2572 = vld [vmem:[%s532 + $0x1578] sm:$0xff]
        %v2573 = vld [vmem:[%s532 + $0x1580] sm:$0xff]
        %v2574 = vld [vmem:[%s532 + $0x1588] sm:$0xff]
        %v2575 = vld [vmem:[%s532 + $0x1590] sm:$0xff]
        %v2576 = vld [vmem:[%s532 + $0x1598] sm:$0xff]
        %v2577 = vld [vmem:[%s532 + $0x15a0] sm:$0xff]
        %v2578 = vld [vmem:[%s532 + $0x15a8] sm:$0xff]
        %v2579 = vld [vmem:[%s532 + $0x15b0] sm:$0xff]
        %v2580 = vld [vmem:[%s532 + $0x15b8] sm:$0xff]
        %v2581 = vld [vmem:[%s532 + $0x15c0] sm:$0xff]
        %v2582 = vld [vmem:[%s532 + $0x15c8] sm:$0xff]
        %v2583 = vld [vmem:[%s532 + $0x15d0] sm:$0xff]
        %v2584 = vld [vmem:[%s532 + $0x15d8] sm:$0xff]
        %v2585 = vld [vmem:[%s532 + $0x15e0] sm:$0xff]
        %v2586 = vld [vmem:[%s532 + $0x15e8] sm:$0xff]
        %v2587 = vld [vmem:[%s532 + $0x15f0] sm:$0xff]
        %v2588 = vld [vmem:[%s532 + $0x15f8] sm:$0xff]
        %v2589 = vld [vmem:[%s532 + $0x1600] sm:$0xff]
        %v2590 = vld [vmem:[%s532 + $0x1608] sm:$0xff]
        %v2591 = vld [vmem:[%s532 + $0x1610] sm:$0xff]
        %v2592 = vld [vmem:[%s532 + $0x1618] sm:$0xff]
        %v2593 = vld [vmem:[%s532 + $0x1620] sm:$0xff]
        %v2594 = vld [vmem:[%s532 + $0x1628] sm:$0xff]
        %v2595 = vld [vmem:[%s532 + $0x1630] sm:$0xff]
        %v2596 = vld [vmem:[%s532 + $0x1638] sm:$0xff]
        %v2597 = vld [vmem:[%s532 + $0x1640] sm:$0xff]
        %v2598 = vld [vmem:[%s532 + $0x1648] sm:$0xff]
        %v2599 = vld [vmem:[%s532 + $0x1650] sm:$0xff]
        %v2600 = vld [vmem:[%s532 + $0x1658] sm:$0xff]
        %v2601 = vld [vmem:[%s532 + $0x1660] sm:$0xff]
        %v2602 = vld [vmem:[%s532 + $0x1668] sm:$0xff]
        %v2603 = vld [vmem:[%s532 + $0x1670] sm:$0xff]
        %v2604 = vld [vmem:[%s532 + $0x1678] sm:$0xff]
        %v2605 = vld [vmem:[%s532 + $0x1680] sm:$0xff]
        %v2606 = vld [vmem:[%s532 + $0x1688] sm:$0xff]
        %v2607 = vld [vmem:[%s532 + $0x1690] sm:$0xff]
        %v2608 = vld [vmem:[%s532 + $0x1698] sm:$0xff]
        %v2609 = vld [vmem:[%s532 + $0x16a0] sm:$0xff]
        %v2610 = vld [vmem:[%s532 + $0x16a8] sm:$0xff]
        %v2611 = vld [vmem:[%s532 + $0x16b0] sm:$0xff]
        %v2612 = vld [vmem:[%s532 + $0x16b8] sm:$0xff]
        %v2613 = vld [vmem:[%s532 + $0x16c0] sm:$0xff]
        %v2614 = vld [vmem:[%s532 + $0x16c8] sm:$0xff]
        %v2615 = vld [vmem:[%s532 + $0x16d0] sm:$0xff]
        %v2616 = vld [vmem:[%s532 + $0x16d8] sm:$0xff]
        %v2617 = vld [vmem:[%s532 + $0x16e0] sm:$0xff]
        %v2618 = vld [vmem:[%s532 + $0x16e8] sm:$0xff]
        %v2619 = vld [vmem:[%s532 + $0x16f0] sm:$0xff]
        %v2620 = vld [vmem:[%s532 + $0x16f8] sm:$0xff]
        %v2621 = vld [vmem:[%s532 + $0x1700] sm:$0xff]
        %v2622 = vld [vmem:[%s532 + $0x1708] sm:$0xff]
        %v2623 = vld [vmem:[%s532 + $0x1710] sm:$0xff]
        %v2624 = vld [vmem:[%s532 + $0x1718] sm:$0xff]
        %v2625 = vld [vmem:[%s532 + $0x1720] sm:$0xff]
        %v2626 = vld [vmem:[%s532 + $0x1728] sm:$0xff]
        %v2627 = vld [vmem:[%s532 + $0x1730] sm:$0xff]
        %v2628 = vld [vmem:[%s532 + $0x1738] sm:$0xff]
        %v2629 = vld [vmem:[%s532 + $0x1740] sm:$0xff]
        %v2630 = vld [vmem:[%s532 + $0x1748] sm:$0xff]
        %v2631 = vld [vmem:[%s532 + $0x1750] sm:$0xff]
        %v2632 = vld [vmem:[%s532 + $0x1758] sm:$0xff]
        %v2633 = vld [vmem:[%s532 + $0x1760] sm:$0xff]
        %v2634 = vld [vmem:[%s532 + $0x1768] sm:$0xff]
        %v2635 = vld [vmem:[%s532 + $0x1770] sm:$0xff]
        %v2636 = vld [vmem:[%s532 + $0x1778] sm:$0xff]
        %v2637 = vld [vmem:[%s532 + $0x1780] sm:$0xff]
        %v2638 = vld [vmem:[%s532 + $0x1788] sm:$0xff]
        %v2639 = vld [vmem:[%s532 + $0x1790] sm:$0xff]
        %v2640 = vld [vmem:[%s532 + $0x1798] sm:$0xff]
        %v2641 = vld [vmem:[%s532 + $0x17a0] sm:$0xff]
        %v2642 = vld [vmem:[%s532 + $0x17a8] sm:$0xff]
        %v2643 = vld [vmem:[%s532 + $0x17b0] sm:$0xff]
        %v2644 = vld [vmem:[%s532 + $0x17b8] sm:$0xff]
        %v2645 = vld [vmem:[%s532 + $0x17c0] sm:$0xff]
        %v2646 = vld [vmem:[%s532 + $0x17c8] sm:$0xff]
        %v2647 = vld [vmem:[%s532 + $0x17d0] sm:$0xff]
        %v2648 = vld [vmem:[%s532 + $0x17d8] sm:$0xff]
        %v2649 = vld [vmem:[%s532 + $0x17e0] sm:$0xff]
        %v2650 = vld [vmem:[%s532 + $0x17e8] sm:$0xff]
        %v2651 = vld [vmem:[%s532 + $0x17f0] sm:$0xff]
        %v2652 = vld [vmem:[%s532 + $0x17f8] sm:$0xff]
        %v2653 = vld [vmem:[%s532 + $0x1800] sm:$0xff]
        %v2654 = vld [vmem:[%s532 + $0x1808] sm:$0xff]
        %v2655 = vld [vmem:[%s532 + $0x1810] sm:$0xff]
        %v2656 = vld [vmem:[%s532 + $0x1818] sm:$0xff]
        %v2657 = vld [vmem:[%s532 + $0x1820] sm:$0xff]
        %v2658 = vld [vmem:[%s532 + $0x1828] sm:$0xff]
        %v2659 = vld [vmem:[%s532 + $0x1830] sm:$0xff]
        %v2660 = vld [vmem:[%s532 + $0x1838] sm:$0xff]
        %v2661 = vld [vmem:[%s532 + $0x1840] sm:$0xff]
        %v2662 = vld [vmem:[%s532 + $0x1848] sm:$0xff]
        %v2663 = vld [vmem:[%s532 + $0x1850] sm:$0xff]
        %v2664 = vld [vmem:[%s532 + $0x1858] sm:$0xff]
        %v2665 = vld [vmem:[%s532 + $0x1860] sm:$0xff]
        %v2666 = vld [vmem:[%s532 + $0x1868] sm:$0xff]
        %v2667 = vld [vmem:[%s532 + $0x1870] sm:$0xff]
        %v2668 = vld [vmem:[%s532 + $0x1878] sm:$0xff]
        %v2669 = vld [vmem:[%s532 + $0x1880] sm:$0xff]
        %v2670 = vld [vmem:[%s532 + $0x1888] sm:$0xff]
        %v2671 = vld [vmem:[%s532 + $0x1890] sm:$0xff]
        %v2672 = vld [vmem:[%s532 + $0x1898] sm:$0xff]
        %v2673 = vld [vmem:[%s532 + $0x18a0] sm:$0xff]
        %v2674 = vld [vmem:[%s532 + $0x18a8] sm:$0xff]
        %v2675 = vld [vmem:[%s532 + $0x18b0] sm:$0xff]
        %v2676 = vld [vmem:[%s532 + $0x18b8] sm:$0xff]
        %v2677 = vld [vmem:[%s532 + $0x18c0] sm:$0xff]
        %v2678 = vld [vmem:[%s532 + $0x18c8] sm:$0xff]
        %v2679 = vld [vmem:[%s532 + $0x18d0] sm:$0xff]
        %v2680 = vld [vmem:[%s532 + $0x18d8] sm:$0xff]
        %v2681 = vld [vmem:[%s532 + $0x18e0] sm:$0xff]
        %v2682 = vld [vmem:[%s532 + $0x18e8] sm:$0xff]
        %v2683 = vld [vmem:[%s532 + $0x18f0] sm:$0xff]
        %v2684 = vld [vmem:[%s532 + $0x18f8] sm:$0xff]
        %v2685 = vld [vmem:[%s532 + $0x1900] sm:$0xff]
        %v2686 = vld [vmem:[%s532 + $0x1908] sm:$0xff]
        %v2687 = vld [vmem:[%s532 + $0x1910] sm:$0xff]
        %v2688 = vld [vmem:[%s532 + $0x1918] sm:$0xff]
        %v2689 = vld [vmem:[%s532 + $0x1920] sm:$0xff]
        %v2690 = vld [vmem:[%s532 + $0x1928] sm:$0xff]
        %v2691 = vld [vmem:[%s532 + $0x1930] sm:$0xff]
        %v2692 = vld [vmem:[%s532 + $0x1938] sm:$0xff]
        %v2693 = vld [vmem:[%s532 + $0x1940] sm:$0xff]
        %v2694 = vld [vmem:[%s532 + $0x1948] sm:$0xff]
        %v2695 = vld [vmem:[%s532 + $0x1950] sm:$0xff]
        %v2696 = vld [vmem:[%s532 + $0x1958] sm:$0xff]
        %v2697 = vld [vmem:[%s532 + $0x1960] sm:$0xff]
        %v2698 = vld [vmem:[%s532 + $0x1968] sm:$0xff]
        %v2699 = vld [vmem:[%s532 + $0x1970] sm:$0xff]
        %v2700 = vld [vmem:[%s532 + $0x1978] sm:$0xff]
        %v2701 = vld [vmem:[%s532 + $0x1980] sm:$0xff]
        %v2702 = vld [vmem:[%s532 + $0x1988] sm:$0xff]
        %v2703 = vld [vmem:[%s532 + $0x1990] sm:$0xff]
        %v2704 = vld [vmem:[%s532 + $0x1998] sm:$0xff]
        %v2705 = vld [vmem:[%s532 + $0x19a0] sm:$0xff]
        %v2706 = vld [vmem:[%s532 + $0x19a8] sm:$0xff]
        %v2707 = vld [vmem:[%s532 + $0x19b0] sm:$0xff]
        %v2708 = vld [vmem:[%s532 + $0x19b8] sm:$0xff]
        %v2709 = vld [vmem:[%s532 + $0x19c0] sm:$0xff]
        %v2710 = vld [vmem:[%s532 + $0x19c8] sm:$0xff]
        %v2711 = vld [vmem:[%s532 + $0x19d0] sm:$0xff]
        %v2712 = vld [vmem:[%s532 + $0x19d8] sm:$0xff]
        %v2713 = vld [vmem:[%s532 + $0x19e0] sm:$0xff]
        %v2714 = vld [vmem:[%s532 + $0x19e8] sm:$0xff]
        %v2715 = vld [vmem:[%s532 + $0x19f0] sm:$0xff]
        %v2716 = vld [vmem:[%s532 + $0x19f8] sm:$0xff]
        %v2717 = vld [vmem:[%s532 + $0x1a00] sm:$0xff]
        %v2718 = vld [vmem:[%s532 + $0x1a08] sm:$0xff]
        %v2719 = vld [vmem:[%s532 + $0x1a10] sm:$0xff]
        %v2720 = vld [vmem:[%s532 + $0x1a18] sm:$0xff]
        %v2721 = vld [vmem:[%s532 + $0x1a20] sm:$0xff]
        %v2722 = vld [vmem:[%s532 + $0x1a28] sm:$0xff]
        %v2723 = vld [vmem:[%s532 + $0x1a30] sm:$0xff]
        %v2724 = vld [vmem:[%s532 + $0x1a38] sm:$0xff]
        %v2725 = vld [vmem:[%s532 + $0x1a40] sm:$0xff]
        %v2726 = vld [vmem:[%s532 + $0x1a48] sm:$0xff]
        %v2727 = vld [vmem:[%s532 + $0x1a50] sm:$0xff]
        %v2728 = vld [vmem:[%s532 + $0x1a58] sm:$0xff]
        %v2729 = vld [vmem:[%s532 + $0x1a60] sm:$0xff]
        %v2730 = vld [vmem:[%s532 + $0x1a68] sm:$0xff]
        %v2731 = vld [vmem:[%s532 + $0x1a70] sm:$0xff]
        %v2732 = vld [vmem:[%s532 + $0x1a78] sm:$0xff]
        %v2733 = vld [vmem:[%s532 + $0x1a80] sm:$0xff]
        %v2734 = vld [vmem:[%s532 + $0x1a88] sm:$0xff]
        %v2735 = vld [vmem:[%s532 + $0x1a90] sm:$0xff]
        %v2736 = vld [vmem:[%s532 + $0x1a98] sm:$0xff]
        %v2737 = vld [vmem:[%s532 + $0x1aa0] sm:$0xff]
        %v2738 = vld [vmem:[%s532 + $0x1aa8] sm:$0xff]
        %v2739 = vld [vmem:[%s532 + $0x1ab0] sm:$0xff]
        %v2740 = vld [vmem:[%s532 + $0x1ab8] sm:$0xff]
        %v2741 = vld [vmem:[%s532 + $0x1ac0] sm:$0xff]
        %v2742 = vld [vmem:[%s532 + $0x1ac8] sm:$0xff]
        %v2743 = vld [vmem:[%s532 + $0x1ad0] sm:$0xff]
        %v2744 = vld [vmem:[%s532 + $0x1ad8] sm:$0xff]
        %v2745 = vld [vmem:[%s532 + $0x1ae0] sm:$0xff]
        %v2746 = vld [vmem:[%s532 + $0x1ae8] sm:$0xff]
        %v2747 = vld [vmem:[%s532 + $0x1af0] sm:$0xff]
        %v2748 = vld [vmem:[%s532 + $0x1af8] sm:$0xff]
        %v2749 = vld [vmem:[%s532 + $0x1b00] sm:$0xff]
        %v2750 = vld [vmem:[%s532 + $0x1b08] sm:$0xff]
        %v2751 = vld [vmem:[%s532 + $0x1b10] sm:$0xff]
        %v2752 = vld [vmem:[%s532 + $0x1b18] sm:$0xff]
        %v2753 = vld [vmem:[%s532 + $0x1b20] sm:$0xff]
        %v2754 = vld [vmem:[%s532 + $0x1b28] sm:$0xff]
        %v2755 = vld [vmem:[%s532 + $0x1b30] sm:$0xff]
        %v2756 = vld [vmem:[%s532 + $0x1b38] sm:$0xff]
        %v2757 = vld [vmem:[%s532 + $0x1b40] sm:$0xff]
        %v2758 = vld [vmem:[%s532 + $0x1b48] sm:$0xff]
        %v2759 = vld [vmem:[%s532 + $0x1b50] sm:$0xff]
        %v2760 = vld [vmem:[%s532 + $0x1b58] sm:$0xff]
        %v2761 = vld [vmem:[%s532 + $0x1b60] sm:$0xff]
        %v2762 = vld [vmem:[%s532 + $0x1b68] sm:$0xff]
        %v2763 = vld [vmem:[%s532 + $0x1b70] sm:$0xff]
        %v2764 = vld [vmem:[%s532 + $0x1b78] sm:$0xff]
        %v2765 = vld [vmem:[%s532 + $0x1b80] sm:$0xff]
        %v2766 = vld [vmem:[%s532 + $0x1b88] sm:$0xff]
        %v2767 = vld [vmem:[%s532 + $0x1b90] sm:$0xff]
        %v2768 = vld [vmem:[%s532 + $0x1b98] sm:$0xff]
        %v2769 = vld [vmem:[%s532 + $0x1ba0] sm:$0xff]
        %v2770 = vld [vmem:[%s532 + $0x1ba8] sm:$0xff]
        %v2771 = vld [vmem:[%s532 + $0x1bb0] sm:$0xff]
        %v2772 = vld [vmem:[%s532 + $0x1bb8] sm:$0xff]
        %v2773 = vld [vmem:[%s532 + $0x1bc0] sm:$0xff]
        %v2774 = vld [vmem:[%s532 + $0x1bc8] sm:$0xff]
        %v2775 = vld [vmem:[%s532 + $0x1bd0] sm:$0xff]
        %v2776 = vld [vmem:[%s532 + $0x1bd8] sm:$0xff]
        %v2777 = vld [vmem:[%s532 + $0x1be0] sm:$0xff]
        %v2778 = vld [vmem:[%s532 + $0x1be8] sm:$0xff]
        %v2779 = vld [vmem:[%s532 + $0x1bf0] sm:$0xff]
        %v2780 = vld [vmem:[%s532 + $0x1bf8] sm:$0xff]
        %v2781 = vld [vmem:[%s532 + $0x1c00] sm:$0xff]
        %v2782 = vld [vmem:[%s532 + $0x1c08] sm:$0xff]
        %v2783 = vld [vmem:[%s532 + $0x1c10] sm:$0xff]
        %v2784 = vld [vmem:[%s532 + $0x1c18] sm:$0xff]
        %v2785 = vld [vmem:[%s532 + $0x1c20] sm:$0xff]
        %v2786 = vld [vmem:[%s532 + $0x1c28] sm:$0xff]
        %v2787 = vld [vmem:[%s532 + $0x1c30] sm:$0xff]
        %v2788 = vld [vmem:[%s532 + $0x1c38] sm:$0xff]
        %v2789 = vld [vmem:[%s532 + $0x1c40] sm:$0xff]
        %v2790 = vld [vmem:[%s532 + $0x1c48] sm:$0xff]
        %v2791 = vld [vmem:[%s532 + $0x1c50] sm:$0xff]
        %v2792 = vld [vmem:[%s532 + $0x1c58] sm:$0xff]
        %v2793 = vld [vmem:[%s532 + $0x1c60] sm:$0xff]
        %v2794 = vld [vmem:[%s532 + $0x1c68] sm:$0xff]
        %v2795 = vld [vmem:[%s532 + $0x1c70] sm:$0xff]
        %v2796 = vld [vmem:[%s532 + $0x1c78] sm:$0xff]
        %v2797 = vld [vmem:[%s532 + $0x1c80] sm:$0xff]
        %v2798 = vld [vmem:[%s532 + $0x1c88] sm:$0xff]
        %v2799 = vld [vmem:[%s532 + $0x1c90] sm:$0xff]
        %v2800 = vld [vmem:[%s532 + $0x1c98] sm:$0xff]
        %v2801 = vld [vmem:[%s532 + $0x1ca0] sm:$0xff]
        %v2802 = vld [vmem:[%s532 + $0x1ca8] sm:$0xff]
        %v2803 = vld [vmem:[%s532 + $0x1cb0] sm:$0xff]
        %v2804 = vld [vmem:[%s532 + $0x1cb8] sm:$0xff]
        %v2805 = vld [vmem:[%s532 + $0x1cc0] sm:$0xff]
        %v2806 = vld [vmem:[%s532 + $0x1cc8] sm:$0xff]
        %v2807 = vld [vmem:[%s532 + $0x1cd0] sm:$0xff]
        %v2808 = vld [vmem:[%s532 + $0x1cd8] sm:$0xff]
        %v2809 = vld [vmem:[%s532 + $0x1ce0] sm:$0xff]
        %v2810 = vld [vmem:[%s532 + $0x1ce8] sm:$0xff]
        %v2811 = vld [vmem:[%s532 + $0x1cf0] sm:$0xff]
        %v2812 = vld [vmem:[%s532 + $0x1cf8] sm:$0xff]
        %v2813 = vld [vmem:[%s532 + $0x1d00] sm:$0xff]
        %v2814 = vld [vmem:[%s532 + $0x1d08] sm:$0xff]
        %v2815 = vld [vmem:[%s532 + $0x1d10] sm:$0xff]
        %v2816 = vld [vmem:[%s532 + $0x1d18] sm:$0xff]
        %v2817 = vld [vmem:[%s532 + $0x1d20] sm:$0xff]
        %v2818 = vld [vmem:[%s532 + $0x1d28] sm:$0xff]
        %v2819 = vld [vmem:[%s532 + $0x1d30] sm:$0xff]
        %v2820 = vld [vmem:[%s532 + $0x1d38] sm:$0xff]
        %v2821 = vld [vmem:[%s532 + $0x1d40] sm:$0xff]
        %v2822 = vld [vmem:[%s532 + $0x1d48] sm:$0xff]
        %v2823 = vld [vmem:[%s532 + $0x1d50] sm:$0xff]
        %v2824 = vld [vmem:[%s532 + $0x1d58] sm:$0xff]
        %v2825 = vld [vmem:[%s532 + $0x1d60] sm:$0xff]
        %v2826 = vld [vmem:[%s532 + $0x1d68] sm:$0xff]
        %v2827 = vld [vmem:[%s532 + $0x1d70] sm:$0xff]
        %v2828 = vld [vmem:[%s532 + $0x1d78] sm:$0xff]
        %v2829 = vld [vmem:[%s532 + $0x1d80] sm:$0xff]
        %v2830 = vld [vmem:[%s532 + $0x1d88] sm:$0xff]
        %v2831 = vld [vmem:[%s532 + $0x1d90] sm:$0xff]
        %v2832 = vld [vmem:[%s532 + $0x1d98] sm:$0xff]
        %v2833 = vld [vmem:[%s532 + $0x1da0] sm:$0xff]
        %v2834 = vld [vmem:[%s532 + $0x1da8] sm:$0xff]
        %v2835 = vld [vmem:[%s532 + $0x1db0] sm:$0xff]
        %v2836 = vld [vmem:[%s532 + $0x1db8] sm:$0xff]
        %v2837 = vld [vmem:[%s532 + $0x1dc0] sm:$0xff]
        %v2838 = vld [vmem:[%s532 + $0x1dc8] sm:$0xff]
        %v2839 = vld [vmem:[%s532 + $0x1dd0] sm:$0xff]
        %v2840 = vld [vmem:[%s532 + $0x1dd8] sm:$0xff]
        %v2841 = vld [vmem:[%s532 + $0x1de0] sm:$0xff]
        %v2842 = vld [vmem:[%s532 + $0x1de8] sm:$0xff]
        %v2843 = vld [vmem:[%s532 + $0x1df0] sm:$0xff]
        %v2844 = vld [vmem:[%s532 + $0x1df8] sm:$0xff]
        %v2845 = vld [vmem:[%s532 + $0x1e00] sm:$0xff]
        %v2846 = vld [vmem:[%s532 + $0x1e08] sm:$0xff]
        %v2847 = vld [vmem:[%s532 + $0x1e10] sm:$0xff]
        %v2848 = vld [vmem:[%s532 + $0x1e18] sm:$0xff]
        %v2849 = vld [vmem:[%s532 + $0x1e20] sm:$0xff]
        %v2850 = vld [vmem:[%s532 + $0x1e28] sm:$0xff]
        %v2851 = vld [vmem:[%s532 + $0x1e30] sm:$0xff]
        %v2852 = vld [vmem:[%s532 + $0x1e38] sm:$0xff]
        %v2853 = vld [vmem:[%s532 + $0x1e40] sm:$0xff]
        %v2854 = vld [vmem:[%s532 + $0x1e48] sm:$0xff]
        %v2855 = vld [vmem:[%s532 + $0x1e50] sm:$0xff]
        %v2856 = vld [vmem:[%s532 + $0x1e58] sm:$0xff]
        %v2857 = vld [vmem:[%s532 + $0x1e60] sm:$0xff]
        %v2858 = vld [vmem:[%s532 + $0x1e68] sm:$0xff]
        %v2859 = vld [vmem:[%s532 + $0x1e70] sm:$0xff]
        %v2860 = vld [vmem:[%s532 + $0x1e78] sm:$0xff]
        %v2861 = vld [vmem:[%s532 + $0x1e80] sm:$0xff]
        %v2862 = vld [vmem:[%s532 + $0x1e88] sm:$0xff]
        %v2863 = vld [vmem:[%s532 + $0x1e90] sm:$0xff]
        %v2864 = vld [vmem:[%s532 + $0x1e98] sm:$0xff]
        %v2865 = vld [vmem:[%s532 + $0x1ea0] sm:$0xff]
        %v2866 = vld [vmem:[%s532 + $0x1ea8] sm:$0xff]
        %v2867 = vld [vmem:[%s532 + $0x1eb0] sm:$0xff]
        %v2868 = vld [vmem:[%s532 + $0x1eb8] sm:$0xff]
        %v2869 = vld [vmem:[%s532 + $0x1ec0] sm:$0xff]
        %v2870 = vld [vmem:[%s532 + $0x1ec8] sm:$0xff]
        %v2871 = vld [vmem:[%s532 + $0x1ed0] sm:$0xff]
        %v2872 = vld [vmem:[%s532 + $0x1ed8] sm:$0xff]
        %v2873 = vld [vmem:[%s532 + $0x1ee0] sm:$0xff]
        %v2874 = vld [vmem:[%s532 + $0x1ee8] sm:$0xff]
        %v2875 = vld [vmem:[%s532 + $0x1ef0] sm:$0xff]
        %v2876 = vld [vmem:[%s532 + $0x1ef8] sm:$0xff]
        %v2877 = vld [vmem:[%s532 + $0x1f00] sm:$0xff]
        %v2878 = vld [vmem:[%s532 + $0x1f08] sm:$0xff]
        %v2879 = vld [vmem:[%s532 + $0x1f10] sm:$0xff]
        %v2880 = vld [vmem:[%s532 + $0x1f18] sm:$0xff]
        %v2881 = vld [vmem:[%s532 + $0x1f20] sm:$0xff]
        %v2882 = vld [vmem:[%s532 + $0x1f28] sm:$0xff]
        %v2883 = vld [vmem:[%s532 + $0x1f30] sm:$0xff]
        %v2884 = vld [vmem:[%s532 + $0x1f38] sm:$0xff]
        %v2885 = vld [vmem:[%s532 + $0x1f40] sm:$0xff]
        %v2886 = vld [vmem:[%s532 + $0x1f48] sm:$0xff]
        %v2887 = vld [vmem:[%s532 + $0x1f50] sm:$0xff]
        %v2888 = vld [vmem:[%s532 + $0x1f58] sm:$0xff]
        %v2889 = vld [vmem:[%s532 + $0x1f60] sm:$0xff]
        %v2890 = vld [vmem:[%s532 + $0x1f68] sm:$0xff]
        %v2891 = vld [vmem:[%s532 + $0x1f70] sm:$0xff]
        %v2892 = vld [vmem:[%s532 + $0x1f78] sm:$0xff]
        %v2893 = vld [vmem:[%s532 + $0x1f80] sm:$0xff]
        %v2894 = vld [vmem:[%s532 + $0x1f88] sm:$0xff]
        %v2895 = vld [vmem:[%s532 + $0x1f90] sm:$0xff]
        %v2896 = vld [vmem:[%s532 + $0x1f98] sm:$0xff]
        %v2897 = vld [vmem:[%s532 + $0x1fa0] sm:$0xff]
        %v2898 = vld [vmem:[%s532 + $0x1fa8] sm:$0xff]
        %v2899 = vld [vmem:[%s532 + $0x1fb0] sm:$0xff]
        %v2900 = vld [vmem:[%s532 + $0x1fb8] sm:$0xff]
        %v2901 = vld [vmem:[%s532 + $0x1fc0] sm:$0xff]
        %v2902 = vld [vmem:[%s532 + $0x1fc8] sm:$0xff]
        %v2903 = vld [vmem:[%s532 + $0x1fd0] sm:$0xff]
        %v2904 = vld [vmem:[%s532 + $0x1fd8] sm:$0xff]
        %v2905 = vld [vmem:[%s532 + $0x1fe0] sm:$0xff]
        %v2906 = vld [vmem:[%s532 + $0x1fe8] sm:$0xff]
        %v2907 = vld [vmem:[%s532 + $0x1ff0] sm:$0xff]
        %v2908 = vld [vmem:[%s532 + $0x1ff8] sm:$0xff]
        %v2909 = vld [vmem:[%s541] sm:$0xff]
        %v2911 = vlaneseq
        %v2912 = vshrl.u32 %v2911, 7
        %v2913 = vsub.s32 0, %v2912
        %v2914 = vrot.slane %v2909, %v2913
        %v2915 = vlaneseq
        %v2916 = vshrl.u32 %v2915, 7
        %v2917 = vsub.s32 1, %v2916
        %v2918 = vrot.slane %v2909, %v2917
        %v2919 = vlaneseq
        %v2920 = vshrl.u32 %v2919, 7
        %v2921 = vsub.s32 2, %v2920
        %v2922 = vrot.slane %v2909, %v2921
        %v2923 = vlaneseq
        %v2924 = vshrl.u32 %v2923, 7
        %v2925 = vsub.s32 3, %v2924
        %v2926 = vrot.slane %v2909, %v2925
        %v2927 = vlaneseq
        %v2928 = vshrl.u32 %v2927, 7
        %v2929 = vsub.s32 4, %v2928
        %v2930 = vrot.slane %v2909, %v2929
        %v2931 = vlaneseq
        %v2932 = vshrl.u32 %v2931, 7
        %v2933 = vsub.s32 5, %v2932
        %v2934 = vrot.slane %v2909, %v2933
        %v2935 = vlaneseq
        %v2936 = vshrl.u32 %v2935, 7
        %v2937 = vsub.s32 6, %v2936
        %v2938 = vrot.slane %v2909, %v2937
        %v2939 = vlaneseq
        %v2940 = vshrl.u32 %v2939, 7
        %v2941 = vsub.s32 7, %v2940
        %v2942 = vrot.slane %v2909, %v2941
        %v3975 = vunpack.c.l.b16 %v1885
        %v3976 = vunpack.c.h.b16 %v1885
        %v3977 = vunpack.c.l.b16 %v1886
        %v3978 = vunpack.c.h.b16 %v1886
        %v3979 = vunpack.c.l.b16 %v1887
        %v3980 = vunpack.c.h.b16 %v1887
        %v3981 = vunpack.c.l.b16 %v1888
        %v3982 = vunpack.c.h.b16 %v1888
        %v3983 = vunpack.c.l.b16 %v1889
        %v3984 = vunpack.c.h.b16 %v1889
        %v3985 = vunpack.c.l.b16 %v1890
        %v3986 = vunpack.c.h.b16 %v1890
        %v3987 = vunpack.c.l.b16 %v1891
        %v3988 = vunpack.c.h.b16 %v1891
        %v3989 = vunpack.c.l.b16 %v1892
        %v3990 = vunpack.c.h.b16 %v1892
        %v3991 = vunpack.c.l.b16 %v1893
        %v3992 = vunpack.c.h.b16 %v1893
        %v3993 = vunpack.c.l.b16 %v1894
        %v3994 = vunpack.c.h.b16 %v1894
        %v3995 = vunpack.c.l.b16 %v1895
        %v3996 = vunpack.c.h.b16 %v1895
        %v3997 = vunpack.c.l.b16 %v1896
        %v3998 = vunpack.c.h.b16 %v1896
        %v3999 = vunpack.c.l.b16 %v1897
        %v4000 = vunpack.c.h.b16 %v1897
        %v4001 = vunpack.c.l.b16 %v1898
        %v4002 = vunpack.c.h.b16 %v1898
        %v4003 = vunpack.c.l.b16 %v1899
        %v4004 = vunpack.c.h.b16 %v1899
        %v4005 = vunpack.c.l.b16 %v1900
        %v4006 = vunpack.c.h.b16 %v1900
        %v4007 = vunpack.c.l.b16 %v1901
        %v4008 = vunpack.c.h.b16 %v1901
        %v4009 = vunpack.c.l.b16 %v1902
        %v4010 = vunpack.c.h.b16 %v1902
        %v4011 = vunpack.c.l.b16 %v1903
        %v4012 = vunpack.c.h.b16 %v1903
        %v4013 = vunpack.c.l.b16 %v1904
        %v4014 = vunpack.c.h.b16 %v1904
        %v4015 = vunpack.c.l.b16 %v1905
        %v4016 = vunpack.c.h.b16 %v1905
        %v4017 = vunpack.c.l.b16 %v1906
        %v4018 = vunpack.c.h.b16 %v1906
        %v4019 = vunpack.c.l.b16 %v1907
        %v4020 = vunpack.c.h.b16 %v1907
        %v4021 = vunpack.c.l.b16 %v1908
        %v4022 = vunpack.c.h.b16 %v1908
        %v4023 = vunpack.c.l.b16 %v1909
        %v4024 = vunpack.c.h.b16 %v1909
        %v4025 = vunpack.c.l.b16 %v1910
        %v4026 = vunpack.c.h.b16 %v1910
        %v4027 = vunpack.c.l.b16 %v1911
        %v4028 = vunpack.c.h.b16 %v1911
        %v4029 = vunpack.c.l.b16 %v1912
        %v4030 = vunpack.c.h.b16 %v1912
        %v4031 = vunpack.c.l.b16 %v1913
        %v4032 = vunpack.c.h.b16 %v1913
        %v4033 = vunpack.c.l.b16 %v1914
        %v4034 = vunpack.c.h.b16 %v1914
        %v4035 = vunpack.c.l.b16 %v1915
        %v4036 = vunpack.c.h.b16 %v1915
        %v4037 = vunpack.c.l.b16 %v1916
        %v4038 = vunpack.c.h.b16 %v1916
        %v4039 = vunpack.c.l.b16 %v1917
        %v4040 = vunpack.c.h.b16 %v1917
        %v4041 = vunpack.c.l.b16 %v1918
        %v4042 = vunpack.c.h.b16 %v1918
        %v4043 = vunpack.c.l.b16 %v1919
        %v4044 = vunpack.c.h.b16 %v1919
        %v4045 = vunpack.c.l.b16 %v1920
        %v4046 = vunpack.c.h.b16 %v1920
        %v4047 = vunpack.c.l.b16 %v1921
        %v4048 = vunpack.c.h.b16 %v1921
        %v4049 = vunpack.c.l.b16 %v1922
        %v4050 = vunpack.c.h.b16 %v1922
        %v4051 = vunpack.c.l.b16 %v1923
        %v4052 = vunpack.c.h.b16 %v1923
        %v4053 = vunpack.c.l.b16 %v1924
        %v4054 = vunpack.c.h.b16 %v1924
        %v4055 = vunpack.c.l.b16 %v1925
        %v4056 = vunpack.c.h.b16 %v1925
        %v4057 = vunpack.c.l.b16 %v1926
        %v4058 = vunpack.c.h.b16 %v1926
        %v4059 = vunpack.c.l.b16 %v1927
        %v4060 = vunpack.c.h.b16 %v1927
        %v4061 = vunpack.c.l.b16 %v1928
        %v4062 = vunpack.c.h.b16 %v1928
        %v4063 = vunpack.c.l.b16 %v1929
        %v4064 = vunpack.c.h.b16 %v1929
        %v4065 = vunpack.c.l.b16 %v1930
        %v4066 = vunpack.c.h.b16 %v1930
        %v4067 = vunpack.c.l.b16 %v1931
        %v4068 = vunpack.c.h.b16 %v1931
        %v4069 = vunpack.c.l.b16 %v1932
        %v4070 = vunpack.c.h.b16 %v1932
        %v4071 = vunpack.c.l.b16 %v1933
        %v4072 = vunpack.c.h.b16 %v1933
        %v4073 = vunpack.c.l.b16 %v1934
        %v4074 = vunpack.c.h.b16 %v1934
        %v4075 = vunpack.c.l.b16 %v1935
        %v4076 = vunpack.c.h.b16 %v1935
        %v4077 = vunpack.c.l.b16 %v1936
        %v4078 = vunpack.c.h.b16 %v1936
        %v4079 = vunpack.c.l.b16 %v1937
        %v4080 = vunpack.c.h.b16 %v1937
        %v4081 = vunpack.c.l.b16 %v1938
        %v4082 = vunpack.c.h.b16 %v1938
        %v4083 = vunpack.c.l.b16 %v1939
        %v4084 = vunpack.c.h.b16 %v1939
        %v4085 = vunpack.c.l.b16 %v1940
        %v4086 = vunpack.c.h.b16 %v1940
        %v4087 = vunpack.c.l.b16 %v1941
        %v4088 = vunpack.c.h.b16 %v1941
        %v4089 = vunpack.c.l.b16 %v1942
        %v4090 = vunpack.c.h.b16 %v1942
        %v4091 = vunpack.c.l.b16 %v1943
        %v4092 = vunpack.c.h.b16 %v1943
        %v4093 = vunpack.c.l.b16 %v1944
        %v4094 = vunpack.c.h.b16 %v1944
        %v4095 = vunpack.c.l.b16 %v1945
        %v4096 = vunpack.c.h.b16 %v1945
        %v4097 = vunpack.c.l.b16 %v1946
        %v4098 = vunpack.c.h.b16 %v1946
        %v4099 = vunpack.c.l.b16 %v1947
        %v4100 = vunpack.c.h.b16 %v1947
        %v4101 = vunpack.c.l.b16 %v1948
        %v4102 = vunpack.c.h.b16 %v1948
        %v4103 = vunpack.c.l.b16 %v1949
        %v4104 = vunpack.c.h.b16 %v1949
        %v4105 = vunpack.c.l.b16 %v1950
        %v4106 = vunpack.c.h.b16 %v1950
        %v4107 = vunpack.c.l.b16 %v1951
        %v4108 = vunpack.c.h.b16 %v1951
        %v4109 = vunpack.c.l.b16 %v1952
        %v4110 = vunpack.c.h.b16 %v1952
        %v4111 = vunpack.c.l.b16 %v1953
        %v4112 = vunpack.c.h.b16 %v1953
        %v4113 = vunpack.c.l.b16 %v1954
        %v4114 = vunpack.c.h.b16 %v1954
        %v4115 = vunpack.c.l.b16 %v1955
        %v4116 = vunpack.c.h.b16 %v1955
        %v4117 = vunpack.c.l.b16 %v1956
        %v4118 = vunpack.c.h.b16 %v1956
        %v4119 = vunpack.c.l.b16 %v1957
        %v4120 = vunpack.c.h.b16 %v1957
        %v4121 = vunpack.c.l.b16 %v1958
        %v4122 = vunpack.c.h.b16 %v1958
        %v4123 = vunpack.c.l.b16 %v1959
        %v4124 = vunpack.c.h.b16 %v1959
        %v4125 = vunpack.c.l.b16 %v1960
        %v4126 = vunpack.c.h.b16 %v1960
        %v4127 = vunpack.c.l.b16 %v1961
        %v4128 = vunpack.c.h.b16 %v1961
        %v4129 = vunpack.c.l.b16 %v1962
        %v4130 = vunpack.c.h.b16 %v1962
        %v4131 = vunpack.c.l.b16 %v1963
        %v4132 = vunpack.c.h.b16 %v1963
        %v4133 = vunpack.c.l.b16 %v1964
        %v4134 = vunpack.c.h.b16 %v1964
        %v4135 = vunpack.c.l.b16 %v1965
        %v4136 = vunpack.c.h.b16 %v1965
        %v4137 = vunpack.c.l.b16 %v1966
        %v4138 = vunpack.c.h.b16 %v1966
        %v4139 = vunpack.c.l.b16 %v1967
        %v4140 = vunpack.c.h.b16 %v1967
        %v4141 = vunpack.c.l.b16 %v1968
        %v4142 = vunpack.c.h.b16 %v1968
        %v4143 = vunpack.c.l.b16 %v1969
        %v4144 = vunpack.c.h.b16 %v1969
        %v4145 = vunpack.c.l.b16 %v1970
        %v4146 = vunpack.c.h.b16 %v1970
        %v4147 = vunpack.c.l.b16 %v1971
        %v4148 = vunpack.c.h.b16 %v1971
        %v4149 = vunpack.c.l.b16 %v1972
        %v4150 = vunpack.c.h.b16 %v1972
        %v4151 = vunpack.c.l.b16 %v1973
        %v4152 = vunpack.c.h.b16 %v1973
        %v4153 = vunpack.c.l.b16 %v1974
        %v4154 = vunpack.c.h.b16 %v1974
        %v4155 = vunpack.c.l.b16 %v1975
        %v4156 = vunpack.c.h.b16 %v1975
        %v4157 = vunpack.c.l.b16 %v1976
        %v4158 = vunpack.c.h.b16 %v1976
        %v4159 = vunpack.c.l.b16 %v1977
        %v4160 = vunpack.c.h.b16 %v1977
        %v4161 = vunpack.c.l.b16 %v1978
        %v4162 = vunpack.c.h.b16 %v1978
        %v4163 = vunpack.c.l.b16 %v1979
        %v4164 = vunpack.c.h.b16 %v1979
        %v4165 = vunpack.c.l.b16 %v1980
        %v4166 = vunpack.c.h.b16 %v1980
        %v4167 = vunpack.c.l.b16 %v1981
        %v4168 = vunpack.c.h.b16 %v1981
        %v4169 = vunpack.c.l.b16 %v1982
        %v4170 = vunpack.c.h.b16 %v1982
        %v4171 = vunpack.c.l.b16 %v1983
        %v4172 = vunpack.c.h.b16 %v1983
        %v4173 = vunpack.c.l.b16 %v1984
        %v4174 = vunpack.c.h.b16 %v1984
        %v4175 = vunpack.c.l.b16 %v1985
        %v4176 = vunpack.c.h.b16 %v1985
        %v4177 = vunpack.c.l.b16 %v1986
        %v4178 = vunpack.c.h.b16 %v1986
        %v4179 = vunpack.c.l.b16 %v1987
        %v4180 = vunpack.c.h.b16 %v1987
        %v4181 = vunpack.c.l.b16 %v1988
        %v4182 = vunpack.c.h.b16 %v1988
        %v4183 = vunpack.c.l.b16 %v1989
        %v4184 = vunpack.c.h.b16 %v1989
        %v4185 = vunpack.c.l.b16 %v1990
        %v4186 = vunpack.c.h.b16 %v1990
        %v4187 = vunpack.c.l.b16 %v1991
        %v4188 = vunpack.c.h.b16 %v1991
        %v4189 = vunpack.c.l.b16 %v1992
        %v4190 = vunpack.c.h.b16 %v1992
        %v4191 = vunpack.c.l.b16 %v1993
        %v4192 = vunpack.c.h.b16 %v1993
        %v4193 = vunpack.c.l.b16 %v1994
        %v4194 = vunpack.c.h.b16 %v1994
        %v4195 = vunpack.c.l.b16 %v1995
        %v4196 = vunpack.c.h.b16 %v1995
        %v4197 = vunpack.c.l.b16 %v1996
        %v4198 = vunpack.c.h.b16 %v1996
        %v4199 = vunpack.c.l.b16 %v1997
        %v4200 = vunpack.c.h.b16 %v1997
        %v4201 = vunpack.c.l.b16 %v1998
        %v4202 = vunpack.c.h.b16 %v1998
        %v4203 = vunpack.c.l.b16 %v1999
        %v4204 = vunpack.c.h.b16 %v1999
        %v4205 = vunpack.c.l.b16 %v2000
        %v4206 = vunpack.c.h.b16 %v2000
        %v4207 = vunpack.c.l.b16 %v2001
        %v4208 = vunpack.c.h.b16 %v2001
        %v4209 = vunpack.c.l.b16 %v2002
        %v4210 = vunpack.c.h.b16 %v2002
        %v4211 = vunpack.c.l.b16 %v2003
        %v4212 = vunpack.c.h.b16 %v2003
        %v4213 = vunpack.c.l.b16 %v2004
        %v4214 = vunpack.c.h.b16 %v2004
        %v4215 = vunpack.c.l.b16 %v2005
        %v4216 = vunpack.c.h.b16 %v2005
        %v4217 = vunpack.c.l.b16 %v2006
        %v4218 = vunpack.c.h.b16 %v2006
        %v4219 = vunpack.c.l.b16 %v2007
        %v4220 = vunpack.c.h.b16 %v2007
        %v4221 = vunpack.c.l.b16 %v2008
        %v4222 = vunpack.c.h.b16 %v2008
        %v4223 = vunpack.c.l.b16 %v2009
        %v4224 = vunpack.c.h.b16 %v2009
        %v4225 = vunpack.c.l.b16 %v2010
        %v4226 = vunpack.c.h.b16 %v2010
        %v4227 = vunpack.c.l.b16 %v2011
        %v4228 = vunpack.c.h.b16 %v2011
        %v4229 = vunpack.c.l.b16 %v2012
        %v4230 = vunpack.c.h.b16 %v2012
        %v4231 = vunpack.c.l.b16 %v2013
        %v4232 = vunpack.c.h.b16 %v2013
        %v4233 = vunpack.c.l.b16 %v2014
        %v4234 = vunpack.c.h.b16 %v2014
        %v4235 = vunpack.c.l.b16 %v2015
        %v4236 = vunpack.c.h.b16 %v2015
        %v4237 = vunpack.c.l.b16 %v2016
        %v4238 = vunpack.c.h.b16 %v2016
        %v4239 = vunpack.c.l.b16 %v2017
        %v4240 = vunpack.c.h.b16 %v2017
        %v4241 = vunpack.c.l.b16 %v2018
        %v4242 = vunpack.c.h.b16 %v2018
        %v4243 = vunpack.c.l.b16 %v2019
        %v4244 = vunpack.c.h.b16 %v2019
        %v4245 = vunpack.c.l.b16 %v2020
        %v4246 = vunpack.c.h.b16 %v2020
        %v4247 = vunpack.c.l.b16 %v2021
        %v4248 = vunpack.c.h.b16 %v2021
        %v4249 = vunpack.c.l.b16 %v2022
        %v4250 = vunpack.c.h.b16 %v2022
        %v4251 = vunpack.c.l.b16 %v2023
        %v4252 = vunpack.c.h.b16 %v2023
        %v4253 = vunpack.c.l.b16 %v2024
        %v4254 = vunpack.c.h.b16 %v2024
        %v4255 = vunpack.c.l.b16 %v2025
        %v4256 = vunpack.c.h.b16 %v2025
        %v4257 = vunpack.c.l.b16 %v2026
        %v4258 = vunpack.c.h.b16 %v2026
        %v4259 = vunpack.c.l.b16 %v2027
        %v4260 = vunpack.c.h.b16 %v2027
        %v4261 = vunpack.c.l.b16 %v2028
        %v4262 = vunpack.c.h.b16 %v2028
        %v4263 = vunpack.c.l.b16 %v2029
        %v4264 = vunpack.c.h.b16 %v2029
        %v4265 = vunpack.c.l.b16 %v2030
        %v4266 = vunpack.c.h.b16 %v2030
        %v4267 = vunpack.c.l.b16 %v2031
        %v4268 = vunpack.c.h.b16 %v2031
        %v4269 = vunpack.c.l.b16 %v2032
        %v4270 = vunpack.c.h.b16 %v2032
        %v4271 = vunpack.c.l.b16 %v2033
        %v4272 = vunpack.c.h.b16 %v2033
        %v4273 = vunpack.c.l.b16 %v2034
        %v4274 = vunpack.c.h.b16 %v2034
        %v4275 = vunpack.c.l.b16 %v2035
        %v4276 = vunpack.c.h.b16 %v2035
        %v4277 = vunpack.c.l.b16 %v2036
        %v4278 = vunpack.c.h.b16 %v2036
        %v4279 = vunpack.c.l.b16 %v2037
        %v4280 = vunpack.c.h.b16 %v2037
        %v4281 = vunpack.c.l.b16 %v2038
        %v4282 = vunpack.c.h.b16 %v2038
        %v4283 = vunpack.c.l.b16 %v2039
        %v4284 = vunpack.c.h.b16 %v2039
        %v4285 = vunpack.c.l.b16 %v2040
        %v4286 = vunpack.c.h.b16 %v2040
        %v4287 = vunpack.c.l.b16 %v2041
        %v4288 = vunpack.c.h.b16 %v2041
        %v4289 = vunpack.c.l.b16 %v2042
        %v4290 = vunpack.c.h.b16 %v2042
        %v4291 = vunpack.c.l.b16 %v2043
        %v4292 = vunpack.c.h.b16 %v2043
        %v4293 = vunpack.c.l.b16 %v2044
        %v4294 = vunpack.c.h.b16 %v2044
        %v4295 = vunpack.c.l.b16 %v2045
        %v4296 = vunpack.c.h.b16 %v2045
        %v4297 = vunpack.c.l.b16 %v2046
        %v4298 = vunpack.c.h.b16 %v2046
        %v4299 = vunpack.c.l.b16 %v2047
        %v4300 = vunpack.c.h.b16 %v2047
        %v4301 = vunpack.c.l.b16 %v2048
        %v4302 = vunpack.c.h.b16 %v2048
        %v4303 = vunpack.c.l.b16 %v2049
        %v4304 = vunpack.c.h.b16 %v2049
        %v4305 = vunpack.c.l.b16 %v2050
        %v4306 = vunpack.c.h.b16 %v2050
        %v4307 = vunpack.c.l.b16 %v2051
        %v4308 = vunpack.c.h.b16 %v2051
        %v4309 = vunpack.c.l.b16 %v2052
        %v4310 = vunpack.c.h.b16 %v2052
        %v4311 = vunpack.c.l.b16 %v2053
        %v4312 = vunpack.c.h.b16 %v2053
        %v4313 = vunpack.c.l.b16 %v2054
        %v4314 = vunpack.c.h.b16 %v2054
        %v4315 = vunpack.c.l.b16 %v2055
        %v4316 = vunpack.c.h.b16 %v2055
        %v4317 = vunpack.c.l.b16 %v2056
        %v4318 = vunpack.c.h.b16 %v2056
        %v4319 = vunpack.c.l.b16 %v2057
        %v4320 = vunpack.c.h.b16 %v2057
        %v4321 = vunpack.c.l.b16 %v2058
        %v4322 = vunpack.c.h.b16 %v2058
        %v4323 = vunpack.c.l.b16 %v2059
        %v4324 = vunpack.c.h.b16 %v2059
        %v4325 = vunpack.c.l.b16 %v2060
        %v4326 = vunpack.c.h.b16 %v2060
        %v4327 = vunpack.c.l.b16 %v2061
        %v4328 = vunpack.c.h.b16 %v2061
        %v4329 = vunpack.c.l.b16 %v2062
        %v4330 = vunpack.c.h.b16 %v2062
        %v4331 = vunpack.c.l.b16 %v2063
        %v4332 = vunpack.c.h.b16 %v2063
        %v4333 = vunpack.c.l.b16 %v2064
        %v4334 = vunpack.c.h.b16 %v2064
        %v4335 = vunpack.c.l.b16 %v2065
        %v4336 = vunpack.c.h.b16 %v2065
        %v4337 = vunpack.c.l.b16 %v2066
        %v4338 = vunpack.c.h.b16 %v2066
        %v4339 = vunpack.c.l.b16 %v2067
        %v4340 = vunpack.c.h.b16 %v2067
        %v4341 = vunpack.c.l.b16 %v2068
        %v4342 = vunpack.c.h.b16 %v2068
        %v4343 = vunpack.c.l.b16 %v2069
        %v4344 = vunpack.c.h.b16 %v2069
        %v4345 = vunpack.c.l.b16 %v2070
        %v4346 = vunpack.c.h.b16 %v2070
        %v4347 = vunpack.c.l.b16 %v2071
        %v4348 = vunpack.c.h.b16 %v2071
        %v4349 = vunpack.c.l.b16 %v2072
        %v4350 = vunpack.c.h.b16 %v2072
        %v4351 = vunpack.c.l.b16 %v2073
        %v4352 = vunpack.c.h.b16 %v2073
        %v4353 = vunpack.c.l.b16 %v2074
        %v4354 = vunpack.c.h.b16 %v2074
        %v4355 = vunpack.c.l.b16 %v2075
        %v4356 = vunpack.c.h.b16 %v2075
        %v4357 = vunpack.c.l.b16 %v2076
        %v4358 = vunpack.c.h.b16 %v2076
        %v4359 = vunpack.c.l.b16 %v2077
        %v4360 = vunpack.c.h.b16 %v2077
        %v4361 = vunpack.c.l.b16 %v2078
        %v4362 = vunpack.c.h.b16 %v2078
        %v4363 = vunpack.c.l.b16 %v2079
        %v4364 = vunpack.c.h.b16 %v2079
        %v4365 = vunpack.c.l.b16 %v2080
        %v4366 = vunpack.c.h.b16 %v2080
        %v4367 = vunpack.c.l.b16 %v2081
        %v4368 = vunpack.c.h.b16 %v2081
        %v4369 = vunpack.c.l.b16 %v2082
        %v4370 = vunpack.c.h.b16 %v2082
        %v4371 = vunpack.c.l.b16 %v2083
        %v4372 = vunpack.c.h.b16 %v2083
        %v4373 = vunpack.c.l.b16 %v2084
        %v4374 = vunpack.c.h.b16 %v2084
        %v4375 = vunpack.c.l.b16 %v2085
        %v4376 = vunpack.c.h.b16 %v2085
        %v4377 = vunpack.c.l.b16 %v2086
        %v4378 = vunpack.c.h.b16 %v2086
        %v4379 = vunpack.c.l.b16 %v2087
        %v4380 = vunpack.c.h.b16 %v2087
        %v4381 = vunpack.c.l.b16 %v2088
        %v4382 = vunpack.c.h.b16 %v2088
        %v4383 = vunpack.c.l.b16 %v2089
        %v4384 = vunpack.c.h.b16 %v2089
        %v4385 = vunpack.c.l.b16 %v2090
        %v4386 = vunpack.c.h.b16 %v2090
        %v4387 = vunpack.c.l.b16 %v2091
        %v4388 = vunpack.c.h.b16 %v2091
        %v4389 = vunpack.c.l.b16 %v2092
        %v4390 = vunpack.c.h.b16 %v2092
        %v4391 = vunpack.c.l.b16 %v2093
        %v4392 = vunpack.c.h.b16 %v2093
        %v4393 = vunpack.c.l.b16 %v2094
        %v4394 = vunpack.c.h.b16 %v2094
        %v4395 = vunpack.c.l.b16 %v2095
        %v4396 = vunpack.c.h.b16 %v2095
        %v4397 = vunpack.c.l.b16 %v2096
        %v4398 = vunpack.c.h.b16 %v2096
        %v4399 = vunpack.c.l.b16 %v2097
        %v4400 = vunpack.c.h.b16 %v2097
        %v4401 = vunpack.c.l.b16 %v2098
        %v4402 = vunpack.c.h.b16 %v2098
        %v4403 = vunpack.c.l.b16 %v2099
        %v4404 = vunpack.c.h.b16 %v2099
        %v4405 = vunpack.c.l.b16 %v2100
        %v4406 = vunpack.c.h.b16 %v2100
        %v4407 = vunpack.c.l.b16 %v2101
        %v4408 = vunpack.c.h.b16 %v2101
        %v4409 = vunpack.c.l.b16 %v2102
        %v4410 = vunpack.c.h.b16 %v2102
        %v4411 = vunpack.c.l.b16 %v2103
        %v4412 = vunpack.c.h.b16 %v2103
        %v4413 = vunpack.c.l.b16 %v2104
        %v4414 = vunpack.c.h.b16 %v2104
        %v4415 = vunpack.c.l.b16 %v2105
        %v4416 = vunpack.c.h.b16 %v2105
        %v4417 = vunpack.c.l.b16 %v2106
        %v4418 = vunpack.c.h.b16 %v2106
        %v4419 = vunpack.c.l.b16 %v2107
        %v4420 = vunpack.c.h.b16 %v2107
        %v4421 = vunpack.c.l.b16 %v2108
        %v4422 = vunpack.c.h.b16 %v2108
        %v4423 = vunpack.c.l.b16 %v2109
        %v4424 = vunpack.c.h.b16 %v2109
        %v4425 = vunpack.c.l.b16 %v2110
        %v4426 = vunpack.c.h.b16 %v2110
        %v4427 = vunpack.c.l.b16 %v2111
        %v4428 = vunpack.c.h.b16 %v2111
        %v4429 = vunpack.c.l.b16 %v2112
        %v4430 = vunpack.c.h.b16 %v2112
        %v4431 = vunpack.c.l.b16 %v2113
        %v4432 = vunpack.c.h.b16 %v2113
        %v4433 = vunpack.c.l.b16 %v2114
        %v4434 = vunpack.c.h.b16 %v2114
        %v4435 = vunpack.c.l.b16 %v2115
        %v4436 = vunpack.c.h.b16 %v2115
        %v4437 = vunpack.c.l.b16 %v2116
        %v4438 = vunpack.c.h.b16 %v2116
        %v4439 = vunpack.c.l.b16 %v2117
        %v4440 = vunpack.c.h.b16 %v2117
        %v4441 = vunpack.c.l.b16 %v2118
        %v4442 = vunpack.c.h.b16 %v2118
        %v4443 = vunpack.c.l.b16 %v2119
        %v4444 = vunpack.c.h.b16 %v2119
        %v4445 = vunpack.c.l.b16 %v2120
        %v4446 = vunpack.c.h.b16 %v2120
        %v4447 = vunpack.c.l.b16 %v2121
        %v4448 = vunpack.c.h.b16 %v2121
        %v4449 = vunpack.c.l.b16 %v2122
        %v4450 = vunpack.c.h.b16 %v2122
        %v4451 = vunpack.c.l.b16 %v2123
        %v4452 = vunpack.c.h.b16 %v2123
        %v4453 = vunpack.c.l.b16 %v2124
        %v4454 = vunpack.c.h.b16 %v2124
        %v4455 = vunpack.c.l.b16 %v2125
        %v4456 = vunpack.c.h.b16 %v2125
        %v4457 = vunpack.c.l.b16 %v2126
        %v4458 = vunpack.c.h.b16 %v2126
        %v4459 = vunpack.c.l.b16 %v2127
        %v4460 = vunpack.c.h.b16 %v2127
        %v4461 = vunpack.c.l.b16 %v2128
        %v4462 = vunpack.c.h.b16 %v2128
        %v4463 = vunpack.c.l.b16 %v2129
        %v4464 = vunpack.c.h.b16 %v2129
        %v4465 = vunpack.c.l.b16 %v2130
        %v4466 = vunpack.c.h.b16 %v2130
        %v4467 = vunpack.c.l.b16 %v2131
        %v4468 = vunpack.c.h.b16 %v2131
        %v4469 = vunpack.c.l.b16 %v2132
        %v4470 = vunpack.c.h.b16 %v2132
        %v4471 = vunpack.c.l.b16 %v2133
        %v4472 = vunpack.c.h.b16 %v2133
        %v4473 = vunpack.c.l.b16 %v2134
        %v4474 = vunpack.c.h.b16 %v2134
        %v4475 = vunpack.c.l.b16 %v2135
        %v4476 = vunpack.c.h.b16 %v2135
        %v4477 = vunpack.c.l.b16 %v2136
        %v4478 = vunpack.c.h.b16 %v2136
        %v4479 = vunpack.c.l.b16 %v2137
        %v4480 = vunpack.c.h.b16 %v2137
        %v4481 = vunpack.c.l.b16 %v2138
        %v4482 = vunpack.c.h.b16 %v2138
        %v4483 = vunpack.c.l.b16 %v2139
        %v4484 = vunpack.c.h.b16 %v2139
        %v4485 = vunpack.c.l.b16 %v2140
        %v4486 = vunpack.c.h.b16 %v2140
        %v4487 = vunpack.c.l.b16 %v2141
        %v4488 = vunpack.c.h.b16 %v2141
        %v4489 = vunpack.c.l.b16 %v2142
        %v4490 = vunpack.c.h.b16 %v2142
        %v4491 = vunpack.c.l.b16 %v2143
        %v4492 = vunpack.c.h.b16 %v2143
        %v4493 = vunpack.c.l.b16 %v2144
        %v4494 = vunpack.c.h.b16 %v2144
        %v4495 = vunpack.c.l.b16 %v2145
        %v4496 = vunpack.c.h.b16 %v2145
        %v4497 = vunpack.c.l.b16 %v2146
        %v4498 = vunpack.c.h.b16 %v2146
        %v4499 = vunpack.c.l.b16 %v2147
        %v4500 = vunpack.c.h.b16 %v2147
        %v4501 = vunpack.c.l.b16 %v2148
        %v4502 = vunpack.c.h.b16 %v2148
        %v4503 = vunpack.c.l.b16 %v2149
        %v4504 = vunpack.c.h.b16 %v2149
        %v4505 = vunpack.c.l.b16 %v2150
        %v4506 = vunpack.c.h.b16 %v2150
        %v4507 = vunpack.c.l.b16 %v2151
        %v4508 = vunpack.c.h.b16 %v2151
        %v4509 = vunpack.c.l.b16 %v2152
        %v4510 = vunpack.c.h.b16 %v2152
        %v4511 = vunpack.c.l.b16 %v2153
        %v4512 = vunpack.c.h.b16 %v2153
        %v4513 = vunpack.c.l.b16 %v2154
        %v4514 = vunpack.c.h.b16 %v2154
        %v4515 = vunpack.c.l.b16 %v2155
        %v4516 = vunpack.c.h.b16 %v2155
        %v4517 = vunpack.c.l.b16 %v2156
        %v4518 = vunpack.c.h.b16 %v2156
        %v4519 = vunpack.c.l.b16 %v2157
        %v4520 = vunpack.c.h.b16 %v2157
        %v4521 = vunpack.c.l.b16 %v2158
        %v4522 = vunpack.c.h.b16 %v2158
        %v4523 = vunpack.c.l.b16 %v2159
        %v4524 = vunpack.c.h.b16 %v2159
        %v4525 = vunpack.c.l.b16 %v2160
        %v4526 = vunpack.c.h.b16 %v2160
        %v4527 = vunpack.c.l.b16 %v2161
        %v4528 = vunpack.c.h.b16 %v2161
        %v4529 = vunpack.c.l.b16 %v2162
        %v4530 = vunpack.c.h.b16 %v2162
        %v4531 = vunpack.c.l.b16 %v2163
        %v4532 = vunpack.c.h.b16 %v2163
        %v4533 = vunpack.c.l.b16 %v2164
        %v4534 = vunpack.c.h.b16 %v2164
        %v4535 = vunpack.c.l.b16 %v2165
        %v4536 = vunpack.c.h.b16 %v2165
        %v4537 = vunpack.c.l.b16 %v2166
        %v4538 = vunpack.c.h.b16 %v2166
        %v4539 = vunpack.c.l.b16 %v2167
        %v4540 = vunpack.c.h.b16 %v2167
        %v4541 = vunpack.c.l.b16 %v2168
        %v4542 = vunpack.c.h.b16 %v2168
        %v4543 = vunpack.c.l.b16 %v2169
        %v4544 = vunpack.c.h.b16 %v2169
        %v4545 = vunpack.c.l.b16 %v2170
        %v4546 = vunpack.c.h.b16 %v2170
        %v4547 = vunpack.c.l.b16 %v2171
        %v4548 = vunpack.c.h.b16 %v2171
        %v4549 = vunpack.c.l.b16 %v2172
        %v4550 = vunpack.c.h.b16 %v2172
        %v4551 = vunpack.c.l.b16 %v2173
        %v4552 = vunpack.c.h.b16 %v2173
        %v4553 = vunpack.c.l.b16 %v2174
        %v4554 = vunpack.c.h.b16 %v2174
        %v4555 = vunpack.c.l.b16 %v2175
        %v4556 = vunpack.c.h.b16 %v2175
        %v4557 = vunpack.c.l.b16 %v2176
        %v4558 = vunpack.c.h.b16 %v2176
        %v4559 = vunpack.c.l.b16 %v2177
        %v4560 = vunpack.c.h.b16 %v2177
        %v4561 = vunpack.c.l.b16 %v2178
        %v4562 = vunpack.c.h.b16 %v2178
        %v4563 = vunpack.c.l.b16 %v2179
        %v4564 = vunpack.c.h.b16 %v2179
        %v4565 = vunpack.c.l.b16 %v2180
        %v4566 = vunpack.c.h.b16 %v2180
        %v4567 = vunpack.c.l.b16 %v2181
        %v4568 = vunpack.c.h.b16 %v2181
        %v4569 = vunpack.c.l.b16 %v2182
        %v4570 = vunpack.c.h.b16 %v2182
        %v4571 = vunpack.c.l.b16 %v2183
        %v4572 = vunpack.c.h.b16 %v2183
        %v4573 = vunpack.c.l.b16 %v2184
        %v4574 = vunpack.c.h.b16 %v2184
        %v4575 = vunpack.c.l.b16 %v2185
        %v4576 = vunpack.c.h.b16 %v2185
        %v4577 = vunpack.c.l.b16 %v2186
        %v4578 = vunpack.c.h.b16 %v2186
        %v4579 = vunpack.c.l.b16 %v2187
        %v4580 = vunpack.c.h.b16 %v2187
        %v4581 = vunpack.c.l.b16 %v2188
        %v4582 = vunpack.c.h.b16 %v2188
        %v4583 = vunpack.c.l.b16 %v2189
        %v4584 = vunpack.c.h.b16 %v2189
        %v4585 = vunpack.c.l.b16 %v2190
        %v4586 = vunpack.c.h.b16 %v2190
        %v4587 = vunpack.c.l.b16 %v2191
        %v4588 = vunpack.c.h.b16 %v2191
        %v4589 = vunpack.c.l.b16 %v2192
        %v4590 = vunpack.c.h.b16 %v2192
        %v4591 = vunpack.c.l.b16 %v2193
        %v4592 = vunpack.c.h.b16 %v2193
        %v4593 = vunpack.c.l.b16 %v2194
        %v4594 = vunpack.c.h.b16 %v2194
        %v4595 = vunpack.c.l.b16 %v2195
        %v4596 = vunpack.c.h.b16 %v2195
        %v4597 = vunpack.c.l.b16 %v2196
        %v4598 = vunpack.c.h.b16 %v2196
        %v4599 = vunpack.c.l.b16 %v2197
        %v4600 = vunpack.c.h.b16 %v2197
        %v4601 = vunpack.c.l.b16 %v2198
        %v4602 = vunpack.c.h.b16 %v2198
        %v4603 = vunpack.c.l.b16 %v2199
        %v4604 = vunpack.c.h.b16 %v2199
        %v4605 = vunpack.c.l.b16 %v2200
        %v4606 = vunpack.c.h.b16 %v2200
        %v4607 = vunpack.c.l.b16 %v2201
        %v4608 = vunpack.c.h.b16 %v2201
        %v4609 = vunpack.c.l.b16 %v2202
        %v4610 = vunpack.c.h.b16 %v2202
        %v4611 = vunpack.c.l.b16 %v2203
        %v4612 = vunpack.c.h.b16 %v2203
        %v4613 = vunpack.c.l.b16 %v2204
        %v4614 = vunpack.c.h.b16 %v2204
        %v4615 = vunpack.c.l.b16 %v2205
        %v4616 = vunpack.c.h.b16 %v2205
        %v4617 = vunpack.c.l.b16 %v2206
        %v4618 = vunpack.c.h.b16 %v2206
        %v4619 = vunpack.c.l.b16 %v2207
        %v4620 = vunpack.c.h.b16 %v2207
        %v4621 = vunpack.c.l.b16 %v2208
        %v4622 = vunpack.c.h.b16 %v2208
        %v4623 = vunpack.c.l.b16 %v2209
        %v4624 = vunpack.c.h.b16 %v2209
        %v4625 = vunpack.c.l.b16 %v2210
        %v4626 = vunpack.c.h.b16 %v2210
        %v4627 = vunpack.c.l.b16 %v2211
        %v4628 = vunpack.c.h.b16 %v2211
        %v4629 = vunpack.c.l.b16 %v2212
        %v4630 = vunpack.c.h.b16 %v2212
        %v4631 = vunpack.c.l.b16 %v2213
        %v4632 = vunpack.c.h.b16 %v2213
        %v4633 = vunpack.c.l.b16 %v2214
        %v4634 = vunpack.c.h.b16 %v2214
        %v4635 = vunpack.c.l.b16 %v2215
        %v4636 = vunpack.c.h.b16 %v2215
        %v4637 = vunpack.c.l.b16 %v2216
        %v4638 = vunpack.c.h.b16 %v2216
        %v4639 = vunpack.c.l.b16 %v2217
        %v4640 = vunpack.c.h.b16 %v2217
        %v4641 = vunpack.c.l.b16 %v2218
        %v4642 = vunpack.c.h.b16 %v2218
        %v4643 = vunpack.c.l.b16 %v2219
        %v4644 = vunpack.c.h.b16 %v2219
        %v4645 = vunpack.c.l.b16 %v2220
        %v4646 = vunpack.c.h.b16 %v2220
        %v4647 = vunpack.c.l.b16 %v2221
        %v4648 = vunpack.c.h.b16 %v2221
        %v4649 = vunpack.c.l.b16 %v2222
        %v4650 = vunpack.c.h.b16 %v2222
        %v4651 = vunpack.c.l.b16 %v2223
        %v4652 = vunpack.c.h.b16 %v2223
        %v4653 = vunpack.c.l.b16 %v2224
        %v4654 = vunpack.c.h.b16 %v2224
        %v4655 = vunpack.c.l.b16 %v2225
        %v4656 = vunpack.c.h.b16 %v2225
        %v4657 = vunpack.c.l.b16 %v2226
        %v4658 = vunpack.c.h.b16 %v2226
        %v4659 = vunpack.c.l.b16 %v2227
        %v4660 = vunpack.c.h.b16 %v2227
        %v4661 = vunpack.c.l.b16 %v2228
        %v4662 = vunpack.c.h.b16 %v2228
        %v4663 = vunpack.c.l.b16 %v2229
        %v4664 = vunpack.c.h.b16 %v2229
        %v4665 = vunpack.c.l.b16 %v2230
        %v4666 = vunpack.c.h.b16 %v2230
        %v4667 = vunpack.c.l.b16 %v2231
        %v4668 = vunpack.c.h.b16 %v2231
        %v4669 = vunpack.c.l.b16 %v2232
        %v4670 = vunpack.c.h.b16 %v2232
        %v4671 = vunpack.c.l.b16 %v2233
        %v4672 = vunpack.c.h.b16 %v2233
        %v4673 = vunpack.c.l.b16 %v2234
        %v4674 = vunpack.c.h.b16 %v2234
        %v4675 = vunpack.c.l.b16 %v2235
        %v4676 = vunpack.c.h.b16 %v2235
        %v4677 = vunpack.c.l.b16 %v2236
        %v4678 = vunpack.c.h.b16 %v2236
        %v4679 = vunpack.c.l.b16 %v2237
        %v4680 = vunpack.c.h.b16 %v2237
        %v4681 = vunpack.c.l.b16 %v2238
        %v4682 = vunpack.c.h.b16 %v2238
        %v4683 = vunpack.c.l.b16 %v2239
        %v4684 = vunpack.c.h.b16 %v2239
        %v4685 = vunpack.c.l.b16 %v2240
        %v4686 = vunpack.c.h.b16 %v2240
        %v4687 = vunpack.c.l.b16 %v2241
        %v4688 = vunpack.c.h.b16 %v2241
        %v4689 = vunpack.c.l.b16 %v2242
        %v4690 = vunpack.c.h.b16 %v2242
        %v4691 = vunpack.c.l.b16 %v2243
        %v4692 = vunpack.c.h.b16 %v2243
        %v4693 = vunpack.c.l.b16 %v2244
        %v4694 = vunpack.c.h.b16 %v2244
        %v4695 = vunpack.c.l.b16 %v2245
        %v4696 = vunpack.c.h.b16 %v2245
        %v4697 = vunpack.c.l.b16 %v2246
        %v4698 = vunpack.c.h.b16 %v2246
        %v4699 = vunpack.c.l.b16 %v2247
        %v4700 = vunpack.c.h.b16 %v2247
        %v4701 = vunpack.c.l.b16 %v2248
        %v4702 = vunpack.c.h.b16 %v2248
        %v4703 = vunpack.c.l.b16 %v2249
        %v4704 = vunpack.c.h.b16 %v2249
        %v4705 = vunpack.c.l.b16 %v2250
        %v4706 = vunpack.c.h.b16 %v2250
        %v4707 = vunpack.c.l.b16 %v2251
        %v4708 = vunpack.c.h.b16 %v2251
        %v4709 = vunpack.c.l.b16 %v2252
        %v4710 = vunpack.c.h.b16 %v2252
        %v4711 = vunpack.c.l.b16 %v2253
        %v4712 = vunpack.c.h.b16 %v2253
        %v4713 = vunpack.c.l.b16 %v2254
        %v4714 = vunpack.c.h.b16 %v2254
        %v4715 = vunpack.c.l.b16 %v2255
        %v4716 = vunpack.c.h.b16 %v2255
        %v4717 = vunpack.c.l.b16 %v2256
        %v4718 = vunpack.c.h.b16 %v2256
        %v4719 = vunpack.c.l.b16 %v2257
        %v4720 = vunpack.c.h.b16 %v2257
        %v4721 = vunpack.c.l.b16 %v2258
        %v4722 = vunpack.c.h.b16 %v2258
        %v4723 = vunpack.c.l.b16 %v2259
        %v4724 = vunpack.c.h.b16 %v2259
        %v4725 = vunpack.c.l.b16 %v2260
        %v4726 = vunpack.c.h.b16 %v2260
        %v4727 = vunpack.c.l.b16 %v2261
        %v4728 = vunpack.c.h.b16 %v2261
        %v4729 = vunpack.c.l.b16 %v2262
        %v4730 = vunpack.c.h.b16 %v2262
        %v4731 = vunpack.c.l.b16 %v2263
        %v4732 = vunpack.c.h.b16 %v2263
        %v4733 = vunpack.c.l.b16 %v2264
        %v4734 = vunpack.c.h.b16 %v2264
        %v4735 = vunpack.c.l.b16 %v2265
        %v4736 = vunpack.c.h.b16 %v2265
        %v4737 = vunpack.c.l.b16 %v2266
        %v4738 = vunpack.c.h.b16 %v2266
        %v4739 = vunpack.c.l.b16 %v2267
        %v4740 = vunpack.c.h.b16 %v2267
        %v4741 = vunpack.c.l.b16 %v2268
        %v4742 = vunpack.c.h.b16 %v2268
        %v4743 = vunpack.c.l.b16 %v2269
        %v4744 = vunpack.c.h.b16 %v2269
        %v4745 = vunpack.c.l.b16 %v2270
        %v4746 = vunpack.c.h.b16 %v2270
        %v4747 = vunpack.c.l.b16 %v2271
        %v4748 = vunpack.c.h.b16 %v2271
        %v4749 = vunpack.c.l.b16 %v2272
        %v4750 = vunpack.c.h.b16 %v2272
        %v4751 = vunpack.c.l.b16 %v2273
        %v4752 = vunpack.c.h.b16 %v2273
        %v4753 = vunpack.c.l.b16 %v2274
        %v4754 = vunpack.c.h.b16 %v2274
        %v4755 = vunpack.c.l.b16 %v2275
        %v4756 = vunpack.c.h.b16 %v2275
        %v4757 = vunpack.c.l.b16 %v2276
        %v4758 = vunpack.c.h.b16 %v2276
        %v4759 = vunpack.c.l.b16 %v2277
        %v4760 = vunpack.c.h.b16 %v2277
        %v4761 = vunpack.c.l.b16 %v2278
        %v4762 = vunpack.c.h.b16 %v2278
        %v4763 = vunpack.c.l.b16 %v2279
        %v4764 = vunpack.c.h.b16 %v2279
        %v4765 = vunpack.c.l.b16 %v2280
        %v4766 = vunpack.c.h.b16 %v2280
        %v4767 = vunpack.c.l.b16 %v2281
        %v4768 = vunpack.c.h.b16 %v2281
        %v4769 = vunpack.c.l.b16 %v2282
        %v4770 = vunpack.c.h.b16 %v2282
        %v4771 = vunpack.c.l.b16 %v2283
        %v4772 = vunpack.c.h.b16 %v2283
        %v4773 = vunpack.c.l.b16 %v2284
        %v4774 = vunpack.c.h.b16 %v2284
        %v4775 = vunpack.c.l.b16 %v2285
        %v4776 = vunpack.c.h.b16 %v2285
        %v4777 = vunpack.c.l.b16 %v2286
        %v4778 = vunpack.c.h.b16 %v2286
        %v4779 = vunpack.c.l.b16 %v2287
        %v4780 = vunpack.c.h.b16 %v2287
        %v4781 = vunpack.c.l.b16 %v2288
        %v4782 = vunpack.c.h.b16 %v2288
        %v4783 = vunpack.c.l.b16 %v2289
        %v4784 = vunpack.c.h.b16 %v2289
        %v4785 = vunpack.c.l.b16 %v2290
        %v4786 = vunpack.c.h.b16 %v2290
        %v4787 = vunpack.c.l.b16 %v2291
        %v4788 = vunpack.c.h.b16 %v2291
        %v4789 = vunpack.c.l.b16 %v2292
        %v4790 = vunpack.c.h.b16 %v2292
        %v4791 = vunpack.c.l.b16 %v2293
        %v4792 = vunpack.c.h.b16 %v2293
        %v4793 = vunpack.c.l.b16 %v2294
        %v4794 = vunpack.c.h.b16 %v2294
        %v4795 = vunpack.c.l.b16 %v2295
        %v4796 = vunpack.c.h.b16 %v2295
        %v4797 = vunpack.c.l.b16 %v2296
        %v4798 = vunpack.c.h.b16 %v2296
        %v4799 = vunpack.c.l.b16 %v2297
        %v4800 = vunpack.c.h.b16 %v2297
        %v4801 = vunpack.c.l.b16 %v2298
        %v4802 = vunpack.c.h.b16 %v2298
        %v4803 = vunpack.c.l.b16 %v2299
        %v4804 = vunpack.c.h.b16 %v2299
        %v4805 = vunpack.c.l.b16 %v2300
        %v4806 = vunpack.c.h.b16 %v2300
        %v4807 = vunpack.c.l.b16 %v2301
        %v4808 = vunpack.c.h.b16 %v2301
        %v4809 = vunpack.c.l.b16 %v2302
        %v4810 = vunpack.c.h.b16 %v2302
        %v4811 = vunpack.c.l.b16 %v2303
        %v4812 = vunpack.c.h.b16 %v2303
        %v4813 = vunpack.c.l.b16 %v2304
        %v4814 = vunpack.c.h.b16 %v2304
        %v4815 = vunpack.c.l.b16 %v2305
        %v4816 = vunpack.c.h.b16 %v2305
        %v4817 = vunpack.c.l.b16 %v2306
        %v4818 = vunpack.c.h.b16 %v2306
        %v4819 = vunpack.c.l.b16 %v2307
        %v4820 = vunpack.c.h.b16 %v2307
        %v4821 = vunpack.c.l.b16 %v2308
        %v4822 = vunpack.c.h.b16 %v2308
        %v4823 = vunpack.c.l.b16 %v2309
        %v4824 = vunpack.c.h.b16 %v2309
        %v4825 = vunpack.c.l.b16 %v2310
        %v4826 = vunpack.c.h.b16 %v2310
        %v4827 = vunpack.c.l.b16 %v2311
        %v4828 = vunpack.c.h.b16 %v2311
        %v4829 = vunpack.c.l.b16 %v2312
        %v4830 = vunpack.c.h.b16 %v2312
        %v4831 = vunpack.c.l.b16 %v2313
        %v4832 = vunpack.c.h.b16 %v2313
        %v4833 = vunpack.c.l.b16 %v2314
        %v4834 = vunpack.c.h.b16 %v2314
        %v4835 = vunpack.c.l.b16 %v2315
        %v4836 = vunpack.c.h.b16 %v2315
        %v4837 = vunpack.c.l.b16 %v2316
        %v4838 = vunpack.c.h.b16 %v2316
        %v4839 = vunpack.c.l.b16 %v2317
        %v4840 = vunpack.c.h.b16 %v2317
        %v4841 = vunpack.c.l.b16 %v2318
        %v4842 = vunpack.c.h.b16 %v2318
        %v4843 = vunpack.c.l.b16 %v2319
        %v4844 = vunpack.c.h.b16 %v2319
        %v4845 = vunpack.c.l.b16 %v2320
        %v4846 = vunpack.c.h.b16 %v2320
        %v4847 = vunpack.c.l.b16 %v2321
        %v4848 = vunpack.c.h.b16 %v2321
        %v4849 = vunpack.c.l.b16 %v2322
        %v4850 = vunpack.c.h.b16 %v2322
        %v4851 = vunpack.c.l.b16 %v2323
        %v4852 = vunpack.c.h.b16 %v2323
        %v4853 = vunpack.c.l.b16 %v2324
        %v4854 = vunpack.c.h.b16 %v2324
        %v4855 = vunpack.c.l.b16 %v2325
        %v4856 = vunpack.c.h.b16 %v2325
        %v4857 = vunpack.c.l.b16 %v2326
        %v4858 = vunpack.c.h.b16 %v2326
        %v4859 = vunpack.c.l.b16 %v2327
        %v4860 = vunpack.c.h.b16 %v2327
        %v4861 = vunpack.c.l.b16 %v2328
        %v4862 = vunpack.c.h.b16 %v2328
        %v4863 = vunpack.c.l.b16 %v2329
        %v4864 = vunpack.c.h.b16 %v2329
        %v4865 = vunpack.c.l.b16 %v2330
        %v4866 = vunpack.c.h.b16 %v2330
        %v4867 = vunpack.c.l.b16 %v2331
        %v4868 = vunpack.c.h.b16 %v2331
        %v4869 = vunpack.c.l.b16 %v2332
        %v4870 = vunpack.c.h.b16 %v2332
        %v4871 = vunpack.c.l.b16 %v2333
        %v4872 = vunpack.c.h.b16 %v2333
        %v4873 = vunpack.c.l.b16 %v2334
        %v4874 = vunpack.c.h.b16 %v2334
        %v4875 = vunpack.c.l.b16 %v2335
        %v4876 = vunpack.c.h.b16 %v2335
        %v4877 = vunpack.c.l.b16 %v2336
        %v4878 = vunpack.c.h.b16 %v2336
        %v4879 = vunpack.c.l.b16 %v2337
        %v4880 = vunpack.c.h.b16 %v2337
        %v4881 = vunpack.c.l.b16 %v2338
        %v4882 = vunpack.c.h.b16 %v2338
        %v4883 = vunpack.c.l.b16 %v2339
        %v4884 = vunpack.c.h.b16 %v2339
        %v4885 = vunpack.c.l.b16 %v2340
        %v4886 = vunpack.c.h.b16 %v2340
        %v4887 = vunpack.c.l.b16 %v2341
        %v4888 = vunpack.c.h.b16 %v2341
        %v4889 = vunpack.c.l.b16 %v2342
        %v4890 = vunpack.c.h.b16 %v2342
        %v4891 = vunpack.c.l.b16 %v2343
        %v4892 = vunpack.c.h.b16 %v2343
        %v4893 = vunpack.c.l.b16 %v2344
        %v4894 = vunpack.c.h.b16 %v2344
        %v4895 = vunpack.c.l.b16 %v2345
        %v4896 = vunpack.c.h.b16 %v2345
        %v4897 = vunpack.c.l.b16 %v2346
        %v4898 = vunpack.c.h.b16 %v2346
        %v4899 = vunpack.c.l.b16 %v2347
        %v4900 = vunpack.c.h.b16 %v2347
        %v4901 = vunpack.c.l.b16 %v2348
        %v4902 = vunpack.c.h.b16 %v2348
        %v4903 = vunpack.c.l.b16 %v2349
        %v4904 = vunpack.c.h.b16 %v2349
        %v4905 = vunpack.c.l.b16 %v2350
        %v4906 = vunpack.c.h.b16 %v2350
        %v4907 = vunpack.c.l.b16 %v2351
        %v4908 = vunpack.c.h.b16 %v2351
        %v4909 = vunpack.c.l.b16 %v2352
        %v4910 = vunpack.c.h.b16 %v2352
        %v4911 = vunpack.c.l.b16 %v2353
        %v4912 = vunpack.c.h.b16 %v2353
        %v4913 = vunpack.c.l.b16 %v2354
        %v4914 = vunpack.c.h.b16 %v2354
        %v4915 = vunpack.c.l.b16 %v2355
        %v4916 = vunpack.c.h.b16 %v2355
        %v4917 = vunpack.c.l.b16 %v2356
        %v4918 = vunpack.c.h.b16 %v2356
        %v4919 = vunpack.c.l.b16 %v2357
        %v4920 = vunpack.c.h.b16 %v2357
        %v4921 = vunpack.c.l.b16 %v2358
        %v4922 = vunpack.c.h.b16 %v2358
        %v4923 = vunpack.c.l.b16 %v2359
        %v4924 = vunpack.c.h.b16 %v2359
        %v4925 = vunpack.c.l.b16 %v2360
        %v4926 = vunpack.c.h.b16 %v2360
        %v4927 = vunpack.c.l.b16 %v2361
        %v4928 = vunpack.c.h.b16 %v2361
        %v4929 = vunpack.c.l.b16 %v2362
        %v4930 = vunpack.c.h.b16 %v2362
        %v4931 = vunpack.c.l.b16 %v2363
        %v4932 = vunpack.c.h.b16 %v2363
        %v4933 = vunpack.c.l.b16 %v2364
        %v4934 = vunpack.c.h.b16 %v2364
        %v4935 = vunpack.c.l.b16 %v2365
        %v4936 = vunpack.c.h.b16 %v2365
        %v4937 = vunpack.c.l.b16 %v2366
        %v4938 = vunpack.c.h.b16 %v2366
        %v4939 = vunpack.c.l.b16 %v2367
        %v4940 = vunpack.c.h.b16 %v2367
        %v4941 = vunpack.c.l.b16 %v2368
        %v4942 = vunpack.c.h.b16 %v2368
        %v4943 = vunpack.c.l.b16 %v2369
        %v4944 = vunpack.c.h.b16 %v2369
        %v4945 = vunpack.c.l.b16 %v2370
        %v4946 = vunpack.c.h.b16 %v2370
        %v4947 = vunpack.c.l.b16 %v2371
        %v4948 = vunpack.c.h.b16 %v2371
        %v4949 = vunpack.c.l.b16 %v2372
        %v4950 = vunpack.c.h.b16 %v2372
        %v4951 = vunpack.c.l.b16 %v2373
        %v4952 = vunpack.c.h.b16 %v2373
        %v4953 = vunpack.c.l.b16 %v2374
        %v4954 = vunpack.c.h.b16 %v2374
        %v4955 = vunpack.c.l.b16 %v2375
        %v4956 = vunpack.c.h.b16 %v2375
        %v4957 = vunpack.c.l.b16 %v2376
        %v4958 = vunpack.c.h.b16 %v2376
        %v4959 = vunpack.c.l.b16 %v2377
        %v4960 = vunpack.c.h.b16 %v2377
        %v4961 = vunpack.c.l.b16 %v2378
        %v4962 = vunpack.c.h.b16 %v2378
        %v4963 = vunpack.c.l.b16 %v2379
        %v4964 = vunpack.c.h.b16 %v2379
        %v4965 = vunpack.c.l.b16 %v2380
        %v4966 = vunpack.c.h.b16 %v2380
        %v4967 = vunpack.c.l.b16 %v2381
        %v4968 = vunpack.c.h.b16 %v2381
        %v4969 = vunpack.c.l.b16 %v2382
        %v4970 = vunpack.c.h.b16 %v2382
        %v4971 = vunpack.c.l.b16 %v2383
        %v4972 = vunpack.c.h.b16 %v2383
        %v4973 = vunpack.c.l.b16 %v2384
        %v4974 = vunpack.c.h.b16 %v2384
        %v4975 = vunpack.c.l.b16 %v2385
        %v4976 = vunpack.c.h.b16 %v2385
        %v4977 = vunpack.c.l.b16 %v2386
        %v4978 = vunpack.c.h.b16 %v2386
        %v4979 = vunpack.c.l.b16 %v2387
        %v4980 = vunpack.c.h.b16 %v2387
        %v4981 = vunpack.c.l.b16 %v2388
        %v4982 = vunpack.c.h.b16 %v2388
        %v4983 = vunpack.c.l.b16 %v2389
        %v4984 = vunpack.c.h.b16 %v2389
        %v4985 = vunpack.c.l.b16 %v2390
        %v4986 = vunpack.c.h.b16 %v2390
        %v4987 = vunpack.c.l.b16 %v2391
        %v4988 = vunpack.c.h.b16 %v2391
        %v4989 = vunpack.c.l.b16 %v2392
        %v4990 = vunpack.c.h.b16 %v2392
        %v4991 = vunpack.c.l.b16 %v2393
        %v4992 = vunpack.c.h.b16 %v2393
        %v4993 = vunpack.c.l.b16 %v2394
        %v4994 = vunpack.c.h.b16 %v2394
        %v4995 = vunpack.c.l.b16 %v2395
        %v4996 = vunpack.c.h.b16 %v2395
        %v4997 = vunpack.c.l.b16 %v2396
        %v4998 = vunpack.c.h.b16 %v2396
        %v4999 = vunpack.c.l.b16 %v2397
        %v5000 = vunpack.c.h.b16 %v2397
        %v5001 = vunpack.c.l.b16 %v2398
        %v5002 = vunpack.c.h.b16 %v2398
        %v5003 = vunpack.c.l.b16 %v2399
        %v5004 = vunpack.c.h.b16 %v2399
        %v5005 = vunpack.c.l.b16 %v2400
        %v5006 = vunpack.c.h.b16 %v2400
        %v5007 = vunpack.c.l.b16 %v2401
        %v5008 = vunpack.c.h.b16 %v2401
        %v5009 = vunpack.c.l.b16 %v2402
        %v5010 = vunpack.c.h.b16 %v2402
        %v5011 = vunpack.c.l.b16 %v2403
        %v5012 = vunpack.c.h.b16 %v2403
        %v5013 = vunpack.c.l.b16 %v2404
        %v5014 = vunpack.c.h.b16 %v2404
        %v5015 = vunpack.c.l.b16 %v2405
        %v5016 = vunpack.c.h.b16 %v2405
        %v5017 = vunpack.c.l.b16 %v2406
        %v5018 = vunpack.c.h.b16 %v2406
        %v5019 = vunpack.c.l.b16 %v2407
        %v5020 = vunpack.c.h.b16 %v2407
        %v5021 = vunpack.c.l.b16 %v2408
        %v5022 = vunpack.c.h.b16 %v2408
        %v5023 = vunpack.c.l.b16 %v2409
        %v5024 = vunpack.c.h.b16 %v2409
        %v5025 = vunpack.c.l.b16 %v2410
        %v5026 = vunpack.c.h.b16 %v2410
        %v5027 = vunpack.c.l.b16 %v2411
        %v5028 = vunpack.c.h.b16 %v2411
        %v5029 = vunpack.c.l.b16 %v2412
        %v5030 = vunpack.c.h.b16 %v2412
        %v5031 = vunpack.c.l.b16 %v2413
        %v5032 = vunpack.c.h.b16 %v2413
        %v5033 = vunpack.c.l.b16 %v2414
        %v5034 = vunpack.c.h.b16 %v2414
        %v5035 = vunpack.c.l.b16 %v2415
        %v5036 = vunpack.c.h.b16 %v2415
        %v5037 = vunpack.c.l.b16 %v2416
        %v5038 = vunpack.c.h.b16 %v2416
        %v5039 = vunpack.c.l.b16 %v2417
        %v5040 = vunpack.c.h.b16 %v2417
        %v5041 = vunpack.c.l.b16 %v2418
        %v5042 = vunpack.c.h.b16 %v2418
        %v5043 = vunpack.c.l.b16 %v2419
        %v5044 = vunpack.c.h.b16 %v2419
        %v5045 = vunpack.c.l.b16 %v2420
        %v5046 = vunpack.c.h.b16 %v2420
        %v5047 = vunpack.c.l.b16 %v2421
        %v5048 = vunpack.c.h.b16 %v2421
        %v5049 = vunpack.c.l.b16 %v2422
        %v5050 = vunpack.c.h.b16 %v2422
        %v5051 = vunpack.c.l.b16 %v2423
        %v5052 = vunpack.c.h.b16 %v2423
        %v5053 = vunpack.c.l.b16 %v2424
        %v5054 = vunpack.c.h.b16 %v2424
        %v5055 = vunpack.c.l.b16 %v2425
        %v5056 = vunpack.c.h.b16 %v2425
        %v5057 = vunpack.c.l.b16 %v2426
        %v5058 = vunpack.c.h.b16 %v2426
        %v5059 = vunpack.c.l.b16 %v2427
        %v5060 = vunpack.c.h.b16 %v2427
        %v5061 = vunpack.c.l.b16 %v2428
        %v5062 = vunpack.c.h.b16 %v2428
        %v5063 = vunpack.c.l.b16 %v2429
        %v5064 = vunpack.c.h.b16 %v2429
        %v5065 = vunpack.c.l.b16 %v2430
        %v5066 = vunpack.c.h.b16 %v2430
        %v5067 = vunpack.c.l.b16 %v2431
        %v5068 = vunpack.c.h.b16 %v2431
        %v5069 = vunpack.c.l.b16 %v2432
        %v5070 = vunpack.c.h.b16 %v2432
        %v5071 = vunpack.c.l.b16 %v2433
        %v5072 = vunpack.c.h.b16 %v2433
        %v5073 = vunpack.c.l.b16 %v2434
        %v5074 = vunpack.c.h.b16 %v2434
        %v5075 = vunpack.c.l.b16 %v2435
        %v5076 = vunpack.c.h.b16 %v2435
        %v5077 = vunpack.c.l.b16 %v2436
        %v5078 = vunpack.c.h.b16 %v2436
        %v5079 = vunpack.c.l.b16 %v2437
        %v5080 = vunpack.c.h.b16 %v2437
        %v5081 = vunpack.c.l.b16 %v2438
        %v5082 = vunpack.c.h.b16 %v2438
        %v5083 = vunpack.c.l.b16 %v2439
        %v5084 = vunpack.c.h.b16 %v2439
        %v5085 = vunpack.c.l.b16 %v2440
        %v5086 = vunpack.c.h.b16 %v2440
        %v5087 = vunpack.c.l.b16 %v2441
        %v5088 = vunpack.c.h.b16 %v2441
        %v5089 = vunpack.c.l.b16 %v2442
        %v5090 = vunpack.c.h.b16 %v2442
        %v5091 = vunpack.c.l.b16 %v2443
        %v5092 = vunpack.c.h.b16 %v2443
        %v5093 = vunpack.c.l.b16 %v2444
        %v5094 = vunpack.c.h.b16 %v2444
        %v5095 = vunpack.c.l.b16 %v2445
        %v5096 = vunpack.c.h.b16 %v2445
        %v5097 = vunpack.c.l.b16 %v2446
        %v5098 = vunpack.c.h.b16 %v2446
        %v5099 = vunpack.c.l.b16 %v2447
        %v5100 = vunpack.c.h.b16 %v2447
        %v5101 = vunpack.c.l.b16 %v2448
        %v5102 = vunpack.c.h.b16 %v2448
        %v5103 = vunpack.c.l.b16 %v2449
        %v5104 = vunpack.c.h.b16 %v2449
        %v5105 = vunpack.c.l.b16 %v2450
        %v5106 = vunpack.c.h.b16 %v2450
        %v5107 = vunpack.c.l.b16 %v2451
        %v5108 = vunpack.c.h.b16 %v2451
        %v5109 = vunpack.c.l.b16 %v2452
        %v5110 = vunpack.c.h.b16 %v2452
        %v5111 = vunpack.c.l.b16 %v2453
        %v5112 = vunpack.c.h.b16 %v2453
        %v5113 = vunpack.c.l.b16 %v2454
        %v5114 = vunpack.c.h.b16 %v2454
        %v5115 = vunpack.c.l.b16 %v2455
        %v5116 = vunpack.c.h.b16 %v2455
        %v5117 = vunpack.c.l.b16 %v2456
        %v5118 = vunpack.c.h.b16 %v2456
        %v5119 = vunpack.c.l.b16 %v2457
        %v5120 = vunpack.c.h.b16 %v2457
        %v5121 = vunpack.c.l.b16 %v2458
        %v5122 = vunpack.c.h.b16 %v2458
        %v5123 = vunpack.c.l.b16 %v2459
        %v5124 = vunpack.c.h.b16 %v2459
        %v5125 = vunpack.c.l.b16 %v2460
        %v5126 = vunpack.c.h.b16 %v2460
        %v5127 = vunpack.c.l.b16 %v2461
        %v5128 = vunpack.c.h.b16 %v2461
        %v5129 = vunpack.c.l.b16 %v2462
        %v5130 = vunpack.c.h.b16 %v2462
        %v5131 = vunpack.c.l.b16 %v2463
        %v5132 = vunpack.c.h.b16 %v2463
        %v5133 = vunpack.c.l.b16 %v2464
        %v5134 = vunpack.c.h.b16 %v2464
        %v5135 = vunpack.c.l.b16 %v2465
        %v5136 = vunpack.c.h.b16 %v2465
        %v5137 = vunpack.c.l.b16 %v2466
        %v5138 = vunpack.c.h.b16 %v2466
        %v5139 = vunpack.c.l.b16 %v2467
        %v5140 = vunpack.c.h.b16 %v2467
        %v5141 = vunpack.c.l.b16 %v2468
        %v5142 = vunpack.c.h.b16 %v2468
        %v5143 = vunpack.c.l.b16 %v2469
        %v5144 = vunpack.c.h.b16 %v2469
        %v5145 = vunpack.c.l.b16 %v2470
        %v5146 = vunpack.c.h.b16 %v2470
        %v5147 = vunpack.c.l.b16 %v2471
        %v5148 = vunpack.c.h.b16 %v2471
        %v5149 = vunpack.c.l.b16 %v2472
        %v5150 = vunpack.c.h.b16 %v2472
        %v5151 = vunpack.c.l.b16 %v2473
        %v5152 = vunpack.c.h.b16 %v2473
        %v5153 = vunpack.c.l.b16 %v2474
        %v5154 = vunpack.c.h.b16 %v2474
        %v5155 = vunpack.c.l.b16 %v2475
        %v5156 = vunpack.c.h.b16 %v2475
        %v5157 = vunpack.c.l.b16 %v2476
        %v5158 = vunpack.c.h.b16 %v2476
        %v5159 = vunpack.c.l.b16 %v2477
        %v5160 = vunpack.c.h.b16 %v2477
        %v5161 = vunpack.c.l.b16 %v2478
        %v5162 = vunpack.c.h.b16 %v2478
        %v5163 = vunpack.c.l.b16 %v2479
        %v5164 = vunpack.c.h.b16 %v2479
        %v5165 = vunpack.c.l.b16 %v2480
        %v5166 = vunpack.c.h.b16 %v2480
        %v5167 = vunpack.c.l.b16 %v2481
        %v5168 = vunpack.c.h.b16 %v2481
        %v5169 = vunpack.c.l.b16 %v2482
        %v5170 = vunpack.c.h.b16 %v2482
        %v5171 = vunpack.c.l.b16 %v2483
        %v5172 = vunpack.c.h.b16 %v2483
        %v5173 = vunpack.c.l.b16 %v2484
        %v5174 = vunpack.c.h.b16 %v2484
        %v5175 = vunpack.c.l.b16 %v2485
        %v5176 = vunpack.c.h.b16 %v2485
        %v5177 = vunpack.c.l.b16 %v2486
        %v5178 = vunpack.c.h.b16 %v2486
        %v5179 = vunpack.c.l.b16 %v2487
        %v5180 = vunpack.c.h.b16 %v2487
        %v5181 = vunpack.c.l.b16 %v2488
        %v5182 = vunpack.c.h.b16 %v2488
        %v5183 = vunpack.c.l.b16 %v2489
        %v5184 = vunpack.c.h.b16 %v2489
        %v5185 = vunpack.c.l.b16 %v2490
        %v5186 = vunpack.c.h.b16 %v2490
        %v5187 = vunpack.c.l.b16 %v2491
        %v5188 = vunpack.c.h.b16 %v2491
        %v5189 = vunpack.c.l.b16 %v2492
        %v5190 = vunpack.c.h.b16 %v2492
        %v5191 = vunpack.c.l.b16 %v2493
        %v5192 = vunpack.c.h.b16 %v2493
        %v5193 = vunpack.c.l.b16 %v2494
        %v5194 = vunpack.c.h.b16 %v2494
        %v5195 = vunpack.c.l.b16 %v2495
        %v5196 = vunpack.c.h.b16 %v2495
        %v5197 = vunpack.c.l.b16 %v2496
        %v5198 = vunpack.c.h.b16 %v2496
        %v5199 = vunpack.c.l.b16 %v2497
        %v5200 = vunpack.c.h.b16 %v2497
        %v5201 = vunpack.c.l.b16 %v2498
        %v5202 = vunpack.c.h.b16 %v2498
        %v5203 = vunpack.c.l.b16 %v2499
        %v5204 = vunpack.c.h.b16 %v2499
        %v5205 = vunpack.c.l.b16 %v2500
        %v5206 = vunpack.c.h.b16 %v2500
        %v5207 = vunpack.c.l.b16 %v2501
        %v5208 = vunpack.c.h.b16 %v2501
        %v5209 = vunpack.c.l.b16 %v2502
        %v5210 = vunpack.c.h.b16 %v2502
        %v5211 = vunpack.c.l.b16 %v2503
        %v5212 = vunpack.c.h.b16 %v2503
        %v5213 = vunpack.c.l.b16 %v2504
        %v5214 = vunpack.c.h.b16 %v2504
        %v5215 = vunpack.c.l.b16 %v2505
        %v5216 = vunpack.c.h.b16 %v2505
        %v5217 = vunpack.c.l.b16 %v2506
        %v5218 = vunpack.c.h.b16 %v2506
        %v5219 = vunpack.c.l.b16 %v2507
        %v5220 = vunpack.c.h.b16 %v2507
        %v5221 = vunpack.c.l.b16 %v2508
        %v5222 = vunpack.c.h.b16 %v2508
        %v5223 = vunpack.c.l.b16 %v2509
        %v5224 = vunpack.c.h.b16 %v2509
        %v5225 = vunpack.c.l.b16 %v2510
        %v5226 = vunpack.c.h.b16 %v2510
        %v5227 = vunpack.c.l.b16 %v2511
        %v5228 = vunpack.c.h.b16 %v2511
        %v5229 = vunpack.c.l.b16 %v2512
        %v5230 = vunpack.c.h.b16 %v2512
        %v5231 = vunpack.c.l.b16 %v2513
        %v5232 = vunpack.c.h.b16 %v2513
        %v5233 = vunpack.c.l.b16 %v2514
        %v5234 = vunpack.c.h.b16 %v2514
        %v5235 = vunpack.c.l.b16 %v2515
        %v5236 = vunpack.c.h.b16 %v2515
        %v5237 = vunpack.c.l.b16 %v2516
        %v5238 = vunpack.c.h.b16 %v2516
        %v5239 = vunpack.c.l.b16 %v2517
        %v5240 = vunpack.c.h.b16 %v2517
        %v5241 = vunpack.c.l.b16 %v2518
        %v5242 = vunpack.c.h.b16 %v2518
        %v5243 = vunpack.c.l.b16 %v2519
        %v5244 = vunpack.c.h.b16 %v2519
        %v5245 = vunpack.c.l.b16 %v2520
        %v5246 = vunpack.c.h.b16 %v2520
        %v5247 = vunpack.c.l.b16 %v2521
        %v5248 = vunpack.c.h.b16 %v2521
        %v5249 = vunpack.c.l.b16 %v2522
        %v5250 = vunpack.c.h.b16 %v2522
        %v5251 = vunpack.c.l.b16 %v2523
        %v5252 = vunpack.c.h.b16 %v2523
        %v5253 = vunpack.c.l.b16 %v2524
        %v5254 = vunpack.c.h.b16 %v2524
        %v5255 = vunpack.c.l.b16 %v2525
        %v5256 = vunpack.c.h.b16 %v2525
        %v5257 = vunpack.c.l.b16 %v2526
        %v5258 = vunpack.c.h.b16 %v2526
        %v5259 = vunpack.c.l.b16 %v2527
        %v5260 = vunpack.c.h.b16 %v2527
        %v5261 = vunpack.c.l.b16 %v2528
        %v5262 = vunpack.c.h.b16 %v2528
        %v5263 = vunpack.c.l.b16 %v2529
        %v5264 = vunpack.c.h.b16 %v2529
        %v5265 = vunpack.c.l.b16 %v2530
        %v5266 = vunpack.c.h.b16 %v2530
        %v5267 = vunpack.c.l.b16 %v2531
        %v5268 = vunpack.c.h.b16 %v2531
        %v5269 = vunpack.c.l.b16 %v2532
        %v5270 = vunpack.c.h.b16 %v2532
        %v5271 = vunpack.c.l.b16 %v2533
        %v5272 = vunpack.c.h.b16 %v2533
        %v5273 = vunpack.c.l.b16 %v2534
        %v5274 = vunpack.c.h.b16 %v2534
        %v5275 = vunpack.c.l.b16 %v2535
        %v5276 = vunpack.c.h.b16 %v2535
        %v5277 = vunpack.c.l.b16 %v2536
        %v5278 = vunpack.c.h.b16 %v2536
        %v5279 = vunpack.c.l.b16 %v2537
        %v5280 = vunpack.c.h.b16 %v2537
        %v5281 = vunpack.c.l.b16 %v2538
        %v5282 = vunpack.c.h.b16 %v2538
        %v5283 = vunpack.c.l.b16 %v2539
        %v5284 = vunpack.c.h.b16 %v2539
        %v5285 = vunpack.c.l.b16 %v2540
        %v5286 = vunpack.c.h.b16 %v2540
        %v5287 = vunpack.c.l.b16 %v2541
        %v5288 = vunpack.c.h.b16 %v2541
        %v5289 = vunpack.c.l.b16 %v2542
        %v5290 = vunpack.c.h.b16 %v2542
        %v5291 = vunpack.c.l.b16 %v2543
        %v5292 = vunpack.c.h.b16 %v2543
        %v5293 = vunpack.c.l.b16 %v2544
        %v5294 = vunpack.c.h.b16 %v2544
        %v5295 = vunpack.c.l.b16 %v2545
        %v5296 = vunpack.c.h.b16 %v2545
        %v5297 = vunpack.c.l.b16 %v2546
        %v5298 = vunpack.c.h.b16 %v2546
        %v5299 = vunpack.c.l.b16 %v2547
        %v5300 = vunpack.c.h.b16 %v2547
        %v5301 = vunpack.c.l.b16 %v2548
        %v5302 = vunpack.c.h.b16 %v2548
        %v5303 = vunpack.c.l.b16 %v2549
        %v5304 = vunpack.c.h.b16 %v2549
        %v5305 = vunpack.c.l.b16 %v2550
        %v5306 = vunpack.c.h.b16 %v2550
        %v5307 = vunpack.c.l.b16 %v2551
        %v5308 = vunpack.c.h.b16 %v2551
        %v5309 = vunpack.c.l.b16 %v2552
        %v5310 = vunpack.c.h.b16 %v2552
        %v5311 = vunpack.c.l.b16 %v2553
        %v5312 = vunpack.c.h.b16 %v2553
        %v5313 = vunpack.c.l.b16 %v2554
        %v5314 = vunpack.c.h.b16 %v2554
        %v5315 = vunpack.c.l.b16 %v2555
        %v5316 = vunpack.c.h.b16 %v2555
        %v5317 = vunpack.c.l.b16 %v2556
        %v5318 = vunpack.c.h.b16 %v2556
        %v5319 = vunpack.c.l.b16 %v2557
        %v5320 = vunpack.c.h.b16 %v2557
        %v5321 = vunpack.c.l.b16 %v2558
        %v5322 = vunpack.c.h.b16 %v2558
        %v5323 = vunpack.c.l.b16 %v2559
        %v5324 = vunpack.c.h.b16 %v2559
        %v5325 = vunpack.c.l.b16 %v2560
        %v5326 = vunpack.c.h.b16 %v2560
        %v5327 = vunpack.c.l.b16 %v2561
        %v5328 = vunpack.c.h.b16 %v2561
        %v5329 = vunpack.c.l.b16 %v2562
        %v5330 = vunpack.c.h.b16 %v2562
        %v5331 = vunpack.c.l.b16 %v2563
        %v5332 = vunpack.c.h.b16 %v2563
        %v5333 = vunpack.c.l.b16 %v2564
        %v5334 = vunpack.c.h.b16 %v2564
        %v5335 = vunpack.c.l.b16 %v2565
        %v5336 = vunpack.c.h.b16 %v2565
        %v5337 = vunpack.c.l.b16 %v2566
        %v5338 = vunpack.c.h.b16 %v2566
        %v5339 = vunpack.c.l.b16 %v2567
        %v5340 = vunpack.c.h.b16 %v2567
        %v5341 = vunpack.c.l.b16 %v2568
        %v5342 = vunpack.c.h.b16 %v2568
        %v5343 = vunpack.c.l.b16 %v2569
        %v5344 = vunpack.c.h.b16 %v2569
        %v5345 = vunpack.c.l.b16 %v2570
        %v5346 = vunpack.c.h.b16 %v2570
        %v5347 = vunpack.c.l.b16 %v2571
        %v5348 = vunpack.c.h.b16 %v2571
        %v5349 = vunpack.c.l.b16 %v2572
        %v5350 = vunpack.c.h.b16 %v2572
        %v5351 = vunpack.c.l.b16 %v2573
        %v5352 = vunpack.c.h.b16 %v2573
        %v5353 = vunpack.c.l.b16 %v2574
        %v5354 = vunpack.c.h.b16 %v2574
        %v5355 = vunpack.c.l.b16 %v2575
        %v5356 = vunpack.c.h.b16 %v2575
        %v5357 = vunpack.c.l.b16 %v2576
        %v5358 = vunpack.c.h.b16 %v2576
        %v5359 = vunpack.c.l.b16 %v2577
        %v5360 = vunpack.c.h.b16 %v2577
        %v5361 = vunpack.c.l.b16 %v2578
        %v5362 = vunpack.c.h.b16 %v2578
        %v5363 = vunpack.c.l.b16 %v2579
        %v5364 = vunpack.c.h.b16 %v2579
        %v5365 = vunpack.c.l.b16 %v2580
        %v5366 = vunpack.c.h.b16 %v2580
        %v5367 = vunpack.c.l.b16 %v2581
        %v5368 = vunpack.c.h.b16 %v2581
        %v5369 = vunpack.c.l.b16 %v2582
        %v5370 = vunpack.c.h.b16 %v2582
        %v5371 = vunpack.c.l.b16 %v2583
        %v5372 = vunpack.c.h.b16 %v2583
        %v5373 = vunpack.c.l.b16 %v2584
        %v5374 = vunpack.c.h.b16 %v2584
        %v5375 = vunpack.c.l.b16 %v2585
        %v5376 = vunpack.c.h.b16 %v2585
        %v5377 = vunpack.c.l.b16 %v2586
        %v5378 = vunpack.c.h.b16 %v2586
        %v5379 = vunpack.c.l.b16 %v2587
        %v5380 = vunpack.c.h.b16 %v2587
        %v5381 = vunpack.c.l.b16 %v2588
        %v5382 = vunpack.c.h.b16 %v2588
        %v5383 = vunpack.c.l.b16 %v2589
        %v5384 = vunpack.c.h.b16 %v2589
        %v5385 = vunpack.c.l.b16 %v2590
        %v5386 = vunpack.c.h.b16 %v2590
        %v5387 = vunpack.c.l.b16 %v2591
        %v5388 = vunpack.c.h.b16 %v2591
        %v5389 = vunpack.c.l.b16 %v2592
        %v5390 = vunpack.c.h.b16 %v2592
        %v5391 = vunpack.c.l.b16 %v2593
        %v5392 = vunpack.c.h.b16 %v2593
        %v5393 = vunpack.c.l.b16 %v2594
        %v5394 = vunpack.c.h.b16 %v2594
        %v5395 = vunpack.c.l.b16 %v2595
        %v5396 = vunpack.c.h.b16 %v2595
        %v5397 = vunpack.c.l.b16 %v2596
        %v5398 = vunpack.c.h.b16 %v2596
        %v5399 = vunpack.c.l.b16 %v2597
        %v5400 = vunpack.c.h.b16 %v2597
        %v5401 = vunpack.c.l.b16 %v2598
        %v5402 = vunpack.c.h.b16 %v2598
        %v5403 = vunpack.c.l.b16 %v2599
        %v5404 = vunpack.c.h.b16 %v2599
        %v5405 = vunpack.c.l.b16 %v2600
        %v5406 = vunpack.c.h.b16 %v2600
        %v5407 = vunpack.c.l.b16 %v2601
        %v5408 = vunpack.c.h.b16 %v2601
        %v5409 = vunpack.c.l.b16 %v2602
        %v5410 = vunpack.c.h.b16 %v2602
        %v5411 = vunpack.c.l.b16 %v2603
        %v5412 = vunpack.c.h.b16 %v2603
        %v5413 = vunpack.c.l.b16 %v2604
        %v5414 = vunpack.c.h.b16 %v2604
        %v5415 = vunpack.c.l.b16 %v2605
        %v5416 = vunpack.c.h.b16 %v2605
        %v5417 = vunpack.c.l.b16 %v2606
        %v5418 = vunpack.c.h.b16 %v2606
        %v5419 = vunpack.c.l.b16 %v2607
        %v5420 = vunpack.c.h.b16 %v2607
        %v5421 = vunpack.c.l.b16 %v2608
        %v5422 = vunpack.c.h.b16 %v2608
        %v5423 = vunpack.c.l.b16 %v2609
        %v5424 = vunpack.c.h.b16 %v2609
        %v5425 = vunpack.c.l.b16 %v2610
        %v5426 = vunpack.c.h.b16 %v2610
        %v5427 = vunpack.c.l.b16 %v2611
        %v5428 = vunpack.c.h.b16 %v2611
        %v5429 = vunpack.c.l.b16 %v2612
        %v5430 = vunpack.c.h.b16 %v2612
        %v5431 = vunpack.c.l.b16 %v2613
        %v5432 = vunpack.c.h.b16 %v2613
        %v5433 = vunpack.c.l.b16 %v2614
        %v5434 = vunpack.c.h.b16 %v2614
        %v5435 = vunpack.c.l.b16 %v2615
        %v5436 = vunpack.c.h.b16 %v2615
        %v5437 = vunpack.c.l.b16 %v2616
        %v5438 = vunpack.c.h.b16 %v2616
        %v5439 = vunpack.c.l.b16 %v2617
        %v5440 = vunpack.c.h.b16 %v2617
        %v5441 = vunpack.c.l.b16 %v2618
        %v5442 = vunpack.c.h.b16 %v2618
        %v5443 = vunpack.c.l.b16 %v2619
        %v5444 = vunpack.c.h.b16 %v2619
        %v5445 = vunpack.c.l.b16 %v2620
        %v5446 = vunpack.c.h.b16 %v2620
        %v5447 = vunpack.c.l.b16 %v2621
        %v5448 = vunpack.c.h.b16 %v2621
        %v5449 = vunpack.c.l.b16 %v2622
        %v5450 = vunpack.c.h.b16 %v2622
        %v5451 = vunpack.c.l.b16 %v2623
        %v5452 = vunpack.c.h.b16 %v2623
        %v5453 = vunpack.c.l.b16 %v2624
        %v5454 = vunpack.c.h.b16 %v2624
        %v5455 = vunpack.c.l.b16 %v2625
        %v5456 = vunpack.c.h.b16 %v2625
        %v5457 = vunpack.c.l.b16 %v2626
        %v5458 = vunpack.c.h.b16 %v2626
        %v5459 = vunpack.c.l.b16 %v2627
        %v5460 = vunpack.c.h.b16 %v2627
        %v5461 = vunpack.c.l.b16 %v2628
        %v5462 = vunpack.c.h.b16 %v2628
        %v5463 = vunpack.c.l.b16 %v2629
        %v5464 = vunpack.c.h.b16 %v2629
        %v5465 = vunpack.c.l.b16 %v2630
        %v5466 = vunpack.c.h.b16 %v2630
        %v5467 = vunpack.c.l.b16 %v2631
        %v5468 = vunpack.c.h.b16 %v2631
        %v5469 = vunpack.c.l.b16 %v2632
        %v5470 = vunpack.c.h.b16 %v2632
        %v5471 = vunpack.c.l.b16 %v2633
        %v5472 = vunpack.c.h.b16 %v2633
        %v5473 = vunpack.c.l.b16 %v2634
        %v5474 = vunpack.c.h.b16 %v2634
        %v5475 = vunpack.c.l.b16 %v2635
        %v5476 = vunpack.c.h.b16 %v2635
        %v5477 = vunpack.c.l.b16 %v2636
        %v5478 = vunpack.c.h.b16 %v2636
        %v5479 = vunpack.c.l.b16 %v2637
        %v5480 = vunpack.c.h.b16 %v2637
        %v5481 = vunpack.c.l.b16 %v2638
        %v5482 = vunpack.c.h.b16 %v2638
        %v5483 = vunpack.c.l.b16 %v2639
        %v5484 = vunpack.c.h.b16 %v2639
        %v5485 = vunpack.c.l.b16 %v2640
        %v5486 = vunpack.c.h.b16 %v2640
        %v5487 = vunpack.c.l.b16 %v2641
        %v5488 = vunpack.c.h.b16 %v2641
        %v5489 = vunpack.c.l.b16 %v2642
        %v5490 = vunpack.c.h.b16 %v2642
        %v5491 = vunpack.c.l.b16 %v2643
        %v5492 = vunpack.c.h.b16 %v2643
        %v5493 = vunpack.c.l.b16 %v2644
        %v5494 = vunpack.c.h.b16 %v2644
        %v5495 = vunpack.c.l.b16 %v2645
        %v5496 = vunpack.c.h.b16 %v2645
        %v5497 = vunpack.c.l.b16 %v2646
        %v5498 = vunpack.c.h.b16 %v2646
        %v5499 = vunpack.c.l.b16 %v2647
        %v5500 = vunpack.c.h.b16 %v2647
        %v5501 = vunpack.c.l.b16 %v2648
        %v5502 = vunpack.c.h.b16 %v2648
        %v5503 = vunpack.c.l.b16 %v2649
        %v5504 = vunpack.c.h.b16 %v2649
        %v5505 = vunpack.c.l.b16 %v2650
        %v5506 = vunpack.c.h.b16 %v2650
        %v5507 = vunpack.c.l.b16 %v2651
        %v5508 = vunpack.c.h.b16 %v2651
        %v5509 = vunpack.c.l.b16 %v2652
        %v5510 = vunpack.c.h.b16 %v2652
        %v5511 = vunpack.c.l.b16 %v2653
        %v5512 = vunpack.c.h.b16 %v2653
        %v5513 = vunpack.c.l.b16 %v2654
        %v5514 = vunpack.c.h.b16 %v2654
        %v5515 = vunpack.c.l.b16 %v2655
        %v5516 = vunpack.c.h.b16 %v2655
        %v5517 = vunpack.c.l.b16 %v2656
        %v5518 = vunpack.c.h.b16 %v2656
        %v5519 = vunpack.c.l.b16 %v2657
        %v5520 = vunpack.c.h.b16 %v2657
        %v5521 = vunpack.c.l.b16 %v2658
        %v5522 = vunpack.c.h.b16 %v2658
        %v5523 = vunpack.c.l.b16 %v2659
        %v5524 = vunpack.c.h.b16 %v2659
        %v5525 = vunpack.c.l.b16 %v2660
        %v5526 = vunpack.c.h.b16 %v2660
        %v5527 = vunpack.c.l.b16 %v2661
        %v5528 = vunpack.c.h.b16 %v2661
        %v5529 = vunpack.c.l.b16 %v2662
        %v5530 = vunpack.c.h.b16 %v2662
        %v5531 = vunpack.c.l.b16 %v2663
        %v5532 = vunpack.c.h.b16 %v2663
        %v5533 = vunpack.c.l.b16 %v2664
        %v5534 = vunpack.c.h.b16 %v2664
        %v5535 = vunpack.c.l.b16 %v2665
        %v5536 = vunpack.c.h.b16 %v2665
        %v5537 = vunpack.c.l.b16 %v2666
        %v5538 = vunpack.c.h.b16 %v2666
        %v5539 = vunpack.c.l.b16 %v2667
        %v5540 = vunpack.c.h.b16 %v2667
        %v5541 = vunpack.c.l.b16 %v2668
        %v5542 = vunpack.c.h.b16 %v2668
        %v5543 = vunpack.c.l.b16 %v2669
        %v5544 = vunpack.c.h.b16 %v2669
        %v5545 = vunpack.c.l.b16 %v2670
        %v5546 = vunpack.c.h.b16 %v2670
        %v5547 = vunpack.c.l.b16 %v2671
        %v5548 = vunpack.c.h.b16 %v2671
        %v5549 = vunpack.c.l.b16 %v2672
        %v5550 = vunpack.c.h.b16 %v2672
        %v5551 = vunpack.c.l.b16 %v2673
        %v5552 = vunpack.c.h.b16 %v2673
        %v5553 = vunpack.c.l.b16 %v2674
        %v5554 = vunpack.c.h.b16 %v2674
        %v5555 = vunpack.c.l.b16 %v2675
        %v5556 = vunpack.c.h.b16 %v2675
        %v5557 = vunpack.c.l.b16 %v2676
        %v5558 = vunpack.c.h.b16 %v2676
        %v5559 = vunpack.c.l.b16 %v2677
        %v5560 = vunpack.c.h.b16 %v2677
        %v5561 = vunpack.c.l.b16 %v2678
        %v5562 = vunpack.c.h.b16 %v2678
        %v5563 = vunpack.c.l.b16 %v2679
        %v5564 = vunpack.c.h.b16 %v2679
        %v5565 = vunpack.c.l.b16 %v2680
        %v5566 = vunpack.c.h.b16 %v2680
        %v5567 = vunpack.c.l.b16 %v2681
        %v5568 = vunpack.c.h.b16 %v2681
        %v5569 = vunpack.c.l.b16 %v2682
        %v5570 = vunpack.c.h.b16 %v2682
        %v5571 = vunpack.c.l.b16 %v2683
        %v5572 = vunpack.c.h.b16 %v2683
        %v5573 = vunpack.c.l.b16 %v2684
        %v5574 = vunpack.c.h.b16 %v2684
        %v5575 = vunpack.c.l.b16 %v2685
        %v5576 = vunpack.c.h.b16 %v2685
        %v5577 = vunpack.c.l.b16 %v2686
        %v5578 = vunpack.c.h.b16 %v2686
        %v5579 = vunpack.c.l.b16 %v2687
        %v5580 = vunpack.c.h.b16 %v2687
        %v5581 = vunpack.c.l.b16 %v2688
        %v5582 = vunpack.c.h.b16 %v2688
        %v5583 = vunpack.c.l.b16 %v2689
        %v5584 = vunpack.c.h.b16 %v2689
        %v5585 = vunpack.c.l.b16 %v2690
        %v5586 = vunpack.c.h.b16 %v2690
        %v5587 = vunpack.c.l.b16 %v2691
        %v5588 = vunpack.c.h.b16 %v2691
        %v5589 = vunpack.c.l.b16 %v2692
        %v5590 = vunpack.c.h.b16 %v2692
        %v5591 = vunpack.c.l.b16 %v2693
        %v5592 = vunpack.c.h.b16 %v2693
        %v5593 = vunpack.c.l.b16 %v2694
        %v5594 = vunpack.c.h.b16 %v2694
        %v5595 = vunpack.c.l.b16 %v2695
        %v5596 = vunpack.c.h.b16 %v2695
        %v5597 = vunpack.c.l.b16 %v2696
        %v5598 = vunpack.c.h.b16 %v2696
        %v5599 = vunpack.c.l.b16 %v2697
        %v5600 = vunpack.c.h.b16 %v2697
        %v5601 = vunpack.c.l.b16 %v2698
        %v5602 = vunpack.c.h.b16 %v2698
        %v5603 = vunpack.c.l.b16 %v2699
        %v5604 = vunpack.c.h.b16 %v2699
        %v5605 = vunpack.c.l.b16 %v2700
        %v5606 = vunpack.c.h.b16 %v2700
        %v5607 = vunpack.c.l.b16 %v2701
        %v5608 = vunpack.c.h.b16 %v2701
        %v5609 = vunpack.c.l.b16 %v2702
        %v5610 = vunpack.c.h.b16 %v2702
        %v5611 = vunpack.c.l.b16 %v2703
        %v5612 = vunpack.c.h.b16 %v2703
        %v5613 = vunpack.c.l.b16 %v2704
        %v5614 = vunpack.c.h.b16 %v2704
        %v5615 = vunpack.c.l.b16 %v2705
        %v5616 = vunpack.c.h.b16 %v2705
        %v5617 = vunpack.c.l.b16 %v2706
        %v5618 = vunpack.c.h.b16 %v2706
        %v5619 = vunpack.c.l.b16 %v2707
        %v5620 = vunpack.c.h.b16 %v2707
        %v5621 = vunpack.c.l.b16 %v2708
        %v5622 = vunpack.c.h.b16 %v2708
        %v5623 = vunpack.c.l.b16 %v2709
        %v5624 = vunpack.c.h.b16 %v2709
        %v5625 = vunpack.c.l.b16 %v2710
        %v5626 = vunpack.c.h.b16 %v2710
        %v5627 = vunpack.c.l.b16 %v2711
        %v5628 = vunpack.c.h.b16 %v2711
        %v5629 = vunpack.c.l.b16 %v2712
        %v5630 = vunpack.c.h.b16 %v2712
        %v5631 = vunpack.c.l.b16 %v2713
        %v5632 = vunpack.c.h.b16 %v2713
        %v5633 = vunpack.c.l.b16 %v2714
        %v5634 = vunpack.c.h.b16 %v2714
        %v5635 = vunpack.c.l.b16 %v2715
        %v5636 = vunpack.c.h.b16 %v2715
        %v5637 = vunpack.c.l.b16 %v2716
        %v5638 = vunpack.c.h.b16 %v2716
        %v5639 = vunpack.c.l.b16 %v2717
        %v5640 = vunpack.c.h.b16 %v2717
        %v5641 = vunpack.c.l.b16 %v2718
        %v5642 = vunpack.c.h.b16 %v2718
        %v5643 = vunpack.c.l.b16 %v2719
        %v5644 = vunpack.c.h.b16 %v2719
        %v5645 = vunpack.c.l.b16 %v2720
        %v5646 = vunpack.c.h.b16 %v2720
        %v5647 = vunpack.c.l.b16 %v2721
        %v5648 = vunpack.c.h.b16 %v2721
        %v5649 = vunpack.c.l.b16 %v2722
        %v5650 = vunpack.c.h.b16 %v2722
        %v5651 = vunpack.c.l.b16 %v2723
        %v5652 = vunpack.c.h.b16 %v2723
        %v5653 = vunpack.c.l.b16 %v2724
        %v5654 = vunpack.c.h.b16 %v2724
        %v5655 = vunpack.c.l.b16 %v2725
        %v5656 = vunpack.c.h.b16 %v2725
        %v5657 = vunpack.c.l.b16 %v2726
        %v5658 = vunpack.c.h.b16 %v2726
        %v5659 = vunpack.c.l.b16 %v2727
        %v5660 = vunpack.c.h.b16 %v2727
        %v5661 = vunpack.c.l.b16 %v2728
        %v5662 = vunpack.c.h.b16 %v2728
        %v5663 = vunpack.c.l.b16 %v2729
        %v5664 = vunpack.c.h.b16 %v2729
        %v5665 = vunpack.c.l.b16 %v2730
        %v5666 = vunpack.c.h.b16 %v2730
        %v5667 = vunpack.c.l.b16 %v2731
        %v5668 = vunpack.c.h.b16 %v2731
        %v5669 = vunpack.c.l.b16 %v2732
        %v5670 = vunpack.c.h.b16 %v2732
        %v5671 = vunpack.c.l.b16 %v2733
        %v5672 = vunpack.c.h.b16 %v2733
        %v5673 = vunpack.c.l.b16 %v2734
        %v5674 = vunpack.c.h.b16 %v2734
        %v5675 = vunpack.c.l.b16 %v2735
        %v5676 = vunpack.c.h.b16 %v2735
        %v5677 = vunpack.c.l.b16 %v2736
        %v5678 = vunpack.c.h.b16 %v2736
        %v5679 = vunpack.c.l.b16 %v2737
        %v5680 = vunpack.c.h.b16 %v2737
        %v5681 = vunpack.c.l.b16 %v2738
        %v5682 = vunpack.c.h.b16 %v2738
        %v5683 = vunpack.c.l.b16 %v2739
        %v5684 = vunpack.c.h.b16 %v2739
        %v5685 = vunpack.c.l.b16 %v2740
        %v5686 = vunpack.c.h.b16 %v2740
        %v5687 = vunpack.c.l.b16 %v2741
        %v5688 = vunpack.c.h.b16 %v2741
        %v5689 = vunpack.c.l.b16 %v2742
        %v5690 = vunpack.c.h.b16 %v2742
        %v5691 = vunpack.c.l.b16 %v2743
        %v5692 = vunpack.c.h.b16 %v2743
        %v5693 = vunpack.c.l.b16 %v2744
        %v5694 = vunpack.c.h.b16 %v2744
        %v5695 = vunpack.c.l.b16 %v2745
        %v5696 = vunpack.c.h.b16 %v2745
        %v5697 = vunpack.c.l.b16 %v2746
        %v5698 = vunpack.c.h.b16 %v2746
        %v5699 = vunpack.c.l.b16 %v2747
        %v5700 = vunpack.c.h.b16 %v2747
        %v5701 = vunpack.c.l.b16 %v2748
        %v5702 = vunpack.c.h.b16 %v2748
        %v5703 = vunpack.c.l.b16 %v2749
        %v5704 = vunpack.c.h.b16 %v2749
        %v5705 = vunpack.c.l.b16 %v2750
        %v5706 = vunpack.c.h.b16 %v2750
        %v5707 = vunpack.c.l.b16 %v2751
        %v5708 = vunpack.c.h.b16 %v2751
        %v5709 = vunpack.c.l.b16 %v2752
        %v5710 = vunpack.c.h.b16 %v2752
        %v5711 = vunpack.c.l.b16 %v2753
        %v5712 = vunpack.c.h.b16 %v2753
        %v5713 = vunpack.c.l.b16 %v2754
        %v5714 = vunpack.c.h.b16 %v2754
        %v5715 = vunpack.c.l.b16 %v2755
        %v5716 = vunpack.c.h.b16 %v2755
        %v5717 = vunpack.c.l.b16 %v2756
        %v5718 = vunpack.c.h.b16 %v2756
        %v5719 = vunpack.c.l.b16 %v2757
        %v5720 = vunpack.c.h.b16 %v2757
        %v5721 = vunpack.c.l.b16 %v2758
        %v5722 = vunpack.c.h.b16 %v2758
        %v5723 = vunpack.c.l.b16 %v2759
        %v5724 = vunpack.c.h.b16 %v2759
        %v5725 = vunpack.c.l.b16 %v2760
        %v5726 = vunpack.c.h.b16 %v2760
        %v5727 = vunpack.c.l.b16 %v2761
        %v5728 = vunpack.c.h.b16 %v2761
        %v5729 = vunpack.c.l.b16 %v2762
        %v5730 = vunpack.c.h.b16 %v2762
        %v5731 = vunpack.c.l.b16 %v2763
        %v5732 = vunpack.c.h.b16 %v2763
        %v5733 = vunpack.c.l.b16 %v2764
        %v5734 = vunpack.c.h.b16 %v2764
        %v5735 = vunpack.c.l.b16 %v2765
        %v5736 = vunpack.c.h.b16 %v2765
        %v5737 = vunpack.c.l.b16 %v2766
        %v5738 = vunpack.c.h.b16 %v2766
        %v5739 = vunpack.c.l.b16 %v2767
        %v5740 = vunpack.c.h.b16 %v2767
        %v5741 = vunpack.c.l.b16 %v2768
        %v5742 = vunpack.c.h.b16 %v2768
        %v5743 = vunpack.c.l.b16 %v2769
        %v5744 = vunpack.c.h.b16 %v2769
        %v5745 = vunpack.c.l.b16 %v2770
        %v5746 = vunpack.c.h.b16 %v2770
        %v5747 = vunpack.c.l.b16 %v2771
        %v5748 = vunpack.c.h.b16 %v2771
        %v5749 = vunpack.c.l.b16 %v2772
        %v5750 = vunpack.c.h.b16 %v2772
        %v5751 = vunpack.c.l.b16 %v2773
        %v5752 = vunpack.c.h.b16 %v2773
        %v5753 = vunpack.c.l.b16 %v2774
        %v5754 = vunpack.c.h.b16 %v2774
        %v5755 = vunpack.c.l.b16 %v2775
        %v5756 = vunpack.c.h.b16 %v2775
        %v5757 = vunpack.c.l.b16 %v2776
        %v5758 = vunpack.c.h.b16 %v2776
        %v5759 = vunpack.c.l.b16 %v2777
        %v5760 = vunpack.c.h.b16 %v2777
        %v5761 = vunpack.c.l.b16 %v2778
        %v5762 = vunpack.c.h.b16 %v2778
        %v5763 = vunpack.c.l.b16 %v2779
        %v5764 = vunpack.c.h.b16 %v2779
        %v5765 = vunpack.c.l.b16 %v2780
        %v5766 = vunpack.c.h.b16 %v2780
        %v5767 = vunpack.c.l.b16 %v2781
        %v5768 = vunpack.c.h.b16 %v2781
        %v5769 = vunpack.c.l.b16 %v2782
        %v5770 = vunpack.c.h.b16 %v2782
        %v5771 = vunpack.c.l.b16 %v2783
        %v5772 = vunpack.c.h.b16 %v2783
        %v5773 = vunpack.c.l.b16 %v2784
        %v5774 = vunpack.c.h.b16 %v2784
        %v5775 = vunpack.c.l.b16 %v2785
        %v5776 = vunpack.c.h.b16 %v2785
        %v5777 = vunpack.c.l.b16 %v2786
        %v5778 = vunpack.c.h.b16 %v2786
        %v5779 = vunpack.c.l.b16 %v2787
        %v5780 = vunpack.c.h.b16 %v2787
        %v5781 = vunpack.c.l.b16 %v2788
        %v5782 = vunpack.c.h.b16 %v2788
        %v5783 = vunpack.c.l.b16 %v2789
        %v5784 = vunpack.c.h.b16 %v2789
        %v5785 = vunpack.c.l.b16 %v2790
        %v5786 = vunpack.c.h.b16 %v2790
        %v5787 = vunpack.c.l.b16 %v2791
        %v5788 = vunpack.c.h.b16 %v2791
        %v5789 = vunpack.c.l.b16 %v2792
        %v5790 = vunpack.c.h.b16 %v2792
        %v5791 = vunpack.c.l.b16 %v2793
        %v5792 = vunpack.c.h.b16 %v2793
        %v5793 = vunpack.c.l.b16 %v2794
        %v5794 = vunpack.c.h.b16 %v2794
        %v5795 = vunpack.c.l.b16 %v2795
        %v5796 = vunpack.c.h.b16 %v2795
        %v5797 = vunpack.c.l.b16 %v2796
        %v5798 = vunpack.c.h.b16 %v2796
        %v5799 = vunpack.c.l.b16 %v2797
        %v5800 = vunpack.c.h.b16 %v2797
        %v5801 = vunpack.c.l.b16 %v2798
        %v5802 = vunpack.c.h.b16 %v2798
        %v5803 = vunpack.c.l.b16 %v2799
        %v5804 = vunpack.c.h.b16 %v2799
        %v5805 = vunpack.c.l.b16 %v2800
        %v5806 = vunpack.c.h.b16 %v2800
        %v5807 = vunpack.c.l.b16 %v2801
        %v5808 = vunpack.c.h.b16 %v2801
        %v5809 = vunpack.c.l.b16 %v2802
        %v5810 = vunpack.c.h.b16 %v2802
        %v5811 = vunpack.c.l.b16 %v2803
        %v5812 = vunpack.c.h.b16 %v2803
        %v5813 = vunpack.c.l.b16 %v2804
        %v5814 = vunpack.c.h.b16 %v2804
        %v5815 = vunpack.c.l.b16 %v2805
        %v5816 = vunpack.c.h.b16 %v2805
        %v5817 = vunpack.c.l.b16 %v2806
        %v5818 = vunpack.c.h.b16 %v2806
        %v5819 = vunpack.c.l.b16 %v2807
        %v5820 = vunpack.c.h.b16 %v2807
        %v5821 = vunpack.c.l.b16 %v2808
        %v5822 = vunpack.c.h.b16 %v2808
        %v5823 = vunpack.c.l.b16 %v2809
        %v5824 = vunpack.c.h.b16 %v2809
        %v5825 = vunpack.c.l.b16 %v2810
        %v5826 = vunpack.c.h.b16 %v2810
        %v5827 = vunpack.c.l.b16 %v2811
        %v5828 = vunpack.c.h.b16 %v2811
        %v5829 = vunpack.c.l.b16 %v2812
        %v5830 = vunpack.c.h.b16 %v2812
        %v5831 = vunpack.c.l.b16 %v2813
        %v5832 = vunpack.c.h.b16 %v2813
        %v5833 = vunpack.c.l.b16 %v2814
        %v5834 = vunpack.c.h.b16 %v2814
        %v5835 = vunpack.c.l.b16 %v2815
        %v5836 = vunpack.c.h.b16 %v2815
        %v5837 = vunpack.c.l.b16 %v2816
        %v5838 = vunpack.c.h.b16 %v2816
        %v5839 = vunpack.c.l.b16 %v2817
        %v5840 = vunpack.c.h.b16 %v2817
        %v5841 = vunpack.c.l.b16 %v2818
        %v5842 = vunpack.c.h.b16 %v2818
        %v5843 = vunpack.c.l.b16 %v2819
        %v5844 = vunpack.c.h.b16 %v2819
        %v5845 = vunpack.c.l.b16 %v2820
        %v5846 = vunpack.c.h.b16 %v2820
        %v5847 = vunpack.c.l.b16 %v2821
        %v5848 = vunpack.c.h.b16 %v2821
        %v5849 = vunpack.c.l.b16 %v2822
        %v5850 = vunpack.c.h.b16 %v2822
        %v5851 = vunpack.c.l.b16 %v2823
        %v5852 = vunpack.c.h.b16 %v2823
        %v5853 = vunpack.c.l.b16 %v2824
        %v5854 = vunpack.c.h.b16 %v2824
        %v5855 = vunpack.c.l.b16 %v2825
        %v5856 = vunpack.c.h.b16 %v2825
        %v5857 = vunpack.c.l.b16 %v2826
        %v5858 = vunpack.c.h.b16 %v2826
        %v5859 = vunpack.c.l.b16 %v2827
        %v5860 = vunpack.c.h.b16 %v2827
        %v5861 = vunpack.c.l.b16 %v2828
        %v5862 = vunpack.c.h.b16 %v2828
        %v5863 = vunpack.c.l.b16 %v2829
        %v5864 = vunpack.c.h.b16 %v2829
        %v5865 = vunpack.c.l.b16 %v2830
        %v5866 = vunpack.c.h.b16 %v2830
        %v5867 = vunpack.c.l.b16 %v2831
        %v5868 = vunpack.c.h.b16 %v2831
        %v5869 = vunpack.c.l.b16 %v2832
        %v5870 = vunpack.c.h.b16 %v2832
        %v5871 = vunpack.c.l.b16 %v2833
        %v5872 = vunpack.c.h.b16 %v2833
        %v5873 = vunpack.c.l.b16 %v2834
        %v5874 = vunpack.c.h.b16 %v2834
        %v5875 = vunpack.c.l.b16 %v2835
        %v5876 = vunpack.c.h.b16 %v2835
        %v5877 = vunpack.c.l.b16 %v2836
        %v5878 = vunpack.c.h.b16 %v2836
        %v5879 = vunpack.c.l.b16 %v2837
        %v5880 = vunpack.c.h.b16 %v2837
        %v5881 = vunpack.c.l.b16 %v2838
        %v5882 = vunpack.c.h.b16 %v2838
        %v5883 = vunpack.c.l.b16 %v2839
        %v5884 = vunpack.c.h.b16 %v2839
        %v5885 = vunpack.c.l.b16 %v2840
        %v5886 = vunpack.c.h.b16 %v2840
        %v5887 = vunpack.c.l.b16 %v2841
        %v5888 = vunpack.c.h.b16 %v2841
        %v5889 = vunpack.c.l.b16 %v2842
        %v5890 = vunpack.c.h.b16 %v2842
        %v5891 = vunpack.c.l.b16 %v2843
        %v5892 = vunpack.c.h.b16 %v2843
        %v5893 = vunpack.c.l.b16 %v2844
        %v5894 = vunpack.c.h.b16 %v2844
        %v5895 = vunpack.c.l.b16 %v2845
        %v5896 = vunpack.c.h.b16 %v2845
        %v5897 = vunpack.c.l.b16 %v2846
        %v5898 = vunpack.c.h.b16 %v2846
        %v5899 = vunpack.c.l.b16 %v2847
        %v5900 = vunpack.c.h.b16 %v2847
        %v5901 = vunpack.c.l.b16 %v2848
        %v5902 = vunpack.c.h.b16 %v2848
        %v5903 = vunpack.c.l.b16 %v2849
        %v5904 = vunpack.c.h.b16 %v2849
        %v5905 = vunpack.c.l.b16 %v2850
        %v5906 = vunpack.c.h.b16 %v2850
        %v5907 = vunpack.c.l.b16 %v2851
        %v5908 = vunpack.c.h.b16 %v2851
        %v5909 = vunpack.c.l.b16 %v2852
        %v5910 = vunpack.c.h.b16 %v2852
        %v5911 = vunpack.c.l.b16 %v2853
        %v5912 = vunpack.c.h.b16 %v2853
        %v5913 = vunpack.c.l.b16 %v2854
        %v5914 = vunpack.c.h.b16 %v2854
        %v5915 = vunpack.c.l.b16 %v2855
        %v5916 = vunpack.c.h.b16 %v2855
        %v5917 = vunpack.c.l.b16 %v2856
        %v5918 = vunpack.c.h.b16 %v2856
        %v5919 = vunpack.c.l.b16 %v2857
        %v5920 = vunpack.c.h.b16 %v2857
        %v5921 = vunpack.c.l.b16 %v2858
        %v5922 = vunpack.c.h.b16 %v2858
        %v5923 = vunpack.c.l.b16 %v2859
        %v5924 = vunpack.c.h.b16 %v2859
        %v5925 = vunpack.c.l.b16 %v2860
        %v5926 = vunpack.c.h.b16 %v2860
        %v5927 = vunpack.c.l.b16 %v2861
        %v5928 = vunpack.c.h.b16 %v2861
        %v5929 = vunpack.c.l.b16 %v2862
        %v5930 = vunpack.c.h.b16 %v2862
        %v5931 = vunpack.c.l.b16 %v2863
        %v5932 = vunpack.c.h.b16 %v2863
        %v5933 = vunpack.c.l.b16 %v2864
        %v5934 = vunpack.c.h.b16 %v2864
        %v5935 = vunpack.c.l.b16 %v2865
        %v5936 = vunpack.c.h.b16 %v2865
        %v5937 = vunpack.c.l.b16 %v2866
        %v5938 = vunpack.c.h.b16 %v2866
        %v5939 = vunpack.c.l.b16 %v2867
        %v5940 = vunpack.c.h.b16 %v2867
        %v5941 = vunpack.c.l.b16 %v2868
        %v5942 = vunpack.c.h.b16 %v2868
        %v5943 = vunpack.c.l.b16 %v2869
        %v5944 = vunpack.c.h.b16 %v2869
        %v5945 = vunpack.c.l.b16 %v2870
        %v5946 = vunpack.c.h.b16 %v2870
        %v5947 = vunpack.c.l.b16 %v2871
        %v5948 = vunpack.c.h.b16 %v2871
        %v5949 = vunpack.c.l.b16 %v2872
        %v5950 = vunpack.c.h.b16 %v2872
        %v5951 = vunpack.c.l.b16 %v2873
        %v5952 = vunpack.c.h.b16 %v2873
        %v5953 = vunpack.c.l.b16 %v2874
        %v5954 = vunpack.c.h.b16 %v2874
        %v5955 = vunpack.c.l.b16 %v2875
        %v5956 = vunpack.c.h.b16 %v2875
        %v5957 = vunpack.c.l.b16 %v2876
        %v5958 = vunpack.c.h.b16 %v2876
        %v5959 = vunpack.c.l.b16 %v2877
        %v5960 = vunpack.c.h.b16 %v2877
        %v5961 = vunpack.c.l.b16 %v2878
        %v5962 = vunpack.c.h.b16 %v2878
        %v5963 = vunpack.c.l.b16 %v2879
        %v5964 = vunpack.c.h.b16 %v2879
        %v5965 = vunpack.c.l.b16 %v2880
        %v5966 = vunpack.c.h.b16 %v2880
        %v5967 = vunpack.c.l.b16 %v2881
        %v5968 = vunpack.c.h.b16 %v2881
        %v5969 = vunpack.c.l.b16 %v2882
        %v5970 = vunpack.c.h.b16 %v2882
        %v5971 = vunpack.c.l.b16 %v2883
        %v5972 = vunpack.c.h.b16 %v2883
        %v5973 = vunpack.c.l.b16 %v2884
        %v5974 = vunpack.c.h.b16 %v2884
        %v5975 = vunpack.c.l.b16 %v2885
        %v5976 = vunpack.c.h.b16 %v2885
        %v5977 = vunpack.c.l.b16 %v2886
        %v5978 = vunpack.c.h.b16 %v2886
        %v5979 = vunpack.c.l.b16 %v2887
        %v5980 = vunpack.c.h.b16 %v2887
        %v5981 = vunpack.c.l.b16 %v2888
        %v5982 = vunpack.c.h.b16 %v2888
        %v5983 = vunpack.c.l.b16 %v2889
        %v5984 = vunpack.c.h.b16 %v2889
        %v5985 = vunpack.c.l.b16 %v2890
        %v5986 = vunpack.c.h.b16 %v2890
        %v5987 = vunpack.c.l.b16 %v2891
        %v5988 = vunpack.c.h.b16 %v2891
        %v5989 = vunpack.c.l.b16 %v2892
        %v5990 = vunpack.c.h.b16 %v2892
        %v5991 = vunpack.c.l.b16 %v2893
        %v5992 = vunpack.c.h.b16 %v2893
        %v5993 = vunpack.c.l.b16 %v2894
        %v5994 = vunpack.c.h.b16 %v2894
        %v5995 = vunpack.c.l.b16 %v2895
        %v5996 = vunpack.c.h.b16 %v2895
        %v5997 = vunpack.c.l.b16 %v2896
        %v5998 = vunpack.c.h.b16 %v2896
        %v5999 = vunpack.c.l.b16 %v2897
        %v6000 = vunpack.c.h.b16 %v2897
        %v6001 = vunpack.c.l.b16 %v2898
        %v6002 = vunpack.c.h.b16 %v2898
        %v6003 = vunpack.c.l.b16 %v2899
        %v6004 = vunpack.c.h.b16 %v2899
        %v6005 = vunpack.c.l.b16 %v2900
        %v6006 = vunpack.c.h.b16 %v2900
        %v6007 = vunpack.c.l.b16 %v2901
        %v6008 = vunpack.c.h.b16 %v2901
        %v6009 = vunpack.c.l.b16 %v2902
        %v6010 = vunpack.c.h.b16 %v2902
        %v6011 = vunpack.c.l.b16 %v2903
        %v6012 = vunpack.c.h.b16 %v2903
        %v6013 = vunpack.c.l.b16 %v2904
        %v6014 = vunpack.c.h.b16 %v2904
        %v6015 = vunpack.c.l.b16 %v2905
        %v6016 = vunpack.c.h.b16 %v2905
        %v6017 = vunpack.c.l.b16 %v2906
        %v6018 = vunpack.c.h.b16 %v2906
        %v6019 = vunpack.c.l.b16 %v2907
        %v6020 = vunpack.c.h.b16 %v2907
        %v6021 = vunpack.c.l.b16 %v2908
        %v6022 = vunpack.c.h.b16 %v2908
        %v6023 = vpack.c.b16 %v3983, %v3975
        %v6024 = vpack.c.b16 %v3984, %v3976
        %v6025 = vpack.c.b16 %v3985, %v3977
        %v6026 = vpack.c.b16 %v3986, %v3978
        %v6027 = vpack.c.b16 %v3987, %v3979
        %v6028 = vpack.c.b16 %v3988, %v3980
        %v6029 = vpack.c.b16 %v3989, %v3981
        %v6030 = vpack.c.b16 %v3990, %v3982
        %v6031 = vpack.c.b16 %v3999, %v3991
        %v6032 = vpack.c.b16 %v4000, %v3992
        %v6033 = vpack.c.b16 %v4001, %v3993
        %v6034 = vpack.c.b16 %v4002, %v3994
        %v6035 = vpack.c.b16 %v4003, %v3995
        %v6036 = vpack.c.b16 %v4004, %v3996
        %v6037 = vpack.c.b16 %v4005, %v3997
        %v6038 = vpack.c.b16 %v4006, %v3998
        %v6039 = vpack.c.b16 %v4015, %v4007
        %v6040 = vpack.c.b16 %v4016, %v4008
        %v6041 = vpack.c.b16 %v4017, %v4009
        %v6042 = vpack.c.b16 %v4018, %v4010
        %v6043 = vpack.c.b16 %v4019, %v4011
        %v6044 = vpack.c.b16 %v4020, %v4012
        %v6045 = vpack.c.b16 %v4021, %v4013
        %v6046 = vpack.c.b16 %v4022, %v4014
        %v6047 = vpack.c.b16 %v4031, %v4023
        %v6048 = vpack.c.b16 %v4032, %v4024
        %v6049 = vpack.c.b16 %v4033, %v4025
        %v6050 = vpack.c.b16 %v4034, %v4026
        %v6051 = vpack.c.b16 %v4035, %v4027
        %v6052 = vpack.c.b16 %v4036, %v4028
        %v6053 = vpack.c.b16 %v4037, %v4029
        %v6054 = vpack.c.b16 %v4038, %v4030
        %v6055 = vpack.c.b16 %v4047, %v4039
        %v6056 = vpack.c.b16 %v4048, %v4040
        %v6057 = vpack.c.b16 %v4049, %v4041
        %v6058 = vpack.c.b16 %v4050, %v4042
        %v6059 = vpack.c.b16 %v4051, %v4043
        %v6060 = vpack.c.b16 %v4052, %v4044
        %v6061 = vpack.c.b16 %v4053, %v4045
        %v6062 = vpack.c.b16 %v4054, %v4046
        %v6063 = vpack.c.b16 %v4063, %v4055
        %v6064 = vpack.c.b16 %v4064, %v4056
        %v6065 = vpack.c.b16 %v4065, %v4057
        %v6066 = vpack.c.b16 %v4066, %v4058
        %v6067 = vpack.c.b16 %v4067, %v4059
        %v6068 = vpack.c.b16 %v4068, %v4060
        %v6069 = vpack.c.b16 %v4069, %v4061
        %v6070 = vpack.c.b16 %v4070, %v4062
        %v6071 = vpack.c.b16 %v4079, %v4071
        %v6072 = vpack.c.b16 %v4080, %v4072
        %v6073 = vpack.c.b16 %v4081, %v4073
        %v6074 = vpack.c.b16 %v4082, %v4074
        %v6075 = vpack.c.b16 %v4083, %v4075
        %v6076 = vpack.c.b16 %v4084, %v4076
        %v6077 = vpack.c.b16 %v4085, %v4077
        %v6078 = vpack.c.b16 %v4086, %v4078
        %v6079 = vpack.c.b16 %v4095, %v4087
        %v6080 = vpack.c.b16 %v4096, %v4088
        %v6081 = vpack.c.b16 %v4097, %v4089
        %v6082 = vpack.c.b16 %v4098, %v4090
        %v6083 = vpack.c.b16 %v4099, %v4091
        %v6084 = vpack.c.b16 %v4100, %v4092
        %v6085 = vpack.c.b16 %v4101, %v4093
        %v6086 = vpack.c.b16 %v4102, %v4094
        %v6087 = vpack.c.b16 %v4111, %v4103
        %v6088 = vpack.c.b16 %v4112, %v4104
        %v6089 = vpack.c.b16 %v4113, %v4105
        %v6090 = vpack.c.b16 %v4114, %v4106
        %v6091 = vpack.c.b16 %v4115, %v4107
        %v6092 = vpack.c.b16 %v4116, %v4108
        %v6093 = vpack.c.b16 %v4117, %v4109
        %v6094 = vpack.c.b16 %v4118, %v4110
        %v6095 = vpack.c.b16 %v4127, %v4119
        %v6096 = vpack.c.b16 %v4128, %v4120
        %v6097 = vpack.c.b16 %v4129, %v4121
        %v6098 = vpack.c.b16 %v4130, %v4122
        %v6099 = vpack.c.b16 %v4131, %v4123
        %v6100 = vpack.c.b16 %v4132, %v4124
        %v6101 = vpack.c.b16 %v4133, %v4125
        %v6102 = vpack.c.b16 %v4134, %v4126
        %v6103 = vpack.c.b16 %v4143, %v4135
        %v6104 = vpack.c.b16 %v4144, %v4136
        %v6105 = vpack.c.b16 %v4145, %v4137
        %v6106 = vpack.c.b16 %v4146, %v4138
        %v6107 = vpack.c.b16 %v4147, %v4139
        %v6108 = vpack.c.b16 %v4148, %v4140
        %v6109 = vpack.c.b16 %v4149, %v4141
        %v6110 = vpack.c.b16 %v4150, %v4142
        %v6111 = vpack.c.b16 %v4159, %v4151
        %v6112 = vpack.c.b16 %v4160, %v4152
        %v6113 = vpack.c.b16 %v4161, %v4153
        %v6114 = vpack.c.b16 %v4162, %v4154
        %v6115 = vpack.c.b16 %v4163, %v4155
        %v6116 = vpack.c.b16 %v4164, %v4156
        %v6117 = vpack.c.b16 %v4165, %v4157
        %v6118 = vpack.c.b16 %v4166, %v4158
        %v6119 = vpack.c.b16 %v4175, %v4167
        %v6120 = vpack.c.b16 %v4176, %v4168
        %v6121 = vpack.c.b16 %v4177, %v4169
        %v6122 = vpack.c.b16 %v4178, %v4170
        %v6123 = vpack.c.b16 %v4179, %v4171
        %v6124 = vpack.c.b16 %v4180, %v4172
        %v6125 = vpack.c.b16 %v4181, %v4173
        %v6126 = vpack.c.b16 %v4182, %v4174
        %v6127 = vpack.c.b16 %v4191, %v4183
        %v6128 = vpack.c.b16 %v4192, %v4184
        %v6129 = vpack.c.b16 %v4193, %v4185
        %v6130 = vpack.c.b16 %v4194, %v4186
        %v6131 = vpack.c.b16 %v4195, %v4187
        %v6132 = vpack.c.b16 %v4196, %v4188
        %v6133 = vpack.c.b16 %v4197, %v4189
        %v6134 = vpack.c.b16 %v4198, %v4190
        %v6135 = vpack.c.b16 %v4207, %v4199
        %v6136 = vpack.c.b16 %v4208, %v4200
        %v6137 = vpack.c.b16 %v4209, %v4201
        %v6138 = vpack.c.b16 %v4210, %v4202
        %v6139 = vpack.c.b16 %v4211, %v4203
        %v6140 = vpack.c.b16 %v4212, %v4204
        %v6141 = vpack.c.b16 %v4213, %v4205
        %v6142 = vpack.c.b16 %v4214, %v4206
        %v6143 = vpack.c.b16 %v4223, %v4215
        %v6144 = vpack.c.b16 %v4224, %v4216
        %v6145 = vpack.c.b16 %v4225, %v4217
        %v6146 = vpack.c.b16 %v4226, %v4218
        %v6147 = vpack.c.b16 %v4227, %v4219
        %v6148 = vpack.c.b16 %v4228, %v4220
        %v6149 = vpack.c.b16 %v4229, %v4221
        %v6150 = vpack.c.b16 %v4230, %v4222
        %v6151 = vpack.c.b16 %v4239, %v4231
        %v6152 = vpack.c.b16 %v4240, %v4232
        %v6153 = vpack.c.b16 %v4241, %v4233
        %v6154 = vpack.c.b16 %v4242, %v4234
        %v6155 = vpack.c.b16 %v4243, %v4235
        %v6156 = vpack.c.b16 %v4244, %v4236
        %v6157 = vpack.c.b16 %v4245, %v4237
        %v6158 = vpack.c.b16 %v4246, %v4238
        %v6159 = vpack.c.b16 %v4255, %v4247
        %v6160 = vpack.c.b16 %v4256, %v4248
        %v6161 = vpack.c.b16 %v4257, %v4249
        %v6162 = vpack.c.b16 %v4258, %v4250
        %v6163 = vpack.c.b16 %v4259, %v4251
        %v6164 = vpack.c.b16 %v4260, %v4252
        %v6165 = vpack.c.b16 %v4261, %v4253
        %v6166 = vpack.c.b16 %v4262, %v4254
        %v6167 = vpack.c.b16 %v4271, %v4263
        %v6168 = vpack.c.b16 %v4272, %v4264
        %v6169 = vpack.c.b16 %v4273, %v4265
        %v6170 = vpack.c.b16 %v4274, %v4266
        %v6171 = vpack.c.b16 %v4275, %v4267
        %v6172 = vpack.c.b16 %v4276, %v4268
        %v6173 = vpack.c.b16 %v4277, %v4269
        %v6174 = vpack.c.b16 %v4278, %v4270
        %v6175 = vpack.c.b16 %v4287, %v4279
        %v6176 = vpack.c.b16 %v4288, %v4280
        %v6177 = vpack.c.b16 %v4289, %v4281
        %v6178 = vpack.c.b16 %v4290, %v4282
        %v6179 = vpack.c.b16 %v4291, %v4283
        %v6180 = vpack.c.b16 %v4292, %v4284
        %v6181 = vpack.c.b16 %v4293, %v4285
        %v6182 = vpack.c.b16 %v4294, %v4286
        %v6183 = vpack.c.b16 %v4303, %v4295
        %v6184 = vpack.c.b16 %v4304, %v4296
        %v6185 = vpack.c.b16 %v4305, %v4297
        %v6186 = vpack.c.b16 %v4306, %v4298
        %v6187 = vpack.c.b16 %v4307, %v4299
        %v6188 = vpack.c.b16 %v4308, %v4300
        %v6189 = vpack.c.b16 %v4309, %v4301
        %v6190 = vpack.c.b16 %v4310, %v4302
        %v6191 = vpack.c.b16 %v4319, %v4311
        %v6192 = vpack.c.b16 %v4320, %v4312
        %v6193 = vpack.c.b16 %v4321, %v4313
        %v6194 = vpack.c.b16 %v4322, %v4314
        %v6195 = vpack.c.b16 %v4323, %v4315
        %v6196 = vpack.c.b16 %v4324, %v4316
        %v6197 = vpack.c.b16 %v4325, %v4317
        %v6198 = vpack.c.b16 %v4326, %v4318
        %v6199 = vpack.c.b16 %v4335, %v4327
        %v6200 = vpack.c.b16 %v4336, %v4328
        %v6201 = vpack.c.b16 %v4337, %v4329
        %v6202 = vpack.c.b16 %v4338, %v4330
        %v6203 = vpack.c.b16 %v4339, %v4331
        %v6204 = vpack.c.b16 %v4340, %v4332
        %v6205 = vpack.c.b16 %v4341, %v4333
        %v6206 = vpack.c.b16 %v4342, %v4334
        %v6207 = vpack.c.b16 %v4351, %v4343
        %v6208 = vpack.c.b16 %v4352, %v4344
        %v6209 = vpack.c.b16 %v4353, %v4345
        %v6210 = vpack.c.b16 %v4354, %v4346
        %v6211 = vpack.c.b16 %v4355, %v4347
        %v6212 = vpack.c.b16 %v4356, %v4348
        %v6213 = vpack.c.b16 %v4357, %v4349
        %v6214 = vpack.c.b16 %v4358, %v4350
        %v6215 = vpack.c.b16 %v4367, %v4359
        %v6216 = vpack.c.b16 %v4368, %v4360
        %v6217 = vpack.c.b16 %v4369, %v4361
        %v6218 = vpack.c.b16 %v4370, %v4362
        %v6219 = vpack.c.b16 %v4371, %v4363
        %v6220 = vpack.c.b16 %v4372, %v4364
        %v6221 = vpack.c.b16 %v4373, %v4365
        %v6222 = vpack.c.b16 %v4374, %v4366
        %v6223 = vpack.c.b16 %v4383, %v4375
        %v6224 = vpack.c.b16 %v4384, %v4376
        %v6225 = vpack.c.b16 %v4385, %v4377
        %v6226 = vpack.c.b16 %v4386, %v4378
        %v6227 = vpack.c.b16 %v4387, %v4379
        %v6228 = vpack.c.b16 %v4388, %v4380
        %v6229 = vpack.c.b16 %v4389, %v4381
        %v6230 = vpack.c.b16 %v4390, %v4382
        %v6231 = vpack.c.b16 %v4399, %v4391
        %v6232 = vpack.c.b16 %v4400, %v4392
        %v6233 = vpack.c.b16 %v4401, %v4393
        %v6234 = vpack.c.b16 %v4402, %v4394
        %v6235 = vpack.c.b16 %v4403, %v4395
        %v6236 = vpack.c.b16 %v4404, %v4396
        %v6237 = vpack.c.b16 %v4405, %v4397
        %v6238 = vpack.c.b16 %v4406, %v4398
        %v6239 = vpack.c.b16 %v4415, %v4407
        %v6240 = vpack.c.b16 %v4416, %v4408
        %v6241 = vpack.c.b16 %v4417, %v4409
        %v6242 = vpack.c.b16 %v4418, %v4410
        %v6243 = vpack.c.b16 %v4419, %v4411
        %v6244 = vpack.c.b16 %v4420, %v4412
        %v6245 = vpack.c.b16 %v4421, %v4413
        %v6246 = vpack.c.b16 %v4422, %v4414
        %v6247 = vpack.c.b16 %v4431, %v4423
        %v6248 = vpack.c.b16 %v4432, %v4424
        %v6249 = vpack.c.b16 %v4433, %v4425
        %v6250 = vpack.c.b16 %v4434, %v4426
        %v6251 = vpack.c.b16 %v4435, %v4427
        %v6252 = vpack.c.b16 %v4436, %v4428
        %v6253 = vpack.c.b16 %v4437, %v4429
        %v6254 = vpack.c.b16 %v4438, %v4430
        %v6255 = vpack.c.b16 %v4447, %v4439
        %v6256 = vpack.c.b16 %v4448, %v4440
        %v6257 = vpack.c.b16 %v4449, %v4441
        %v6258 = vpack.c.b16 %v4450, %v4442
        %v6259 = vpack.c.b16 %v4451, %v4443
        %v6260 = vpack.c.b16 %v4452, %v4444
        %v6261 = vpack.c.b16 %v4453, %v4445
        %v6262 = vpack.c.b16 %v4454, %v4446
        %v6263 = vpack.c.b16 %v4463, %v4455
        %v6264 = vpack.c.b16 %v4464, %v4456
        %v6265 = vpack.c.b16 %v4465, %v4457
        %v6266 = vpack.c.b16 %v4466, %v4458
        %v6267 = vpack.c.b16 %v4467, %v4459
        %v6268 = vpack.c.b16 %v4468, %v4460
        %v6269 = vpack.c.b16 %v4469, %v4461
        %v6270 = vpack.c.b16 %v4470, %v4462
        %v6271 = vpack.c.b16 %v4479, %v4471
        %v6272 = vpack.c.b16 %v4480, %v4472
        %v6273 = vpack.c.b16 %v4481, %v4473
        %v6274 = vpack.c.b16 %v4482, %v4474
        %v6275 = vpack.c.b16 %v4483, %v4475
        %v6276 = vpack.c.b16 %v4484, %v4476
        %v6277 = vpack.c.b16 %v4485, %v4477
        %v6278 = vpack.c.b16 %v4486, %v4478
        %v6279 = vpack.c.b16 %v4495, %v4487
        %v6280 = vpack.c.b16 %v4496, %v4488
        %v6281 = vpack.c.b16 %v4497, %v4489
        %v6282 = vpack.c.b16 %v4498, %v4490
        %v6283 = vpack.c.b16 %v4499, %v4491
        %v6284 = vpack.c.b16 %v4500, %v4492
        %v6285 = vpack.c.b16 %v4501, %v4493
        %v6286 = vpack.c.b16 %v4502, %v4494
        %v6287 = vpack.c.b16 %v4511, %v4503
        %v6288 = vpack.c.b16 %v4512, %v4504
        %v6289 = vpack.c.b16 %v4513, %v4505
        %v6290 = vpack.c.b16 %v4514, %v4506
        %v6291 = vpack.c.b16 %v4515, %v4507
        %v6292 = vpack.c.b16 %v4516, %v4508
        %v6293 = vpack.c.b16 %v4517, %v4509
        %v6294 = vpack.c.b16 %v4518, %v4510
        %v6295 = vpack.c.b16 %v4527, %v4519
        %v6296 = vpack.c.b16 %v4528, %v4520
        %v6297 = vpack.c.b16 %v4529, %v4521
        %v6298 = vpack.c.b16 %v4530, %v4522
        %v6299 = vpack.c.b16 %v4531, %v4523
        %v6300 = vpack.c.b16 %v4532, %v4524
        %v6301 = vpack.c.b16 %v4533, %v4525
        %v6302 = vpack.c.b16 %v4534, %v4526
        %v6303 = vpack.c.b16 %v4543, %v4535
        %v6304 = vpack.c.b16 %v4544, %v4536
        %v6305 = vpack.c.b16 %v4545, %v4537
        %v6306 = vpack.c.b16 %v4546, %v4538
        %v6307 = vpack.c.b16 %v4547, %v4539
        %v6308 = vpack.c.b16 %v4548, %v4540
        %v6309 = vpack.c.b16 %v4549, %v4541
        %v6310 = vpack.c.b16 %v4550, %v4542
        %v6311 = vpack.c.b16 %v4559, %v4551
        %v6312 = vpack.c.b16 %v4560, %v4552
        %v6313 = vpack.c.b16 %v4561, %v4553
        %v6314 = vpack.c.b16 %v4562, %v4554
        %v6315 = vpack.c.b16 %v4563, %v4555
        %v6316 = vpack.c.b16 %v4564, %v4556
        %v6317 = vpack.c.b16 %v4565, %v4557
        %v6318 = vpack.c.b16 %v4566, %v4558
        %v6319 = vpack.c.b16 %v4575, %v4567
        %v6320 = vpack.c.b16 %v4576, %v4568
        %v6321 = vpack.c.b16 %v4577, %v4569
        %v6322 = vpack.c.b16 %v4578, %v4570
        %v6323 = vpack.c.b16 %v4579, %v4571
        %v6324 = vpack.c.b16 %v4580, %v4572
        %v6325 = vpack.c.b16 %v4581, %v4573
        %v6326 = vpack.c.b16 %v4582, %v4574
        %v6327 = vpack.c.b16 %v4591, %v4583
        %v6328 = vpack.c.b16 %v4592, %v4584
        %v6329 = vpack.c.b16 %v4593, %v4585
        %v6330 = vpack.c.b16 %v4594, %v4586
        %v6331 = vpack.c.b16 %v4595, %v4587
        %v6332 = vpack.c.b16 %v4596, %v4588
        %v6333 = vpack.c.b16 %v4597, %v4589
        %v6334 = vpack.c.b16 %v4598, %v4590
        %v6335 = vpack.c.b16 %v4607, %v4599
        %v6336 = vpack.c.b16 %v4608, %v4600
        %v6337 = vpack.c.b16 %v4609, %v4601
        %v6338 = vpack.c.b16 %v4610, %v4602
        %v6339 = vpack.c.b16 %v4611, %v4603
        %v6340 = vpack.c.b16 %v4612, %v4604
        %v6341 = vpack.c.b16 %v4613, %v4605
        %v6342 = vpack.c.b16 %v4614, %v4606
        %v6343 = vpack.c.b16 %v4623, %v4615
        %v6344 = vpack.c.b16 %v4624, %v4616
        %v6345 = vpack.c.b16 %v4625, %v4617
        %v6346 = vpack.c.b16 %v4626, %v4618
        %v6347 = vpack.c.b16 %v4627, %v4619
        %v6348 = vpack.c.b16 %v4628, %v4620
        %v6349 = vpack.c.b16 %v4629, %v4621
        %v6350 = vpack.c.b16 %v4630, %v4622
        %v6351 = vpack.c.b16 %v4639, %v4631
        %v6352 = vpack.c.b16 %v4640, %v4632
        %v6353 = vpack.c.b16 %v4641, %v4633
        %v6354 = vpack.c.b16 %v4642, %v4634
        %v6355 = vpack.c.b16 %v4643, %v4635
        %v6356 = vpack.c.b16 %v4644, %v4636
        %v6357 = vpack.c.b16 %v4645, %v4637
        %v6358 = vpack.c.b16 %v4646, %v4638
        %v6359 = vpack.c.b16 %v4655, %v4647
        %v6360 = vpack.c.b16 %v4656, %v4648
        %v6361 = vpack.c.b16 %v4657, %v4649
        %v6362 = vpack.c.b16 %v4658, %v4650
        %v6363 = vpack.c.b16 %v4659, %v4651
        %v6364 = vpack.c.b16 %v4660, %v4652
        %v6365 = vpack.c.b16 %v4661, %v4653
        %v6366 = vpack.c.b16 %v4662, %v4654
        %v6367 = vpack.c.b16 %v4671, %v4663
        %v6368 = vpack.c.b16 %v4672, %v4664
        %v6369 = vpack.c.b16 %v4673, %v4665
        %v6370 = vpack.c.b16 %v4674, %v4666
        %v6371 = vpack.c.b16 %v4675, %v4667
        %v6372 = vpack.c.b16 %v4676, %v4668
        %v6373 = vpack.c.b16 %v4677, %v4669
        %v6374 = vpack.c.b16 %v4678, %v4670
        %v6375 = vpack.c.b16 %v4687, %v4679
        %v6376 = vpack.c.b16 %v4688, %v4680
        %v6377 = vpack.c.b16 %v4689, %v4681
        %v6378 = vpack.c.b16 %v4690, %v4682
        %v6379 = vpack.c.b16 %v4691, %v4683
        %v6380 = vpack.c.b16 %v4692, %v4684
        %v6381 = vpack.c.b16 %v4693, %v4685
        %v6382 = vpack.c.b16 %v4694, %v4686
        %v6383 = vpack.c.b16 %v4703, %v4695
        %v6384 = vpack.c.b16 %v4704, %v4696
        %v6385 = vpack.c.b16 %v4705, %v4697
        %v6386 = vpack.c.b16 %v4706, %v4698
        %v6387 = vpack.c.b16 %v4707, %v4699
        %v6388 = vpack.c.b16 %v4708, %v4700
        %v6389 = vpack.c.b16 %v4709, %v4701
        %v6390 = vpack.c.b16 %v4710, %v4702
        %v6391 = vpack.c.b16 %v4719, %v4711
        %v6392 = vpack.c.b16 %v4720, %v4712
        %v6393 = vpack.c.b16 %v4721, %v4713
        %v6394 = vpack.c.b16 %v4722, %v4714
        %v6395 = vpack.c.b16 %v4723, %v4715
        %v6396 = vpack.c.b16 %v4724, %v4716
        %v6397 = vpack.c.b16 %v4725, %v4717
        %v6398 = vpack.c.b16 %v4726, %v4718
        %v6399 = vpack.c.b16 %v4735, %v4727
        %v6400 = vpack.c.b16 %v4736, %v4728
        %v6401 = vpack.c.b16 %v4737, %v4729
        %v6402 = vpack.c.b16 %v4738, %v4730
        %v6403 = vpack.c.b16 %v4739, %v4731
        %v6404 = vpack.c.b16 %v4740, %v4732
        %v6405 = vpack.c.b16 %v4741, %v4733
        %v6406 = vpack.c.b16 %v4742, %v4734
        %v6407 = vpack.c.b16 %v4751, %v4743
        %v6408 = vpack.c.b16 %v4752, %v4744
        %v6409 = vpack.c.b16 %v4753, %v4745
        %v6410 = vpack.c.b16 %v4754, %v4746
        %v6411 = vpack.c.b16 %v4755, %v4747
        %v6412 = vpack.c.b16 %v4756, %v4748
        %v6413 = vpack.c.b16 %v4757, %v4749
        %v6414 = vpack.c.b16 %v4758, %v4750
        %v6415 = vpack.c.b16 %v4767, %v4759
        %v6416 = vpack.c.b16 %v4768, %v4760
        %v6417 = vpack.c.b16 %v4769, %v4761
        %v6418 = vpack.c.b16 %v4770, %v4762
        %v6419 = vpack.c.b16 %v4771, %v4763
        %v6420 = vpack.c.b16 %v4772, %v4764
        %v6421 = vpack.c.b16 %v4773, %v4765
        %v6422 = vpack.c.b16 %v4774, %v4766
        %v6423 = vpack.c.b16 %v4783, %v4775
        %v6424 = vpack.c.b16 %v4784, %v4776
        %v6425 = vpack.c.b16 %v4785, %v4777
        %v6426 = vpack.c.b16 %v4786, %v4778
        %v6427 = vpack.c.b16 %v4787, %v4779
        %v6428 = vpack.c.b16 %v4788, %v4780
        %v6429 = vpack.c.b16 %v4789, %v4781
        %v6430 = vpack.c.b16 %v4790, %v4782
        %v6431 = vpack.c.b16 %v4799, %v4791
        %v6432 = vpack.c.b16 %v4800, %v4792
        %v6433 = vpack.c.b16 %v4801, %v4793
        %v6434 = vpack.c.b16 %v4802, %v4794
        %v6435 = vpack.c.b16 %v4803, %v4795
        %v6436 = vpack.c.b16 %v4804, %v4796
        %v6437 = vpack.c.b16 %v4805, %v4797
        %v6438 = vpack.c.b16 %v4806, %v4798
        %v6439 = vpack.c.b16 %v4815, %v4807
        %v6440 = vpack.c.b16 %v4816, %v4808
        %v6441 = vpack.c.b16 %v4817, %v4809
        %v6442 = vpack.c.b16 %v4818, %v4810
        %v6443 = vpack.c.b16 %v4819, %v4811
        %v6444 = vpack.c.b16 %v4820, %v4812
        %v6445 = vpack.c.b16 %v4821, %v4813
        %v6446 = vpack.c.b16 %v4822, %v4814
        %v6447 = vpack.c.b16 %v4831, %v4823
        %v6448 = vpack.c.b16 %v4832, %v4824
        %v6449 = vpack.c.b16 %v4833, %v4825
        %v6450 = vpack.c.b16 %v4834, %v4826
        %v6451 = vpack.c.b16 %v4835, %v4827
        %v6452 = vpack.c.b16 %v4836, %v4828
        %v6453 = vpack.c.b16 %v4837, %v4829
        %v6454 = vpack.c.b16 %v4838, %v4830
        %v6455 = vpack.c.b16 %v4847, %v4839
        %v6456 = vpack.c.b16 %v4848, %v4840
        %v6457 = vpack.c.b16 %v4849, %v4841
        %v6458 = vpack.c.b16 %v4850, %v4842
        %v6459 = vpack.c.b16 %v4851, %v4843
        %v6460 = vpack.c.b16 %v4852, %v4844
        %v6461 = vpack.c.b16 %v4853, %v4845
        %v6462 = vpack.c.b16 %v4854, %v4846
        %v6463 = vpack.c.b16 %v4863, %v4855
        %v6464 = vpack.c.b16 %v4864, %v4856
        %v6465 = vpack.c.b16 %v4865, %v4857
        %v6466 = vpack.c.b16 %v4866, %v4858
        %v6467 = vpack.c.b16 %v4867, %v4859
        %v6468 = vpack.c.b16 %v4868, %v4860
        %v6469 = vpack.c.b16 %v4869, %v4861
        %v6470 = vpack.c.b16 %v4870, %v4862
        %v6471 = vpack.c.b16 %v4879, %v4871
        %v6472 = vpack.c.b16 %v4880, %v4872
        %v6473 = vpack.c.b16 %v4881, %v4873
        %v6474 = vpack.c.b16 %v4882, %v4874
        %v6475 = vpack.c.b16 %v4883, %v4875
        %v6476 = vpack.c.b16 %v4884, %v4876
        %v6477 = vpack.c.b16 %v4885, %v4877
        %v6478 = vpack.c.b16 %v4886, %v4878
        %v6479 = vpack.c.b16 %v4895, %v4887
        %v6480 = vpack.c.b16 %v4896, %v4888
        %v6481 = vpack.c.b16 %v4897, %v4889
        %v6482 = vpack.c.b16 %v4898, %v4890
        %v6483 = vpack.c.b16 %v4899, %v4891
        %v6484 = vpack.c.b16 %v4900, %v4892
        %v6485 = vpack.c.b16 %v4901, %v4893
        %v6486 = vpack.c.b16 %v4902, %v4894
        %v6487 = vpack.c.b16 %v4911, %v4903
        %v6488 = vpack.c.b16 %v4912, %v4904
        %v6489 = vpack.c.b16 %v4913, %v4905
        %v6490 = vpack.c.b16 %v4914, %v4906
        %v6491 = vpack.c.b16 %v4915, %v4907
        %v6492 = vpack.c.b16 %v4916, %v4908
        %v6493 = vpack.c.b16 %v4917, %v4909
        %v6494 = vpack.c.b16 %v4918, %v4910
        %v6495 = vpack.c.b16 %v4927, %v4919
        %v6496 = vpack.c.b16 %v4928, %v4920
        %v6497 = vpack.c.b16 %v4929, %v4921
        %v6498 = vpack.c.b16 %v4930, %v4922
        %v6499 = vpack.c.b16 %v4931, %v4923
        %v6500 = vpack.c.b16 %v4932, %v4924
        %v6501 = vpack.c.b16 %v4933, %v4925
        %v6502 = vpack.c.b16 %v4934, %v4926
        %v6503 = vpack.c.b16 %v4943, %v4935
        %v6504 = vpack.c.b16 %v4944, %v4936
        %v6505 = vpack.c.b16 %v4945, %v4937
        %v6506 = vpack.c.b16 %v4946, %v4938
        %v6507 = vpack.c.b16 %v4947, %v4939
        %v6508 = vpack.c.b16 %v4948, %v4940
        %v6509 = vpack.c.b16 %v4949, %v4941
        %v6510 = vpack.c.b16 %v4950, %v4942
        %v6511 = vpack.c.b16 %v4959, %v4951
        %v6512 = vpack.c.b16 %v4960, %v4952
        %v6513 = vpack.c.b16 %v4961, %v4953
        %v6514 = vpack.c.b16 %v4962, %v4954
        %v6515 = vpack.c.b16 %v4963, %v4955
        %v6516 = vpack.c.b16 %v4964, %v4956
        %v6517 = vpack.c.b16 %v4965, %v4957
        %v6518 = vpack.c.b16 %v4966, %v4958
        %v6519 = vpack.c.b16 %v4975, %v4967
        %v6520 = vpack.c.b16 %v4976, %v4968
        %v6521 = vpack.c.b16 %v4977, %v4969
        %v6522 = vpack.c.b16 %v4978, %v4970
        %v6523 = vpack.c.b16 %v4979, %v4971
        %v6524 = vpack.c.b16 %v4980, %v4972
        %v6525 = vpack.c.b16 %v4981, %v4973
        %v6526 = vpack.c.b16 %v4982, %v4974
        %v6527 = vpack.c.b16 %v4991, %v4983
        %v6528 = vpack.c.b16 %v4992, %v4984
        %v6529 = vpack.c.b16 %v4993, %v4985
        %v6530 = vpack.c.b16 %v4994, %v4986
        %v6531 = vpack.c.b16 %v4995, %v4987
        %v6532 = vpack.c.b16 %v4996, %v4988
        %v6533 = vpack.c.b16 %v4997, %v4989
        %v6534 = vpack.c.b16 %v4998, %v4990
        %v6535 = vpack.c.b16 %v5007, %v4999
        %v6536 = vpack.c.b16 %v5008, %v5000
        %v6537 = vpack.c.b16 %v5009, %v5001
        %v6538 = vpack.c.b16 %v5010, %v5002
        %v6539 = vpack.c.b16 %v5011, %v5003
        %v6540 = vpack.c.b16 %v5012, %v5004
        %v6541 = vpack.c.b16 %v5013, %v5005
        %v6542 = vpack.c.b16 %v5014, %v5006
        %v6543 = vpack.c.b16 %v5023, %v5015
        %v6544 = vpack.c.b16 %v5024, %v5016
        %v6545 = vpack.c.b16 %v5025, %v5017
        %v6546 = vpack.c.b16 %v5026, %v5018
        %v6547 = vpack.c.b16 %v5027, %v5019
        %v6548 = vpack.c.b16 %v5028, %v5020
        %v6549 = vpack.c.b16 %v5029, %v5021
        %v6550 = vpack.c.b16 %v5030, %v5022
        %v6551 = vpack.c.b16 %v5039, %v5031
        %v6552 = vpack.c.b16 %v5040, %v5032
        %v6553 = vpack.c.b16 %v5041, %v5033
        %v6554 = vpack.c.b16 %v5042, %v5034
        %v6555 = vpack.c.b16 %v5043, %v5035
        %v6556 = vpack.c.b16 %v5044, %v5036
        %v6557 = vpack.c.b16 %v5045, %v5037
        %v6558 = vpack.c.b16 %v5046, %v5038
        %v6559 = vpack.c.b16 %v5055, %v5047
        %v6560 = vpack.c.b16 %v5056, %v5048
        %v6561 = vpack.c.b16 %v5057, %v5049
        %v6562 = vpack.c.b16 %v5058, %v5050
        %v6563 = vpack.c.b16 %v5059, %v5051
        %v6564 = vpack.c.b16 %v5060, %v5052
        %v6565 = vpack.c.b16 %v5061, %v5053
        %v6566 = vpack.c.b16 %v5062, %v5054
        %v6567 = vpack.c.b16 %v5071, %v5063
        %v6568 = vpack.c.b16 %v5072, %v5064
        %v6569 = vpack.c.b16 %v5073, %v5065
        %v6570 = vpack.c.b16 %v5074, %v5066
        %v6571 = vpack.c.b16 %v5075, %v5067
        %v6572 = vpack.c.b16 %v5076, %v5068
        %v6573 = vpack.c.b16 %v5077, %v5069
        %v6574 = vpack.c.b16 %v5078, %v5070
        %v6575 = vpack.c.b16 %v5087, %v5079
        %v6576 = vpack.c.b16 %v5088, %v5080
        %v6577 = vpack.c.b16 %v5089, %v5081
        %v6578 = vpack.c.b16 %v5090, %v5082
        %v6579 = vpack.c.b16 %v5091, %v5083
        %v6580 = vpack.c.b16 %v5092, %v5084
        %v6581 = vpack.c.b16 %v5093, %v5085
        %v6582 = vpack.c.b16 %v5094, %v5086
        %v6583 = vpack.c.b16 %v5103, %v5095
        %v6584 = vpack.c.b16 %v5104, %v5096
        %v6585 = vpack.c.b16 %v5105, %v5097
        %v6586 = vpack.c.b16 %v5106, %v5098
        %v6587 = vpack.c.b16 %v5107, %v5099
        %v6588 = vpack.c.b16 %v5108, %v5100
        %v6589 = vpack.c.b16 %v5109, %v5101
        %v6590 = vpack.c.b16 %v5110, %v5102
        %v6591 = vpack.c.b16 %v5119, %v5111
        %v6592 = vpack.c.b16 %v5120, %v5112
        %v6593 = vpack.c.b16 %v5121, %v5113
        %v6594 = vpack.c.b16 %v5122, %v5114
        %v6595 = vpack.c.b16 %v5123, %v5115
        %v6596 = vpack.c.b16 %v5124, %v5116
        %v6597 = vpack.c.b16 %v5125, %v5117
        %v6598 = vpack.c.b16 %v5126, %v5118
        %v6599 = vpack.c.b16 %v5135, %v5127
        %v6600 = vpack.c.b16 %v5136, %v5128
        %v6601 = vpack.c.b16 %v5137, %v5129
        %v6602 = vpack.c.b16 %v5138, %v5130
        %v6603 = vpack.c.b16 %v5139, %v5131
        %v6604 = vpack.c.b16 %v5140, %v5132
        %v6605 = vpack.c.b16 %v5141, %v5133
        %v6606 = vpack.c.b16 %v5142, %v5134
        %v6607 = vpack.c.b16 %v5151, %v5143
        %v6608 = vpack.c.b16 %v5152, %v5144
        %v6609 = vpack.c.b16 %v5153, %v5145
        %v6610 = vpack.c.b16 %v5154, %v5146
        %v6611 = vpack.c.b16 %v5155, %v5147
        %v6612 = vpack.c.b16 %v5156, %v5148
        %v6613 = vpack.c.b16 %v5157, %v5149
        %v6614 = vpack.c.b16 %v5158, %v5150
        %v6615 = vpack.c.b16 %v5167, %v5159
        %v6616 = vpack.c.b16 %v5168, %v5160
        %v6617 = vpack.c.b16 %v5169, %v5161
        %v6618 = vpack.c.b16 %v5170, %v5162
        %v6619 = vpack.c.b16 %v5171, %v5163
        %v6620 = vpack.c.b16 %v5172, %v5164
        %v6621 = vpack.c.b16 %v5173, %v5165
        %v6622 = vpack.c.b16 %v5174, %v5166
        %v6623 = vpack.c.b16 %v5183, %v5175
        %v6624 = vpack.c.b16 %v5184, %v5176
        %v6625 = vpack.c.b16 %v5185, %v5177
        %v6626 = vpack.c.b16 %v5186, %v5178
        %v6627 = vpack.c.b16 %v5187, %v5179
        %v6628 = vpack.c.b16 %v5188, %v5180
        %v6629 = vpack.c.b16 %v5189, %v5181
        %v6630 = vpack.c.b16 %v5190, %v5182
        %v6631 = vpack.c.b16 %v5199, %v5191
        %v6632 = vpack.c.b16 %v5200, %v5192
        %v6633 = vpack.c.b16 %v5201, %v5193
        %v6634 = vpack.c.b16 %v5202, %v5194
        %v6635 = vpack.c.b16 %v5203, %v5195
        %v6636 = vpack.c.b16 %v5204, %v5196
        %v6637 = vpack.c.b16 %v5205, %v5197
        %v6638 = vpack.c.b16 %v5206, %v5198
        %v6639 = vpack.c.b16 %v5215, %v5207
        %v6640 = vpack.c.b16 %v5216, %v5208
        %v6641 = vpack.c.b16 %v5217, %v5209
        %v6642 = vpack.c.b16 %v5218, %v5210
        %v6643 = vpack.c.b16 %v5219, %v5211
        %v6644 = vpack.c.b16 %v5220, %v5212
        %v6645 = vpack.c.b16 %v5221, %v5213
        %v6646 = vpack.c.b16 %v5222, %v5214
        %v6647 = vpack.c.b16 %v5231, %v5223
        %v6648 = vpack.c.b16 %v5232, %v5224
        %v6649 = vpack.c.b16 %v5233, %v5225
        %v6650 = vpack.c.b16 %v5234, %v5226
        %v6651 = vpack.c.b16 %v5235, %v5227
        %v6652 = vpack.c.b16 %v5236, %v5228
        %v6653 = vpack.c.b16 %v5237, %v5229
        %v6654 = vpack.c.b16 %v5238, %v5230
        %v6655 = vpack.c.b16 %v5247, %v5239
        %v6656 = vpack.c.b16 %v5248, %v5240
        %v6657 = vpack.c.b16 %v5249, %v5241
        %v6658 = vpack.c.b16 %v5250, %v5242
        %v6659 = vpack.c.b16 %v5251, %v5243
        %v6660 = vpack.c.b16 %v5252, %v5244
        %v6661 = vpack.c.b16 %v5253, %v5245
        %v6662 = vpack.c.b16 %v5254, %v5246
        %v6663 = vpack.c.b16 %v5263, %v5255
        %v6664 = vpack.c.b16 %v5264, %v5256
        %v6665 = vpack.c.b16 %v5265, %v5257
        %v6666 = vpack.c.b16 %v5266, %v5258
        %v6667 = vpack.c.b16 %v5267, %v5259
        %v6668 = vpack.c.b16 %v5268, %v5260
        %v6669 = vpack.c.b16 %v5269, %v5261
        %v6670 = vpack.c.b16 %v5270, %v5262
        %v6671 = vpack.c.b16 %v5279, %v5271
        %v6672 = vpack.c.b16 %v5280, %v5272
        %v6673 = vpack.c.b16 %v5281, %v5273
        %v6674 = vpack.c.b16 %v5282, %v5274
        %v6675 = vpack.c.b16 %v5283, %v5275
        %v6676 = vpack.c.b16 %v5284, %v5276
        %v6677 = vpack.c.b16 %v5285, %v5277
        %v6678 = vpack.c.b16 %v5286, %v5278
        %v6679 = vpack.c.b16 %v5295, %v5287
        %v6680 = vpack.c.b16 %v5296, %v5288
        %v6681 = vpack.c.b16 %v5297, %v5289
        %v6682 = vpack.c.b16 %v5298, %v5290
        %v6683 = vpack.c.b16 %v5299, %v5291
        %v6684 = vpack.c.b16 %v5300, %v5292
        %v6685 = vpack.c.b16 %v5301, %v5293
        %v6686 = vpack.c.b16 %v5302, %v5294
        %v6687 = vpack.c.b16 %v5311, %v5303
        %v6688 = vpack.c.b16 %v5312, %v5304
        %v6689 = vpack.c.b16 %v5313, %v5305
        %v6690 = vpack.c.b16 %v5314, %v5306
        %v6691 = vpack.c.b16 %v5315, %v5307
        %v6692 = vpack.c.b16 %v5316, %v5308
        %v6693 = vpack.c.b16 %v5317, %v5309
        %v6694 = vpack.c.b16 %v5318, %v5310
        %v6695 = vpack.c.b16 %v5327, %v5319
        %v6696 = vpack.c.b16 %v5328, %v5320
        %v6697 = vpack.c.b16 %v5329, %v5321
        %v6698 = vpack.c.b16 %v5330, %v5322
        %v6699 = vpack.c.b16 %v5331, %v5323
        %v6700 = vpack.c.b16 %v5332, %v5324
        %v6701 = vpack.c.b16 %v5333, %v5325
        %v6702 = vpack.c.b16 %v5334, %v5326
        %v6703 = vpack.c.b16 %v5343, %v5335
        %v6704 = vpack.c.b16 %v5344, %v5336
        %v6705 = vpack.c.b16 %v5345, %v5337
        %v6706 = vpack.c.b16 %v5346, %v5338
        %v6707 = vpack.c.b16 %v5347, %v5339
        %v6708 = vpack.c.b16 %v5348, %v5340
        %v6709 = vpack.c.b16 %v5349, %v5341
        %v6710 = vpack.c.b16 %v5350, %v5342
        %v6711 = vpack.c.b16 %v5359, %v5351
        %v6712 = vpack.c.b16 %v5360, %v5352
        %v6713 = vpack.c.b16 %v5361, %v5353
        %v6714 = vpack.c.b16 %v5362, %v5354
        %v6715 = vpack.c.b16 %v5363, %v5355
        %v6716 = vpack.c.b16 %v5364, %v5356
        %v6717 = vpack.c.b16 %v5365, %v5357
        %v6718 = vpack.c.b16 %v5366, %v5358
        %v6719 = vpack.c.b16 %v5375, %v5367
        %v6720 = vpack.c.b16 %v5376, %v5368
        %v6721 = vpack.c.b16 %v5377, %v5369
        %v6722 = vpack.c.b16 %v5378, %v5370
        %v6723 = vpack.c.b16 %v5379, %v5371
        %v6724 = vpack.c.b16 %v5380, %v5372
        %v6725 = vpack.c.b16 %v5381, %v5373
        %v6726 = vpack.c.b16 %v5382, %v5374
        %v6727 = vpack.c.b16 %v5391, %v5383
        %v6728 = vpack.c.b16 %v5392, %v5384
        %v6729 = vpack.c.b16 %v5393, %v5385
        %v6730 = vpack.c.b16 %v5394, %v5386
        %v6731 = vpack.c.b16 %v5395, %v5387
        %v6732 = vpack.c.b16 %v5396, %v5388
        %v6733 = vpack.c.b16 %v5397, %v5389
        %v6734 = vpack.c.b16 %v5398, %v5390
        %v6735 = vpack.c.b16 %v5407, %v5399
        %v6736 = vpack.c.b16 %v5408, %v5400
        %v6737 = vpack.c.b16 %v5409, %v5401
        %v6738 = vpack.c.b16 %v5410, %v5402
        %v6739 = vpack.c.b16 %v5411, %v5403
        %v6740 = vpack.c.b16 %v5412, %v5404
        %v6741 = vpack.c.b16 %v5413, %v5405
        %v6742 = vpack.c.b16 %v5414, %v5406
        %v6743 = vpack.c.b16 %v5423, %v5415
        %v6744 = vpack.c.b16 %v5424, %v5416
        %v6745 = vpack.c.b16 %v5425, %v5417
        %v6746 = vpack.c.b16 %v5426, %v5418
        %v6747 = vpack.c.b16 %v5427, %v5419
        %v6748 = vpack.c.b16 %v5428, %v5420
        %v6749 = vpack.c.b16 %v5429, %v5421
        %v6750 = vpack.c.b16 %v5430, %v5422
        %v6751 = vpack.c.b16 %v5439, %v5431
        %v6752 = vpack.c.b16 %v5440, %v5432
        %v6753 = vpack.c.b16 %v5441, %v5433
        %v6754 = vpack.c.b16 %v5442, %v5434
        %v6755 = vpack.c.b16 %v5443, %v5435
        %v6756 = vpack.c.b16 %v5444, %v5436
        %v6757 = vpack.c.b16 %v5445, %v5437
        %v6758 = vpack.c.b16 %v5446, %v5438
        %v6759 = vpack.c.b16 %v5455, %v5447
        %v6760 = vpack.c.b16 %v5456, %v5448
        %v6761 = vpack.c.b16 %v5457, %v5449
        %v6762 = vpack.c.b16 %v5458, %v5450
        %v6763 = vpack.c.b16 %v5459, %v5451
        %v6764 = vpack.c.b16 %v5460, %v5452
        %v6765 = vpack.c.b16 %v5461, %v5453
        %v6766 = vpack.c.b16 %v5462, %v5454
        %v6767 = vpack.c.b16 %v5471, %v5463
        %v6768 = vpack.c.b16 %v5472, %v5464
        %v6769 = vpack.c.b16 %v5473, %v5465
        %v6770 = vpack.c.b16 %v5474, %v5466
        %v6771 = vpack.c.b16 %v5475, %v5467
        %v6772 = vpack.c.b16 %v5476, %v5468
        %v6773 = vpack.c.b16 %v5477, %v5469
        %v6774 = vpack.c.b16 %v5478, %v5470
        %v6775 = vpack.c.b16 %v5487, %v5479
        %v6776 = vpack.c.b16 %v5488, %v5480
        %v6777 = vpack.c.b16 %v5489, %v5481
        %v6778 = vpack.c.b16 %v5490, %v5482
        %v6779 = vpack.c.b16 %v5491, %v5483
        %v6780 = vpack.c.b16 %v5492, %v5484
        %v6781 = vpack.c.b16 %v5493, %v5485
        %v6782 = vpack.c.b16 %v5494, %v5486
        %v6783 = vpack.c.b16 %v5503, %v5495
        %v6784 = vpack.c.b16 %v5504, %v5496
        %v6785 = vpack.c.b16 %v5505, %v5497
        %v6786 = vpack.c.b16 %v5506, %v5498
        %v6787 = vpack.c.b16 %v5507, %v5499
        %v6788 = vpack.c.b16 %v5508, %v5500
        %v6789 = vpack.c.b16 %v5509, %v5501
        %v6790 = vpack.c.b16 %v5510, %v5502
        %v6791 = vpack.c.b16 %v5519, %v5511
        %v6792 = vpack.c.b16 %v5520, %v5512
        %v6793 = vpack.c.b16 %v5521, %v5513
        %v6794 = vpack.c.b16 %v5522, %v5514
        %v6795 = vpack.c.b16 %v5523, %v5515
        %v6796 = vpack.c.b16 %v5524, %v5516
        %v6797 = vpack.c.b16 %v5525, %v5517
        %v6798 = vpack.c.b16 %v5526, %v5518
        %v6799 = vpack.c.b16 %v5535, %v5527
        %v6800 = vpack.c.b16 %v5536, %v5528
        %v6801 = vpack.c.b16 %v5537, %v5529
        %v6802 = vpack.c.b16 %v5538, %v5530
        %v6803 = vpack.c.b16 %v5539, %v5531
        %v6804 = vpack.c.b16 %v5540, %v5532
        %v6805 = vpack.c.b16 %v5541, %v5533
        %v6806 = vpack.c.b16 %v5542, %v5534
        %v6807 = vpack.c.b16 %v5551, %v5543
        %v6808 = vpack.c.b16 %v5552, %v5544
        %v6809 = vpack.c.b16 %v5553, %v5545
        %v6810 = vpack.c.b16 %v5554, %v5546
        %v6811 = vpack.c.b16 %v5555, %v5547
        %v6812 = vpack.c.b16 %v5556, %v5548
        %v6813 = vpack.c.b16 %v5557, %v5549
        %v6814 = vpack.c.b16 %v5558, %v5550
        %v6815 = vpack.c.b16 %v5567, %v5559
        %v6816 = vpack.c.b16 %v5568, %v5560
        %v6817 = vpack.c.b16 %v5569, %v5561
        %v6818 = vpack.c.b16 %v5570, %v5562
        %v6819 = vpack.c.b16 %v5571, %v5563
        %v6820 = vpack.c.b16 %v5572, %v5564
        %v6821 = vpack.c.b16 %v5573, %v5565
        %v6822 = vpack.c.b16 %v5574, %v5566
        %v6823 = vpack.c.b16 %v5583, %v5575
        %v6824 = vpack.c.b16 %v5584, %v5576
        %v6825 = vpack.c.b16 %v5585, %v5577
        %v6826 = vpack.c.b16 %v5586, %v5578
        %v6827 = vpack.c.b16 %v5587, %v5579
        %v6828 = vpack.c.b16 %v5588, %v5580
        %v6829 = vpack.c.b16 %v5589, %v5581
        %v6830 = vpack.c.b16 %v5590, %v5582
        %v6831 = vpack.c.b16 %v5599, %v5591
        %v6832 = vpack.c.b16 %v5600, %v5592
        %v6833 = vpack.c.b16 %v5601, %v5593
        %v6834 = vpack.c.b16 %v5602, %v5594
        %v6835 = vpack.c.b16 %v5603, %v5595
        %v6836 = vpack.c.b16 %v5604, %v5596
        %v6837 = vpack.c.b16 %v5605, %v5597
        %v6838 = vpack.c.b16 %v5606, %v5598
        %v6839 = vpack.c.b16 %v5615, %v5607
        %v6840 = vpack.c.b16 %v5616, %v5608
        %v6841 = vpack.c.b16 %v5617, %v5609
        %v6842 = vpack.c.b16 %v5618, %v5610
        %v6843 = vpack.c.b16 %v5619, %v5611
        %v6844 = vpack.c.b16 %v5620, %v5612
        %v6845 = vpack.c.b16 %v5621, %v5613
        %v6846 = vpack.c.b16 %v5622, %v5614
        %v6847 = vpack.c.b16 %v5631, %v5623
        %v6848 = vpack.c.b16 %v5632, %v5624
        %v6849 = vpack.c.b16 %v5633, %v5625
        %v6850 = vpack.c.b16 %v5634, %v5626
        %v6851 = vpack.c.b16 %v5635, %v5627
        %v6852 = vpack.c.b16 %v5636, %v5628
        %v6853 = vpack.c.b16 %v5637, %v5629
        %v6854 = vpack.c.b16 %v5638, %v5630
        %v6855 = vpack.c.b16 %v5647, %v5639
        %v6856 = vpack.c.b16 %v5648, %v5640
        %v6857 = vpack.c.b16 %v5649, %v5641
        %v6858 = vpack.c.b16 %v5650, %v5642
        %v6859 = vpack.c.b16 %v5651, %v5643
        %v6860 = vpack.c.b16 %v5652, %v5644
        %v6861 = vpack.c.b16 %v5653, %v5645
        %v6862 = vpack.c.b16 %v5654, %v5646
        %v6863 = vpack.c.b16 %v5663, %v5655
        %v6864 = vpack.c.b16 %v5664, %v5656
        %v6865 = vpack.c.b16 %v5665, %v5657
        %v6866 = vpack.c.b16 %v5666, %v5658
        %v6867 = vpack.c.b16 %v5667, %v5659
        %v6868 = vpack.c.b16 %v5668, %v5660
        %v6869 = vpack.c.b16 %v5669, %v5661
        %v6870 = vpack.c.b16 %v5670, %v5662
        %v6871 = vpack.c.b16 %v5679, %v5671
        %v6872 = vpack.c.b16 %v5680, %v5672
        %v6873 = vpack.c.b16 %v5681, %v5673
        %v6874 = vpack.c.b16 %v5682, %v5674
        %v6875 = vpack.c.b16 %v5683, %v5675
        %v6876 = vpack.c.b16 %v5684, %v5676
        %v6877 = vpack.c.b16 %v5685, %v5677
        %v6878 = vpack.c.b16 %v5686, %v5678
        %v6879 = vpack.c.b16 %v5695, %v5687
        %v6880 = vpack.c.b16 %v5696, %v5688
        %v6881 = vpack.c.b16 %v5697, %v5689
        %v6882 = vpack.c.b16 %v5698, %v5690
        %v6883 = vpack.c.b16 %v5699, %v5691
        %v6884 = vpack.c.b16 %v5700, %v5692
        %v6885 = vpack.c.b16 %v5701, %v5693
        %v6886 = vpack.c.b16 %v5702, %v5694
        %v6887 = vpack.c.b16 %v5711, %v5703
        %v6888 = vpack.c.b16 %v5712, %v5704
        %v6889 = vpack.c.b16 %v5713, %v5705
        %v6890 = vpack.c.b16 %v5714, %v5706
        %v6891 = vpack.c.b16 %v5715, %v5707
        %v6892 = vpack.c.b16 %v5716, %v5708
        %v6893 = vpack.c.b16 %v5717, %v5709
        %v6894 = vpack.c.b16 %v5718, %v5710
        %v6895 = vpack.c.b16 %v5727, %v5719
        %v6896 = vpack.c.b16 %v5728, %v5720
        %v6897 = vpack.c.b16 %v5729, %v5721
        %v6898 = vpack.c.b16 %v5730, %v5722
        %v6899 = vpack.c.b16 %v5731, %v5723
        %v6900 = vpack.c.b16 %v5732, %v5724
        %v6901 = vpack.c.b16 %v5733, %v5725
        %v6902 = vpack.c.b16 %v5734, %v5726
        %v6903 = vpack.c.b16 %v5743, %v5735
        %v6904 = vpack.c.b16 %v5744, %v5736
        %v6905 = vpack.c.b16 %v5745, %v5737
        %v6906 = vpack.c.b16 %v5746, %v5738
        %v6907 = vpack.c.b16 %v5747, %v5739
        %v6908 = vpack.c.b16 %v5748, %v5740
        %v6909 = vpack.c.b16 %v5749, %v5741
        %v6910 = vpack.c.b16 %v5750, %v5742
        %v6911 = vpack.c.b16 %v5759, %v5751
        %v6912 = vpack.c.b16 %v5760, %v5752
        %v6913 = vpack.c.b16 %v5761, %v5753
        %v6914 = vpack.c.b16 %v5762, %v5754
        %v6915 = vpack.c.b16 %v5763, %v5755
        %v6916 = vpack.c.b16 %v5764, %v5756
        %v6917 = vpack.c.b16 %v5765, %v5757
        %v6918 = vpack.c.b16 %v5766, %v5758
        %v6919 = vpack.c.b16 %v5775, %v5767
        %v6920 = vpack.c.b16 %v5776, %v5768
        %v6921 = vpack.c.b16 %v5777, %v5769
        %v6922 = vpack.c.b16 %v5778, %v5770
        %v6923 = vpack.c.b16 %v5779, %v5771
        %v6924 = vpack.c.b16 %v5780, %v5772
        %v6925 = vpack.c.b16 %v5781, %v5773
        %v6926 = vpack.c.b16 %v5782, %v5774
        %v6927 = vpack.c.b16 %v5791, %v5783
        %v6928 = vpack.c.b16 %v5792, %v5784
        %v6929 = vpack.c.b16 %v5793, %v5785
        %v6930 = vpack.c.b16 %v5794, %v5786
        %v6931 = vpack.c.b16 %v5795, %v5787
        %v6932 = vpack.c.b16 %v5796, %v5788
        %v6933 = vpack.c.b16 %v5797, %v5789
        %v6934 = vpack.c.b16 %v5798, %v5790
        %v6935 = vpack.c.b16 %v5807, %v5799
        %v6936 = vpack.c.b16 %v5808, %v5800
        %v6937 = vpack.c.b16 %v5809, %v5801
        %v6938 = vpack.c.b16 %v5810, %v5802
        %v6939 = vpack.c.b16 %v5811, %v5803
        %v6940 = vpack.c.b16 %v5812, %v5804
        %v6941 = vpack.c.b16 %v5813, %v5805
        %v6942 = vpack.c.b16 %v5814, %v5806
        %v6943 = vpack.c.b16 %v5823, %v5815
        %v6944 = vpack.c.b16 %v5824, %v5816
        %v6945 = vpack.c.b16 %v5825, %v5817
        %v6946 = vpack.c.b16 %v5826, %v5818
        %v6947 = vpack.c.b16 %v5827, %v5819
        %v6948 = vpack.c.b16 %v5828, %v5820
        %v6949 = vpack.c.b16 %v5829, %v5821
        %v6950 = vpack.c.b16 %v5830, %v5822
        %v6951 = vpack.c.b16 %v5839, %v5831
        %v6952 = vpack.c.b16 %v5840, %v5832
        %v6953 = vpack.c.b16 %v5841, %v5833
        %v6954 = vpack.c.b16 %v5842, %v5834
        %v6955 = vpack.c.b16 %v5843, %v5835
        %v6956 = vpack.c.b16 %v5844, %v5836
        %v6957 = vpack.c.b16 %v5845, %v5837
        %v6958 = vpack.c.b16 %v5846, %v5838
        %v6959 = vpack.c.b16 %v5855, %v5847
        %v6960 = vpack.c.b16 %v5856, %v5848
        %v6961 = vpack.c.b16 %v5857, %v5849
        %v6962 = vpack.c.b16 %v5858, %v5850
        %v6963 = vpack.c.b16 %v5859, %v5851
        %v6964 = vpack.c.b16 %v5860, %v5852
        %v6965 = vpack.c.b16 %v5861, %v5853
        %v6966 = vpack.c.b16 %v5862, %v5854
        %v6967 = vpack.c.b16 %v5871, %v5863
        %v6968 = vpack.c.b16 %v5872, %v5864
        %v6969 = vpack.c.b16 %v5873, %v5865
        %v6970 = vpack.c.b16 %v5874, %v5866
        %v6971 = vpack.c.b16 %v5875, %v5867
        %v6972 = vpack.c.b16 %v5876, %v5868
        %v6973 = vpack.c.b16 %v5877, %v5869
        %v6974 = vpack.c.b16 %v5878, %v5870
        %v6975 = vpack.c.b16 %v5887, %v5879
        %v6976 = vpack.c.b16 %v5888, %v5880
        %v6977 = vpack.c.b16 %v5889, %v5881
        %v6978 = vpack.c.b16 %v5890, %v5882
        %v6979 = vpack.c.b16 %v5891, %v5883
        %v6980 = vpack.c.b16 %v5892, %v5884
        %v6981 = vpack.c.b16 %v5893, %v5885
        %v6982 = vpack.c.b16 %v5894, %v5886
        %v6983 = vpack.c.b16 %v5903, %v5895
        %v6984 = vpack.c.b16 %v5904, %v5896
        %v6985 = vpack.c.b16 %v5905, %v5897
        %v6986 = vpack.c.b16 %v5906, %v5898
        %v6987 = vpack.c.b16 %v5907, %v5899
        %v6988 = vpack.c.b16 %v5908, %v5900
        %v6989 = vpack.c.b16 %v5909, %v5901
        %v6990 = vpack.c.b16 %v5910, %v5902
        %v6991 = vpack.c.b16 %v5919, %v5911
        %v6992 = vpack.c.b16 %v5920, %v5912
        %v6993 = vpack.c.b16 %v5921, %v5913
        %v6994 = vpack.c.b16 %v5922, %v5914
        %v6995 = vpack.c.b16 %v5923, %v5915
        %v6996 = vpack.c.b16 %v5924, %v5916
        %v6997 = vpack.c.b16 %v5925, %v5917
        %v6998 = vpack.c.b16 %v5926, %v5918
        %v6999 = vpack.c.b16 %v5935, %v5927
        %v7000 = vpack.c.b16 %v5936, %v5928
        %v7001 = vpack.c.b16 %v5937, %v5929
        %v7002 = vpack.c.b16 %v5938, %v5930
        %v7003 = vpack.c.b16 %v5939, %v5931
        %v7004 = vpack.c.b16 %v5940, %v5932
        %v7005 = vpack.c.b16 %v5941, %v5933
        %v7006 = vpack.c.b16 %v5942, %v5934
        %v7007 = vpack.c.b16 %v5951, %v5943
        %v7008 = vpack.c.b16 %v5952, %v5944
        %v7009 = vpack.c.b16 %v5953, %v5945
        %v7010 = vpack.c.b16 %v5954, %v5946
        %v7011 = vpack.c.b16 %v5955, %v5947
        %v7012 = vpack.c.b16 %v5956, %v5948
        %v7013 = vpack.c.b16 %v5957, %v5949
        %v7014 = vpack.c.b16 %v5958, %v5950
        %v7015 = vpack.c.b16 %v5967, %v5959
        %v7016 = vpack.c.b16 %v5968, %v5960
        %v7017 = vpack.c.b16 %v5969, %v5961
        %v7018 = vpack.c.b16 %v5970, %v5962
        %v7019 = vpack.c.b16 %v5971, %v5963
        %v7020 = vpack.c.b16 %v5972, %v5964
        %v7021 = vpack.c.b16 %v5973, %v5965
        %v7022 = vpack.c.b16 %v5974, %v5966
        %v7023 = vpack.c.b16 %v5983, %v5975
        %v7024 = vpack.c.b16 %v5984, %v5976
        %v7025 = vpack.c.b16 %v5985, %v5977
        %v7026 = vpack.c.b16 %v5986, %v5978
        %v7027 = vpack.c.b16 %v5987, %v5979
        %v7028 = vpack.c.b16 %v5988, %v5980
        %v7029 = vpack.c.b16 %v5989, %v5981
        %v7030 = vpack.c.b16 %v5990, %v5982
        %v7031 = vpack.c.b16 %v5999, %v5991
        %v7032 = vpack.c.b16 %v6000, %v5992
        %v7033 = vpack.c.b16 %v6001, %v5993
        %v7034 = vpack.c.b16 %v6002, %v5994
        %v7035 = vpack.c.b16 %v6003, %v5995
        %v7036 = vpack.c.b16 %v6004, %v5996
        %v7037 = vpack.c.b16 %v6005, %v5997
        %v7038 = vpack.c.b16 %v6006, %v5998
        %v7039 = vpack.c.b16 %v6015, %v6007
        %v7040 = vpack.c.b16 %v6016, %v6008
        %v7041 = vpack.c.b16 %v6017, %v6009
        %v7042 = vpack.c.b16 %v6018, %v6010
        %v7043 = vpack.c.b16 %v6019, %v6011
        %v7044 = vpack.c.b16 %v6020, %v6012
        %v7045 = vpack.c.b16 %v6021, %v6013
        %v7046 = vpack.c.b16 %v6022, %v6014
        %8071 = vmatprep.subr.bf16.mxu0 %v6080
        %8072 = vmatpush1.bf16.msra.mxu0 %v6079
        %8073 = vmatprep.subr.bf16.mxu0 %v6072
        %8074 = vmatpush1.bf16.msra.mxu0 %v6071
        %8075 = vmatprep.subr.bf16.mxu0 %v6064
        %8076 = vmatpush1.bf16.msra.mxu0 %v6063
        %8077 = vmatprep.subr.bf16.mxu0 %v6056
        %8078 = vmatpush1.bf16.msra.mxu0 %v6055
        %8079 = vmatprep.subr.bf16.mxu0 %v6048
        %8080 = vmatpush1.bf16.msra.mxu0 %v6047
        %8081 = vmatprep.subr.bf16.mxu0 %v6040
        %8082 = vmatpush1.bf16.msra.mxu0 %v6039
        %8083 = vmatprep.subr.bf16.mxu0 %v6032
        %8084 = vmatpush1.bf16.msra.mxu0 %v6031
        %8085 = vmatprep.subr.bf16.mxu0 %v6024
        %8086 = vmatpush1.bf16.msra.mxu0 %v6023
        %8087 = vmatprep.subr.bf16.mxu0 %v6144
        %8088 = vmatpush2.bf16.msra.mxu0 %v6143
        %8089 = vmatprep.subr.bf16.mxu0 %v6136
        %8090 = vmatpush2.bf16.msra.mxu0 %v6135
        %8091 = vmatprep.subr.bf16.mxu0 %v6128
        %8092 = vmatpush2.bf16.msra.mxu0 %v6127
        %8093 = vmatprep.subr.bf16.mxu0 %v6120
        %8094 = vmatpush2.bf16.msra.mxu0 %v6119
        %8095 = vmatprep.subr.bf16.mxu0 %v6112
        %8096 = vmatpush2.bf16.msra.mxu0 %v6111
        %8097 = vmatprep.subr.bf16.mxu0 %v6104
        %8098 = vmatpush2.bf16.msra.mxu0 %v6103
        %8099 = vmatprep.subr.bf16.mxu0 %v6096
        %8100 = vmatpush2.bf16.msra.mxu0 %v6095
        %8101 = vmatprep.subr.bf16.mxu0 %v6088
        %8102 = vmatpush2.bf16.msra.mxu0 %v6087
        %8103 = vmatprep.mubr.bf16.mxu0 %v1870
        %8104 = vmatmul.mubr.bf16.gmra.mxu0 %v1869
        %v8105 = vpop.f32.mrf.mxu0
        %v8106 = vadd.f32 %v2914, %v8105
        %v8107 = vpop.f32.mrf.mxu0
        %v8108 = vadd.f32 %v2918, %v8107
        %v8109 = vpop.f32.mrf.mxu0
        %v8110 = vpop.f32.mrf.mxu0
        %8111 = vdwg.mxu0
        %8112 = vmatprep.subr.bf16.mxu0 %v6208
        %8113 = vmatpush1.bf16.msra.mxu0 %v6207
        %8114 = vmatprep.subr.bf16.mxu0 %v6200
        %8115 = vmatpush1.bf16.msra.mxu0 %v6199
        %8116 = vmatprep.subr.bf16.mxu0 %v6192
        %8117 = vmatpush1.bf16.msra.mxu0 %v6191
        %8118 = vmatprep.subr.bf16.mxu0 %v6184
        %8119 = vmatpush1.bf16.msra.mxu0 %v6183
        %8120 = vmatprep.subr.bf16.mxu0 %v6176
        %8121 = vmatpush1.bf16.msra.mxu0 %v6175
        %8122 = vmatprep.subr.bf16.mxu0 %v6168
        %8123 = vmatpush1.bf16.msra.mxu0 %v6167
        %8124 = vmatprep.subr.bf16.mxu0 %v6160
        %8125 = vmatpush1.bf16.msra.mxu0 %v6159
        %8126 = vmatprep.subr.bf16.mxu0 %v6152
        %8127 = vmatpush1.bf16.msra.mxu0 %v6151
        %8128 = vmatprep.subr.bf16.mxu0 %v6272
        %8129 = vmatpush2.bf16.msra.mxu0 %v6271
        %8130 = vmatprep.subr.bf16.mxu0 %v6264
        %8131 = vmatpush2.bf16.msra.mxu0 %v6263
        %8132 = vmatprep.subr.bf16.mxu0 %v6256
        %8133 = vmatpush2.bf16.msra.mxu0 %v6255
        %8134 = vmatprep.subr.bf16.mxu0 %v6248
        %8135 = vmatpush2.bf16.msra.mxu0 %v6247
        %8136 = vmatprep.subr.bf16.mxu0 %v6240
        %8137 = vmatpush2.bf16.msra.mxu0 %v6239
        %8138 = vmatprep.subr.bf16.mxu0 %v6232
        %8139 = vmatpush2.bf16.msra.mxu0 %v6231
        %8140 = vmatprep.subr.bf16.mxu0 %v6224
        %8141 = vmatpush2.bf16.msra.mxu0 %v6223
        %8142 = vmatprep.subr.bf16.mxu0 %v6216
        %8143 = vmatpush2.bf16.msra.mxu0 %v6215
        %8144 = vmatprep.mubr.bf16.mxu0 %v1872
        %8145 = vmatmul.mubr.bf16.gmra.mxu0 %v1871
        %v8146 = vpop.f32.mrf.mxu0
        %v8147 = vadd.f32 %v8106, %v8146
        %v8148 = vpop.f32.mrf.mxu0
        %v8149 = vadd.f32 %v8108, %v8148
        %v8150 = vpop.f32.mrf.mxu0
        %v8151 = vpop.f32.mrf.mxu0
        %8152 = vdwg.mxu0
        %8153 = vmatprep.subr.bf16.mxu0 %v6336
        %8154 = vmatpush1.bf16.msra.mxu0 %v6335
        %8155 = vmatprep.subr.bf16.mxu0 %v6328
        %8156 = vmatpush1.bf16.msra.mxu0 %v6327
        %8157 = vmatprep.subr.bf16.mxu0 %v6320
        %8158 = vmatpush1.bf16.msra.mxu0 %v6319
        %8159 = vmatprep.subr.bf16.mxu0 %v6312
        %8160 = vmatpush1.bf16.msra.mxu0 %v6311
        %8161 = vmatprep.subr.bf16.mxu0 %v6304
        %8162 = vmatpush1.bf16.msra.mxu0 %v6303
        %8163 = vmatprep.subr.bf16.mxu0 %v6296
        %8164 = vmatpush1.bf16.msra.mxu0 %v6295
        %8165 = vmatprep.subr.bf16.mxu0 %v6288
        %8166 = vmatpush1.bf16.msra.mxu0 %v6287
        %8167 = vmatprep.subr.bf16.mxu0 %v6280
        %8168 = vmatpush1.bf16.msra.mxu0 %v6279
        %8169 = vmatprep.subr.bf16.mxu0 %v6400
        %8170 = vmatpush2.bf16.msra.mxu0 %v6399
        %8171 = vmatprep.subr.bf16.mxu0 %v6392
        %8172 = vmatpush2.bf16.msra.mxu0 %v6391
        %8173 = vmatprep.subr.bf16.mxu0 %v6384
        %8174 = vmatpush2.bf16.msra.mxu0 %v6383
        %8175 = vmatprep.subr.bf16.mxu0 %v6376
        %8176 = vmatpush2.bf16.msra.mxu0 %v6375
        %8177 = vmatprep.subr.bf16.mxu0 %v6368
        %8178 = vmatpush2.bf16.msra.mxu0 %v6367
        %8179 = vmatprep.subr.bf16.mxu0 %v6360
        %8180 = vmatpush2.bf16.msra.mxu0 %v6359
        %8181 = vmatprep.subr.bf16.mxu0 %v6352
        %8182 = vmatpush2.bf16.msra.mxu0 %v6351
        %8183 = vmatprep.subr.bf16.mxu0 %v6344
        %8184 = vmatpush2.bf16.msra.mxu0 %v6343
        %8185 = vmatprep.mubr.bf16.mxu0 %v1874
        %8186 = vmatmul.mubr.bf16.gmra.mxu0 %v1873
        %v8187 = vpop.f32.mrf.mxu0
        %v8188 = vadd.f32 %v8147, %v8187
        %v8189 = vpop.f32.mrf.mxu0
        %v8190 = vadd.f32 %v8149, %v8189
        %v8191 = vpop.f32.mrf.mxu0
        %v8192 = vpop.f32.mrf.mxu0
        %8193 = vdwg.mxu0
        %8194 = vmatprep.subr.bf16.mxu0 %v6464
        %8195 = vmatpush1.bf16.msra.mxu0 %v6463
        %8196 = vmatprep.subr.bf16.mxu0 %v6456
        %8197 = vmatpush1.bf16.msra.mxu0 %v6455
        %8198 = vmatprep.subr.bf16.mxu0 %v6448
        %8199 = vmatpush1.bf16.msra.mxu0 %v6447
        %8200 = vmatprep.subr.bf16.mxu0 %v6440
        %8201 = vmatpush1.bf16.msra.mxu0 %v6439
        %8202 = vmatprep.subr.bf16.mxu0 %v6432
        %8203 = vmatpush1.bf16.msra.mxu0 %v6431
        %8204 = vmatprep.subr.bf16.mxu0 %v6424
        %8205 = vmatpush1.bf16.msra.mxu0 %v6423
        %8206 = vmatprep.subr.bf16.mxu0 %v6416
        %8207 = vmatpush1.bf16.msra.mxu0 %v6415
        %8208 = vmatprep.subr.bf16.mxu0 %v6408
        %8209 = vmatpush1.bf16.msra.mxu0 %v6407
        %8210 = vmatprep.subr.bf16.mxu0 %v6528
        %8211 = vmatpush2.bf16.msra.mxu0 %v6527
        %8212 = vmatprep.subr.bf16.mxu0 %v6520
        %8213 = vmatpush2.bf16.msra.mxu0 %v6519
        %8214 = vmatprep.subr.bf16.mxu0 %v6512
        %8215 = vmatpush2.bf16.msra.mxu0 %v6511
        %8216 = vmatprep.subr.bf16.mxu0 %v6504
        %8217 = vmatpush2.bf16.msra.mxu0 %v6503
        %8218 = vmatprep.subr.bf16.mxu0 %v6496
        %8219 = vmatpush2.bf16.msra.mxu0 %v6495
        %8220 = vmatprep.subr.bf16.mxu0 %v6488
        %8221 = vmatpush2.bf16.msra.mxu0 %v6487
        %8222 = vmatprep.subr.bf16.mxu0 %v6480
        %8223 = vmatpush2.bf16.msra.mxu0 %v6479
        %8224 = vmatprep.subr.bf16.mxu0 %v6472
        %8225 = vmatpush2.bf16.msra.mxu0 %v6471
        %8226 = vmatprep.mubr.bf16.mxu0 %v1876
        %8227 = vmatmul.mubr.bf16.gmra.mxu0 %v1875
        %v8228 = vpop.f32.mrf.mxu0
        %v8229 = vadd.f32 %v8188, %v8228
        %v8230 = vpop.f32.mrf.mxu0
        %v8231 = vadd.f32 %v8190, %v8230
        %v8232 = vpop.f32.mrf.mxu0
        %v8233 = vpop.f32.mrf.mxu0
        %8234 = vdwg.mxu0
        %8235 = vmatprep.subr.bf16.mxu0 %v6592
        %8236 = vmatpush1.bf16.msra.mxu0 %v6591
        %8237 = vmatprep.subr.bf16.mxu0 %v6584
        %8238 = vmatpush1.bf16.msra.mxu0 %v6583
        %8239 = vmatprep.subr.bf16.mxu0 %v6576
        %8240 = vmatpush1.bf16.msra.mxu0 %v6575
        %8241 = vmatprep.subr.bf16.mxu0 %v6568
        %8242 = vmatpush1.bf16.msra.mxu0 %v6567
        %8243 = vmatprep.subr.bf16.mxu0 %v6560
        %8244 = vmatpush1.bf16.msra.mxu0 %v6559
        %8245 = vmatprep.subr.bf16.mxu0 %v6552
        %8246 = vmatpush1.bf16.msra.mxu0 %v6551
        %8247 = vmatprep.subr.bf16.mxu0 %v6544
        %8248 = vmatpush1.bf16.msra.mxu0 %v6543
        %8249 = vmatprep.subr.bf16.mxu0 %v6536
        %8250 = vmatpush1.bf16.msra.mxu0 %v6535
        %8251 = vmatprep.subr.bf16.mxu0 %v6656
        %8252 = vmatpush2.bf16.msra.mxu0 %v6655
        %8253 = vmatprep.subr.bf16.mxu0 %v6648
        %8254 = vmatpush2.bf16.msra.mxu0 %v6647
        %8255 = vmatprep.subr.bf16.mxu0 %v6640
        %8256 = vmatpush2.bf16.msra.mxu0 %v6639
        %8257 = vmatprep.subr.bf16.mxu0 %v6632
        %8258 = vmatpush2.bf16.msra.mxu0 %v6631
        %8259 = vmatprep.subr.bf16.mxu0 %v6624
        %8260 = vmatpush2.bf16.msra.mxu0 %v6623
        %8261 = vmatprep.subr.bf16.mxu0 %v6616
        %8262 = vmatpush2.bf16.msra.mxu0 %v6615
        %8263 = vmatprep.subr.bf16.mxu0 %v6608
        %8264 = vmatpush2.bf16.msra.mxu0 %v6607
        %8265 = vmatprep.subr.bf16.mxu0 %v6600
        %8266 = vmatpush2.bf16.msra.mxu0 %v6599
        %8267 = vmatprep.mubr.bf16.mxu0 %v1878
        %8268 = vmatmul.mubr.bf16.gmra.mxu0 %v1877
        %v8269 = vpop.f32.mrf.mxu0
        %v8270 = vadd.f32 %v8229, %v8269
        %v8271 = vpop.f32.mrf.mxu0
        %v8272 = vadd.f32 %v8231, %v8271
        %v8273 = vpop.f32.mrf.mxu0
        %v8274 = vpop.f32.mrf.mxu0
        %8275 = vdwg.mxu0
        %8276 = vmatprep.subr.bf16.mxu0 %v6720
        %8277 = vmatpush1.bf16.msra.mxu0 %v6719
        %8278 = vmatprep.subr.bf16.mxu0 %v6712
        %8279 = vmatpush1.bf16.msra.mxu0 %v6711
        %8280 = vmatprep.subr.bf16.mxu0 %v6704
        %8281 = vmatpush1.bf16.msra.mxu0 %v6703
        %8282 = vmatprep.subr.bf16.mxu0 %v6696
        %8283 = vmatpush1.bf16.msra.mxu0 %v6695
        %8284 = vmatprep.subr.bf16.mxu0 %v6688
        %8285 = vmatpush1.bf16.msra.mxu0 %v6687
        %8286 = vmatprep.subr.bf16.mxu0 %v6680
        %8287 = vmatpush1.bf16.msra.mxu0 %v6679
        %8288 = vmatprep.subr.bf16.mxu0 %v6672
        %8289 = vmatpush1.bf16.msra.mxu0 %v6671
        %8290 = vmatprep.subr.bf16.mxu0 %v6664
        %8291 = vmatpush1.bf16.msra.mxu0 %v6663
        %8292 = vmatprep.subr.bf16.mxu0 %v6784
        %8293 = vmatpush2.bf16.msra.mxu0 %v6783
        %8294 = vmatprep.subr.bf16.mxu0 %v6776
        %8295 = vmatpush2.bf16.msra.mxu0 %v6775
        %8296 = vmatprep.subr.bf16.mxu0 %v6768
        %8297 = vmatpush2.bf16.msra.mxu0 %v6767
        %8298 = vmatprep.subr.bf16.mxu0 %v6760
        %8299 = vmatpush2.bf16.msra.mxu0 %v6759
        %8300 = vmatprep.subr.bf16.mxu0 %v6752
        %8301 = vmatpush2.bf16.msra.mxu0 %v6751
        %8302 = vmatprep.subr.bf16.mxu0 %v6744
        %8303 = vmatpush2.bf16.msra.mxu0 %v6743
        %8304 = vmatprep.subr.bf16.mxu0 %v6736
        %8305 = vmatpush2.bf16.msra.mxu0 %v6735
        %8306 = vmatprep.subr.bf16.mxu0 %v6728
        %8307 = vmatpush2.bf16.msra.mxu0 %v6727
        %8308 = vmatprep.mubr.bf16.mxu0 %v1880
        %8309 = vmatmul.mubr.bf16.gmra.mxu0 %v1879
        %v8310 = vpop.f32.mrf.mxu0
        %v8311 = vadd.f32 %v8270, %v8310
        %v8312 = vpop.f32.mrf.mxu0
        %v8313 = vadd.f32 %v8272, %v8312
        %v8314 = vpop.f32.mrf.mxu0
        %v8315 = vpop.f32.mrf.mxu0
        %8316 = vdwg.mxu0
        %8317 = vmatprep.subr.bf16.mxu0 %v6848
        %8318 = vmatpush1.bf16.msra.mxu0 %v6847
        %8319 = vmatprep.subr.bf16.mxu0 %v6840
        %8320 = vmatpush1.bf16.msra.mxu0 %v6839
        %8321 = vmatprep.subr.bf16.mxu0 %v6832
        %8322 = vmatpush1.bf16.msra.mxu0 %v6831
        %8323 = vmatprep.subr.bf16.mxu0 %v6824
        %8324 = vmatpush1.bf16.msra.mxu0 %v6823
        %8325 = vmatprep.subr.bf16.mxu0 %v6816
        %8326 = vmatpush1.bf16.msra.mxu0 %v6815
        %8327 = vmatprep.subr.bf16.mxu0 %v6808
        %8328 = vmatpush1.bf16.msra.mxu0 %v6807
        %8329 = vmatprep.subr.bf16.mxu0 %v6800
        %8330 = vmatpush1.bf16.msra.mxu0 %v6799
        %8331 = vmatprep.subr.bf16.mxu0 %v6792
        %8332 = vmatpush1.bf16.msra.mxu0 %v6791
        %8333 = vmatprep.subr.bf16.mxu0 %v6912
        %8334 = vmatpush2.bf16.msra.mxu0 %v6911
        %8335 = vmatprep.subr.bf16.mxu0 %v6904
        %8336 = vmatpush2.bf16.msra.mxu0 %v6903
        %8337 = vmatprep.subr.bf16.mxu0 %v6896
        %8338 = vmatpush2.bf16.msra.mxu0 %v6895
        %8339 = vmatprep.subr.bf16.mxu0 %v6888
        %8340 = vmatpush2.bf16.msra.mxu0 %v6887
        %8341 = vmatprep.subr.bf16.mxu0 %v6880
        %8342 = vmatpush2.bf16.msra.mxu0 %v6879
        %8343 = vmatprep.subr.bf16.mxu0 %v6872
        %8344 = vmatpush2.bf16.msra.mxu0 %v6871
        %8345 = vmatprep.subr.bf16.mxu0 %v6864
        %8346 = vmatpush2.bf16.msra.mxu0 %v6863
        %8347 = vmatprep.subr.bf16.mxu0 %v6856
        %8348 = vmatpush2.bf16.msra.mxu0 %v6855
        %8349 = vmatprep.mubr.bf16.mxu0 %v1882
        %8350 = vmatmul.mubr.bf16.gmra.mxu0 %v1881
        %v8351 = vpop.f32.mrf.mxu0
        %v8352 = vadd.f32 %v8311, %v8351
        %v8353 = vpop.f32.mrf.mxu0
        %v8354 = vadd.f32 %v8313, %v8353
        %v8355 = vpop.f32.mrf.mxu0
        %v8356 = vpop.f32.mrf.mxu0
        %8357 = vdwg.mxu0
        %8358 = vmatprep.subr.bf16.mxu0 %v6976
        %8359 = vmatpush1.bf16.msra.mxu0 %v6975
        %8360 = vmatprep.subr.bf16.mxu0 %v6968
        %8361 = vmatpush1.bf16.msra.mxu0 %v6967
        %8362 = vmatprep.subr.bf16.mxu0 %v6960
        %8363 = vmatpush1.bf16.msra.mxu0 %v6959
        %8364 = vmatprep.subr.bf16.mxu0 %v6952
        %8365 = vmatpush1.bf16.msra.mxu0 %v6951
        %8366 = vmatprep.subr.bf16.mxu0 %v6944
        %8367 = vmatpush1.bf16.msra.mxu0 %v6943
        %8368 = vmatprep.subr.bf16.mxu0 %v6936
        %8369 = vmatpush1.bf16.msra.mxu0 %v6935
        %8370 = vmatprep.subr.bf16.mxu0 %v6928
        %8371 = vmatpush1.bf16.msra.mxu0 %v6927
        %8372 = vmatprep.subr.bf16.mxu0 %v6920
        %8373 = vmatpush1.bf16.msra.mxu0 %v6919
        %8374 = vmatprep.subr.bf16.mxu0 %v7040
        %8375 = vmatpush2.bf16.msra.mxu0 %v7039
        %8376 = vmatprep.subr.bf16.mxu0 %v7032
        %8377 = vmatpush2.bf16.msra.mxu0 %v7031
        %8378 = vmatprep.subr.bf16.mxu0 %v7024
        %8379 = vmatpush2.bf16.msra.mxu0 %v7023
        %8380 = vmatprep.subr.bf16.mxu0 %v7016
        %8381 = vmatpush2.bf16.msra.mxu0 %v7015
        %8382 = vmatprep.subr.bf16.mxu0 %v7008
        %8383 = vmatpush2.bf16.msra.mxu0 %v7007
        %8384 = vmatprep.subr.bf16.mxu0 %v7000
        %8385 = vmatpush2.bf16.msra.mxu0 %v6999
        %8386 = vmatprep.subr.bf16.mxu0 %v6992
        %8387 = vmatpush2.bf16.msra.mxu0 %v6991
        %8388 = vmatprep.subr.bf16.mxu0 %v6984
        %8389 = vmatpush2.bf16.msra.mxu0 %v6983
        %8390 = vmatprep.mubr.bf16.mxu0 %v1884
        %8391 = vmatmul.mubr.bf16.gmra.mxu0 %v1883
        %v8392 = vpop.f32.mrf.mxu0
        %v8393 = vadd.f32 %v8352, %v8392
        %v8394 = vpop.f32.mrf.mxu0
        %v8395 = vadd.f32 %v8354, %v8394
        %v8396 = vpop.f32.mrf.mxu0
        %v8397 = vpop.f32.mrf.mxu0
        %8398 = vdwg.mxu0
        %8399 = vmatprep.subr.bf16.mxu0 %v6082
        %8400 = vmatpush1.bf16.msra.mxu0 %v6081
        %8401 = vmatprep.subr.bf16.mxu0 %v6074
        %8402 = vmatpush1.bf16.msra.mxu0 %v6073
        %8403 = vmatprep.subr.bf16.mxu0 %v6066
        %8404 = vmatpush1.bf16.msra.mxu0 %v6065
        %8405 = vmatprep.subr.bf16.mxu0 %v6058
        %8406 = vmatpush1.bf16.msra.mxu0 %v6057
        %8407 = vmatprep.subr.bf16.mxu0 %v6050
        %8408 = vmatpush1.bf16.msra.mxu0 %v6049
        %8409 = vmatprep.subr.bf16.mxu0 %v6042
        %8410 = vmatpush1.bf16.msra.mxu0 %v6041
        %8411 = vmatprep.subr.bf16.mxu0 %v6034
        %8412 = vmatpush1.bf16.msra.mxu0 %v6033
        %8413 = vmatprep.subr.bf16.mxu0 %v6026
        %8414 = vmatpush1.bf16.msra.mxu0 %v6025
        %8415 = vmatprep.subr.bf16.mxu0 %v6146
        %8416 = vmatpush2.bf16.msra.mxu0 %v6145
        %8417 = vmatprep.subr.bf16.mxu0 %v6138
        %8418 = vmatpush2.bf16.msra.mxu0 %v6137
        %8419 = vmatprep.subr.bf16.mxu0 %v6130
        %8420 = vmatpush2.bf16.msra.mxu0 %v6129
        %8421 = vmatprep.subr.bf16.mxu0 %v6122
        %8422 = vmatpush2.bf16.msra.mxu0 %v6121
        %8423 = vmatprep.subr.bf16.mxu0 %v6114
        %8424 = vmatpush2.bf16.msra.mxu0 %v6113
        %8425 = vmatprep.subr.bf16.mxu0 %v6106
        %8426 = vmatpush2.bf16.msra.mxu0 %v6105
        %8427 = vmatprep.subr.bf16.mxu0 %v6098
        %8428 = vmatpush2.bf16.msra.mxu0 %v6097
        %8429 = vmatprep.subr.bf16.mxu0 %v6090
        %8430 = vmatpush2.bf16.msra.mxu0 %v6089
        %8431 = vmatprep.mubr.bf16.mxu0 %v1870
        %8432 = vmatmul.mubr.bf16.gmra.mxu0 %v1869
        %v8433 = vpop.f32.mrf.mxu0
        %v8434 = vadd.f32 %v2922, %v8433
        %v8435 = vpop.f32.mrf.mxu0
        %v8436 = vadd.f32 %v2926, %v8435
        %v8437 = vpop.f32.mrf.mxu0
        %v8438 = vpop.f32.mrf.mxu0
        %8439 = vdwg.mxu0
        %8440 = vmatprep.subr.bf16.mxu0 %v6210
        %8441 = vmatpush1.bf16.msra.mxu0 %v6209
        %8442 = vmatprep.subr.bf16.mxu0 %v6202
        %8443 = vmatpush1.bf16.msra.mxu0 %v6201
        %8444 = vmatprep.subr.bf16.mxu0 %v6194
        %8445 = vmatpush1.bf16.msra.mxu0 %v6193
        %8446 = vmatprep.subr.bf16.mxu0 %v6186
        %8447 = vmatpush1.bf16.msra.mxu0 %v6185
        %8448 = vmatprep.subr.bf16.mxu0 %v6178
        %8449 = vmatpush1.bf16.msra.mxu0 %v6177
        %8450 = vmatprep.subr.bf16.mxu0 %v6170
        %8451 = vmatpush1.bf16.msra.mxu0 %v6169
        %8452 = vmatprep.subr.bf16.mxu0 %v6162
        %8453 = vmatpush1.bf16.msra.mxu0 %v6161
        %8454 = vmatprep.subr.bf16.mxu0 %v6154
        %8455 = vmatpush1.bf16.msra.mxu0 %v6153
        %8456 = vmatprep.subr.bf16.mxu0 %v6274
        %8457 = vmatpush2.bf16.msra.mxu0 %v6273
        %8458 = vmatprep.subr.bf16.mxu0 %v6266
        %8459 = vmatpush2.bf16.msra.mxu0 %v6265
        %8460 = vmatprep.subr.bf16.mxu0 %v6258
        %8461 = vmatpush2.bf16.msra.mxu0 %v6257
        %8462 = vmatprep.subr.bf16.mxu0 %v6250
        %8463 = vmatpush2.bf16.msra.mxu0 %v6249
        %8464 = vmatprep.subr.bf16.mxu0 %v6242
        %8465 = vmatpush2.bf16.msra.mxu0 %v6241
        %8466 = vmatprep.subr.bf16.mxu0 %v6234
        %8467 = vmatpush2.bf16.msra.mxu0 %v6233
        %8468 = vmatprep.subr.bf16.mxu0 %v6226
        %8469 = vmatpush2.bf16.msra.mxu0 %v6225
        %8470 = vmatprep.subr.bf16.mxu0 %v6218
        %8471 = vmatpush2.bf16.msra.mxu0 %v6217
        %8472 = vmatprep.mubr.bf16.mxu0 %v1872
        %8473 = vmatmul.mubr.bf16.gmra.mxu0 %v1871
        %v8474 = vpop.f32.mrf.mxu0
        %v8475 = vadd.f32 %v8434, %v8474
        %v8476 = vpop.f32.mrf.mxu0
        %v8477 = vadd.f32 %v8436, %v8476
        %v8478 = vpop.f32.mrf.mxu0
        %v8479 = vpop.f32.mrf.mxu0
        %8480 = vdwg.mxu0
        %8481 = vmatprep.subr.bf16.mxu0 %v6338
        %8482 = vmatpush1.bf16.msra.mxu0 %v6337
        %8483 = vmatprep.subr.bf16.mxu0 %v6330
        %8484 = vmatpush1.bf16.msra.mxu0 %v6329
        %8485 = vmatprep.subr.bf16.mxu0 %v6322
        %8486 = vmatpush1.bf16.msra.mxu0 %v6321
        %8487 = vmatprep.subr.bf16.mxu0 %v6314
        %8488 = vmatpush1.bf16.msra.mxu0 %v6313
        %8489 = vmatprep.subr.bf16.mxu0 %v6306
        %8490 = vmatpush1.bf16.msra.mxu0 %v6305
        %8491 = vmatprep.subr.bf16.mxu0 %v6298
        %8492 = vmatpush1.bf16.msra.mxu0 %v6297
        %8493 = vmatprep.subr.bf16.mxu0 %v6290
        %8494 = vmatpush1.bf16.msra.mxu0 %v6289
        %8495 = vmatprep.subr.bf16.mxu0 %v6282
        %8496 = vmatpush1.bf16.msra.mxu0 %v6281
        %8497 = vmatprep.subr.bf16.mxu0 %v6402
        %8498 = vmatpush2.bf16.msra.mxu0 %v6401
        %8499 = vmatprep.subr.bf16.mxu0 %v6394
        %8500 = vmatpush2.bf16.msra.mxu0 %v6393
        %8501 = vmatprep.subr.bf16.mxu0 %v6386
        %8502 = vmatpush2.bf16.msra.mxu0 %v6385
        %8503 = vmatprep.subr.bf16.mxu0 %v6378
        %8504 = vmatpush2.bf16.msra.mxu0 %v6377
        %8505 = vmatprep.subr.bf16.mxu0 %v6370
        %8506 = vmatpush2.bf16.msra.mxu0 %v6369
        %8507 = vmatprep.subr.bf16.mxu0 %v6362
        %8508 = vmatpush2.bf16.msra.mxu0 %v6361
        %8509 = vmatprep.subr.bf16.mxu0 %v6354
        %8510 = vmatpush2.bf16.msra.mxu0 %v6353
        %8511 = vmatprep.subr.bf16.mxu0 %v6346
        %8512 = vmatpush2.bf16.msra.mxu0 %v6345
        %8513 = vmatprep.mubr.bf16.mxu0 %v1874
        %8514 = vmatmul.mubr.bf16.gmra.mxu0 %v1873
        %v8515 = vpop.f32.mrf.mxu0
        %v8516 = vadd.f32 %v8475, %v8515
        %v8517 = vpop.f32.mrf.mxu0
        %v8518 = vadd.f32 %v8477, %v8517
        %v8519 = vpop.f32.mrf.mxu0
        %v8520 = vpop.f32.mrf.mxu0
        %8521 = vdwg.mxu0
        %8522 = vmatprep.subr.bf16.mxu0 %v6466
        %8523 = vmatpush1.bf16.msra.mxu0 %v6465
        %8524 = vmatprep.subr.bf16.mxu0 %v6458
        %8525 = vmatpush1.bf16.msra.mxu0 %v6457
        %8526 = vmatprep.subr.bf16.mxu0 %v6450
        %8527 = vmatpush1.bf16.msra.mxu0 %v6449
        %8528 = vmatprep.subr.bf16.mxu0 %v6442
        %8529 = vmatpush1.bf16.msra.mxu0 %v6441
        %8530 = vmatprep.subr.bf16.mxu0 %v6434
        %8531 = vmatpush1.bf16.msra.mxu0 %v6433
        %8532 = vmatprep.subr.bf16.mxu0 %v6426
        %8533 = vmatpush1.bf16.msra.mxu0 %v6425
        %8534 = vmatprep.subr.bf16.mxu0 %v6418
        %8535 = vmatpush1.bf16.msra.mxu0 %v6417
        %8536 = vmatprep.subr.bf16.mxu0 %v6410
        %8537 = vmatpush1.bf16.msra.mxu0 %v6409
        %8538 = vmatprep.subr.bf16.mxu0 %v6530
        %8539 = vmatpush2.bf16.msra.mxu0 %v6529
        %8540 = vmatprep.subr.bf16.mxu0 %v6522
        %8541 = vmatpush2.bf16.msra.mxu0 %v6521
        %8542 = vmatprep.subr.bf16.mxu0 %v6514
        %8543 = vmatpush2.bf16.msra.mxu0 %v6513
        %8544 = vmatprep.subr.bf16.mxu0 %v6506
        %8545 = vmatpush2.bf16.msra.mxu0 %v6505
        %8546 = vmatprep.subr.bf16.mxu0 %v6498
        %8547 = vmatpush2.bf16.msra.mxu0 %v6497
        %8548 = vmatprep.subr.bf16.mxu0 %v6490
        %8549 = vmatpush2.bf16.msra.mxu0 %v6489
        %8550 = vmatprep.subr.bf16.mxu0 %v6482
        %8551 = vmatpush2.bf16.msra.mxu0 %v6481
        %8552 = vmatprep.subr.bf16.mxu0 %v6474
        %8553 = vmatpush2.bf16.msra.mxu0 %v6473
        %8554 = vmatprep.mubr.bf16.mxu0 %v1876
        %8555 = vmatmul.mubr.bf16.gmra.mxu0 %v1875
        %v8556 = vpop.f32.mrf.mxu0
        %v8557 = vadd.f32 %v8516, %v8556
        %v8558 = vpop.f32.mrf.mxu0
        %v8559 = vadd.f32 %v8518, %v8558
        %v8560 = vpop.f32.mrf.mxu0
        %v8561 = vpop.f32.mrf.mxu0
        %8562 = vdwg.mxu0
        %8563 = vmatprep.subr.bf16.mxu0 %v6594
        %8564 = vmatpush1.bf16.msra.mxu0 %v6593
        %8565 = vmatprep.subr.bf16.mxu0 %v6586
        %8566 = vmatpush1.bf16.msra.mxu0 %v6585
        %8567 = vmatprep.subr.bf16.mxu0 %v6578
        %8568 = vmatpush1.bf16.msra.mxu0 %v6577
        %8569 = vmatprep.subr.bf16.mxu0 %v6570
        %8570 = vmatpush1.bf16.msra.mxu0 %v6569
        %8571 = vmatprep.subr.bf16.mxu0 %v6562
        %8572 = vmatpush1.bf16.msra.mxu0 %v6561
        %8573 = vmatprep.subr.bf16.mxu0 %v6554
        %8574 = vmatpush1.bf16.msra.mxu0 %v6553
        %8575 = vmatprep.subr.bf16.mxu0 %v6546
        %8576 = vmatpush1.bf16.msra.mxu0 %v6545
        %8577 = vmatprep.subr.bf16.mxu0 %v6538
        %8578 = vmatpush1.bf16.msra.mxu0 %v6537
        %8579 = vmatprep.subr.bf16.mxu0 %v6658
        %8580 = vmatpush2.bf16.msra.mxu0 %v6657
        %8581 = vmatprep.subr.bf16.mxu0 %v6650
        %8582 = vmatpush2.bf16.msra.mxu0 %v6649
        %8583 = vmatprep.subr.bf16.mxu0 %v6642
        %8584 = vmatpush2.bf16.msra.mxu0 %v6641
        %8585 = vmatprep.subr.bf16.mxu0 %v6634
        %8586 = vmatpush2.bf16.msra.mxu0 %v6633
        %8587 = vmatprep.subr.bf16.mxu0 %v6626
        %8588 = vmatpush2.bf16.msra.mxu0 %v6625
        %8589 = vmatprep.subr.bf16.mxu0 %v6618
        %8590 = vmatpush2.bf16.msra.mxu0 %v6617
        %8591 = vmatprep.subr.bf16.mxu0 %v6610
        %8592 = vmatpush2.bf16.msra.mxu0 %v6609
        %8593 = vmatprep.subr.bf16.mxu0 %v6602
        %8594 = vmatpush2.bf16.msra.mxu0 %v6601
        %8595 = vmatprep.mubr.bf16.mxu0 %v1878
        %8596 = vmatmul.mubr.bf16.gmra.mxu0 %v1877
        %v8597 = vpop.f32.mrf.mxu0
        %v8598 = vadd.f32 %v8557, %v8597
        %v8599 = vpop.f32.mrf.mxu0
        %v8600 = vadd.f32 %v8559, %v8599
        %v8601 = vpop.f32.mrf.mxu0
        %v8602 = vpop.f32.mrf.mxu0
        %8603 = vdwg.mxu0
        %8604 = vmatprep.subr.bf16.mxu0 %v6722
        %8605 = vmatpush1.bf16.msra.mxu0 %v6721
        %8606 = vmatprep.subr.bf16.mxu0 %v6714
        %8607 = vmatpush1.bf16.msra.mxu0 %v6713
        %8608 = vmatprep.subr.bf16.mxu0 %v6706
        %8609 = vmatpush1.bf16.msra.mxu0 %v6705
        %8610 = vmatprep.subr.bf16.mxu0 %v6698
        %8611 = vmatpush1.bf16.msra.mxu0 %v6697
        %8612 = vmatprep.subr.bf16.mxu0 %v6690
        %8613 = vmatpush1.bf16.msra.mxu0 %v6689
        %8614 = vmatprep.subr.bf16.mxu0 %v6682
        %8615 = vmatpush1.bf16.msra.mxu0 %v6681
        %8616 = vmatprep.subr.bf16.mxu0 %v6674
        %8617 = vmatpush1.bf16.msra.mxu0 %v6673
        %8618 = vmatprep.subr.bf16.mxu0 %v6666
        %8619 = vmatpush1.bf16.msra.mxu0 %v6665
        %8620 = vmatprep.subr.bf16.mxu0 %v6786
        %8621 = vmatpush2.bf16.msra.mxu0 %v6785
        %8622 = vmatprep.subr.bf16.mxu0 %v6778
        %8623 = vmatpush2.bf16.msra.mxu0 %v6777
        %8624 = vmatprep.subr.bf16.mxu0 %v6770
        %8625 = vmatpush2.bf16.msra.mxu0 %v6769
        %8626 = vmatprep.subr.bf16.mxu0 %v6762
        %8627 = vmatpush2.bf16.msra.mxu0 %v6761
        %8628 = vmatprep.subr.bf16.mxu0 %v6754
        %8629 = vmatpush2.bf16.msra.mxu0 %v6753
        %8630 = vmatprep.subr.bf16.mxu0 %v6746
        %8631 = vmatpush2.bf16.msra.mxu0 %v6745
        %8632 = vmatprep.subr.bf16.mxu0 %v6738
        %8633 = vmatpush2.bf16.msra.mxu0 %v6737
        %8634 = vmatprep.subr.bf16.mxu0 %v6730
        %8635 = vmatpush2.bf16.msra.mxu0 %v6729
        %8636 = vmatprep.mubr.bf16.mxu0 %v1880
        %8637 = vmatmul.mubr.bf16.gmra.mxu0 %v1879
        %v8638 = vpop.f32.mrf.mxu0
        %v8639 = vadd.f32 %v8598, %v8638
        %v8640 = vpop.f32.mrf.mxu0
        %v8641 = vadd.f32 %v8600, %v8640
        %v8642 = vpop.f32.mrf.mxu0
        %v8643 = vpop.f32.mrf.mxu0
        %8644 = vdwg.mxu0
        %8645 = vmatprep.subr.bf16.mxu0 %v6850
        %8646 = vmatpush1.bf16.msra.mxu0 %v6849
        %8647 = vmatprep.subr.bf16.mxu0 %v6842
        %8648 = vmatpush1.bf16.msra.mxu0 %v6841
        %8649 = vmatprep.subr.bf16.mxu0 %v6834
        %8650 = vmatpush1.bf16.msra.mxu0 %v6833
        %8651 = vmatprep.subr.bf16.mxu0 %v6826
        %8652 = vmatpush1.bf16.msra.mxu0 %v6825
        %8653 = vmatprep.subr.bf16.mxu0 %v6818
        %8654 = vmatpush1.bf16.msra.mxu0 %v6817
        %8655 = vmatprep.subr.bf16.mxu0 %v6810
        %8656 = vmatpush1.bf16.msra.mxu0 %v6809
        %8657 = vmatprep.subr.bf16.mxu0 %v6802
        %8658 = vmatpush1.bf16.msra.mxu0 %v6801
        %8659 = vmatprep.subr.bf16.mxu0 %v6794
        %8660 = vmatpush1.bf16.msra.mxu0 %v6793
        %8661 = vmatprep.subr.bf16.mxu0 %v6914
        %8662 = vmatpush2.bf16.msra.mxu0 %v6913
        %8663 = vmatprep.subr.bf16.mxu0 %v6906
        %8664 = vmatpush2.bf16.msra.mxu0 %v6905
        %8665 = vmatprep.subr.bf16.mxu0 %v6898
        %8666 = vmatpush2.bf16.msra.mxu0 %v6897
        %8667 = vmatprep.subr.bf16.mxu0 %v6890
        %8668 = vmatpush2.bf16.msra.mxu0 %v6889
        %8669 = vmatprep.subr.bf16.mxu0 %v6882
        %8670 = vmatpush2.bf16.msra.mxu0 %v6881
        %8671 = vmatprep.subr.bf16.mxu0 %v6874
        %8672 = vmatpush2.bf16.msra.mxu0 %v6873
        %8673 = vmatprep.subr.bf16.mxu0 %v6866
        %8674 = vmatpush2.bf16.msra.mxu0 %v6865
        %8675 = vmatprep.subr.bf16.mxu0 %v6858
        %8676 = vmatpush2.bf16.msra.mxu0 %v6857
        %8677 = vmatprep.mubr.bf16.mxu0 %v1882
        %8678 = vmatmul.mubr.bf16.gmra.mxu0 %v1881
        %v8679 = vpop.f32.mrf.mxu0
        %v8680 = vadd.f32 %v8639, %v8679
        %v8681 = vpop.f32.mrf.mxu0
        %v8682 = vadd.f32 %v8641, %v8681
        %v8683 = vpop.f32.mrf.mxu0
        %v8684 = vpop.f32.mrf.mxu0
        %8685 = vdwg.mxu0
        %8686 = vmatprep.subr.bf16.mxu0 %v6978
        %8687 = vmatpush1.bf16.msra.mxu0 %v6977
        %8688 = vmatprep.subr.bf16.mxu0 %v6970
        %8689 = vmatpush1.bf16.msra.mxu0 %v6969
        %8690 = vmatprep.subr.bf16.mxu0 %v6962
        %8691 = vmatpush1.bf16.msra.mxu0 %v6961
        %8692 = vmatprep.subr.bf16.mxu0 %v6954
        %8693 = vmatpush1.bf16.msra.mxu0 %v6953
        %8694 = vmatprep.subr.bf16.mxu0 %v6946
        %8695 = vmatpush1.bf16.msra.mxu0 %v6945
        %8696 = vmatprep.subr.bf16.mxu0 %v6938
        %8697 = vmatpush1.bf16.msra.mxu0 %v6937
        %8698 = vmatprep.subr.bf16.mxu0 %v6930
        %8699 = vmatpush1.bf16.msra.mxu0 %v6929
        %8700 = vmatprep.subr.bf16.mxu0 %v6922
        %8701 = vmatpush1.bf16.msra.mxu0 %v6921
        %8702 = vmatprep.subr.bf16.mxu0 %v7042
        %8703 = vmatpush2.bf16.msra.mxu0 %v7041
        %8704 = vmatprep.subr.bf16.mxu0 %v7034
        %8705 = vmatpush2.bf16.msra.mxu0 %v7033
        %8706 = vmatprep.subr.bf16.mxu0 %v7026
        %8707 = vmatpush2.bf16.msra.mxu0 %v7025
        %8708 = vmatprep.subr.bf16.mxu0 %v7018
        %8709 = vmatpush2.bf16.msra.mxu0 %v7017
        %8710 = vmatprep.subr.bf16.mxu0 %v7010
        %8711 = vmatpush2.bf16.msra.mxu0 %v7009
        %8712 = vmatprep.subr.bf16.mxu0 %v7002
        %8713 = vmatpush2.bf16.msra.mxu0 %v7001
        %8714 = vmatprep.subr.bf16.mxu0 %v6994
        %8715 = vmatpush2.bf16.msra.mxu0 %v6993
        %8716 = vmatprep.subr.bf16.mxu0 %v6986
        %8717 = vmatpush2.bf16.msra.mxu0 %v6985
        %8718 = vmatprep.mubr.bf16.mxu0 %v1884
        %8719 = vmatmul.mubr.bf16.gmra.mxu0 %v1883
        %v8720 = vpop.f32.mrf.mxu0
        %v8721 = vadd.f32 %v8680, %v8720
        %v8722 = vpop.f32.mrf.mxu0
        %v8723 = vadd.f32 %v8682, %v8722
        %v8724 = vpop.f32.mrf.mxu0
        %v8725 = vpop.f32.mrf.mxu0
        %8726 = vdwg.mxu0
        %8727 = vmatprep.subr.bf16.mxu0 %v6084
        %8728 = vmatpush1.bf16.msra.mxu0 %v6083
        %8729 = vmatprep.subr.bf16.mxu0 %v6076
        %8730 = vmatpush1.bf16.msra.mxu0 %v6075
        %8731 = vmatprep.subr.bf16.mxu0 %v6068
        %8732 = vmatpush1.bf16.msra.mxu0 %v6067
        %8733 = vmatprep.subr.bf16.mxu0 %v6060
        %8734 = vmatpush1.bf16.msra.mxu0 %v6059
        %8735 = vmatprep.subr.bf16.mxu0 %v6052
        %8736 = vmatpush1.bf16.msra.mxu0 %v6051
        %8737 = vmatprep.subr.bf16.mxu0 %v6044
        %8738 = vmatpush1.bf16.msra.mxu0 %v6043
        %8739 = vmatprep.subr.bf16.mxu0 %v6036
        %8740 = vmatpush1.bf16.msra.mxu0 %v6035
        %8741 = vmatprep.subr.bf16.mxu0 %v6028
        %8742 = vmatpush1.bf16.msra.mxu0 %v6027
        %8743 = vmatprep.subr.bf16.mxu0 %v6148
        %8744 = vmatpush2.bf16.msra.mxu0 %v6147
        %8745 = vmatprep.subr.bf16.mxu0 %v6140
        %8746 = vmatpush2.bf16.msra.mxu0 %v6139
        %8747 = vmatprep.subr.bf16.mxu0 %v6132
        %8748 = vmatpush2.bf16.msra.mxu0 %v6131
        %8749 = vmatprep.subr.bf16.mxu0 %v6124
        %8750 = vmatpush2.bf16.msra.mxu0 %v6123
        %8751 = vmatprep.subr.bf16.mxu0 %v6116
        %8752 = vmatpush2.bf16.msra.mxu0 %v6115
        %8753 = vmatprep.subr.bf16.mxu0 %v6108
        %8754 = vmatpush2.bf16.msra.mxu0 %v6107
        %8755 = vmatprep.subr.bf16.mxu0 %v6100
        %8756 = vmatpush2.bf16.msra.mxu0 %v6099
        %8757 = vmatprep.subr.bf16.mxu0 %v6092
        %8758 = vmatpush2.bf16.msra.mxu0 %v6091
        %8759 = vmatprep.mubr.bf16.mxu0 %v1870
        %8760 = vmatmul.mubr.bf16.gmra.mxu0 %v1869
        %v8761 = vpop.f32.mrf.mxu0
        %v8762 = vadd.f32 %v2930, %v8761
        %v8763 = vpop.f32.mrf.mxu0
        %v8764 = vadd.f32 %v2934, %v8763
        %v8765 = vpop.f32.mrf.mxu0
        %v8766 = vpop.f32.mrf.mxu0
        %8767 = vdwg.mxu0
        %8768 = vmatprep.subr.bf16.mxu0 %v6212
        %8769 = vmatpush1.bf16.msra.mxu0 %v6211
        %8770 = vmatprep.subr.bf16.mxu0 %v6204
        %8771 = vmatpush1.bf16.msra.mxu0 %v6203
        %8772 = vmatprep.subr.bf16.mxu0 %v6196
        %8773 = vmatpush1.bf16.msra.mxu0 %v6195
        %8774 = vmatprep.subr.bf16.mxu0 %v6188
        %8775 = vmatpush1.bf16.msra.mxu0 %v6187
        %8776 = vmatprep.subr.bf16.mxu0 %v6180
        %8777 = vmatpush1.bf16.msra.mxu0 %v6179
        %8778 = vmatprep.subr.bf16.mxu0 %v6172
        %8779 = vmatpush1.bf16.msra.mxu0 %v6171
        %8780 = vmatprep.subr.bf16.mxu0 %v6164
        %8781 = vmatpush1.bf16.msra.mxu0 %v6163
        %8782 = vmatprep.subr.bf16.mxu0 %v6156
        %8783 = vmatpush1.bf16.msra.mxu0 %v6155
        %8784 = vmatprep.subr.bf16.mxu0 %v6276
        %8785 = vmatpush2.bf16.msra.mxu0 %v6275
        %8786 = vmatprep.subr.bf16.mxu0 %v6268
        %8787 = vmatpush2.bf16.msra.mxu0 %v6267
        %8788 = vmatprep.subr.bf16.mxu0 %v6260
        %8789 = vmatpush2.bf16.msra.mxu0 %v6259
        %8790 = vmatprep.subr.bf16.mxu0 %v6252
        %8791 = vmatpush2.bf16.msra.mxu0 %v6251
        %8792 = vmatprep.subr.bf16.mxu0 %v6244
        %8793 = vmatpush2.bf16.msra.mxu0 %v6243
        %8794 = vmatprep.subr.bf16.mxu0 %v6236
        %8795 = vmatpush2.bf16.msra.mxu0 %v6235
        %8796 = vmatprep.subr.bf16.mxu0 %v6228
        %8797 = vmatpush2.bf16.msra.mxu0 %v6227
        %8798 = vmatprep.subr.bf16.mxu0 %v6220
        %8799 = vmatpush2.bf16.msra.mxu0 %v6219
        %8800 = vmatprep.mubr.bf16.mxu0 %v1872
        %8801 = vmatmul.mubr.bf16.gmra.mxu0 %v1871
        %v8802 = vpop.f32.mrf.mxu0
        %v8803 = vadd.f32 %v8762, %v8802
        %v8804 = vpop.f32.mrf.mxu0
        %v8805 = vadd.f32 %v8764, %v8804
        %v8806 = vpop.f32.mrf.mxu0
        %v8807 = vpop.f32.mrf.mxu0
        %8808 = vdwg.mxu0
        %8809 = vmatprep.subr.bf16.mxu0 %v6340
        %8810 = vmatpush1.bf16.msra.mxu0 %v6339
        %8811 = vmatprep.subr.bf16.mxu0 %v6332
        %8812 = vmatpush1.bf16.msra.mxu0 %v6331
        %8813 = vmatprep.subr.bf16.mxu0 %v6324
        %8814 = vmatpush1.bf16.msra.mxu0 %v6323
        %8815 = vmatprep.subr.bf16.mxu0 %v6316
        %8816 = vmatpush1.bf16.msra.mxu0 %v6315
        %8817 = vmatprep.subr.bf16.mxu0 %v6308
        %8818 = vmatpush1.bf16.msra.mxu0 %v6307
        %8819 = vmatprep.subr.bf16.mxu0 %v6300
        %8820 = vmatpush1.bf16.msra.mxu0 %v6299
        %8821 = vmatprep.subr.bf16.mxu0 %v6292
        %8822 = vmatpush1.bf16.msra.mxu0 %v6291
        %8823 = vmatprep.subr.bf16.mxu0 %v6284
        %8824 = vmatpush1.bf16.msra.mxu0 %v6283
        %8825 = vmatprep.subr.bf16.mxu0 %v6404
        %8826 = vmatpush2.bf16.msra.mxu0 %v6403
        %8827 = vmatprep.subr.bf16.mxu0 %v6396
        %8828 = vmatpush2.bf16.msra.mxu0 %v6395
        %8829 = vmatprep.subr.bf16.mxu0 %v6388
        %8830 = vmatpush2.bf16.msra.mxu0 %v6387
        %8831 = vmatprep.subr.bf16.mxu0 %v6380
        %8832 = vmatpush2.bf16.msra.mxu0 %v6379
        %8833 = vmatprep.subr.bf16.mxu0 %v6372
        %8834 = vmatpush2.bf16.msra.mxu0 %v6371
        %8835 = vmatprep.subr.bf16.mxu0 %v6364
        %8836 = vmatpush2.bf16.msra.mxu0 %v6363
        %8837 = vmatprep.subr.bf16.mxu0 %v6356
        %8838 = vmatpush2.bf16.msra.mxu0 %v6355
        %8839 = vmatprep.subr.bf16.mxu0 %v6348
        %8840 = vmatpush2.bf16.msra.mxu0 %v6347
        %8841 = vmatprep.mubr.bf16.mxu0 %v1874
        %8842 = vmatmul.mubr.bf16.gmra.mxu0 %v1873
        %v8843 = vpop.f32.mrf.mxu0
        %v8844 = vadd.f32 %v8803, %v8843
        %v8845 = vpop.f32.mrf.mxu0
        %v8846 = vadd.f32 %v8805, %v8845
        %v8847 = vpop.f32.mrf.mxu0
        %v8848 = vpop.f32.mrf.mxu0
        %8849 = vdwg.mxu0
        %8850 = vmatprep.subr.bf16.mxu0 %v6468
        %8851 = vmatpush1.bf16.msra.mxu0 %v6467
        %8852 = vmatprep.subr.bf16.mxu0 %v6460
        %8853 = vmatpush1.bf16.msra.mxu0 %v6459
        %8854 = vmatprep.subr.bf16.mxu0 %v6452
        %8855 = vmatpush1.bf16.msra.mxu0 %v6451
        %8856 = vmatprep.subr.bf16.mxu0 %v6444
        %8857 = vmatpush1.bf16.msra.mxu0 %v6443
        %8858 = vmatprep.subr.bf16.mxu0 %v6436
        %8859 = vmatpush1.bf16.msra.mxu0 %v6435
        %8860 = vmatprep.subr.bf16.mxu0 %v6428
        %8861 = vmatpush1.bf16.msra.mxu0 %v6427
        %8862 = vmatprep.subr.bf16.mxu0 %v6420
        %8863 = vmatpush1.bf16.msra.mxu0 %v6419
        %8864 = vmatprep.subr.bf16.mxu0 %v6412
        %8865 = vmatpush1.bf16.msra.mxu0 %v6411
        %8866 = vmatprep.subr.bf16.mxu0 %v6532
        %8867 = vmatpush2.bf16.msra.mxu0 %v6531
        %8868 = vmatprep.subr.bf16.mxu0 %v6524
        %8869 = vmatpush2.bf16.msra.mxu0 %v6523
        %8870 = vmatprep.subr.bf16.mxu0 %v6516
        %8871 = vmatpush2.bf16.msra.mxu0 %v6515
        %8872 = vmatprep.subr.bf16.mxu0 %v6508
        %8873 = vmatpush2.bf16.msra.mxu0 %v6507
        %8874 = vmatprep.subr.bf16.mxu0 %v6500
        %8875 = vmatpush2.bf16.msra.mxu0 %v6499
        %8876 = vmatprep.subr.bf16.mxu0 %v6492
        %8877 = vmatpush2.bf16.msra.mxu0 %v6491
        %8878 = vmatprep.subr.bf16.mxu0 %v6484
        %8879 = vmatpush2.bf16.msra.mxu0 %v6483
        %8880 = vmatprep.subr.bf16.mxu0 %v6476
        %8881 = vmatpush2.bf16.msra.mxu0 %v6475
        %8882 = vmatprep.mubr.bf16.mxu0 %v1876
        %8883 = vmatmul.mubr.bf16.gmra.mxu0 %v1875
        %v8884 = vpop.f32.mrf.mxu0
        %v8885 = vadd.f32 %v8844, %v8884
        %v8886 = vpop.f32.mrf.mxu0
        %v8887 = vadd.f32 %v8846, %v8886
        %v8888 = vpop.f32.mrf.mxu0
        %v8889 = vpop.f32.mrf.mxu0
        %8890 = vdwg.mxu0
        %8891 = vmatprep.subr.bf16.mxu0 %v6596
        %8892 = vmatpush1.bf16.msra.mxu0 %v6595
        %8893 = vmatprep.subr.bf16.mxu0 %v6588
        %8894 = vmatpush1.bf16.msra.mxu0 %v6587
        %8895 = vmatprep.subr.bf16.mxu0 %v6580
        %8896 = vmatpush1.bf16.msra.mxu0 %v6579
        %8897 = vmatprep.subr.bf16.mxu0 %v6572
        %8898 = vmatpush1.bf16.msra.mxu0 %v6571
        %8899 = vmatprep.subr.bf16.mxu0 %v6564
        %8900 = vmatpush1.bf16.msra.mxu0 %v6563
        %8901 = vmatprep.subr.bf16.mxu0 %v6556
        %8902 = vmatpush1.bf16.msra.mxu0 %v6555
        %8903 = vmatprep.subr.bf16.mxu0 %v6548
        %8904 = vmatpush1.bf16.msra.mxu0 %v6547
        %8905 = vmatprep.subr.bf16.mxu0 %v6540
        %8906 = vmatpush1.bf16.msra.mxu0 %v6539
        %8907 = vmatprep.subr.bf16.mxu0 %v6660
        %8908 = vmatpush2.bf16.msra.mxu0 %v6659
        %8909 = vmatprep.subr.bf16.mxu0 %v6652
        %8910 = vmatpush2.bf16.msra.mxu0 %v6651
        %8911 = vmatprep.subr.bf16.mxu0 %v6644
        %8912 = vmatpush2.bf16.msra.mxu0 %v6643
        %8913 = vmatprep.subr.bf16.mxu0 %v6636
        %8914 = vmatpush2.bf16.msra.mxu0 %v6635
        %8915 = vmatprep.subr.bf16.mxu0 %v6628
        %8916 = vmatpush2.bf16.msra.mxu0 %v6627
        %8917 = vmatprep.subr.bf16.mxu0 %v6620
        %8918 = vmatpush2.bf16.msra.mxu0 %v6619
        %8919 = vmatprep.subr.bf16.mxu0 %v6612
        %8920 = vmatpush2.bf16.msra.mxu0 %v6611
        %8921 = vmatprep.subr.bf16.mxu0 %v6604
        %8922 = vmatpush2.bf16.msra.mxu0 %v6603
        %8923 = vmatprep.mubr.bf16.mxu0 %v1878
        %8924 = vmatmul.mubr.bf16.gmra.mxu0 %v1877
        %v8925 = vpop.f32.mrf.mxu0
        %v8926 = vadd.f32 %v8885, %v8925
        %v8927 = vpop.f32.mrf.mxu0
        %v8928 = vadd.f32 %v8887, %v8927
        %v8929 = vpop.f32.mrf.mxu0
        %v8930 = vpop.f32.mrf.mxu0
        %8931 = vdwg.mxu0
        %8932 = vmatprep.subr.bf16.mxu0 %v6724
        %8933 = vmatpush1.bf16.msra.mxu0 %v6723
        %8934 = vmatprep.subr.bf16.mxu0 %v6716
        %8935 = vmatpush1.bf16.msra.mxu0 %v6715
        %8936 = vmatprep.subr.bf16.mxu0 %v6708
        %8937 = vmatpush1.bf16.msra.mxu0 %v6707
        %8938 = vmatprep.subr.bf16.mxu0 %v6700
        %8939 = vmatpush1.bf16.msra.mxu0 %v6699
        %8940 = vmatprep.subr.bf16.mxu0 %v6692
        %8941 = vmatpush1.bf16.msra.mxu0 %v6691
        %8942 = vmatprep.subr.bf16.mxu0 %v6684
        %8943 = vmatpush1.bf16.msra.mxu0 %v6683
        %8944 = vmatprep.subr.bf16.mxu0 %v6676
        %8945 = vmatpush1.bf16.msra.mxu0 %v6675
        %8946 = vmatprep.subr.bf16.mxu0 %v6668
        %8947 = vmatpush1.bf16.msra.mxu0 %v6667
        %8948 = vmatprep.subr.bf16.mxu0 %v6788
        %8949 = vmatpush2.bf16.msra.mxu0 %v6787
        %8950 = vmatprep.subr.bf16.mxu0 %v6780
        %8951 = vmatpush2.bf16.msra.mxu0 %v6779
        %8952 = vmatprep.subr.bf16.mxu0 %v6772
        %8953 = vmatpush2.bf16.msra.mxu0 %v6771
        %8954 = vmatprep.subr.bf16.mxu0 %v6764
        %8955 = vmatpush2.bf16.msra.mxu0 %v6763
        %8956 = vmatprep.subr.bf16.mxu0 %v6756
        %8957 = vmatpush2.bf16.msra.mxu0 %v6755
        %8958 = vmatprep.subr.bf16.mxu0 %v6748
        %8959 = vmatpush2.bf16.msra.mxu0 %v6747
        %8960 = vmatprep.subr.bf16.mxu0 %v6740
        %8961 = vmatpush2.bf16.msra.mxu0 %v6739
        %8962 = vmatprep.subr.bf16.mxu0 %v6732
        %8963 = vmatpush2.bf16.msra.mxu0 %v6731
        %8964 = vmatprep.mubr.bf16.mxu0 %v1880
        %8965 = vmatmul.mubr.bf16.gmra.mxu0 %v1879
        %v8966 = vpop.f32.mrf.mxu0
        %v8967 = vadd.f32 %v8926, %v8966
        %v8968 = vpop.f32.mrf.mxu0
        %v8969 = vadd.f32 %v8928, %v8968
        %v8970 = vpop.f32.mrf.mxu0
        %v8971 = vpop.f32.mrf.mxu0
        %8972 = vdwg.mxu0
        %8973 = vmatprep.subr.bf16.mxu0 %v6852
        %8974 = vmatpush1.bf16.msra.mxu0 %v6851
        %8975 = vmatprep.subr.bf16.mxu0 %v6844
        %8976 = vmatpush1.bf16.msra.mxu0 %v6843
        %8977 = vmatprep.subr.bf16.mxu0 %v6836
        %8978 = vmatpush1.bf16.msra.mxu0 %v6835
        %8979 = vmatprep.subr.bf16.mxu0 %v6828
        %8980 = vmatpush1.bf16.msra.mxu0 %v6827
        %8981 = vmatprep.subr.bf16.mxu0 %v6820
        %8982 = vmatpush1.bf16.msra.mxu0 %v6819
        %8983 = vmatprep.subr.bf16.mxu0 %v6812
        %8984 = vmatpush1.bf16.msra.mxu0 %v6811
        %8985 = vmatprep.subr.bf16.mxu0 %v6804
        %8986 = vmatpush1.bf16.msra.mxu0 %v6803
        %8987 = vmatprep.subr.bf16.mxu0 %v6796
        %8988 = vmatpush1.bf16.msra.mxu0 %v6795
        %8989 = vmatprep.subr.bf16.mxu0 %v6916
        %8990 = vmatpush2.bf16.msra.mxu0 %v6915
        %8991 = vmatprep.subr.bf16.mxu0 %v6908
        %8992 = vmatpush2.bf16.msra.mxu0 %v6907
        %8993 = vmatprep.subr.bf16.mxu0 %v6900
        %8994 = vmatpush2.bf16.msra.mxu0 %v6899
        %8995 = vmatprep.subr.bf16.mxu0 %v6892
        %8996 = vmatpush2.bf16.msra.mxu0 %v6891
        %8997 = vmatprep.subr.bf16.mxu0 %v6884
        %8998 = vmatpush2.bf16.msra.mxu0 %v6883
        %8999 = vmatprep.subr.bf16.mxu0 %v6876
        %9000 = vmatpush2.bf16.msra.mxu0 %v6875
        %9001 = vmatprep.subr.bf16.mxu0 %v6868
        %9002 = vmatpush2.bf16.msra.mxu0 %v6867
        %9003 = vmatprep.subr.bf16.mxu0 %v6860
        %9004 = vmatpush2.bf16.msra.mxu0 %v6859
        %9005 = vmatprep.mubr.bf16.mxu0 %v1882
        %9006 = vmatmul.mubr.bf16.gmra.mxu0 %v1881
        %v9007 = vpop.f32.mrf.mxu0
        %v9008 = vadd.f32 %v8967, %v9007
        %v9009 = vpop.f32.mrf.mxu0
        %v9010 = vadd.f32 %v8969, %v9009
        %v9011 = vpop.f32.mrf.mxu0
        %v9012 = vpop.f32.mrf.mxu0
        %9013 = vdwg.mxu0
        %9014 = vmatprep.subr.bf16.mxu0 %v6980
        %9015 = vmatpush1.bf16.msra.mxu0 %v6979
        %9016 = vmatprep.subr.bf16.mxu0 %v6972
        %9017 = vmatpush1.bf16.msra.mxu0 %v6971
        %9018 = vmatprep.subr.bf16.mxu0 %v6964
        %9019 = vmatpush1.bf16.msra.mxu0 %v6963
        %9020 = vmatprep.subr.bf16.mxu0 %v6956
        %9021 = vmatpush1.bf16.msra.mxu0 %v6955
        %9022 = vmatprep.subr.bf16.mxu0 %v6948
        %9023 = vmatpush1.bf16.msra.mxu0 %v6947
        %9024 = vmatprep.subr.bf16.mxu0 %v6940
        %9025 = vmatpush1.bf16.msra.mxu0 %v6939
        %9026 = vmatprep.subr.bf16.mxu0 %v6932
        %9027 = vmatpush1.bf16.msra.mxu0 %v6931
        %9028 = vmatprep.subr.bf16.mxu0 %v6924
        %9029 = vmatpush1.bf16.msra.mxu0 %v6923
        %9030 = vmatprep.subr.bf16.mxu0 %v7044
        %9031 = vmatpush2.bf16.msra.mxu0 %v7043
        %9032 = vmatprep.subr.bf16.mxu0 %v7036
        %9033 = vmatpush2.bf16.msra.mxu0 %v7035
        %9034 = vmatprep.subr.bf16.mxu0 %v7028
        %9035 = vmatpush2.bf16.msra.mxu0 %v7027
        %9036 = vmatprep.subr.bf16.mxu0 %v7020
        %9037 = vmatpush2.bf16.msra.mxu0 %v7019
        %9038 = vmatprep.subr.bf16.mxu0 %v7012
        %9039 = vmatpush2.bf16.msra.mxu0 %v7011
        %9040 = vmatprep.subr.bf16.mxu0 %v7004
        %9041 = vmatpush2.bf16.msra.mxu0 %v7003
        %9042 = vmatprep.subr.bf16.mxu0 %v6996
        %9043 = vmatpush2.bf16.msra.mxu0 %v6995
        %9044 = vmatprep.subr.bf16.mxu0 %v6988
        %9045 = vmatpush2.bf16.msra.mxu0 %v6987
        %9046 = vmatprep.mubr.bf16.mxu0 %v1884
        %9047 = vmatmul.mubr.bf16.gmra.mxu0 %v1883
        %v9048 = vpop.f32.mrf.mxu0
        %v9049 = vadd.f32 %v9008, %v9048
        %v9050 = vpop.f32.mrf.mxu0
        %v9051 = vadd.f32 %v9010, %v9050
        %v9052 = vpop.f32.mrf.mxu0
        %v9053 = vpop.f32.mrf.mxu0
        %9054 = vdwg.mxu0
        %9055 = vmatprep.subr.bf16.mxu0 %v6086
        %9056 = vmatpush1.bf16.msra.mxu0 %v6085
        %9057 = vmatprep.subr.bf16.mxu0 %v6078
        %9058 = vmatpush1.bf16.msra.mxu0 %v6077
        %9059 = vmatprep.subr.bf16.mxu0 %v6070
        %9060 = vmatpush1.bf16.msra.mxu0 %v6069
        %9061 = vmatprep.subr.bf16.mxu0 %v6062
        %9062 = vmatpush1.bf16.msra.mxu0 %v6061
        %9063 = vmatprep.subr.bf16.mxu0 %v6054
        %9064 = vmatpush1.bf16.msra.mxu0 %v6053
        %9065 = vmatprep.subr.bf16.mxu0 %v6046
        %9066 = vmatpush1.bf16.msra.mxu0 %v6045
        %9067 = vmatprep.subr.bf16.mxu0 %v6038
        %9068 = vmatpush1.bf16.msra.mxu0 %v6037
        %9069 = vmatprep.subr.bf16.mxu0 %v6030
        %9070 = vmatpush1.bf16.msra.mxu0 %v6029
        %9071 = vmatprep.subr.bf16.mxu0 %v6150
        %9072 = vmatpush2.bf16.msra.mxu0 %v6149
        %9073 = vmatprep.subr.bf16.mxu0 %v6142
        %9074 = vmatpush2.bf16.msra.mxu0 %v6141
        %9075 = vmatprep.subr.bf16.mxu0 %v6134
        %9076 = vmatpush2.bf16.msra.mxu0 %v6133
        %9077 = vmatprep.subr.bf16.mxu0 %v6126
        %9078 = vmatpush2.bf16.msra.mxu0 %v6125
        %9079 = vmatprep.subr.bf16.mxu0 %v6118
        %9080 = vmatpush2.bf16.msra.mxu0 %v6117
        %9081 = vmatprep.subr.bf16.mxu0 %v6110
        %9082 = vmatpush2.bf16.msra.mxu0 %v6109
        %9083 = vmatprep.subr.bf16.mxu0 %v6102
        %9084 = vmatpush2.bf16.msra.mxu0 %v6101
        %9085 = vmatprep.subr.bf16.mxu0 %v6094
        %9086 = vmatpush2.bf16.msra.mxu0 %v6093
        %9087 = vmatprep.mubr.bf16.mxu0 %v1870
        %9088 = vmatmul.mubr.bf16.gmra.mxu0 %v1869
        %v9089 = vpop.f32.mrf.mxu0
        %v9090 = vadd.f32 %v2938, %v9089
        %v9091 = vpop.f32.mrf.mxu0
        %v9092 = vadd.f32 %v2942, %v9091
        %v9093 = vpop.f32.mrf.mxu0
        %v9094 = vpop.f32.mrf.mxu0
        %9095 = vdwg.mxu0
        %9096 = vmatprep.subr.bf16.mxu0 %v6214
        %9097 = vmatpush1.bf16.msra.mxu0 %v6213
        %9098 = vmatprep.subr.bf16.mxu0 %v6206
        %9099 = vmatpush1.bf16.msra.mxu0 %v6205
        %9100 = vmatprep.subr.bf16.mxu0 %v6198
        %9101 = vmatpush1.bf16.msra.mxu0 %v6197
        %9102 = vmatprep.subr.bf16.mxu0 %v6190
        %9103 = vmatpush1.bf16.msra.mxu0 %v6189
        %9104 = vmatprep.subr.bf16.mxu0 %v6182
        %9105 = vmatpush1.bf16.msra.mxu0 %v6181
        %9106 = vmatprep.subr.bf16.mxu0 %v6174
        %9107 = vmatpush1.bf16.msra.mxu0 %v6173
        %9108 = vmatprep.subr.bf16.mxu0 %v6166
        %9109 = vmatpush1.bf16.msra.mxu0 %v6165
        %9110 = vmatprep.subr.bf16.mxu0 %v6158
        %9111 = vmatpush1.bf16.msra.mxu0 %v6157
        %9112 = vmatprep.subr.bf16.mxu0 %v6278
        %9113 = vmatpush2.bf16.msra.mxu0 %v6277
        %9114 = vmatprep.subr.bf16.mxu0 %v6270
        %9115 = vmatpush2.bf16.msra.mxu0 %v6269
        %9116 = vmatprep.subr.bf16.mxu0 %v6262
        %9117 = vmatpush2.bf16.msra.mxu0 %v6261
        %9118 = vmatprep.subr.bf16.mxu0 %v6254
        %9119 = vmatpush2.bf16.msra.mxu0 %v6253
        %9120 = vmatprep.subr.bf16.mxu0 %v6246
        %9121 = vmatpush2.bf16.msra.mxu0 %v6245
        %9122 = vmatprep.subr.bf16.mxu0 %v6238
        %9123 = vmatpush2.bf16.msra.mxu0 %v6237
        %9124 = vmatprep.subr.bf16.mxu0 %v6230
        %9125 = vmatpush2.bf16.msra.mxu0 %v6229
        %9126 = vmatprep.subr.bf16.mxu0 %v6222
        %9127 = vmatpush2.bf16.msra.mxu0 %v6221
        %9128 = vmatprep.mubr.bf16.mxu0 %v1872
        %9129 = vmatmul.mubr.bf16.gmra.mxu0 %v1871
        %v9130 = vpop.f32.mrf.mxu0
        %v9131 = vadd.f32 %v9090, %v9130
        %v9132 = vpop.f32.mrf.mxu0
        %v9133 = vadd.f32 %v9092, %v9132
        %v9134 = vpop.f32.mrf.mxu0
        %v9135 = vpop.f32.mrf.mxu0
        %9136 = vdwg.mxu0
        %9137 = vmatprep.subr.bf16.mxu0 %v6342
        %9138 = vmatpush1.bf16.msra.mxu0 %v6341
        %9139 = vmatprep.subr.bf16.mxu0 %v6334
        %9140 = vmatpush1.bf16.msra.mxu0 %v6333
        %9141 = vmatprep.subr.bf16.mxu0 %v6326
        %9142 = vmatpush1.bf16.msra.mxu0 %v6325
        %9143 = vmatprep.subr.bf16.mxu0 %v6318
        %9144 = vmatpush1.bf16.msra.mxu0 %v6317
        %9145 = vmatprep.subr.bf16.mxu0 %v6310
        %9146 = vmatpush1.bf16.msra.mxu0 %v6309
        %9147 = vmatprep.subr.bf16.mxu0 %v6302
        %9148 = vmatpush1.bf16.msra.mxu0 %v6301
        %9149 = vmatprep.subr.bf16.mxu0 %v6294
        %9150 = vmatpush1.bf16.msra.mxu0 %v6293
        %9151 = vmatprep.subr.bf16.mxu0 %v6286
        %9152 = vmatpush1.bf16.msra.mxu0 %v6285
        %9153 = vmatprep.subr.bf16.mxu0 %v6406
        %9154 = vmatpush2.bf16.msra.mxu0 %v6405
        %9155 = vmatprep.subr.bf16.mxu0 %v6398
        %9156 = vmatpush2.bf16.msra.mxu0 %v6397
        %9157 = vmatprep.subr.bf16.mxu0 %v6390
        %9158 = vmatpush2.bf16.msra.mxu0 %v6389
        %9159 = vmatprep.subr.bf16.mxu0 %v6382
        %9160 = vmatpush2.bf16.msra.mxu0 %v6381
        %9161 = vmatprep.subr.bf16.mxu0 %v6374
        %9162 = vmatpush2.bf16.msra.mxu0 %v6373
        %9163 = vmatprep.subr.bf16.mxu0 %v6366
        %9164 = vmatpush2.bf16.msra.mxu0 %v6365
        %9165 = vmatprep.subr.bf16.mxu0 %v6358
        %9166 = vmatpush2.bf16.msra.mxu0 %v6357
        %9167 = vmatprep.subr.bf16.mxu0 %v6350
        %9168 = vmatpush2.bf16.msra.mxu0 %v6349
        %9169 = vmatprep.mubr.bf16.mxu0 %v1874
        %9170 = vmatmul.mubr.bf16.gmra.mxu0 %v1873
        %v9171 = vpop.f32.mrf.mxu0
        %v9172 = vadd.f32 %v9131, %v9171
        %v9173 = vpop.f32.mrf.mxu0
        %v9174 = vadd.f32 %v9133, %v9173
        %v9175 = vpop.f32.mrf.mxu0
        %v9176 = vpop.f32.mrf.mxu0
        %9177 = vdwg.mxu0
        %9178 = vmatprep.subr.bf16.mxu0 %v6470
        %9179 = vmatpush1.bf16.msra.mxu0 %v6469
        %9180 = vmatprep.subr.bf16.mxu0 %v6462
        %9181 = vmatpush1.bf16.msra.mxu0 %v6461
        %9182 = vmatprep.subr.bf16.mxu0 %v6454
        %9183 = vmatpush1.bf16.msra.mxu0 %v6453
        %9184 = vmatprep.subr.bf16.mxu0 %v6446
        %9185 = vmatpush1.bf16.msra.mxu0 %v6445
        %9186 = vmatprep.subr.bf16.mxu0 %v6438
        %9187 = vmatpush1.bf16.msra.mxu0 %v6437
        %9188 = vmatprep.subr.bf16.mxu0 %v6430
        %9189 = vmatpush1.bf16.msra.mxu0 %v6429
        %9190 = vmatprep.subr.bf16.mxu0 %v6422
        %9191 = vmatpush1.bf16.msra.mxu0 %v6421
        %9192 = vmatprep.subr.bf16.mxu0 %v6414
        %9193 = vmatpush1.bf16.msra.mxu0 %v6413
        %9194 = vmatprep.subr.bf16.mxu0 %v6534
        %9195 = vmatpush2.bf16.msra.mxu0 %v6533
        %9196 = vmatprep.subr.bf16.mxu0 %v6526
        %9197 = vmatpush2.bf16.msra.mxu0 %v6525
        %9198 = vmatprep.subr.bf16.mxu0 %v6518
        %9199 = vmatpush2.bf16.msra.mxu0 %v6517
        %9200 = vmatprep.subr.bf16.mxu0 %v6510
        %9201 = vmatpush2.bf16.msra.mxu0 %v6509
        %9202 = vmatprep.subr.bf16.mxu0 %v6502
        %9203 = vmatpush2.bf16.msra.mxu0 %v6501
        %9204 = vmatprep.subr.bf16.mxu0 %v6494
        %9205 = vmatpush2.bf16.msra.mxu0 %v6493
        %9206 = vmatprep.subr.bf16.mxu0 %v6486
        %9207 = vmatpush2.bf16.msra.mxu0 %v6485
        %9208 = vmatprep.subr.bf16.mxu0 %v6478
        %9209 = vmatpush2.bf16.msra.mxu0 %v6477
        %9210 = vmatprep.mubr.bf16.mxu0 %v1876
        %9211 = vmatmul.mubr.bf16.gmra.mxu0 %v1875
        %v9212 = vpop.f32.mrf.mxu0
        %v9213 = vadd.f32 %v9172, %v9212
        %v9214 = vpop.f32.mrf.mxu0
        %v9215 = vadd.f32 %v9174, %v9214
        %v9216 = vpop.f32.mrf.mxu0
        %v9217 = vpop.f32.mrf.mxu0
        %9218 = vdwg.mxu0
        %9219 = vmatprep.subr.bf16.mxu0 %v6598
        %9220 = vmatpush1.bf16.msra.mxu0 %v6597
        %9221 = vmatprep.subr.bf16.mxu0 %v6590
        %9222 = vmatpush1.bf16.msra.mxu0 %v6589
        %9223 = vmatprep.subr.bf16.mxu0 %v6582
        %9224 = vmatpush1.bf16.msra.mxu0 %v6581
        %9225 = vmatprep.subr.bf16.mxu0 %v6574
        %9226 = vmatpush1.bf16.msra.mxu0 %v6573
        %9227 = vmatprep.subr.bf16.mxu0 %v6566
        %9228 = vmatpush1.bf16.msra.mxu0 %v6565
        %9229 = vmatprep.subr.bf16.mxu0 %v6558
        %9230 = vmatpush1.bf16.msra.mxu0 %v6557
        %9231 = vmatprep.subr.bf16.mxu0 %v6550
        %9232 = vmatpush1.bf16.msra.mxu0 %v6549
        %9233 = vmatprep.subr.bf16.mxu0 %v6542
        %9234 = vmatpush1.bf16.msra.mxu0 %v6541
        %9235 = vmatprep.subr.bf16.mxu0 %v6662
        %9236 = vmatpush2.bf16.msra.mxu0 %v6661
        %9237 = vmatprep.subr.bf16.mxu0 %v6654
        %9238 = vmatpush2.bf16.msra.mxu0 %v6653
        %9239 = vmatprep.subr.bf16.mxu0 %v6646
        %9240 = vmatpush2.bf16.msra.mxu0 %v6645
        %9241 = vmatprep.subr.bf16.mxu0 %v6638
        %9242 = vmatpush2.bf16.msra.mxu0 %v6637
        %9243 = vmatprep.subr.bf16.mxu0 %v6630
        %9244 = vmatpush2.bf16.msra.mxu0 %v6629
        %9245 = vmatprep.subr.bf16.mxu0 %v6622
        %9246 = vmatpush2.bf16.msra.mxu0 %v6621
        %9247 = vmatprep.subr.bf16.mxu0 %v6614
        %9248 = vmatpush2.bf16.msra.mxu0 %v6613
        %9249 = vmatprep.subr.bf16.mxu0 %v6606
        %9250 = vmatpush2.bf16.msra.mxu0 %v6605
        %9251 = vmatprep.mubr.bf16.mxu0 %v1878
        %9252 = vmatmul.mubr.bf16.gmra.mxu0 %v1877
        %v9253 = vpop.f32.mrf.mxu0
        %v9254 = vadd.f32 %v9213, %v9253
        %v9255 = vpop.f32.mrf.mxu0
        %v9256 = vadd.f32 %v9215, %v9255
        %v9257 = vpop.f32.mrf.mxu0
        %v9258 = vpop.f32.mrf.mxu0
        %9259 = vdwg.mxu0
        %9260 = vmatprep.subr.bf16.mxu0 %v6726
        %9261 = vmatpush1.bf16.msra.mxu0 %v6725
        %9262 = vmatprep.subr.bf16.mxu0 %v6718
        %9263 = vmatpush1.bf16.msra.mxu0 %v6717
        %9264 = vmatprep.subr.bf16.mxu0 %v6710
        %9265 = vmatpush1.bf16.msra.mxu0 %v6709
        %9266 = vmatprep.subr.bf16.mxu0 %v6702
        %9267 = vmatpush1.bf16.msra.mxu0 %v6701
        %9268 = vmatprep.subr.bf16.mxu0 %v6694
        %9269 = vmatpush1.bf16.msra.mxu0 %v6693
        %9270 = vmatprep.subr.bf16.mxu0 %v6686
        %9271 = vmatpush1.bf16.msra.mxu0 %v6685
        %9272 = vmatprep.subr.bf16.mxu0 %v6678
        %9273 = vmatpush1.bf16.msra.mxu0 %v6677
        %9274 = vmatprep.subr.bf16.mxu0 %v6670
        %9275 = vmatpush1.bf16.msra.mxu0 %v6669
        %9276 = vmatprep.subr.bf16.mxu0 %v6790
        %9277 = vmatpush2.bf16.msra.mxu0 %v6789
        %9278 = vmatprep.subr.bf16.mxu0 %v6782
        %9279 = vmatpush2.bf16.msra.mxu0 %v6781
        %9280 = vmatprep.subr.bf16.mxu0 %v6774
        %9281 = vmatpush2.bf16.msra.mxu0 %v6773
        %9282 = vmatprep.subr.bf16.mxu0 %v6766
        %9283 = vmatpush2.bf16.msra.mxu0 %v6765
        %9284 = vmatprep.subr.bf16.mxu0 %v6758
        %9285 = vmatpush2.bf16.msra.mxu0 %v6757
        %9286 = vmatprep.subr.bf16.mxu0 %v6750
        %9287 = vmatpush2.bf16.msra.mxu0 %v6749
        %9288 = vmatprep.subr.bf16.mxu0 %v6742
        %9289 = vmatpush2.bf16.msra.mxu0 %v6741
        %9290 = vmatprep.subr.bf16.mxu0 %v6734
        %9291 = vmatpush2.bf16.msra.mxu0 %v6733
        %9292 = vmatprep.mubr.bf16.mxu0 %v1880
        %9293 = vmatmul.mubr.bf16.gmra.mxu0 %v1879
        %v9294 = vpop.f32.mrf.mxu0
        %v9295 = vadd.f32 %v9254, %v9294
        %v9296 = vpop.f32.mrf.mxu0
        %v9297 = vadd.f32 %v9256, %v9296
        %v9298 = vpop.f32.mrf.mxu0
        %v9299 = vpop.f32.mrf.mxu0
        %9300 = vdwg.mxu0
        %9301 = vmatprep.subr.bf16.mxu0 %v6854
        %9302 = vmatpush1.bf16.msra.mxu0 %v6853
        %9303 = vmatprep.subr.bf16.mxu0 %v6846
        %9304 = vmatpush1.bf16.msra.mxu0 %v6845
        %9305 = vmatprep.subr.bf16.mxu0 %v6838
        %9306 = vmatpush1.bf16.msra.mxu0 %v6837
        %9307 = vmatprep.subr.bf16.mxu0 %v6830
        %9308 = vmatpush1.bf16.msra.mxu0 %v6829
        %9309 = vmatprep.subr.bf16.mxu0 %v6822
        %9310 = vmatpush1.bf16.msra.mxu0 %v6821
        %9311 = vmatprep.subr.bf16.mxu0 %v6814
        %9312 = vmatpush1.bf16.msra.mxu0 %v6813
        %9313 = vmatprep.subr.bf16.mxu0 %v6806
        %9314 = vmatpush1.bf16.msra.mxu0 %v6805
        %9315 = vmatprep.subr.bf16.mxu0 %v6798
        %9316 = vmatpush1.bf16.msra.mxu0 %v6797
        %9317 = vmatprep.subr.bf16.mxu0 %v6918
        %9318 = vmatpush2.bf16.msra.mxu0 %v6917
        %9319 = vmatprep.subr.bf16.mxu0 %v6910
        %9320 = vmatpush2.bf16.msra.mxu0 %v6909
        %9321 = vmatprep.subr.bf16.mxu0 %v6902
        %9322 = vmatpush2.bf16.msra.mxu0 %v6901
        %9323 = vmatprep.subr.bf16.mxu0 %v6894
        %9324 = vmatpush2.bf16.msra.mxu0 %v6893
        %9325 = vmatprep.subr.bf16.mxu0 %v6886
        %9326 = vmatpush2.bf16.msra.mxu0 %v6885
        %9327 = vmatprep.subr.bf16.mxu0 %v6878
        %9328 = vmatpush2.bf16.msra.mxu0 %v6877
        %9329 = vmatprep.subr.bf16.mxu0 %v6870
        %9330 = vmatpush2.bf16.msra.mxu0 %v6869
        %9331 = vmatprep.subr.bf16.mxu0 %v6862
        %9332 = vmatpush2.bf16.msra.mxu0 %v6861
        %9333 = vmatprep.mubr.bf16.mxu0 %v1882
        %9334 = vmatmul.mubr.bf16.gmra.mxu0 %v1881
        %v9335 = vpop.f32.mrf.mxu0
        %v9336 = vadd.f32 %v9295, %v9335
        %v9337 = vpop.f32.mrf.mxu0
        %v9338 = vadd.f32 %v9297, %v9337
        %v9339 = vpop.f32.mrf.mxu0
        %v9340 = vpop.f32.mrf.mxu0
        %9341 = vdwg.mxu0
        %9342 = vmatprep.subr.bf16.mxu0 %v6982
        %9343 = vmatpush1.bf16.msra.mxu0 %v6981
        %9344 = vmatprep.subr.bf16.mxu0 %v6974
        %9345 = vmatpush1.bf16.msra.mxu0 %v6973
        %9346 = vmatprep.subr.bf16.mxu0 %v6966
        %9347 = vmatpush1.bf16.msra.mxu0 %v6965
        %9348 = vmatprep.subr.bf16.mxu0 %v6958
        %9349 = vmatpush1.bf16.msra.mxu0 %v6957
        %9350 = vmatprep.subr.bf16.mxu0 %v6950
        %9351 = vmatpush1.bf16.msra.mxu0 %v6949
        %9352 = vmatprep.subr.bf16.mxu0 %v6942
        %9353 = vmatpush1.bf16.msra.mxu0 %v6941
        %9354 = vmatprep.subr.bf16.mxu0 %v6934
        %9355 = vmatpush1.bf16.msra.mxu0 %v6933
        %9356 = vmatprep.subr.bf16.mxu0 %v6926
        %9357 = vmatpush1.bf16.msra.mxu0 %v6925
        %9358 = vmatprep.subr.bf16.mxu0 %v7046
        %9359 = vmatpush2.bf16.msra.mxu0 %v7045
        %9360 = vmatprep.subr.bf16.mxu0 %v7038
        %9361 = vmatpush2.bf16.msra.mxu0 %v7037
        %9362 = vmatprep.subr.bf16.mxu0 %v7030
        %9363 = vmatpush2.bf16.msra.mxu0 %v7029
        %9364 = vmatprep.subr.bf16.mxu0 %v7022
        %9365 = vmatpush2.bf16.msra.mxu0 %v7021
        %9366 = vmatprep.subr.bf16.mxu0 %v7014
        %9367 = vmatpush2.bf16.msra.mxu0 %v7013
        %9368 = vmatprep.subr.bf16.mxu0 %v7006
        %9369 = vmatpush2.bf16.msra.mxu0 %v7005
        %9370 = vmatprep.subr.bf16.mxu0 %v6998
        %9371 = vmatpush2.bf16.msra.mxu0 %v6997
        %9372 = vmatprep.subr.bf16.mxu0 %v6990
        %9373 = vmatpush2.bf16.msra.mxu0 %v6989
        %9374 = vmatprep.mubr.bf16.mxu0 %v1884
        %9375 = vmatmul.mubr.bf16.gmra.mxu0 %v1883
        %v9376 = vpop.f32.mrf.mxu0
        %v9377 = vadd.f32 %v9336, %v9376
        %v9378 = vpop.f32.mrf.mxu0
        %v9379 = vadd.f32 %v9338, %v9378
        %v9380 = vpop.f32.mrf.mxu0
        %v9381 = vpop.f32.mrf.mxu0
        %9382 = vdwg.mxu0
        %v9383 = vmax.f32 %v8393, 0.0
        %v9384 = vmax.f32 %v8395, 0.0
        %v9385 = vmax.f32 %v8721, 0.0
        %v9386 = vmax.f32 %v8723, 0.0
        %v9387 = vmax.f32 %v9049, 0.0
        %v9388 = vmax.f32 %v9051, 0.0
        %v9389 = vmax.f32 %v9377, 0.0
        %v9390 = vmax.f32 %v9379, 0.0
        %v9391 = vpack.c.bf16 %v9383, %v9383
        %v9392 = vpack.c.bf16 %v9384, %v9384
        %v9393 = vpack.c.bf16 %v9385, %v9385
        %v9394 = vpack.c.bf16 %v9386, %v9386
        %v9395 = vpack.c.bf16 %v9387, %v9387
        %v9396 = vpack.c.bf16 %v9388, %v9388
        %v9397 = vpack.c.bf16 %v9389, %v9389
        %v9398 = vpack.c.bf16 %v9390, %v9390
        %v9399 = vld [vmem:[%s550] sm:$0xff]
        %v9400 = vld [vmem:[%s550 + $0x8] sm:$0xff]
        %v9401 = vld [vmem:[%s550 + $0x10] sm:$0xff]
        %v9402 = vld [vmem:[%s550 + $0x18] sm:$0xff]
        %v9403 = vld [vmem:[%s550 + $0x20] sm:$0xff]
        %v9404 = vld [vmem:[%s550 + $0x28] sm:$0xff]
        %v9405 = vld [vmem:[%s550 + $0x30] sm:$0xff]
        %v9406 = vld [vmem:[%s550 + $0x38] sm:$0xff]
        %v9407 = vld [vmem:[%s550 + $0x40] sm:$0xff]
        %v9408 = vld [vmem:[%s550 + $0x48] sm:$0xff]
        %v9409 = vld [vmem:[%s550 + $0x50] sm:$0xff]
        %v9410 = vld [vmem:[%s550 + $0x58] sm:$0xff]
        %v9411 = vld [vmem:[%s550 + $0x60] sm:$0xff]
        %v9412 = vld [vmem:[%s550 + $0x68] sm:$0xff]
        %v9413 = vld [vmem:[%s550 + $0x70] sm:$0xff]
        %v9414 = vld [vmem:[%s550 + $0x78] sm:$0xff]
        %v9415 = vld [vmem:[%s550 + $0x80] sm:$0xff]
        %v9416 = vld [vmem:[%s550 + $0x88] sm:$0xff]
        %v9417 = vld [vmem:[%s550 + $0x90] sm:$0xff]
        %v9418 = vld [vmem:[%s550 + $0x98] sm:$0xff]
        %v9419 = vld [vmem:[%s550 + $0xa0] sm:$0xff]
        %v9420 = vld [vmem:[%s550 + $0xa8] sm:$0xff]
        %v9421 = vld [vmem:[%s550 + $0xb0] sm:$0xff]
        %v9422 = vld [vmem:[%s550 + $0xb8] sm:$0xff]
        %v9423 = vld [vmem:[%s550 + $0xc0] sm:$0xff]
        %v9424 = vld [vmem:[%s550 + $0xc8] sm:$0xff]
        %v9425 = vld [vmem:[%s550 + $0xd0] sm:$0xff]
        %v9426 = vld [vmem:[%s550 + $0xd8] sm:$0xff]
        %v9427 = vld [vmem:[%s550 + $0xe0] sm:$0xff]
        %v9428 = vld [vmem:[%s550 + $0xe8] sm:$0xff]
        %v9429 = vld [vmem:[%s550 + $0xf0] sm:$0xff]
        %v9430 = vld [vmem:[%s550 + $0xf8] sm:$0xff]
        %v9431 = vld [vmem:[%s550 + $0x100] sm:$0xff]
        %v9432 = vld [vmem:[%s550 + $0x108] sm:$0xff]
        %v9433 = vld [vmem:[%s550 + $0x110] sm:$0xff]
        %v9434 = vld [vmem:[%s550 + $0x118] sm:$0xff]
        %v9435 = vld [vmem:[%s550 + $0x120] sm:$0xff]
        %v9436 = vld [vmem:[%s550 + $0x128] sm:$0xff]
        %v9437 = vld [vmem:[%s550 + $0x130] sm:$0xff]
        %v9438 = vld [vmem:[%s550 + $0x138] sm:$0xff]
        %v9439 = vld [vmem:[%s550 + $0x140] sm:$0xff]
        %v9440 = vld [vmem:[%s550 + $0x148] sm:$0xff]
        %v9441 = vld [vmem:[%s550 + $0x150] sm:$0xff]
        %v9442 = vld [vmem:[%s550 + $0x158] sm:$0xff]
        %v9443 = vld [vmem:[%s550 + $0x160] sm:$0xff]
        %v9444 = vld [vmem:[%s550 + $0x168] sm:$0xff]
        %v9445 = vld [vmem:[%s550 + $0x170] sm:$0xff]
        %v9446 = vld [vmem:[%s550 + $0x178] sm:$0xff]
        %v9447 = vld [vmem:[%s550 + $0x180] sm:$0xff]
        %v9448 = vld [vmem:[%s550 + $0x188] sm:$0xff]
        %v9449 = vld [vmem:[%s550 + $0x190] sm:$0xff]
        %v9450 = vld [vmem:[%s550 + $0x198] sm:$0xff]
        %v9451 = vld [vmem:[%s550 + $0x1a0] sm:$0xff]
        %v9452 = vld [vmem:[%s550 + $0x1a8] sm:$0xff]
        %v9453 = vld [vmem:[%s550 + $0x1b0] sm:$0xff]
        %v9454 = vld [vmem:[%s550 + $0x1b8] sm:$0xff]
        %v9455 = vld [vmem:[%s550 + $0x1c0] sm:$0xff]
        %v9456 = vld [vmem:[%s550 + $0x1c8] sm:$0xff]
        %v9457 = vld [vmem:[%s550 + $0x1d0] sm:$0xff]
        %v9458 = vld [vmem:[%s550 + $0x1d8] sm:$0xff]
        %v9459 = vld [vmem:[%s550 + $0x1e0] sm:$0xff]
        %v9460 = vld [vmem:[%s550 + $0x1e8] sm:$0xff]
        %v9461 = vld [vmem:[%s550 + $0x1f0] sm:$0xff]
        %v9462 = vld [vmem:[%s550 + $0x1f8] sm:$0xff]
        %v9463 = vld [vmem:[%s550 + $0x200] sm:$0xff]
        %v9464 = vld [vmem:[%s550 + $0x208] sm:$0xff]
        %v9465 = vld [vmem:[%s550 + $0x210] sm:$0xff]
        %v9466 = vld [vmem:[%s550 + $0x218] sm:$0xff]
        %v9467 = vld [vmem:[%s550 + $0x220] sm:$0xff]
        %v9468 = vld [vmem:[%s550 + $0x228] sm:$0xff]
        %v9469 = vld [vmem:[%s550 + $0x230] sm:$0xff]
        %v9470 = vld [vmem:[%s550 + $0x238] sm:$0xff]
        %v9471 = vld [vmem:[%s550 + $0x240] sm:$0xff]
        %v9472 = vld [vmem:[%s550 + $0x248] sm:$0xff]
        %v9473 = vld [vmem:[%s550 + $0x250] sm:$0xff]
        %v9474 = vld [vmem:[%s550 + $0x258] sm:$0xff]
        %v9475 = vld [vmem:[%s550 + $0x260] sm:$0xff]
        %v9476 = vld [vmem:[%s550 + $0x268] sm:$0xff]
        %v9477 = vld [vmem:[%s550 + $0x270] sm:$0xff]
        %v9478 = vld [vmem:[%s550 + $0x278] sm:$0xff]
        %v9479 = vld [vmem:[%s550 + $0x280] sm:$0xff]
        %v9480 = vld [vmem:[%s550 + $0x288] sm:$0xff]
        %v9481 = vld [vmem:[%s550 + $0x290] sm:$0xff]
        %v9482 = vld [vmem:[%s550 + $0x298] sm:$0xff]
        %v9483 = vld [vmem:[%s550 + $0x2a0] sm:$0xff]
        %v9484 = vld [vmem:[%s550 + $0x2a8] sm:$0xff]
        %v9485 = vld [vmem:[%s550 + $0x2b0] sm:$0xff]
        %v9486 = vld [vmem:[%s550 + $0x2b8] sm:$0xff]
        %v9487 = vld [vmem:[%s550 + $0x2c0] sm:$0xff]
        %v9488 = vld [vmem:[%s550 + $0x2c8] sm:$0xff]
        %v9489 = vld [vmem:[%s550 + $0x2d0] sm:$0xff]
        %v9490 = vld [vmem:[%s550 + $0x2d8] sm:$0xff]
        %v9491 = vld [vmem:[%s550 + $0x2e0] sm:$0xff]
        %v9492 = vld [vmem:[%s550 + $0x2e8] sm:$0xff]
        %v9493 = vld [vmem:[%s550 + $0x2f0] sm:$0xff]
        %v9494 = vld [vmem:[%s550 + $0x2f8] sm:$0xff]
        %v9495 = vld [vmem:[%s550 + $0x300] sm:$0xff]
        %v9496 = vld [vmem:[%s550 + $0x308] sm:$0xff]
        %v9497 = vld [vmem:[%s550 + $0x310] sm:$0xff]
        %v9498 = vld [vmem:[%s550 + $0x318] sm:$0xff]
        %v9499 = vld [vmem:[%s550 + $0x320] sm:$0xff]
        %v9500 = vld [vmem:[%s550 + $0x328] sm:$0xff]
        %v9501 = vld [vmem:[%s550 + $0x330] sm:$0xff]
        %v9502 = vld [vmem:[%s550 + $0x338] sm:$0xff]
        %v9503 = vld [vmem:[%s550 + $0x340] sm:$0xff]
        %v9504 = vld [vmem:[%s550 + $0x348] sm:$0xff]
        %v9505 = vld [vmem:[%s550 + $0x350] sm:$0xff]
        %v9506 = vld [vmem:[%s550 + $0x358] sm:$0xff]
        %v9507 = vld [vmem:[%s550 + $0x360] sm:$0xff]
        %v9508 = vld [vmem:[%s550 + $0x368] sm:$0xff]
        %v9509 = vld [vmem:[%s550 + $0x370] sm:$0xff]
        %v9510 = vld [vmem:[%s550 + $0x378] sm:$0xff]
        %v9511 = vld [vmem:[%s550 + $0x380] sm:$0xff]
        %v9512 = vld [vmem:[%s550 + $0x388] sm:$0xff]
        %v9513 = vld [vmem:[%s550 + $0x390] sm:$0xff]
        %v9514 = vld [vmem:[%s550 + $0x398] sm:$0xff]
        %v9515 = vld [vmem:[%s550 + $0x3a0] sm:$0xff]
        %v9516 = vld [vmem:[%s550 + $0x3a8] sm:$0xff]
        %v9517 = vld [vmem:[%s550 + $0x3b0] sm:$0xff]
        %v9518 = vld [vmem:[%s550 + $0x3b8] sm:$0xff]
        %v9519 = vld [vmem:[%s550 + $0x3c0] sm:$0xff]
        %v9520 = vld [vmem:[%s550 + $0x3c8] sm:$0xff]
        %v9521 = vld [vmem:[%s550 + $0x3d0] sm:$0xff]
        %v9522 = vld [vmem:[%s550 + $0x3d8] sm:$0xff]
        %v9523 = vld [vmem:[%s550 + $0x3e0] sm:$0xff]
        %v9524 = vld [vmem:[%s550 + $0x3e8] sm:$0xff]
        %v9525 = vld [vmem:[%s550 + $0x3f0] sm:$0xff]
        %v9526 = vld [vmem:[%s550 + $0x3f8] sm:$0xff]
        %v9527 = vld [vmem:[%s550 + $0x400] sm:$0xff]
        %v9528 = vld [vmem:[%s550 + $0x408] sm:$0xff]
        %v9529 = vld [vmem:[%s550 + $0x410] sm:$0xff]
        %v9530 = vld [vmem:[%s550 + $0x418] sm:$0xff]
        %v9531 = vld [vmem:[%s550 + $0x420] sm:$0xff]
        %v9532 = vld [vmem:[%s550 + $0x428] sm:$0xff]
        %v9533 = vld [vmem:[%s550 + $0x430] sm:$0xff]
        %v9534 = vld [vmem:[%s550 + $0x438] sm:$0xff]
        %v9535 = vld [vmem:[%s550 + $0x440] sm:$0xff]
        %v9536 = vld [vmem:[%s550 + $0x448] sm:$0xff]
        %v9537 = vld [vmem:[%s550 + $0x450] sm:$0xff]
        %v9538 = vld [vmem:[%s550 + $0x458] sm:$0xff]
        %v9539 = vld [vmem:[%s550 + $0x460] sm:$0xff]
        %v9540 = vld [vmem:[%s550 + $0x468] sm:$0xff]
        %v9541 = vld [vmem:[%s550 + $0x470] sm:$0xff]
        %v9542 = vld [vmem:[%s550 + $0x478] sm:$0xff]
        %v9543 = vld [vmem:[%s550 + $0x480] sm:$0xff]
        %v9544 = vld [vmem:[%s550 + $0x488] sm:$0xff]
        %v9545 = vld [vmem:[%s550 + $0x490] sm:$0xff]
        %v9546 = vld [vmem:[%s550 + $0x498] sm:$0xff]
        %v9547 = vld [vmem:[%s550 + $0x4a0] sm:$0xff]
        %v9548 = vld [vmem:[%s550 + $0x4a8] sm:$0xff]
        %v9549 = vld [vmem:[%s550 + $0x4b0] sm:$0xff]
        %v9550 = vld [vmem:[%s550 + $0x4b8] sm:$0xff]
        %v9551 = vld [vmem:[%s550 + $0x4c0] sm:$0xff]
        %v9552 = vld [vmem:[%s550 + $0x4c8] sm:$0xff]
        %v9553 = vld [vmem:[%s550 + $0x4d0] sm:$0xff]
        %v9554 = vld [vmem:[%s550 + $0x4d8] sm:$0xff]
        %v9555 = vld [vmem:[%s550 + $0x4e0] sm:$0xff]
        %v9556 = vld [vmem:[%s550 + $0x4e8] sm:$0xff]
        %v9557 = vld [vmem:[%s550 + $0x4f0] sm:$0xff]
        %v9558 = vld [vmem:[%s550 + $0x4f8] sm:$0xff]
        %v9559 = vld [vmem:[%s550 + $0x500] sm:$0xff]
        %v9560 = vld [vmem:[%s550 + $0x508] sm:$0xff]
        %v9561 = vld [vmem:[%s550 + $0x510] sm:$0xff]
        %v9562 = vld [vmem:[%s550 + $0x518] sm:$0xff]
        %v9563 = vld [vmem:[%s550 + $0x520] sm:$0xff]
        %v9564 = vld [vmem:[%s550 + $0x528] sm:$0xff]
        %v9565 = vld [vmem:[%s550 + $0x530] sm:$0xff]
        %v9566 = vld [vmem:[%s550 + $0x538] sm:$0xff]
        %v9567 = vld [vmem:[%s550 + $0x540] sm:$0xff]
        %v9568 = vld [vmem:[%s550 + $0x548] sm:$0xff]
        %v9569 = vld [vmem:[%s550 + $0x550] sm:$0xff]
        %v9570 = vld [vmem:[%s550 + $0x558] sm:$0xff]
        %v9571 = vld [vmem:[%s550 + $0x560] sm:$0xff]
        %v9572 = vld [vmem:[%s550 + $0x568] sm:$0xff]
        %v9573 = vld [vmem:[%s550 + $0x570] sm:$0xff]
        %v9574 = vld [vmem:[%s550 + $0x578] sm:$0xff]
        %v9575 = vld [vmem:[%s550 + $0x580] sm:$0xff]
        %v9576 = vld [vmem:[%s550 + $0x588] sm:$0xff]
        %v9577 = vld [vmem:[%s550 + $0x590] sm:$0xff]
        %v9578 = vld [vmem:[%s550 + $0x598] sm:$0xff]
        %v9579 = vld [vmem:[%s550 + $0x5a0] sm:$0xff]
        %v9580 = vld [vmem:[%s550 + $0x5a8] sm:$0xff]
        %v9581 = vld [vmem:[%s550 + $0x5b0] sm:$0xff]
        %v9582 = vld [vmem:[%s550 + $0x5b8] sm:$0xff]
        %v9583 = vld [vmem:[%s550 + $0x5c0] sm:$0xff]
        %v9584 = vld [vmem:[%s550 + $0x5c8] sm:$0xff]
        %v9585 = vld [vmem:[%s550 + $0x5d0] sm:$0xff]
        %v9586 = vld [vmem:[%s550 + $0x5d8] sm:$0xff]
        %v9587 = vld [vmem:[%s550 + $0x5e0] sm:$0xff]
        %v9588 = vld [vmem:[%s550 + $0x5e8] sm:$0xff]
        %v9589 = vld [vmem:[%s550 + $0x5f0] sm:$0xff]
        %v9590 = vld [vmem:[%s550 + $0x5f8] sm:$0xff]
        %v9591 = vld [vmem:[%s550 + $0x600] sm:$0xff]
        %v9592 = vld [vmem:[%s550 + $0x608] sm:$0xff]
        %v9593 = vld [vmem:[%s550 + $0x610] sm:$0xff]
        %v9594 = vld [vmem:[%s550 + $0x618] sm:$0xff]
        %v9595 = vld [vmem:[%s550 + $0x620] sm:$0xff]
        %v9596 = vld [vmem:[%s550 + $0x628] sm:$0xff]
        %v9597 = vld [vmem:[%s550 + $0x630] sm:$0xff]
        %v9598 = vld [vmem:[%s550 + $0x638] sm:$0xff]
        %v9599 = vld [vmem:[%s550 + $0x640] sm:$0xff]
        %v9600 = vld [vmem:[%s550 + $0x648] sm:$0xff]
        %v9601 = vld [vmem:[%s550 + $0x650] sm:$0xff]
        %v9602 = vld [vmem:[%s550 + $0x658] sm:$0xff]
        %v9603 = vld [vmem:[%s550 + $0x660] sm:$0xff]
        %v9604 = vld [vmem:[%s550 + $0x668] sm:$0xff]
        %v9605 = vld [vmem:[%s550 + $0x670] sm:$0xff]
        %v9606 = vld [vmem:[%s550 + $0x678] sm:$0xff]
        %v9607 = vld [vmem:[%s550 + $0x680] sm:$0xff]
        %v9608 = vld [vmem:[%s550 + $0x688] sm:$0xff]
        %v9609 = vld [vmem:[%s550 + $0x690] sm:$0xff]
        %v9610 = vld [vmem:[%s550 + $0x698] sm:$0xff]
        %v9611 = vld [vmem:[%s550 + $0x6a0] sm:$0xff]
        %v9612 = vld [vmem:[%s550 + $0x6a8] sm:$0xff]
        %v9613 = vld [vmem:[%s550 + $0x6b0] sm:$0xff]
        %v9614 = vld [vmem:[%s550 + $0x6b8] sm:$0xff]
        %v9615 = vld [vmem:[%s550 + $0x6c0] sm:$0xff]
        %v9616 = vld [vmem:[%s550 + $0x6c8] sm:$0xff]
        %v9617 = vld [vmem:[%s550 + $0x6d0] sm:$0xff]
        %v9618 = vld [vmem:[%s550 + $0x6d8] sm:$0xff]
        %v9619 = vld [vmem:[%s550 + $0x6e0] sm:$0xff]
        %v9620 = vld [vmem:[%s550 + $0x6e8] sm:$0xff]
        %v9621 = vld [vmem:[%s550 + $0x6f0] sm:$0xff]
        %v9622 = vld [vmem:[%s550 + $0x6f8] sm:$0xff]
        %v9623 = vld [vmem:[%s550 + $0x700] sm:$0xff]
        %v9624 = vld [vmem:[%s550 + $0x708] sm:$0xff]
        %v9625 = vld [vmem:[%s550 + $0x710] sm:$0xff]
        %v9626 = vld [vmem:[%s550 + $0x718] sm:$0xff]
        %v9627 = vld [vmem:[%s550 + $0x720] sm:$0xff]
        %v9628 = vld [vmem:[%s550 + $0x728] sm:$0xff]
        %v9629 = vld [vmem:[%s550 + $0x730] sm:$0xff]
        %v9630 = vld [vmem:[%s550 + $0x738] sm:$0xff]
        %v9631 = vld [vmem:[%s550 + $0x740] sm:$0xff]
        %v9632 = vld [vmem:[%s550 + $0x748] sm:$0xff]
        %v9633 = vld [vmem:[%s550 + $0x750] sm:$0xff]
        %v9634 = vld [vmem:[%s550 + $0x758] sm:$0xff]
        %v9635 = vld [vmem:[%s550 + $0x760] sm:$0xff]
        %v9636 = vld [vmem:[%s550 + $0x768] sm:$0xff]
        %v9637 = vld [vmem:[%s550 + $0x770] sm:$0xff]
        %v9638 = vld [vmem:[%s550 + $0x778] sm:$0xff]
        %v9639 = vld [vmem:[%s550 + $0x780] sm:$0xff]
        %v9640 = vld [vmem:[%s550 + $0x788] sm:$0xff]
        %v9641 = vld [vmem:[%s550 + $0x790] sm:$0xff]
        %v9642 = vld [vmem:[%s550 + $0x798] sm:$0xff]
        %v9643 = vld [vmem:[%s550 + $0x7a0] sm:$0xff]
        %v9644 = vld [vmem:[%s550 + $0x7a8] sm:$0xff]
        %v9645 = vld [vmem:[%s550 + $0x7b0] sm:$0xff]
        %v9646 = vld [vmem:[%s550 + $0x7b8] sm:$0xff]
        %v9647 = vld [vmem:[%s550 + $0x7c0] sm:$0xff]
        %v9648 = vld [vmem:[%s550 + $0x7c8] sm:$0xff]
        %v9649 = vld [vmem:[%s550 + $0x7d0] sm:$0xff]
        %v9650 = vld [vmem:[%s550 + $0x7d8] sm:$0xff]
        %v9651 = vld [vmem:[%s550 + $0x7e0] sm:$0xff]
        %v9652 = vld [vmem:[%s550 + $0x7e8] sm:$0xff]
        %v9653 = vld [vmem:[%s550 + $0x7f0] sm:$0xff]
        %v9654 = vld [vmem:[%s550 + $0x7f8] sm:$0xff]
        %v9655 = vld [vmem:[%s559] sm:$0xf]
        %v9657 = vlaneseq
        %v9658 = vshrl.u32 %v9657, 7
        %v9659 = vsub.s32 0, %v9658
        %v9660 = vrot.slane %v9655, %v9659
        %v9661 = vlaneseq
        %v9662 = vshrl.u32 %v9661, 7
        %v9663 = vsub.s32 1, %v9662
        %v9664 = vrot.slane %v9655, %v9663
        %v9665 = vlaneseq
        %v9666 = vshrl.u32 %v9665, 7
        %v9667 = vsub.s32 2, %v9666
        %v9668 = vrot.slane %v9655, %v9667
        %v9669 = vlaneseq
        %v9670 = vshrl.u32 %v9669, 7
        %v9671 = vsub.s32 3, %v9670
        %v9672 = vrot.slane %v9655, %v9671
        %v9933 = vunpack.c.l.b16 %v9399
        %v9934 = vunpack.c.h.b16 %v9399
        %v9935 = vunpack.c.l.b16 %v9400
        %v9936 = vunpack.c.h.b16 %v9400
        %v9937 = vunpack.c.l.b16 %v9401
        %v9938 = vunpack.c.h.b16 %v9401
        %v9939 = vunpack.c.l.b16 %v9402
        %v9940 = vunpack.c.h.b16 %v9402
        %v9941 = vunpack.c.l.b16 %v9403
        %v9942 = vunpack.c.h.b16 %v9403
        %v9943 = vunpack.c.l.b16 %v9404
        %v9944 = vunpack.c.h.b16 %v9404
        %v9945 = vunpack.c.l.b16 %v9405
        %v9946 = vunpack.c.h.b16 %v9405
        %v9947 = vunpack.c.l.b16 %v9406
        %v9948 = vunpack.c.h.b16 %v9406
        %v9949 = vunpack.c.l.b16 %v9407
        %v9950 = vunpack.c.h.b16 %v9407
        %v9951 = vunpack.c.l.b16 %v9408
        %v9952 = vunpack.c.h.b16 %v9408
        %v9953 = vunpack.c.l.b16 %v9409
        %v9954 = vunpack.c.h.b16 %v9409
        %v9955 = vunpack.c.l.b16 %v9410
        %v9956 = vunpack.c.h.b16 %v9410
        %v9957 = vunpack.c.l.b16 %v9411
        %v9958 = vunpack.c.h.b16 %v9411
        %v9959 = vunpack.c.l.b16 %v9412
        %v9960 = vunpack.c.h.b16 %v9412
        %v9961 = vunpack.c.l.b16 %v9413
        %v9962 = vunpack.c.h.b16 %v9413
        %v9963 = vunpack.c.l.b16 %v9414
        %v9964 = vunpack.c.h.b16 %v9414
        %v9965 = vunpack.c.l.b16 %v9415
        %v9966 = vunpack.c.h.b16 %v9415
        %v9967 = vunpack.c.l.b16 %v9416
        %v9968 = vunpack.c.h.b16 %v9416
        %v9969 = vunpack.c.l.b16 %v9417
        %v9970 = vunpack.c.h.b16 %v9417
        %v9971 = vunpack.c.l.b16 %v9418
        %v9972 = vunpack.c.h.b16 %v9418
        %v9973 = vunpack.c.l.b16 %v9419
        %v9974 = vunpack.c.h.b16 %v9419
        %v9975 = vunpack.c.l.b16 %v9420
        %v9976 = vunpack.c.h.b16 %v9420
        %v9977 = vunpack.c.l.b16 %v9421
        %v9978 = vunpack.c.h.b16 %v9421
        %v9979 = vunpack.c.l.b16 %v9422
        %v9980 = vunpack.c.h.b16 %v9422
        %v9981 = vunpack.c.l.b16 %v9423
        %v9982 = vunpack.c.h.b16 %v9423
        %v9983 = vunpack.c.l.b16 %v9424
        %v9984 = vunpack.c.h.b16 %v9424
        %v9985 = vunpack.c.l.b16 %v9425
        %v9986 = vunpack.c.h.b16 %v9425
        %v9987 = vunpack.c.l.b16 %v9426
        %v9988 = vunpack.c.h.b16 %v9426
        %v9989 = vunpack.c.l.b16 %v9427
        %v9990 = vunpack.c.h.b16 %v9427
        %v9991 = vunpack.c.l.b16 %v9428
        %v9992 = vunpack.c.h.b16 %v9428
        %v9993 = vunpack.c.l.b16 %v9429
        %v9994 = vunpack.c.h.b16 %v9429
        %v9995 = vunpack.c.l.b16 %v9430
        %v9996 = vunpack.c.h.b16 %v9430
        %v9997 = vunpack.c.l.b16 %v9431
        %v9998 = vunpack.c.h.b16 %v9431
        %v9999 = vunpack.c.l.b16 %v9432
        %v10000 = vunpack.c.h.b16 %v9432
        %v10001 = vunpack.c.l.b16 %v9433
        %v10002 = vunpack.c.h.b16 %v9433
        %v10003 = vunpack.c.l.b16 %v9434
        %v10004 = vunpack.c.h.b16 %v9434
        %v10005 = vunpack.c.l.b16 %v9435
        %v10006 = vunpack.c.h.b16 %v9435
        %v10007 = vunpack.c.l.b16 %v9436
        %v10008 = vunpack.c.h.b16 %v9436
        %v10009 = vunpack.c.l.b16 %v9437
        %v10010 = vunpack.c.h.b16 %v9437
        %v10011 = vunpack.c.l.b16 %v9438
        %v10012 = vunpack.c.h.b16 %v9438
        %v10013 = vunpack.c.l.b16 %v9439
        %v10014 = vunpack.c.h.b16 %v9439
        %v10015 = vunpack.c.l.b16 %v9440
        %v10016 = vunpack.c.h.b16 %v9440
        %v10017 = vunpack.c.l.b16 %v9441
        %v10018 = vunpack.c.h.b16 %v9441
        %v10019 = vunpack.c.l.b16 %v9442
        %v10020 = vunpack.c.h.b16 %v9442
        %v10021 = vunpack.c.l.b16 %v9443
        %v10022 = vunpack.c.h.b16 %v9443
        %v10023 = vunpack.c.l.b16 %v9444
        %v10024 = vunpack.c.h.b16 %v9444
        %v10025 = vunpack.c.l.b16 %v9445
        %v10026 = vunpack.c.h.b16 %v9445
        %v10027 = vunpack.c.l.b16 %v9446
        %v10028 = vunpack.c.h.b16 %v9446
        %v10029 = vunpack.c.l.b16 %v9447
        %v10030 = vunpack.c.h.b16 %v9447
        %v10031 = vunpack.c.l.b16 %v9448
        %v10032 = vunpack.c.h.b16 %v9448
        %v10033 = vunpack.c.l.b16 %v9449
        %v10034 = vunpack.c.h.b16 %v9449
        %v10035 = vunpack.c.l.b16 %v9450
        %v10036 = vunpack.c.h.b16 %v9450
        %v10037 = vunpack.c.l.b16 %v9451
        %v10038 = vunpack.c.h.b16 %v9451
        %v10039 = vunpack.c.l.b16 %v9452
        %v10040 = vunpack.c.h.b16 %v9452
        %v10041 = vunpack.c.l.b16 %v9453
        %v10042 = vunpack.c.h.b16 %v9453
        %v10043 = vunpack.c.l.b16 %v9454
        %v10044 = vunpack.c.h.b16 %v9454
        %v10045 = vunpack.c.l.b16 %v9455
        %v10046 = vunpack.c.h.b16 %v9455
        %v10047 = vunpack.c.l.b16 %v9456
        %v10048 = vunpack.c.h.b16 %v9456
        %v10049 = vunpack.c.l.b16 %v9457
        %v10050 = vunpack.c.h.b16 %v9457
        %v10051 = vunpack.c.l.b16 %v9458
        %v10052 = vunpack.c.h.b16 %v9458
        %v10053 = vunpack.c.l.b16 %v9459
        %v10054 = vunpack.c.h.b16 %v9459
        %v10055 = vunpack.c.l.b16 %v9460
        %v10056 = vunpack.c.h.b16 %v9460
        %v10057 = vunpack.c.l.b16 %v9461
        %v10058 = vunpack.c.h.b16 %v9461
        %v10059 = vunpack.c.l.b16 %v9462
        %v10060 = vunpack.c.h.b16 %v9462
        %v10061 = vunpack.c.l.b16 %v9463
        %v10062 = vunpack.c.h.b16 %v9463
        %v10063 = vunpack.c.l.b16 %v9464
        %v10064 = vunpack.c.h.b16 %v9464
        %v10065 = vunpack.c.l.b16 %v9465
        %v10066 = vunpack.c.h.b16 %v9465
        %v10067 = vunpack.c.l.b16 %v9466
        %v10068 = vunpack.c.h.b16 %v9466
        %v10069 = vunpack.c.l.b16 %v9467
        %v10070 = vunpack.c.h.b16 %v9467
        %v10071 = vunpack.c.l.b16 %v9468
        %v10072 = vunpack.c.h.b16 %v9468
        %v10073 = vunpack.c.l.b16 %v9469
        %v10074 = vunpack.c.h.b16 %v9469
        %v10075 = vunpack.c.l.b16 %v9470
        %v10076 = vunpack.c.h.b16 %v9470
        %v10077 = vunpack.c.l.b16 %v9471
        %v10078 = vunpack.c.h.b16 %v9471
        %v10079 = vunpack.c.l.b16 %v9472
        %v10080 = vunpack.c.h.b16 %v9472
        %v10081 = vunpack.c.l.b16 %v9473
        %v10082 = vunpack.c.h.b16 %v9473
        %v10083 = vunpack.c.l.b16 %v9474
        %v10084 = vunpack.c.h.b16 %v9474
        %v10085 = vunpack.c.l.b16 %v9475
        %v10086 = vunpack.c.h.b16 %v9475
        %v10087 = vunpack.c.l.b16 %v9476
        %v10088 = vunpack.c.h.b16 %v9476
        %v10089 = vunpack.c.l.b16 %v9477
        %v10090 = vunpack.c.h.b16 %v9477
        %v10091 = vunpack.c.l.b16 %v9478
        %v10092 = vunpack.c.h.b16 %v9478
        %v10093 = vunpack.c.l.b16 %v9479
        %v10094 = vunpack.c.h.b16 %v9479
        %v10095 = vunpack.c.l.b16 %v9480
        %v10096 = vunpack.c.h.b16 %v9480
        %v10097 = vunpack.c.l.b16 %v9481
        %v10098 = vunpack.c.h.b16 %v9481
        %v10099 = vunpack.c.l.b16 %v9482
        %v10100 = vunpack.c.h.b16 %v9482
        %v10101 = vunpack.c.l.b16 %v9483
        %v10102 = vunpack.c.h.b16 %v9483
        %v10103 = vunpack.c.l.b16 %v9484
        %v10104 = vunpack.c.h.b16 %v9484
        %v10105 = vunpack.c.l.b16 %v9485
        %v10106 = vunpack.c.h.b16 %v9485
        %v10107 = vunpack.c.l.b16 %v9486
        %v10108 = vunpack.c.h.b16 %v9486
        %v10109 = vunpack.c.l.b16 %v9487
        %v10110 = vunpack.c.h.b16 %v9487
        %v10111 = vunpack.c.l.b16 %v9488
        %v10112 = vunpack.c.h.b16 %v9488
        %v10113 = vunpack.c.l.b16 %v9489
        %v10114 = vunpack.c.h.b16 %v9489
        %v10115 = vunpack.c.l.b16 %v9490
        %v10116 = vunpack.c.h.b16 %v9490
        %v10117 = vunpack.c.l.b16 %v9491
        %v10118 = vunpack.c.h.b16 %v9491
        %v10119 = vunpack.c.l.b16 %v9492
        %v10120 = vunpack.c.h.b16 %v9492
        %v10121 = vunpack.c.l.b16 %v9493
        %v10122 = vunpack.c.h.b16 %v9493
        %v10123 = vunpack.c.l.b16 %v9494
        %v10124 = vunpack.c.h.b16 %v9494
        %v10125 = vunpack.c.l.b16 %v9495
        %v10126 = vunpack.c.h.b16 %v9495
        %v10127 = vunpack.c.l.b16 %v9496
        %v10128 = vunpack.c.h.b16 %v9496
        %v10129 = vunpack.c.l.b16 %v9497
        %v10130 = vunpack.c.h.b16 %v9497
        %v10131 = vunpack.c.l.b16 %v9498
        %v10132 = vunpack.c.h.b16 %v9498
        %v10133 = vunpack.c.l.b16 %v9499
        %v10134 = vunpack.c.h.b16 %v9499
        %v10135 = vunpack.c.l.b16 %v9500
        %v10136 = vunpack.c.h.b16 %v9500
        %v10137 = vunpack.c.l.b16 %v9501
        %v10138 = vunpack.c.h.b16 %v9501
        %v10139 = vunpack.c.l.b16 %v9502
        %v10140 = vunpack.c.h.b16 %v9502
        %v10141 = vunpack.c.l.b16 %v9503
        %v10142 = vunpack.c.h.b16 %v9503
        %v10143 = vunpack.c.l.b16 %v9504
        %v10144 = vunpack.c.h.b16 %v9504
        %v10145 = vunpack.c.l.b16 %v9505
        %v10146 = vunpack.c.h.b16 %v9505
        %v10147 = vunpack.c.l.b16 %v9506
        %v10148 = vunpack.c.h.b16 %v9506
        %v10149 = vunpack.c.l.b16 %v9507
        %v10150 = vunpack.c.h.b16 %v9507
        %v10151 = vunpack.c.l.b16 %v9508
        %v10152 = vunpack.c.h.b16 %v9508
        %v10153 = vunpack.c.l.b16 %v9509
        %v10154 = vunpack.c.h.b16 %v9509
        %v10155 = vunpack.c.l.b16 %v9510
        %v10156 = vunpack.c.h.b16 %v9510
        %v10157 = vunpack.c.l.b16 %v9511
        %v10158 = vunpack.c.h.b16 %v9511
        %v10159 = vunpack.c.l.b16 %v9512
        %v10160 = vunpack.c.h.b16 %v9512
        %v10161 = vunpack.c.l.b16 %v9513
        %v10162 = vunpack.c.h.b16 %v9513
        %v10163 = vunpack.c.l.b16 %v9514
        %v10164 = vunpack.c.h.b16 %v9514
        %v10165 = vunpack.c.l.b16 %v9515
        %v10166 = vunpack.c.h.b16 %v9515
        %v10167 = vunpack.c.l.b16 %v9516
        %v10168 = vunpack.c.h.b16 %v9516
        %v10169 = vunpack.c.l.b16 %v9517
        %v10170 = vunpack.c.h.b16 %v9517
        %v10171 = vunpack.c.l.b16 %v9518
        %v10172 = vunpack.c.h.b16 %v9518
        %v10173 = vunpack.c.l.b16 %v9519
        %v10174 = vunpack.c.h.b16 %v9519
        %v10175 = vunpack.c.l.b16 %v9520
        %v10176 = vunpack.c.h.b16 %v9520
        %v10177 = vunpack.c.l.b16 %v9521
        %v10178 = vunpack.c.h.b16 %v9521
        %v10179 = vunpack.c.l.b16 %v9522
        %v10180 = vunpack.c.h.b16 %v9522
        %v10181 = vunpack.c.l.b16 %v9523
        %v10182 = vunpack.c.h.b16 %v9523
        %v10183 = vunpack.c.l.b16 %v9524
        %v10184 = vunpack.c.h.b16 %v9524
        %v10185 = vunpack.c.l.b16 %v9525
        %v10186 = vunpack.c.h.b16 %v9525
        %v10187 = vunpack.c.l.b16 %v9526
        %v10188 = vunpack.c.h.b16 %v9526
        %v10189 = vunpack.c.l.b16 %v9527
        %v10190 = vunpack.c.h.b16 %v9527
        %v10191 = vunpack.c.l.b16 %v9528
        %v10192 = vunpack.c.h.b16 %v9528
        %v10193 = vunpack.c.l.b16 %v9529
        %v10194 = vunpack.c.h.b16 %v9529
        %v10195 = vunpack.c.l.b16 %v9530
        %v10196 = vunpack.c.h.b16 %v9530
        %v10197 = vunpack.c.l.b16 %v9531
        %v10198 = vunpack.c.h.b16 %v9531
        %v10199 = vunpack.c.l.b16 %v9532
        %v10200 = vunpack.c.h.b16 %v9532
        %v10201 = vunpack.c.l.b16 %v9533
        %v10202 = vunpack.c.h.b16 %v9533
        %v10203 = vunpack.c.l.b16 %v9534
        %v10204 = vunpack.c.h.b16 %v9534
        %v10205 = vunpack.c.l.b16 %v9535
        %v10206 = vunpack.c.h.b16 %v9535
        %v10207 = vunpack.c.l.b16 %v9536
        %v10208 = vunpack.c.h.b16 %v9536
        %v10209 = vunpack.c.l.b16 %v9537
        %v10210 = vunpack.c.h.b16 %v9537
        %v10211 = vunpack.c.l.b16 %v9538
        %v10212 = vunpack.c.h.b16 %v9538
        %v10213 = vunpack.c.l.b16 %v9539
        %v10214 = vunpack.c.h.b16 %v9539
        %v10215 = vunpack.c.l.b16 %v9540
        %v10216 = vunpack.c.h.b16 %v9540
        %v10217 = vunpack.c.l.b16 %v9541
        %v10218 = vunpack.c.h.b16 %v9541
        %v10219 = vunpack.c.l.b16 %v9542
        %v10220 = vunpack.c.h.b16 %v9542
        %v10221 = vunpack.c.l.b16 %v9543
        %v10222 = vunpack.c.h.b16 %v9543
        %v10223 = vunpack.c.l.b16 %v9544
        %v10224 = vunpack.c.h.b16 %v9544
        %v10225 = vunpack.c.l.b16 %v9545
        %v10226 = vunpack.c.h.b16 %v9545
        %v10227 = vunpack.c.l.b16 %v9546
        %v10228 = vunpack.c.h.b16 %v9546
        %v10229 = vunpack.c.l.b16 %v9547
        %v10230 = vunpack.c.h.b16 %v9547
        %v10231 = vunpack.c.l.b16 %v9548
        %v10232 = vunpack.c.h.b16 %v9548
        %v10233 = vunpack.c.l.b16 %v9549
        %v10234 = vunpack.c.h.b16 %v9549
        %v10235 = vunpack.c.l.b16 %v9550
        %v10236 = vunpack.c.h.b16 %v9550
        %v10237 = vunpack.c.l.b16 %v9551
        %v10238 = vunpack.c.h.b16 %v9551
        %v10239 = vunpack.c.l.b16 %v9552
        %v10240 = vunpack.c.h.b16 %v9552
        %v10241 = vunpack.c.l.b16 %v9553
        %v10242 = vunpack.c.h.b16 %v9553
        %v10243 = vunpack.c.l.b16 %v9554
        %v10244 = vunpack.c.h.b16 %v9554
        %v10245 = vunpack.c.l.b16 %v9555
        %v10246 = vunpack.c.h.b16 %v9555
        %v10247 = vunpack.c.l.b16 %v9556
        %v10248 = vunpack.c.h.b16 %v9556
        %v10249 = vunpack.c.l.b16 %v9557
        %v10250 = vunpack.c.h.b16 %v9557
        %v10251 = vunpack.c.l.b16 %v9558
        %v10252 = vunpack.c.h.b16 %v9558
        %v10253 = vunpack.c.l.b16 %v9559
        %v10254 = vunpack.c.h.b16 %v9559
        %v10255 = vunpack.c.l.b16 %v9560
        %v10256 = vunpack.c.h.b16 %v9560
        %v10257 = vunpack.c.l.b16 %v9561
        %v10258 = vunpack.c.h.b16 %v9561
        %v10259 = vunpack.c.l.b16 %v9562
        %v10260 = vunpack.c.h.b16 %v9562
        %v10261 = vunpack.c.l.b16 %v9563
        %v10262 = vunpack.c.h.b16 %v9563
        %v10263 = vunpack.c.l.b16 %v9564
        %v10264 = vunpack.c.h.b16 %v9564
        %v10265 = vunpack.c.l.b16 %v9565
        %v10266 = vunpack.c.h.b16 %v9565
        %v10267 = vunpack.c.l.b16 %v9566
        %v10268 = vunpack.c.h.b16 %v9566
        %v10269 = vunpack.c.l.b16 %v9567
        %v10270 = vunpack.c.h.b16 %v9567
        %v10271 = vunpack.c.l.b16 %v9568
        %v10272 = vunpack.c.h.b16 %v9568
        %v10273 = vunpack.c.l.b16 %v9569
        %v10274 = vunpack.c.h.b16 %v9569
        %v10275 = vunpack.c.l.b16 %v9570
        %v10276 = vunpack.c.h.b16 %v9570
        %v10277 = vunpack.c.l.b16 %v9571
        %v10278 = vunpack.c.h.b16 %v9571
        %v10279 = vunpack.c.l.b16 %v9572
        %v10280 = vunpack.c.h.b16 %v9572
        %v10281 = vunpack.c.l.b16 %v9573
        %v10282 = vunpack.c.h.b16 %v9573
        %v10283 = vunpack.c.l.b16 %v9574
        %v10284 = vunpack.c.h.b16 %v9574
        %v10285 = vunpack.c.l.b16 %v9575
        %v10286 = vunpack.c.h.b16 %v9575
        %v10287 = vunpack.c.l.b16 %v9576
        %v10288 = vunpack.c.h.b16 %v9576
        %v10289 = vunpack.c.l.b16 %v9577
        %v10290 = vunpack.c.h.b16 %v9577
        %v10291 = vunpack.c.l.b16 %v9578
        %v10292 = vunpack.c.h.b16 %v9578
        %v10293 = vunpack.c.l.b16 %v9579
        %v10294 = vunpack.c.h.b16 %v9579
        %v10295 = vunpack.c.l.b16 %v9580
        %v10296 = vunpack.c.h.b16 %v9580
        %v10297 = vunpack.c.l.b16 %v9581
        %v10298 = vunpack.c.h.b16 %v9581
        %v10299 = vunpack.c.l.b16 %v9582
        %v10300 = vunpack.c.h.b16 %v9582
        %v10301 = vunpack.c.l.b16 %v9583
        %v10302 = vunpack.c.h.b16 %v9583
        %v10303 = vunpack.c.l.b16 %v9584
        %v10304 = vunpack.c.h.b16 %v9584
        %v10305 = vunpack.c.l.b16 %v9585
        %v10306 = vunpack.c.h.b16 %v9585
        %v10307 = vunpack.c.l.b16 %v9586
        %v10308 = vunpack.c.h.b16 %v9586
        %v10309 = vunpack.c.l.b16 %v9587
        %v10310 = vunpack.c.h.b16 %v9587
        %v10311 = vunpack.c.l.b16 %v9588
        %v10312 = vunpack.c.h.b16 %v9588
        %v10313 = vunpack.c.l.b16 %v9589
        %v10314 = vunpack.c.h.b16 %v9589
        %v10315 = vunpack.c.l.b16 %v9590
        %v10316 = vunpack.c.h.b16 %v9590
        %v10317 = vunpack.c.l.b16 %v9591
        %v10318 = vunpack.c.h.b16 %v9591
        %v10319 = vunpack.c.l.b16 %v9592
        %v10320 = vunpack.c.h.b16 %v9592
        %v10321 = vunpack.c.l.b16 %v9593
        %v10322 = vunpack.c.h.b16 %v9593
        %v10323 = vunpack.c.l.b16 %v9594
        %v10324 = vunpack.c.h.b16 %v9594
        %v10325 = vunpack.c.l.b16 %v9595
        %v10326 = vunpack.c.h.b16 %v9595
        %v10327 = vunpack.c.l.b16 %v9596
        %v10328 = vunpack.c.h.b16 %v9596
        %v10329 = vunpack.c.l.b16 %v9597
        %v10330 = vunpack.c.h.b16 %v9597
        %v10331 = vunpack.c.l.b16 %v9598
        %v10332 = vunpack.c.h.b16 %v9598
        %v10333 = vunpack.c.l.b16 %v9599
        %v10334 = vunpack.c.h.b16 %v9599
        %v10335 = vunpack.c.l.b16 %v9600
        %v10336 = vunpack.c.h.b16 %v9600
        %v10337 = vunpack.c.l.b16 %v9601
        %v10338 = vunpack.c.h.b16 %v9601
        %v10339 = vunpack.c.l.b16 %v9602
        %v10340 = vunpack.c.h.b16 %v9602
        %v10341 = vunpack.c.l.b16 %v9603
        %v10342 = vunpack.c.h.b16 %v9603
        %v10343 = vunpack.c.l.b16 %v9604
        %v10344 = vunpack.c.h.b16 %v9604
        %v10345 = vunpack.c.l.b16 %v9605
        %v10346 = vunpack.c.h.b16 %v9605
        %v10347 = vunpack.c.l.b16 %v9606
        %v10348 = vunpack.c.h.b16 %v9606
        %v10349 = vunpack.c.l.b16 %v9607
        %v10350 = vunpack.c.h.b16 %v9607
        %v10351 = vunpack.c.l.b16 %v9608
        %v10352 = vunpack.c.h.b16 %v9608
        %v10353 = vunpack.c.l.b16 %v9609
        %v10354 = vunpack.c.h.b16 %v9609
        %v10355 = vunpack.c.l.b16 %v9610
        %v10356 = vunpack.c.h.b16 %v9610
        %v10357 = vunpack.c.l.b16 %v9611
        %v10358 = vunpack.c.h.b16 %v9611
        %v10359 = vunpack.c.l.b16 %v9612
        %v10360 = vunpack.c.h.b16 %v9612
        %v10361 = vunpack.c.l.b16 %v9613
        %v10362 = vunpack.c.h.b16 %v9613
        %v10363 = vunpack.c.l.b16 %v9614
        %v10364 = vunpack.c.h.b16 %v9614
        %v10365 = vunpack.c.l.b16 %v9615
        %v10366 = vunpack.c.h.b16 %v9615
        %v10367 = vunpack.c.l.b16 %v9616
        %v10368 = vunpack.c.h.b16 %v9616
        %v10369 = vunpack.c.l.b16 %v9617
        %v10370 = vunpack.c.h.b16 %v9617
        %v10371 = vunpack.c.l.b16 %v9618
        %v10372 = vunpack.c.h.b16 %v9618
        %v10373 = vunpack.c.l.b16 %v9619
        %v10374 = vunpack.c.h.b16 %v9619
        %v10375 = vunpack.c.l.b16 %v9620
        %v10376 = vunpack.c.h.b16 %v9620
        %v10377 = vunpack.c.l.b16 %v9621
        %v10378 = vunpack.c.h.b16 %v9621
        %v10379 = vunpack.c.l.b16 %v9622
        %v10380 = vunpack.c.h.b16 %v9622
        %v10381 = vunpack.c.l.b16 %v9623
        %v10382 = vunpack.c.h.b16 %v9623
        %v10383 = vunpack.c.l.b16 %v9624
        %v10384 = vunpack.c.h.b16 %v9624
        %v10385 = vunpack.c.l.b16 %v9625
        %v10386 = vunpack.c.h.b16 %v9625
        %v10387 = vunpack.c.l.b16 %v9626
        %v10388 = vunpack.c.h.b16 %v9626
        %v10389 = vunpack.c.l.b16 %v9627
        %v10390 = vunpack.c.h.b16 %v9627
        %v10391 = vunpack.c.l.b16 %v9628
        %v10392 = vunpack.c.h.b16 %v9628
        %v10393 = vunpack.c.l.b16 %v9629
        %v10394 = vunpack.c.h.b16 %v9629
        %v10395 = vunpack.c.l.b16 %v9630
        %v10396 = vunpack.c.h.b16 %v9630
        %v10397 = vunpack.c.l.b16 %v9631
        %v10398 = vunpack.c.h.b16 %v9631
        %v10399 = vunpack.c.l.b16 %v9632
        %v10400 = vunpack.c.h.b16 %v9632
        %v10401 = vunpack.c.l.b16 %v9633
        %v10402 = vunpack.c.h.b16 %v9633
        %v10403 = vunpack.c.l.b16 %v9634
        %v10404 = vunpack.c.h.b16 %v9634
        %v10405 = vunpack.c.l.b16 %v9635
        %v10406 = vunpack.c.h.b16 %v9635
        %v10407 = vunpack.c.l.b16 %v9636
        %v10408 = vunpack.c.h.b16 %v9636
        %v10409 = vunpack.c.l.b16 %v9637
        %v10410 = vunpack.c.h.b16 %v9637
        %v10411 = vunpack.c.l.b16 %v9638
        %v10412 = vunpack.c.h.b16 %v9638
        %v10413 = vunpack.c.l.b16 %v9639
        %v10414 = vunpack.c.h.b16 %v9639
        %v10415 = vunpack.c.l.b16 %v9640
        %v10416 = vunpack.c.h.b16 %v9640
        %v10417 = vunpack.c.l.b16 %v9641
        %v10418 = vunpack.c.h.b16 %v9641
        %v10419 = vunpack.c.l.b16 %v9642
        %v10420 = vunpack.c.h.b16 %v9642
        %v10421 = vunpack.c.l.b16 %v9643
        %v10422 = vunpack.c.h.b16 %v9643
        %v10423 = vunpack.c.l.b16 %v9644
        %v10424 = vunpack.c.h.b16 %v9644
        %v10425 = vunpack.c.l.b16 %v9645
        %v10426 = vunpack.c.h.b16 %v9645
        %v10427 = vunpack.c.l.b16 %v9646
        %v10428 = vunpack.c.h.b16 %v9646
        %v10429 = vunpack.c.l.b16 %v9647
        %v10430 = vunpack.c.h.b16 %v9647
        %v10431 = vunpack.c.l.b16 %v9648
        %v10432 = vunpack.c.h.b16 %v9648
        %v10433 = vunpack.c.l.b16 %v9649
        %v10434 = vunpack.c.h.b16 %v9649
        %v10435 = vunpack.c.l.b16 %v9650
        %v10436 = vunpack.c.h.b16 %v9650
        %v10437 = vunpack.c.l.b16 %v9651
        %v10438 = vunpack.c.h.b16 %v9651
        %v10439 = vunpack.c.l.b16 %v9652
        %v10440 = vunpack.c.h.b16 %v9652
        %v10441 = vunpack.c.l.b16 %v9653
        %v10442 = vunpack.c.h.b16 %v9653
        %v10443 = vunpack.c.l.b16 %v9654
        %v10444 = vunpack.c.h.b16 %v9654
        %v10445 = vpack.c.b16 %v9937, %v9933
        %v10446 = vpack.c.b16 %v9938, %v9934
        %v10447 = vpack.c.b16 %v9939, %v9935
        %v10448 = vpack.c.b16 %v9940, %v9936
        %v10449 = vpack.c.b16 %v9945, %v9941
        %v10450 = vpack.c.b16 %v9946, %v9942
        %v10451 = vpack.c.b16 %v9947, %v9943
        %v10452 = vpack.c.b16 %v9948, %v9944
        %v10453 = vpack.c.b16 %v9953, %v9949
        %v10454 = vpack.c.b16 %v9954, %v9950
        %v10455 = vpack.c.b16 %v9955, %v9951
        %v10456 = vpack.c.b16 %v9956, %v9952
        %v10457 = vpack.c.b16 %v9961, %v9957
        %v10458 = vpack.c.b16 %v9962, %v9958
        %v10459 = vpack.c.b16 %v9963, %v9959
        %v10460 = vpack.c.b16 %v9964, %v9960
        %v10461 = vpack.c.b16 %v9969, %v9965
        %v10462 = vpack.c.b16 %v9970, %v9966
        %v10463 = vpack.c.b16 %v9971, %v9967
        %v10464 = vpack.c.b16 %v9972, %v9968
        %v10465 = vpack.c.b16 %v9977, %v9973
        %v10466 = vpack.c.b16 %v9978, %v9974
        %v10467 = vpack.c.b16 %v9979, %v9975
        %v10468 = vpack.c.b16 %v9980, %v9976
        %v10469 = vpack.c.b16 %v9985, %v9981
        %v10470 = vpack.c.b16 %v9986, %v9982
        %v10471 = vpack.c.b16 %v9987, %v9983
        %v10472 = vpack.c.b16 %v9988, %v9984
        %v10473 = vpack.c.b16 %v9993, %v9989
        %v10474 = vpack.c.b16 %v9994, %v9990
        %v10475 = vpack.c.b16 %v9995, %v9991
        %v10476 = vpack.c.b16 %v9996, %v9992
        %v10477 = vpack.c.b16 %v10001, %v9997
        %v10478 = vpack.c.b16 %v10002, %v9998
        %v10479 = vpack.c.b16 %v10003, %v9999
        %v10480 = vpack.c.b16 %v10004, %v10000
        %v10481 = vpack.c.b16 %v10009, %v10005
        %v10482 = vpack.c.b16 %v10010, %v10006
        %v10483 = vpack.c.b16 %v10011, %v10007
        %v10484 = vpack.c.b16 %v10012, %v10008
        %v10485 = vpack.c.b16 %v10017, %v10013
        %v10486 = vpack.c.b16 %v10018, %v10014
        %v10487 = vpack.c.b16 %v10019, %v10015
        %v10488 = vpack.c.b16 %v10020, %v10016
        %v10489 = vpack.c.b16 %v10025, %v10021
        %v10490 = vpack.c.b16 %v10026, %v10022
        %v10491 = vpack.c.b16 %v10027, %v10023
        %v10492 = vpack.c.b16 %v10028, %v10024
        %v10493 = vpack.c.b16 %v10033, %v10029
        %v10494 = vpack.c.b16 %v10034, %v10030
        %v10495 = vpack.c.b16 %v10035, %v10031
        %v10496 = vpack.c.b16 %v10036, %v10032
        %v10497 = vpack.c.b16 %v10041, %v10037
        %v10498 = vpack.c.b16 %v10042, %v10038
        %v10499 = vpack.c.b16 %v10043, %v10039
        %v10500 = vpack.c.b16 %v10044, %v10040
        %v10501 = vpack.c.b16 %v10049, %v10045
        %v10502 = vpack.c.b16 %v10050, %v10046
        %v10503 = vpack.c.b16 %v10051, %v10047
        %v10504 = vpack.c.b16 %v10052, %v10048
        %v10505 = vpack.c.b16 %v10057, %v10053
        %v10506 = vpack.c.b16 %v10058, %v10054
        %v10507 = vpack.c.b16 %v10059, %v10055
        %v10508 = vpack.c.b16 %v10060, %v10056
        %v10509 = vpack.c.b16 %v10065, %v10061
        %v10510 = vpack.c.b16 %v10066, %v10062
        %v10511 = vpack.c.b16 %v10067, %v10063
        %v10512 = vpack.c.b16 %v10068, %v10064
        %v10513 = vpack.c.b16 %v10073, %v10069
        %v10514 = vpack.c.b16 %v10074, %v10070
        %v10515 = vpack.c.b16 %v10075, %v10071
        %v10516 = vpack.c.b16 %v10076, %v10072
        %v10517 = vpack.c.b16 %v10081, %v10077
        %v10518 = vpack.c.b16 %v10082, %v10078
        %v10519 = vpack.c.b16 %v10083, %v10079
        %v10520 = vpack.c.b16 %v10084, %v10080
        %v10521 = vpack.c.b16 %v10089, %v10085
        %v10522 = vpack.c.b16 %v10090, %v10086
        %v10523 = vpack.c.b16 %v10091, %v10087
        %v10524 = vpack.c.b16 %v10092, %v10088
        %v10525 = vpack.c.b16 %v10097, %v10093
        %v10526 = vpack.c.b16 %v10098, %v10094
        %v10527 = vpack.c.b16 %v10099, %v10095
        %v10528 = vpack.c.b16 %v10100, %v10096
        %v10529 = vpack.c.b16 %v10105, %v10101
        %v10530 = vpack.c.b16 %v10106, %v10102
        %v10531 = vpack.c.b16 %v10107, %v10103
        %v10532 = vpack.c.b16 %v10108, %v10104
        %v10533 = vpack.c.b16 %v10113, %v10109
        %v10534 = vpack.c.b16 %v10114, %v10110
        %v10535 = vpack.c.b16 %v10115, %v10111
        %v10536 = vpack.c.b16 %v10116, %v10112
        %v10537 = vpack.c.b16 %v10121, %v10117
        %v10538 = vpack.c.b16 %v10122, %v10118
        %v10539 = vpack.c.b16 %v10123, %v10119
        %v10540 = vpack.c.b16 %v10124, %v10120
        %v10541 = vpack.c.b16 %v10129, %v10125
        %v10542 = vpack.c.b16 %v10130, %v10126
        %v10543 = vpack.c.b16 %v10131, %v10127
        %v10544 = vpack.c.b16 %v10132, %v10128
        %v10545 = vpack.c.b16 %v10137, %v10133
        %v10546 = vpack.c.b16 %v10138, %v10134
        %v10547 = vpack.c.b16 %v10139, %v10135
        %v10548 = vpack.c.b16 %v10140, %v10136
        %v10549 = vpack.c.b16 %v10145, %v10141
        %v10550 = vpack.c.b16 %v10146, %v10142
        %v10551 = vpack.c.b16 %v10147, %v10143
        %v10552 = vpack.c.b16 %v10148, %v10144
        %v10553 = vpack.c.b16 %v10153, %v10149
        %v10554 = vpack.c.b16 %v10154, %v10150
        %v10555 = vpack.c.b16 %v10155, %v10151
        %v10556 = vpack.c.b16 %v10156, %v10152
        %v10557 = vpack.c.b16 %v10161, %v10157
        %v10558 = vpack.c.b16 %v10162, %v10158
        %v10559 = vpack.c.b16 %v10163, %v10159
        %v10560 = vpack.c.b16 %v10164, %v10160
        %v10561 = vpack.c.b16 %v10169, %v10165
        %v10562 = vpack.c.b16 %v10170, %v10166
        %v10563 = vpack.c.b16 %v10171, %v10167
        %v10564 = vpack.c.b16 %v10172, %v10168
        %v10565 = vpack.c.b16 %v10177, %v10173
        %v10566 = vpack.c.b16 %v10178, %v10174
        %v10567 = vpack.c.b16 %v10179, %v10175
        %v10568 = vpack.c.b16 %v10180, %v10176
        %v10569 = vpack.c.b16 %v10185, %v10181
        %v10570 = vpack.c.b16 %v10186, %v10182
        %v10571 = vpack.c.b16 %v10187, %v10183
        %v10572 = vpack.c.b16 %v10188, %v10184
        %v10573 = vpack.c.b16 %v10193, %v10189
        %v10574 = vpack.c.b16 %v10194, %v10190
        %v10575 = vpack.c.b16 %v10195, %v10191
        %v10576 = vpack.c.b16 %v10196, %v10192
        %v10577 = vpack.c.b16 %v10201, %v10197
        %v10578 = vpack.c.b16 %v10202, %v10198
        %v10579 = vpack.c.b16 %v10203, %v10199
        %v10580 = vpack.c.b16 %v10204, %v10200
        %v10581 = vpack.c.b16 %v10209, %v10205
        %v10582 = vpack.c.b16 %v10210, %v10206
        %v10583 = vpack.c.b16 %v10211, %v10207
        %v10584 = vpack.c.b16 %v10212, %v10208
        %v10585 = vpack.c.b16 %v10217, %v10213
        %v10586 = vpack.c.b16 %v10218, %v10214
        %v10587 = vpack.c.b16 %v10219, %v10215
        %v10588 = vpack.c.b16 %v10220, %v10216
        %v10589 = vpack.c.b16 %v10225, %v10221
        %v10590 = vpack.c.b16 %v10226, %v10222
        %v10591 = vpack.c.b16 %v10227, %v10223
        %v10592 = vpack.c.b16 %v10228, %v10224
        %v10593 = vpack.c.b16 %v10233, %v10229
        %v10594 = vpack.c.b16 %v10234, %v10230
        %v10595 = vpack.c.b16 %v10235, %v10231
        %v10596 = vpack.c.b16 %v10236, %v10232
        %v10597 = vpack.c.b16 %v10241, %v10237
        %v10598 = vpack.c.b16 %v10242, %v10238
        %v10599 = vpack.c.b16 %v10243, %v10239
        %v10600 = vpack.c.b16 %v10244, %v10240
        %v10601 = vpack.c.b16 %v10249, %v10245
        %v10602 = vpack.c.b16 %v10250, %v10246
        %v10603 = vpack.c.b16 %v10251, %v10247
        %v10604 = vpack.c.b16 %v10252, %v10248
        %v10605 = vpack.c.b16 %v10257, %v10253
        %v10606 = vpack.c.b16 %v10258, %v10254
        %v10607 = vpack.c.b16 %v10259, %v10255
        %v10608 = vpack.c.b16 %v10260, %v10256
        %v10609 = vpack.c.b16 %v10265, %v10261
        %v10610 = vpack.c.b16 %v10266, %v10262
        %v10611 = vpack.c.b16 %v10267, %v10263
        %v10612 = vpack.c.b16 %v10268, %v10264
        %v10613 = vpack.c.b16 %v10273, %v10269
        %v10614 = vpack.c.b16 %v10274, %v10270
        %v10615 = vpack.c.b16 %v10275, %v10271
        %v10616 = vpack.c.b16 %v10276, %v10272
        %v10617 = vpack.c.b16 %v10281, %v10277
        %v10618 = vpack.c.b16 %v10282, %v10278
        %v10619 = vpack.c.b16 %v10283, %v10279
        %v10620 = vpack.c.b16 %v10284, %v10280
        %v10621 = vpack.c.b16 %v10289, %v10285
        %v10622 = vpack.c.b16 %v10290, %v10286
        %v10623 = vpack.c.b16 %v10291, %v10287
        %v10624 = vpack.c.b16 %v10292, %v10288
        %v10625 = vpack.c.b16 %v10297, %v10293
        %v10626 = vpack.c.b16 %v10298, %v10294
        %v10627 = vpack.c.b16 %v10299, %v10295
        %v10628 = vpack.c.b16 %v10300, %v10296
        %v10629 = vpack.c.b16 %v10305, %v10301
        %v10630 = vpack.c.b16 %v10306, %v10302
        %v10631 = vpack.c.b16 %v10307, %v10303
        %v10632 = vpack.c.b16 %v10308, %v10304
        %v10633 = vpack.c.b16 %v10313, %v10309
        %v10634 = vpack.c.b16 %v10314, %v10310
        %v10635 = vpack.c.b16 %v10315, %v10311
        %v10636 = vpack.c.b16 %v10316, %v10312
        %v10637 = vpack.c.b16 %v10321, %v10317
        %v10638 = vpack.c.b16 %v10322, %v10318
        %v10639 = vpack.c.b16 %v10323, %v10319
        %v10640 = vpack.c.b16 %v10324, %v10320
        %v10641 = vpack.c.b16 %v10329, %v10325
        %v10642 = vpack.c.b16 %v10330, %v10326
        %v10643 = vpack.c.b16 %v10331, %v10327
        %v10644 = vpack.c.b16 %v10332, %v10328
        %v10645 = vpack.c.b16 %v10337, %v10333
        %v10646 = vpack.c.b16 %v10338, %v10334
        %v10647 = vpack.c.b16 %v10339, %v10335
        %v10648 = vpack.c.b16 %v10340, %v10336
        %v10649 = vpack.c.b16 %v10345, %v10341
        %v10650 = vpack.c.b16 %v10346, %v10342
        %v10651 = vpack.c.b16 %v10347, %v10343
        %v10652 = vpack.c.b16 %v10348, %v10344
        %v10653 = vpack.c.b16 %v10353, %v10349
        %v10654 = vpack.c.b16 %v10354, %v10350
        %v10655 = vpack.c.b16 %v10355, %v10351
        %v10656 = vpack.c.b16 %v10356, %v10352
        %v10657 = vpack.c.b16 %v10361, %v10357
        %v10658 = vpack.c.b16 %v10362, %v10358
        %v10659 = vpack.c.b16 %v10363, %v10359
        %v10660 = vpack.c.b16 %v10364, %v10360
        %v10661 = vpack.c.b16 %v10369, %v10365
        %v10662 = vpack.c.b16 %v10370, %v10366
        %v10663 = vpack.c.b16 %v10371, %v10367
        %v10664 = vpack.c.b16 %v10372, %v10368
        %v10665 = vpack.c.b16 %v10377, %v10373
        %v10666 = vpack.c.b16 %v10378, %v10374
        %v10667 = vpack.c.b16 %v10379, %v10375
        %v10668 = vpack.c.b16 %v10380, %v10376
        %v10669 = vpack.c.b16 %v10385, %v10381
        %v10670 = vpack.c.b16 %v10386, %v10382
        %v10671 = vpack.c.b16 %v10387, %v10383
        %v10672 = vpack.c.b16 %v10388, %v10384
        %v10673 = vpack.c.b16 %v10393, %v10389
        %v10674 = vpack.c.b16 %v10394, %v10390
        %v10675 = vpack.c.b16 %v10395, %v10391
        %v10676 = vpack.c.b16 %v10396, %v10392
        %v10677 = vpack.c.b16 %v10401, %v10397
        %v10678 = vpack.c.b16 %v10402, %v10398
        %v10679 = vpack.c.b16 %v10403, %v10399
        %v10680 = vpack.c.b16 %v10404, %v10400
        %v10681 = vpack.c.b16 %v10409, %v10405
        %v10682 = vpack.c.b16 %v10410, %v10406
        %v10683 = vpack.c.b16 %v10411, %v10407
        %v10684 = vpack.c.b16 %v10412, %v10408
        %v10685 = vpack.c.b16 %v10417, %v10413
        %v10686 = vpack.c.b16 %v10418, %v10414
        %v10687 = vpack.c.b16 %v10419, %v10415
        %v10688 = vpack.c.b16 %v10420, %v10416
        %v10689 = vpack.c.b16 %v10425, %v10421
        %v10690 = vpack.c.b16 %v10426, %v10422
        %v10691 = vpack.c.b16 %v10427, %v10423
        %v10692 = vpack.c.b16 %v10428, %v10424
        %v10693 = vpack.c.b16 %v10433, %v10429
        %v10694 = vpack.c.b16 %v10434, %v10430
        %v10695 = vpack.c.b16 %v10435, %v10431
        %v10696 = vpack.c.b16 %v10436, %v10432
        %v10697 = vpack.c.b16 %v10441, %v10437
        %v10698 = vpack.c.b16 %v10442, %v10438
        %v10699 = vpack.c.b16 %v10443, %v10439
        %v10700 = vpack.c.b16 %v10444, %v10440
        %10957 = vmatprep.subr.bf16.mxu0 %v10474
        %10958 = vmatpush1.bf16.msra.mxu0 %v10473
        %10959 = vmatprep.subr.bf16.mxu0 %v10470
        %10960 = vmatpush1.bf16.msra.mxu0 %v10469
        %10961 = vmatprep.subr.bf16.mxu0 %v10466
        %10962 = vmatpush1.bf16.msra.mxu0 %v10465
        %10963 = vmatprep.subr.bf16.mxu0 %v10462
        %10964 = vmatpush1.bf16.msra.mxu0 %v10461
        %10965 = vmatprep.subr.bf16.mxu0 %v10458
        %10966 = vmatpush1.bf16.msra.mxu0 %v10457
        %10967 = vmatprep.subr.bf16.mxu0 %v10454
        %10968 = vmatpush1.bf16.msra.mxu0 %v10453
        %10969 = vmatprep.subr.bf16.mxu0 %v10450
        %10970 = vmatpush1.bf16.msra.mxu0 %v10449
        %10971 = vmatprep.subr.bf16.mxu0 %v10446
        %10972 = vmatpush1.bf16.msra.mxu0 %v10445
        %10973 = vmatprep.subr.bf16.mxu0 %v10506
        %10974 = vmatpush2.bf16.msra.mxu0 %v10505
        %10975 = vmatprep.subr.bf16.mxu0 %v10502
        %10976 = vmatpush2.bf16.msra.mxu0 %v10501
        %10977 = vmatprep.subr.bf16.mxu0 %v10498
        %10978 = vmatpush2.bf16.msra.mxu0 %v10497
        %10979 = vmatprep.subr.bf16.mxu0 %v10494
        %10980 = vmatpush2.bf16.msra.mxu0 %v10493
        %10981 = vmatprep.subr.bf16.mxu0 %v10490
        %10982 = vmatpush2.bf16.msra.mxu0 %v10489
        %10983 = vmatprep.subr.bf16.mxu0 %v10486
        %10984 = vmatpush2.bf16.msra.mxu0 %v10485
        %10985 = vmatprep.subr.bf16.mxu0 %v10482
        %10986 = vmatpush2.bf16.msra.mxu0 %v10481
        %10987 = vmatprep.subr.bf16.mxu0 %v10478
        %10988 = vmatpush2.bf16.msra.mxu0 %v10477
        %10989 = vmatprep.mubr.bf16.mxu0 %v9392
        %10990 = vmatmul.mubr.bf16.gmra.mxu0 %v9391
        %v10991 = vpop.f32.mrf.mxu0
        %v10992 = vadd.f32 %v9660, %v10991
        %v10993 = vpop.f32.mrf.mxu0
        %v10994 = vadd.f32 %v9664, %v10993
        %v10995 = vpop.f32.mrf.mxu0
        %v10996 = vpop.f32.mrf.mxu0
        %10997 = vdwg.mxu0
        %10998 = vmatprep.subr.bf16.mxu0 %v10538
        %10999 = vmatpush1.bf16.msra.mxu0 %v10537
        %11000 = vmatprep.subr.bf16.mxu0 %v10534
        %11001 = vmatpush1.bf16.msra.mxu0 %v10533
        %11002 = vmatprep.subr.bf16.mxu0 %v10530
        %11003 = vmatpush1.bf16.msra.mxu0 %v10529
        %11004 = vmatprep.subr.bf16.mxu0 %v10526
        %11005 = vmatpush1.bf16.msra.mxu0 %v10525
        %11006 = vmatprep.subr.bf16.mxu0 %v10522
        %11007 = vmatpush1.bf16.msra.mxu0 %v10521
        %11008 = vmatprep.subr.bf16.mxu0 %v10518
        %11009 = vmatpush1.bf16.msra.mxu0 %v10517
        %11010 = vmatprep.subr.bf16.mxu0 %v10514
        %11011 = vmatpush1.bf16.msra.mxu0 %v10513
        %11012 = vmatprep.subr.bf16.mxu0 %v10510
        %11013 = vmatpush1.bf16.msra.mxu0 %v10509
        %11014 = vmatprep.subr.bf16.mxu0 %v10570
        %11015 = vmatpush2.bf16.msra.mxu0 %v10569
        %11016 = vmatprep.subr.bf16.mxu0 %v10566
        %11017 = vmatpush2.bf16.msra.mxu0 %v10565
        %11018 = vmatprep.subr.bf16.mxu0 %v10562
        %11019 = vmatpush2.bf16.msra.mxu0 %v10561
        %11020 = vmatprep.subr.bf16.mxu0 %v10558
        %11021 = vmatpush2.bf16.msra.mxu0 %v10557
        %11022 = vmatprep.subr.bf16.mxu0 %v10554
        %11023 = vmatpush2.bf16.msra.mxu0 %v10553
        %11024 = vmatprep.subr.bf16.mxu0 %v10550
        %11025 = vmatpush2.bf16.msra.mxu0 %v10549
        %11026 = vmatprep.subr.bf16.mxu0 %v10546
        %11027 = vmatpush2.bf16.msra.mxu0 %v10545
        %11028 = vmatprep.subr.bf16.mxu0 %v10542
        %11029 = vmatpush2.bf16.msra.mxu0 %v10541
        %11030 = vmatprep.mubr.bf16.mxu0 %v9394
        %11031 = vmatmul.mubr.bf16.gmra.mxu0 %v9393
        %v11032 = vpop.f32.mrf.mxu0
        %v11033 = vadd.f32 %v10992, %v11032
        %v11034 = vpop.f32.mrf.mxu0
        %v11035 = vadd.f32 %v10994, %v11034
        %v11036 = vpop.f32.mrf.mxu0
        %v11037 = vpop.f32.mrf.mxu0
        %11038 = vdwg.mxu0
        %11039 = vmatprep.subr.bf16.mxu0 %v10602
        %11040 = vmatpush1.bf16.msra.mxu0 %v10601
        %11041 = vmatprep.subr.bf16.mxu0 %v10598
        %11042 = vmatpush1.bf16.msra.mxu0 %v10597
        %11043 = vmatprep.subr.bf16.mxu0 %v10594
        %11044 = vmatpush1.bf16.msra.mxu0 %v10593
        %11045 = vmatprep.subr.bf16.mxu0 %v10590
        %11046 = vmatpush1.bf16.msra.mxu0 %v10589
        %11047 = vmatprep.subr.bf16.mxu0 %v10586
        %11048 = vmatpush1.bf16.msra.mxu0 %v10585
        %11049 = vmatprep.subr.bf16.mxu0 %v10582
        %11050 = vmatpush1.bf16.msra.mxu0 %v10581
        %11051 = vmatprep.subr.bf16.mxu0 %v10578
        %11052 = vmatpush1.bf16.msra.mxu0 %v10577
        %11053 = vmatprep.subr.bf16.mxu0 %v10574
        %11054 = vmatpush1.bf16.msra.mxu0 %v10573
        %11055 = vmatprep.subr.bf16.mxu0 %v10634
        %11056 = vmatpush2.bf16.msra.mxu0 %v10633
        %11057 = vmatprep.subr.bf16.mxu0 %v10630
        %11058 = vmatpush2.bf16.msra.mxu0 %v10629
        %11059 = vmatprep.subr.bf16.mxu0 %v10626
        %11060 = vmatpush2.bf16.msra.mxu0 %v10625
        %11061 = vmatprep.subr.bf16.mxu0 %v10622
        %11062 = vmatpush2.bf16.msra.mxu0 %v10621
        %11063 = vmatprep.subr.bf16.mxu0 %v10618
        %11064 = vmatpush2.bf16.msra.mxu0 %v10617
        %11065 = vmatprep.subr.bf16.mxu0 %v10614
        %11066 = vmatpush2.bf16.msra.mxu0 %v10613
        %11067 = vmatprep.subr.bf16.mxu0 %v10610
        %11068 = vmatpush2.bf16.msra.mxu0 %v10609
        %11069 = vmatprep.subr.bf16.mxu0 %v10606
        %11070 = vmatpush2.bf16.msra.mxu0 %v10605
        %11071 = vmatprep.mubr.bf16.mxu0 %v9396
        %11072 = vmatmul.mubr.bf16.gmra.mxu0 %v9395
        %v11073 = vpop.f32.mrf.mxu0
        %v11074 = vadd.f32 %v11033, %v11073
        %v11075 = vpop.f32.mrf.mxu0
        %v11076 = vadd.f32 %v11035, %v11075
        %v11077 = vpop.f32.mrf.mxu0
        %v11078 = vpop.f32.mrf.mxu0
        %11079 = vdwg.mxu0
        %11080 = vmatprep.subr.bf16.mxu0 %v10666
        %11081 = vmatpush1.bf16.msra.mxu0 %v10665
        %11082 = vmatprep.subr.bf16.mxu0 %v10662
        %11083 = vmatpush1.bf16.msra.mxu0 %v10661
        %11084 = vmatprep.subr.bf16.mxu0 %v10658
        %11085 = vmatpush1.bf16.msra.mxu0 %v10657
        %11086 = vmatprep.subr.bf16.mxu0 %v10654
        %11087 = vmatpush1.bf16.msra.mxu0 %v10653
        %11088 = vmatprep.subr.bf16.mxu0 %v10650
        %11089 = vmatpush1.bf16.msra.mxu0 %v10649
        %11090 = vmatprep.subr.bf16.mxu0 %v10646
        %11091 = vmatpush1.bf16.msra.mxu0 %v10645
        %11092 = vmatprep.subr.bf16.mxu0 %v10642
        %11093 = vmatpush1.bf16.msra.mxu0 %v10641
        %11094 = vmatprep.subr.bf16.mxu0 %v10638
        %11095 = vmatpush1.bf16.msra.mxu0 %v10637
        %11096 = vmatprep.subr.bf16.mxu0 %v10698
        %11097 = vmatpush2.bf16.msra.mxu0 %v10697
        %11098 = vmatprep.subr.bf16.mxu0 %v10694
        %11099 = vmatpush2.bf16.msra.mxu0 %v10693
        %11100 = vmatprep.subr.bf16.mxu0 %v10690
        %11101 = vmatpush2.bf16.msra.mxu0 %v10689
        %11102 = vmatprep.subr.bf16.mxu0 %v10686
        %11103 = vmatpush2.bf16.msra.mxu0 %v10685
        %11104 = vmatprep.subr.bf16.mxu0 %v10682
        %11105 = vmatpush2.bf16.msra.mxu0 %v10681
        %11106 = vmatprep.subr.bf16.mxu0 %v10678
        %11107 = vmatpush2.bf16.msra.mxu0 %v10677
        %11108 = vmatprep.subr.bf16.mxu0 %v10674
        %11109 = vmatpush2.bf16.msra.mxu0 %v10673
        %11110 = vmatprep.subr.bf16.mxu0 %v10670
        %11111 = vmatpush2.bf16.msra.mxu0 %v10669
        %11112 = vmatprep.mubr.bf16.mxu0 %v9398
        %11113 = vmatmul.mubr.bf16.gmra.mxu0 %v9397
        %v11114 = vpop.f32.mrf.mxu0
        %v11115 = vadd.f32 %v11074, %v11114
        %v11116 = vpop.f32.mrf.mxu0
        %v11117 = vadd.f32 %v11076, %v11116
        %v11118 = vpop.f32.mrf.mxu0
        %v11119 = vpop.f32.mrf.mxu0
        %11120 = vdwg.mxu0
        %11121 = vmatprep.subr.bf16.mxu0 %v10476
        %11122 = vmatpush1.bf16.msra.mxu0 %v10475
        %11123 = vmatprep.subr.bf16.mxu0 %v10472
        %11124 = vmatpush1.bf16.msra.mxu0 %v10471
        %11125 = vmatprep.subr.bf16.mxu0 %v10468
        %11126 = vmatpush1.bf16.msra.mxu0 %v10467
        %11127 = vmatprep.subr.bf16.mxu0 %v10464
        %11128 = vmatpush1.bf16.msra.mxu0 %v10463
        %11129 = vmatprep.subr.bf16.mxu0 %v10460
        %11130 = vmatpush1.bf16.msra.mxu0 %v10459
        %11131 = vmatprep.subr.bf16.mxu0 %v10456
        %11132 = vmatpush1.bf16.msra.mxu0 %v10455
        %11133 = vmatprep.subr.bf16.mxu0 %v10452
        %11134 = vmatpush1.bf16.msra.mxu0 %v10451
        %11135 = vmatprep.subr.bf16.mxu0 %v10448
        %11136 = vmatpush1.bf16.msra.mxu0 %v10447
        %11137 = vmatprep.subr.bf16.mxu0 %v10508
        %11138 = vmatpush2.bf16.msra.mxu0 %v10507
        %11139 = vmatprep.subr.bf16.mxu0 %v10504
        %11140 = vmatpush2.bf16.msra.mxu0 %v10503
        %11141 = vmatprep.subr.bf16.mxu0 %v10500
        %11142 = vmatpush2.bf16.msra.mxu0 %v10499
        %11143 = vmatprep.subr.bf16.mxu0 %v10496
        %11144 = vmatpush2.bf16.msra.mxu0 %v10495
        %11145 = vmatprep.subr.bf16.mxu0 %v10492
        %11146 = vmatpush2.bf16.msra.mxu0 %v10491
        %11147 = vmatprep.subr.bf16.mxu0 %v10488
        %11148 = vmatpush2.bf16.msra.mxu0 %v10487
        %11149 = vmatprep.subr.bf16.mxu0 %v10484
        %11150 = vmatpush2.bf16.msra.mxu0 %v10483
        %11151 = vmatprep.subr.bf16.mxu0 %v10480
        %11152 = vmatpush2.bf16.msra.mxu0 %v10479
        %11153 = vmatprep.mubr.bf16.mxu0 %v9392
        %11154 = vmatmul.mubr.bf16.gmra.mxu0 %v9391
        %v11155 = vpop.f32.mrf.mxu0
        %v11156 = vadd.f32 %v9668, %v11155
        %v11157 = vpop.f32.mrf.mxu0
        %v11158 = vadd.f32 %v9672, %v11157
        %v11159 = vpop.f32.mrf.mxu0
        %v11160 = vpop.f32.mrf.mxu0
        %11161 = vdwg.mxu0
        %11162 = vmatprep.subr.bf16.mxu0 %v10540
        %11163 = vmatpush1.bf16.msra.mxu0 %v10539
        %11164 = vmatprep.subr.bf16.mxu0 %v10536
        %11165 = vmatpush1.bf16.msra.mxu0 %v10535
        %11166 = vmatprep.subr.bf16.mxu0 %v10532
        %11167 = vmatpush1.bf16.msra.mxu0 %v10531
        %11168 = vmatprep.subr.bf16.mxu0 %v10528
        %11169 = vmatpush1.bf16.msra.mxu0 %v10527
        %11170 = vmatprep.subr.bf16.mxu0 %v10524
        %11171 = vmatpush1.bf16.msra.mxu0 %v10523
        %11172 = vmatprep.subr.bf16.mxu0 %v10520
        %11173 = vmatpush1.bf16.msra.mxu0 %v10519
        %11174 = vmatprep.subr.bf16.mxu0 %v10516
        %11175 = vmatpush1.bf16.msra.mxu0 %v10515
        %11176 = vmatprep.subr.bf16.mxu0 %v10512
        %11177 = vmatpush1.bf16.msra.mxu0 %v10511
        %11178 = vmatprep.subr.bf16.mxu0 %v10572
        %11179 = vmatpush2.bf16.msra.mxu0 %v10571
        %11180 = vmatprep.subr.bf16.mxu0 %v10568
        %11181 = vmatpush2.bf16.msra.mxu0 %v10567
        %11182 = vmatprep.subr.bf16.mxu0 %v10564
        %11183 = vmatpush2.bf16.msra.mxu0 %v10563
        %11184 = vmatprep.subr.bf16.mxu0 %v10560
        %11185 = vmatpush2.bf16.msra.mxu0 %v10559
        %11186 = vmatprep.subr.bf16.mxu0 %v10556
        %11187 = vmatpush2.bf16.msra.mxu0 %v10555
        %11188 = vmatprep.subr.bf16.mxu0 %v10552
        %11189 = vmatpush2.bf16.msra.mxu0 %v10551
        %11190 = vmatprep.subr.bf16.mxu0 %v10548
        %11191 = vmatpush2.bf16.msra.mxu0 %v10547
        %11192 = vmatprep.subr.bf16.mxu0 %v10544
        %11193 = vmatpush2.bf16.msra.mxu0 %v10543
        %11194 = vmatprep.mubr.bf16.mxu0 %v9394
        %11195 = vmatmul.mubr.bf16.gmra.mxu0 %v9393
        %v11196 = vpop.f32.mrf.mxu0
        %v11197 = vadd.f32 %v11156, %v11196
        %v11198 = vpop.f32.mrf.mxu0
        %v11199 = vadd.f32 %v11158, %v11198
        %v11200 = vpop.f32.mrf.mxu0
        %v11201 = vpop.f32.mrf.mxu0
        %11202 = vdwg.mxu0
        %11203 = vmatprep.subr.bf16.mxu0 %v10604
        %11204 = vmatpush1.bf16.msra.mxu0 %v10603
        %11205 = vmatprep.subr.bf16.mxu0 %v10600
        %11206 = vmatpush1.bf16.msra.mxu0 %v10599
        %11207 = vmatprep.subr.bf16.mxu0 %v10596
        %11208 = vmatpush1.bf16.msra.mxu0 %v10595
        %11209 = vmatprep.subr.bf16.mxu0 %v10592
        %11210 = vmatpush1.bf16.msra.mxu0 %v10591
        %11211 = vmatprep.subr.bf16.mxu0 %v10588
        %11212 = vmatpush1.bf16.msra.mxu0 %v10587
        %11213 = vmatprep.subr.bf16.mxu0 %v10584
        %11214 = vmatpush1.bf16.msra.mxu0 %v10583
        %11215 = vmatprep.subr.bf16.mxu0 %v10580
        %11216 = vmatpush1.bf16.msra.mxu0 %v10579
        %11217 = vmatprep.subr.bf16.mxu0 %v10576
        %11218 = vmatpush1.bf16.msra.mxu0 %v10575
        %11219 = vmatprep.subr.bf16.mxu0 %v10636
        %11220 = vmatpush2.bf16.msra.mxu0 %v10635
        %11221 = vmatprep.subr.bf16.mxu0 %v10632
        %11222 = vmatpush2.bf16.msra.mxu0 %v10631
        %11223 = vmatprep.subr.bf16.mxu0 %v10628
        %11224 = vmatpush2.bf16.msra.mxu0 %v10627
        %11225 = vmatprep.subr.bf16.mxu0 %v10624
        %11226 = vmatpush2.bf16.msra.mxu0 %v10623
        %11227 = vmatprep.subr.bf16.mxu0 %v10620
        %11228 = vmatpush2.bf16.msra.mxu0 %v10619
        %11229 = vmatprep.subr.bf16.mxu0 %v10616
        %11230 = vmatpush2.bf16.msra.mxu0 %v10615
        %11231 = vmatprep.subr.bf16.mxu0 %v10612
        %11232 = vmatpush2.bf16.msra.mxu0 %v10611
        %11233 = vmatprep.subr.bf16.mxu0 %v10608
        %11234 = vmatpush2.bf16.msra.mxu0 %v10607
        %11235 = vmatprep.mubr.bf16.mxu0 %v9396
        %11236 = vmatmul.mubr.bf16.gmra.mxu0 %v9395
        %v11237 = vpop.f32.mrf.mxu0
        %v11238 = vadd.f32 %v11197, %v11237
        %v11239 = vpop.f32.mrf.mxu0
        %v11240 = vadd.f32 %v11199, %v11239
        %v11241 = vpop.f32.mrf.mxu0
        %v11242 = vpop.f32.mrf.mxu0
        %11243 = vdwg.mxu0
        %11244 = vmatprep.subr.bf16.mxu0 %v10668
        %11245 = vmatpush1.bf16.msra.mxu0 %v10667
        %11246 = vmatprep.subr.bf16.mxu0 %v10664
        %11247 = vmatpush1.bf16.msra.mxu0 %v10663
        %11248 = vmatprep.subr.bf16.mxu0 %v10660
        %11249 = vmatpush1.bf16.msra.mxu0 %v10659
        %11250 = vmatprep.subr.bf16.mxu0 %v10656
        %11251 = vmatpush1.bf16.msra.mxu0 %v10655
        %11252 = vmatprep.subr.bf16.mxu0 %v10652
        %11253 = vmatpush1.bf16.msra.mxu0 %v10651
        %11254 = vmatprep.subr.bf16.mxu0 %v10648
        %11255 = vmatpush1.bf16.msra.mxu0 %v10647
        %11256 = vmatprep.subr.bf16.mxu0 %v10644
        %11257 = vmatpush1.bf16.msra.mxu0 %v10643
        %11258 = vmatprep.subr.bf16.mxu0 %v10640
        %11259 = vmatpush1.bf16.msra.mxu0 %v10639
        %11260 = vmatprep.subr.bf16.mxu0 %v10700
        %11261 = vmatpush2.bf16.msra.mxu0 %v10699
        %11262 = vmatprep.subr.bf16.mxu0 %v10696
        %11263 = vmatpush2.bf16.msra.mxu0 %v10695
        %11264 = vmatprep.subr.bf16.mxu0 %v10692
        %11265 = vmatpush2.bf16.msra.mxu0 %v10691
        %11266 = vmatprep.subr.bf16.mxu0 %v10688
        %11267 = vmatpush2.bf16.msra.mxu0 %v10687
        %11268 = vmatprep.subr.bf16.mxu0 %v10684
        %11269 = vmatpush2.bf16.msra.mxu0 %v10683
        %11270 = vmatprep.subr.bf16.mxu0 %v10680
        %11271 = vmatpush2.bf16.msra.mxu0 %v10679
        %11272 = vmatprep.subr.bf16.mxu0 %v10676
        %11273 = vmatpush2.bf16.msra.mxu0 %v10675
        %11274 = vmatprep.subr.bf16.mxu0 %v10672
        %11275 = vmatpush2.bf16.msra.mxu0 %v10671
        %11276 = vmatprep.mubr.bf16.mxu0 %v9398
        %11277 = vmatmul.mubr.bf16.gmra.mxu0 %v9397
        %v11278 = vpop.f32.mrf.mxu0
        %v11279 = vadd.f32 %v11238, %v11278
        %v11280 = vpop.f32.mrf.mxu0
        %v11281 = vadd.f32 %v11240, %v11280
        %v11282 = vpop.f32.mrf.mxu0
        %v11283 = vpop.f32.mrf.mxu0
        %11284 = vdwg.mxu0
        %v11285 = vmax.f32 %v11115, 0.0
        %v11286 = vmax.f32 %v11117, 0.0
        %v11287 = vmax.f32 %v11279, 0.0
        %v11288 = vmax.f32 %v11281, 0.0
        %v11289 = vpack.c.bf16 %v11285, %v11285
        %v11290 = vpack.c.bf16 %v11286, %v11286
        %v11291 = vpack.c.bf16 %v11287, %v11287
        %v11292 = vpack.c.bf16 %v11288, %v11288
        %v11293 = vld [vmem:[%s659] sm:$0xf]
        %v11294 = vld [vmem:[%s659 + $0x4] sm:$0xf]
        %v11295 = vld [vmem:[%s659 + $0x8] sm:$0xf]
        %v11296 = vld [vmem:[%s659 + $0xc] sm:$0xf]
        %v11297 = vld [vmem:[%s659 + $0x10] sm:$0xf]
        %v11298 = vld [vmem:[%s659 + $0x14] sm:$0xf]
        %v11299 = vld [vmem:[%s659 + $0x18] sm:$0xf]
        %v11300 = vld [vmem:[%s659 + $0x1c] sm:$0xf]
        %v11301 = vld [vmem:[%s659 + $0x20] sm:$0xf]
        %v11302 = vld [vmem:[%s659 + $0x24] sm:$0xf]
        %v11303 = vld [vmem:[%s659 + $0x28] sm:$0xf]
        %v11304 = vld [vmem:[%s659 + $0x2c] sm:$0xf]
        %v11305 = vld [vmem:[%s659 + $0x30] sm:$0xf]
        %v11306 = vld [vmem:[%s659 + $0x34] sm:$0xf]
        %v11307 = vld [vmem:[%s659 + $0x38] sm:$0xf]
        %v11308 = vld [vmem:[%s659 + $0x3c] sm:$0xf]
        %v11309 = vld [vmem:[%s659 + $0x40] sm:$0xf]
        %v11310 = vld [vmem:[%s659 + $0x44] sm:$0xf]
        %v11311 = vld [vmem:[%s659 + $0x48] sm:$0xf]
        %v11312 = vld [vmem:[%s659 + $0x4c] sm:$0xf]
        %v11313 = vld [vmem:[%s659 + $0x50] sm:$0xf]
        %v11314 = vld [vmem:[%s659 + $0x54] sm:$0xf]
        %v11315 = vld [vmem:[%s659 + $0x58] sm:$0xf]
        %v11316 = vld [vmem:[%s659 + $0x5c] sm:$0xf]
        %v11317 = vld [vmem:[%s659 + $0x60] sm:$0xf]
        %v11318 = vld [vmem:[%s659 + $0x64] sm:$0xf]
        %v11319 = vld [vmem:[%s659 + $0x68] sm:$0xf]
        %v11320 = vld [vmem:[%s659 + $0x6c] sm:$0xf]
        %v11321 = vld [vmem:[%s659 + $0x70] sm:$0xf]
        %v11322 = vld [vmem:[%s659 + $0x74] sm:$0xf]
        %v11323 = vld [vmem:[%s659 + $0x78] sm:$0xf]
        %v11324 = vld [vmem:[%s659 + $0x7c] sm:$0xf]
        %v11325 = vld [vmem:[%s659 + $0x80] sm:$0xf]
        %v11326 = vld [vmem:[%s659 + $0x84] sm:$0xf]
        %v11327 = vld [vmem:[%s659 + $0x88] sm:$0xf]
        %v11328 = vld [vmem:[%s659 + $0x8c] sm:$0xf]
        %v11329 = vld [vmem:[%s659 + $0x90] sm:$0xf]
        %v11330 = vld [vmem:[%s659 + $0x94] sm:$0xf]
        %v11331 = vld [vmem:[%s659 + $0x98] sm:$0xf]
        %v11332 = vld [vmem:[%s659 + $0x9c] sm:$0xf]
        %v11333 = vld [vmem:[%s659 + $0xa0] sm:$0xf]
        %v11334 = vld [vmem:[%s659 + $0xa4] sm:$0xf]
        %v11335 = vld [vmem:[%s659 + $0xa8] sm:$0xf]
        %v11336 = vld [vmem:[%s659 + $0xac] sm:$0xf]
        %v11337 = vld [vmem:[%s659 + $0xb0] sm:$0xf]
        %v11338 = vld [vmem:[%s659 + $0xb4] sm:$0xf]
        %v11339 = vld [vmem:[%s659 + $0xb8] sm:$0xf]
        %v11340 = vld [vmem:[%s659 + $0xbc] sm:$0xf]
        %v11341 = vld [vmem:[%s659 + $0xc0] sm:$0xf]
        %v11342 = vld [vmem:[%s659 + $0xc4] sm:$0xf]
        %v11343 = vld [vmem:[%s659 + $0xc8] sm:$0xf]
        %v11344 = vld [vmem:[%s659 + $0xcc] sm:$0xf]
        %v11345 = vld [vmem:[%s659 + $0xd0] sm:$0xf]
        %v11346 = vld [vmem:[%s659 + $0xd4] sm:$0xf]
        %v11347 = vld [vmem:[%s659 + $0xd8] sm:$0xf]
        %v11348 = vld [vmem:[%s659 + $0xdc] sm:$0xf]
        %v11349 = vld [vmem:[%s659 + $0xe0] sm:$0xf]
        %v11350 = vld [vmem:[%s659 + $0xe4] sm:$0xf]
        %v11351 = vld [vmem:[%s659 + $0xe8] sm:$0xf]
        %v11352 = vld [vmem:[%s659 + $0xec] sm:$0xf]
        %v11353 = vld [vmem:[%s659 + $0xf0] sm:$0xf]
        %v11354 = vld [vmem:[%s659 + $0xf4] sm:$0xf]
        %v11355 = vld [vmem:[%s659 + $0xf8] sm:$0xf]
        %v11356 = vld [vmem:[%s659 + $0xfc] sm:$0xf]
        %v11357 = vld [vmem:[%s567] sm:$0x1]
        %v11359 = vlaneseq
        %v11360 = vshrl.u32 %v11359, 7
        %v11361 = vsub.s32 0, %v11360
        %v11362 = vrot.slane %v11357, %v11361
        %v11428 = vunpack.c.l.b16 %v11293
        %v11429 = vunpack.c.l.b16 %v11294
        %v11430 = vunpack.c.l.b16 %v11295
        %v11431 = vunpack.c.l.b16 %v11296
        %v11432 = vunpack.c.l.b16 %v11297
        %v11433 = vunpack.c.l.b16 %v11298
        %v11434 = vunpack.c.l.b16 %v11299
        %v11435 = vunpack.c.l.b16 %v11300
        %v11436 = vunpack.c.l.b16 %v11301
        %v11437 = vunpack.c.l.b16 %v11302
        %v11438 = vunpack.c.l.b16 %v11303
        %v11439 = vunpack.c.l.b16 %v11304
        %v11440 = vunpack.c.l.b16 %v11305
        %v11441 = vunpack.c.l.b16 %v11306
        %v11442 = vunpack.c.l.b16 %v11307
        %v11443 = vunpack.c.l.b16 %v11308
        %v11444 = vunpack.c.l.b16 %v11309
        %v11445 = vunpack.c.l.b16 %v11310
        %v11446 = vunpack.c.l.b16 %v11311
        %v11447 = vunpack.c.l.b16 %v11312
        %v11448 = vunpack.c.l.b16 %v11313
        %v11449 = vunpack.c.l.b16 %v11314
        %v11450 = vunpack.c.l.b16 %v11315
        %v11451 = vunpack.c.l.b16 %v11316
        %v11452 = vunpack.c.l.b16 %v11317
        %v11453 = vunpack.c.l.b16 %v11318
        %v11454 = vunpack.c.l.b16 %v11319
        %v11455 = vunpack.c.l.b16 %v11320
        %v11456 = vunpack.c.l.b16 %v11321
        %v11457 = vunpack.c.l.b16 %v11322
        %v11458 = vunpack.c.l.b16 %v11323
        %v11459 = vunpack.c.l.b16 %v11324
        %v11460 = vunpack.c.l.b16 %v11325
        %v11461 = vunpack.c.l.b16 %v11326
        %v11462 = vunpack.c.l.b16 %v11327
        %v11463 = vunpack.c.l.b16 %v11328
        %v11464 = vunpack.c.l.b16 %v11329
        %v11465 = vunpack.c.l.b16 %v11330
        %v11466 = vunpack.c.l.b16 %v11331
        %v11467 = vunpack.c.l.b16 %v11332
        %v11468 = vunpack.c.l.b16 %v11333
        %v11469 = vunpack.c.l.b16 %v11334
        %v11470 = vunpack.c.l.b16 %v11335
        %v11471 = vunpack.c.l.b16 %v11336
        %v11472 = vunpack.c.l.b16 %v11337
        %v11473 = vunpack.c.l.b16 %v11338
        %v11474 = vunpack.c.l.b16 %v11339
        %v11475 = vunpack.c.l.b16 %v11340
        %v11476 = vunpack.c.l.b16 %v11341
        %v11477 = vunpack.c.l.b16 %v11342
        %v11478 = vunpack.c.l.b16 %v11343
        %v11479 = vunpack.c.l.b16 %v11344
        %v11480 = vunpack.c.l.b16 %v11345
        %v11481 = vunpack.c.l.b16 %v11346
        %v11482 = vunpack.c.l.b16 %v11347
        %v11483 = vunpack.c.l.b16 %v11348
        %v11484 = vunpack.c.l.b16 %v11349
        %v11485 = vunpack.c.l.b16 %v11350
        %v11486 = vunpack.c.l.b16 %v11351
        %v11487 = vunpack.c.l.b16 %v11352
        %v11488 = vunpack.c.l.b16 %v11353
        %v11489 = vunpack.c.l.b16 %v11354
        %v11490 = vunpack.c.l.b16 %v11355
        %v11491 = vunpack.c.l.b16 %v11356
        %v11492 = vpack.c.b16 %v11429, %v11428
        %v11493 = vpack.c.b16 %v11431, %v11430
        %v11494 = vpack.c.b16 %v11433, %v11432
        %v11495 = vpack.c.b16 %v11435, %v11434
        %v11496 = vpack.c.b16 %v11437, %v11436
        %v11497 = vpack.c.b16 %v11439, %v11438
        %v11498 = vpack.c.b16 %v11441, %v11440
        %v11499 = vpack.c.b16 %v11443, %v11442
        %v11500 = vpack.c.b16 %v11445, %v11444
        %v11501 = vpack.c.b16 %v11447, %v11446
        %v11502 = vpack.c.b16 %v11449, %v11448
        %v11503 = vpack.c.b16 %v11451, %v11450
        %v11504 = vpack.c.b16 %v11453, %v11452
        %v11505 = vpack.c.b16 %v11455, %v11454
        %v11506 = vpack.c.b16 %v11457, %v11456
        %v11507 = vpack.c.b16 %v11459, %v11458
        %v11508 = vpack.c.b16 %v11461, %v11460
        %v11509 = vpack.c.b16 %v11463, %v11462
        %v11510 = vpack.c.b16 %v11465, %v11464
        %v11511 = vpack.c.b16 %v11467, %v11466
        %v11512 = vpack.c.b16 %v11469, %v11468
        %v11513 = vpack.c.b16 %v11471, %v11470
        %v11514 = vpack.c.b16 %v11473, %v11472
        %v11515 = vpack.c.b16 %v11475, %v11474
        %v11516 = vpack.c.b16 %v11477, %v11476
        %v11517 = vpack.c.b16 %v11479, %v11478
        %v11518 = vpack.c.b16 %v11481, %v11480
        %v11519 = vpack.c.b16 %v11483, %v11482
        %v11520 = vpack.c.b16 %v11485, %v11484
        %v11521 = vpack.c.b16 %v11487, %v11486
        %v11522 = vpack.c.b16 %v11489, %v11488
        %v11523 = vpack.c.b16 %v11491, %v11490
        %11556 = vmatprep.subr.bf16.mxu0 0
        %11557 = vmatpush1.bf16.msra.mxu0 %v11499
        %11558 = vmatprep.subr.bf16.mxu0 0
        %11559 = vmatpush1.bf16.msra.mxu0 %v11498
        %11560 = vmatprep.subr.bf16.mxu0 0
        %11561 = vmatpush1.bf16.msra.mxu0 %v11497
        %11562 = vmatprep.subr.bf16.mxu0 0
        %11563 = vmatpush1.bf16.msra.mxu0 %v11496
        %11564 = vmatprep.subr.bf16.mxu0 0
        %11565 = vmatpush1.bf16.msra.mxu0 %v11495
        %11566 = vmatprep.subr.bf16.mxu0 0
        %11567 = vmatpush1.bf16.msra.mxu0 %v11494
        %11568 = vmatprep.subr.bf16.mxu0 0
        %11569 = vmatpush1.bf16.msra.mxu0 %v11493
        %11570 = vmatprep.subr.bf16.mxu0 0
        %11571 = vmatpush1.bf16.msra.mxu0 %v11492
        %11572 = vmatprep.subr.bf16.mxu0 0
        %11573 = vmatpush2.bf16.msra.mxu0 %v11507
        %11574 = vmatprep.subr.bf16.mxu0 0
        %11575 = vmatpush2.bf16.msra.mxu0 %v11506
        %11576 = vmatprep.subr.bf16.mxu0 0
        %11577 = vmatpush2.bf16.msra.mxu0 %v11505
        %11578 = vmatprep.subr.bf16.mxu0 0
        %11579 = vmatpush2.bf16.msra.mxu0 %v11504
        %11580 = vmatprep.subr.bf16.mxu0 0
        %11581 = vmatpush2.bf16.msra.mxu0 %v11503
        %11582 = vmatprep.subr.bf16.mxu0 0
        %11583 = vmatpush2.bf16.msra.mxu0 %v11502
        %11584 = vmatprep.subr.bf16.mxu0 0
        %11585 = vmatpush2.bf16.msra.mxu0 %v11501
        %11586 = vmatprep.subr.bf16.mxu0 0
        %11587 = vmatpush2.bf16.msra.mxu0 %v11500
        %11588 = vmatprep.mubr.bf16.mxu0 %v11290
        %11589 = vmatmul.mubr.bf16.gmra.mxu0 %v11289
        %v11590 = vpop.f32.mrf.mxu0
        %v11591 = vadd.f32 %v11362, %v11590
        %v11592 = vpop.f32.mrf.mxu0
        %v11593 = vpop.f32.mrf.mxu0
        %v11594 = vpop.f32.mrf.mxu0
        %11595 = vdwg.mxu0
        %11596 = vmatprep.subr.bf16.mxu0 0
        %11597 = vmatpush1.bf16.msra.mxu0 %v11515
        %11598 = vmatprep.subr.bf16.mxu0 0
        %11599 = vmatpush1.bf16.msra.mxu0 %v11514
        %11600 = vmatprep.subr.bf16.mxu0 0
        %11601 = vmatpush1.bf16.msra.mxu0 %v11513
        %11602 = vmatprep.subr.bf16.mxu0 0
        %11603 = vmatpush1.bf16.msra.mxu0 %v11512
        %11604 = vmatprep.subr.bf16.mxu0 0
        %11605 = vmatpush1.bf16.msra.mxu0 %v11511
        %11606 = vmatprep.subr.bf16.mxu0 0
        %11607 = vmatpush1.bf16.msra.mxu0 %v11510
        %11608 = vmatprep.subr.bf16.mxu0 0
        %11609 = vmatpush1.bf16.msra.mxu0 %v11509
        %11610 = vmatprep.subr.bf16.mxu0 0
        %11611 = vmatpush1.bf16.msra.mxu0 %v11508
        %11612 = vmatprep.subr.bf16.mxu0 0
        %11613 = vmatpush2.bf16.msra.mxu0 %v11523
        %11614 = vmatprep.subr.bf16.mxu0 0
        %11615 = vmatpush2.bf16.msra.mxu0 %v11522
        %11616 = vmatprep.subr.bf16.mxu0 0
        %11617 = vmatpush2.bf16.msra.mxu0 %v11521
        %11618 = vmatprep.subr.bf16.mxu0 0
        %11619 = vmatpush2.bf16.msra.mxu0 %v11520
        %11620 = vmatprep.subr.bf16.mxu0 0
        %11621 = vmatpush2.bf16.msra.mxu0 %v11519
        %11622 = vmatprep.subr.bf16.mxu0 0
        %11623 = vmatpush2.bf16.msra.mxu0 %v11518
        %11624 = vmatprep.subr.bf16.mxu0 0
        %11625 = vmatpush2.bf16.msra.mxu0 %v11517
        %11626 = vmatprep.subr.bf16.mxu0 0
        %11627 = vmatpush2.bf16.msra.mxu0 %v11516
        %11628 = vmatprep.mubr.bf16.mxu0 %v11292
        %11629 = vmatmul.mubr.bf16.gmra.mxu0 %v11291
        %v11630 = vpop.f32.mrf.mxu0
        %v11631 = vadd.f32 %v11591, %v11630
        %v11632 = vpop.f32.mrf.mxu0
        %v11633 = vpop.f32.mrf.mxu0
        %v11634 = vpop.f32.mrf.mxu0
        %11635 = vdwg.mxu0
        %v11636 = vmax.f32 %v11631, 0.0
        %v11637 = vld [vmem:[%s575] sm:$0x1]
        %v11639 = vlaneseq
        %v11640 = vshrl.u32 %v11639, 7
        %v11641 = vsub.s32 0, %v11640
        %v11642 = vrot.slane %v11637, %v11641
        %v11644 = vmul.f32 %v11636, %v11642
        %vm11645 = vcmask 523264
        %v11646 = vsel %vm11645, %v11644, 0.0
        %11647 = vadd.xlane.f32.xlu0 %v11646
        %v11648 = vpop.xlane.xlu0 %11647
        %v11649 = vld [vmem:[%s662] sm:$0x1]
        %v11651 = vlaneseq
        %v11652 = vshrl.u32 %v11651, 7
        %v11653 = vsub.s32 0, %v11652
        %v11654 = vrot.slane %v11649, %v11653
        %v11656 = vadd.f32 %v11648, %v11654
        %v11657 = vxor.u32 %v11656, 2147483648
        %v11658 = vmul.f32 %v11657, 1.442695
        %v11659 = vpow.pop %v11658
        %v11660 = vadd.f32 %v11659, 1.0
        %v11661 = vrcp.pop %v11660
        %v11662 = vmul.f32 1.0, %v11661
        %vm11663 = vcmask 7168
        %11664 = vst.msk [vmem:[%s669] sm:$0xff] %vm11663, %v11662
        %p11665 = scmp.lt.s32.totalorder %s28, 1
        %s11666 = scalar_select %p11665, %s28, 1
        %p11667 = scmp.lt.s32.totalorder %s29, 0
        %s11668 = scalar_select %p11667, %s29, 0
        %s11669 = sadd.s32 %s11668, %s11666
        %s11670 = smul.addr %s11669, 8
        %s11671 = scalar_lea.vmem %s11, %s11670
        // Predicated region
        $region97: #{weight_score_forward.1} parent=63 // pred_check
          %p11672 = pneg %p332
        $region98: #{weight_score_forward.1} parent=63 // pred_check_branch
          %11674 = sbr.rel (%p11672) target = $region100
        $region99: #{weight_score_forward.1} parent=63 // pred_region
          _
        $region100: #{weight_score_forward.1} parent=63 // pred_fallthru
          _
      $region64: #{weight_score_forward.1} parent=5 // pred_fallthru
        _
      %p11675 = scmp.le.s32.totalorder 2, %s19
      // Predicated region
      $region101: #{weight_score_forward.1} parent=5 // pred_check
        %p11676 = pneg %p11675
      $region102: #{weight_score_forward.1} parent=5 // pred_check_branch
        %11678 = sbr.rel (%p11676) target = $region104
      $region103: #{weight_score_forward.1} parent=5 // pred_region
        %s11679 = ssub.s32 %s19, 2
        // Predicated region
        $region105: #{weight_score_forward.1} parent=103 // pred_check
          %p11680 = pneg %p338
        $region106: #{weight_score_forward.1} parent=103 // pred_check_branch
          %11682 = sbr.rel (%p11680) target = $region108
        $region107: #{weight_score_forward.1} parent=103 // pred_region
          %p11683 = scmp.lt.s32.totalorder %s30, 1
          %s11684 = scalar_select %p11683, %s30, 1
          %p11685 = scmp.lt.s32.totalorder %s31, 0
          %s11686 = scalar_select %p11685, %s31, 0
          %s11687 = sadd.s32 %s11686, %s11684
          %s11688 = smul.addr %s11687, 8
          %s11689 = scalar_lea.vmem %s11, %s11688
        $region108: #{weight_score_forward.1} parent=103 // pred_fallthru
          _
      $region104: #{weight_score_forward.1} parent=5 // pred_fallthru
        _
    $region6: #{weight_score_forward.1} parent=1 // loop_footer
      %s23 = sadd.s32 1, %s19
    $region7: #{weight_score_forward.1} parent=1 // loop_footer_branch
      %18 = sbr.rel target = $region3
    $region8: #{weight_score_forward.1} parent=1 // loop_exit
      _
    %11690 = vsyncpa [#allocation3], 1
    %s11691 = scalar_lea.sflag [#allocation3], 1
    %11692 = vsyncpa %s11691, 1
    %11693 = vsyncpa [#allocation5], 1

</llo_original>
